<compile_context>
chip_gen: v7x
topology: tpu7x:2x2x1
jax: 0.10.0
libtpu: 0.0.40
codegen_flags: <defaults>
</compile_context>

<pallas_src>
import math

import jax
import jax.numpy as jnp
from jax.experimental import pallas as pl
from jax.experimental.pallas import tpu as pltpu

# ----------------------------- configuration (small) -----------------------
B = 2                     # batch
IMG = 32                  # image side
PATCH = 16                # ViT patch size (as in vit_b_16)
NPATCH = (IMG // PATCH) ** 2      # 4 patches
SEQ = NPATCH + 1                  # +1 CLS token (=5)
SEQ_PAD = 8                       # padded to a full sublane tile
PATCH_DIM = 3 * PATCH * PATCH     # 768
DVIT = 128                # ViT hidden dim (downscaled vit_b_16)
NHEAD = 4                 # ViT attention heads
DHEAD = DVIT // NHEAD
MLP = 256                 # ViT MLP dim
NLAYERS = 2               # ViT encoder layers (downscaled)
CONCEPT_DIM = 128
NUM_CONCEPTS = 16
NUM_CLASSES = 10
GAT_HEADS = 4
CLS_HID = 512             # classifier hidden width
LN_EPS = 1e-6
BN_EPS = 1e-5

_F32 = jnp.float32
_BF16 = jnp.bfloat16


# ----------------------------- small helpers -------------------------------
def _layernorm(x, w, b):
    mu = jnp.mean(x, axis=-1, keepdims=True)
    var = jnp.mean((x - mu) ** 2, axis=-1, keepdims=True)
    return (x - mu) * jax.lax.rsqrt(var + LN_EPS) * w + b


def _mm(x, w_bf16):
    # bf16 MXU operands, f32 accumulation.
    return jnp.dot(x.astype(_BF16), w_bf16, preferred_element_type=_F32)


# ----------------------------- the fused kernel -----------------------------
def ncn_kernel(
    patches_ref, tokbase_ref, attnbias_ref,
    conv_w_ref, conv_b_ref,
    ln1_w_ref, ln1_b_ref, wqkv_ref, bqkv_ref, wo_ref, bo_ref,
    ln2_w_ref, ln2_b_ref, w1_ref, b1_ref, w2_ref, b2_ref,
    lnf_w_ref, lnf_b_ref,
    wa1_ref, ba1_ref, wa2_ref, ba2_ref, concepts_ref,
    wgat_ref, attsrc_ref, attdst_ref, bgat_ref,
    bn_g_ref, bn_b_ref, bn_m_ref, bn_v_ref,
    wagg_ref, bagg_ref, wc1_ref, bc1_ref, wc2_ref, bc2_ref,
    o_ref,
):
    # ---- patch embedding (== Conv2d(kernel=stride=patch) of the ViT stem) ---
    patches = patches_ref[0]                                  # (NPATCH, 768)
    emb = _mm(patches, conv_w_ref[...]) + conv_b_ref[...]     # (NPATCH, DVIT)

    # ---- assemble padded token slab: [CLS, patch0..3, pad x3] + pos-emb -----
    tokens = tokbase_ref[...] + jnp.concatenate(
        [jnp.zeros((1, DVIT), _F32),
         emb,
         jnp.zeros((SEQ_PAD - 1 - NPATCH, DVIT), _F32)], axis=0)  # (8, 128)

    bias = attnbias_ref[...]                                  # (1, SEQ_PAD)
    scale = 1.0 / math.sqrt(DHEAD)

    # ---- pre-LN transformer encoder blocks (statically unrolled) ------------
    for l in range(NLAYERS):
        x = tokens
        h = _layernorm(x, ln1_w_ref[l], ln1_b_ref[l])          # (8, 128)
        qkv = _mm(h, wqkv_ref[l]) + bqkv_ref[l]                # (8, 384)
        q = qkv[:, 0 * DVIT:1 * DVIT]
        k = qkv[:, 1 * DVIT:2 * DVIT]
        v = qkv[:, 2 * DVIT:3 * DVIT]

        # heads on the leading (batch) axis of a single batched einsum pair
        qh = jnp.stack([q[:, hh * DHEAD:(hh + 1) * DHEAD] for hh in range(NHEAD)], axis=0)
        kh = jnp.stack([k[:, hh * DHEAD:(hh + 1) * DHEAD] for hh in range(NHEAD)], axis=0)
        vh = jnp.stack([v[:, hh * DHEAD:(hh + 1) * DHEAD] for hh in range(NHEAD)], axis=0)
        s = jnp.einsum('htd,hsd->hts', qh.astype(_BF16), kh.astype(_BF16),
                       preferred_element_type=_F32) * scale     # (H, T, S)
        a = jax.nn.softmax(s + bias, axis=-1)                   # padded keys masked
        ctx_h = jnp.einsum('hts,hsd->htd', a.astype(_BF16), vh.astype(_BF16),
                           preferred_element_type=_F32)         # (H, T, Dh)
        ctx = jnp.concatenate([ctx_h[hh] for hh in range(NHEAD)], axis=-1)  # (8,128)

        x = x + _mm(ctx, wo_ref[l]) + bo_ref[l]

        y = _layernorm(x, ln2_w_ref[l], ln2_b_ref[l])
        y = _mm(y, w1_ref[l]) + b1_ref[l]
        y = jax.nn.gelu(y)   # TODO(synk): tanh approximation (exact erf GELU in torchvision)
        y = _mm(y, w2_ref[l]) + b2_ref[l]
        tokens = x + y

    # ---- backbone features: final LayerNorm on the CLS token ----------------
    cls = tokens[0:1, :]                                        # (1, DVIT)
    feats = _layernorm(cls, lnf_w_ref[...], lnf_b_ref[...])

    # ---- concept attention: Linear -> Tanh -> Linear -> softmax -------------
    ha = jnp.tanh(_mm(feats, wa1_ref[...]) + ba1_ref[...])      # (1, CD)
    scores = _mm(ha, wa2_ref[...]) + ba2_ref[...]               # (1, NC)
    probs = jax.nn.softmax(scores, axis=-1)                     # (1, NC)

    # node_features = concepts ⊙ probs
    node = (concepts_ref[...][None, :, :] * probs[:, :, None])[0]   # (NC, CD)

    # ---- GATConv on the bidirectional ring + self loops (heads=4, mean) -----
    xsrc = _mm(node, wgat_ref[...])                             # (NC, H*CD)
    a_src = _mm(xsrc, attsrc_ref[...])                          # (NC, H)
    a_dst = _mm(xsrc, attdst_ref[...])                          # (NC, H)

    as_prev = pltpu.roll(a_src, shift=1, axis=0)                # source i-1
    as_next = pltpu.roll(a_src, shift=NUM_CONCEPTS - 1, axis=0) # source i+1

    def lrelu(e):
        return jnp.where(e > 0, e, 0.2 * e)

    e_prev = lrelu(as_prev + a_dst)
    e_next = lrelu(as_next + a_dst)
    e_self = lrelu(a_src + a_dst)
    m = jnp.maximum(jnp.maximum(e_prev, e_next), e_self)
    w_prev = jnp.exp(e_prev - m)
    w_next = jnp.exp(e_next - m)
    w_self = jnp.exp(e_self - m)
    inv = 1.0 / (w_prev + w_next + w_self)
    a_p, a_n, a_s = w_prev * inv, w_next * inv, w_self * inv    # (NC, H)

    x_prev = pltpu.roll(xsrc, shift=1, axis=0)
    x_next = pltpu.roll(xsrc, shift=NUM_CONCEPTS - 1, axis=0)
    xh = xsrc.reshape(NUM_CONCEPTS, GAT_HEADS, CONCEPT_DIM)
    xph = x_prev.reshape(NUM_CONCEPTS, GAT_HEADS, CONCEPT_DIM)
    xnh = x_next.reshape(NUM_CONCEPTS, GAT_HEADS, CONCEPT_DIM)

    gat = (a_p[:, :, None] * xph + a_n[:, :, None] * xnh + a_s[:, :, None] * xh)
    gat = jnp.mean(gat, axis=1) + bgat_ref[...]                 # (NC, CD)

    # ---- BatchNorm1d (inference: running stats) + ReLU ----------------------
    gat = (gat - bn_m_ref[...]) * jax.lax.rsqrt(bn_v_ref[...] + BN_EPS)
    gat = jnp.maximum(gat * bn_g_ref[...] + bn_b_ref[...], 0.0)

    # ---- aggregation attention over concepts --------------------------------
    aw = _mm(gat, wagg_ref[...]) + bagg_ref[...]                # (NC, 1)
    aw = jax.nn.softmax(aw, axis=0)
    refined = jnp.sum(aw * gat, axis=0, keepdims=True)          # (1, CD)

    # ---- classifier: Linear -> ReLU -> (Dropout=id) -> Linear ---------------
    hc = jnp.maximum(_mm(refined, wc1_ref[...]) + bc1_ref[...], 0.0)
    logits = _mm(hc, wc2_ref[...]) + bc2_ref[...]               # (1, NUM_CLASSES)
    o_ref[0] = logits


# ----------------------------- parameters ----------------------------------
def _xavier(key, shape):
    fan_a, fan_b = shape
    a = math.sqrt(6.0 / (fan_a + fan_b))
    return jax.random.uniform(key, shape, _F32, -a, a)


def init_params(key):
    keys = iter(jax.random.split(key, 64))
    nxt = lambda: next(keys)
    p = {}

    # --- ViT backbone (downscaled, random init) ---
    p['conv_w_t'] = (0.02 * jax.random.normal(nxt(), (PATCH_DIM, DVIT), _F32)).astype(_BF16)
    p['conv_b'] = jnp.zeros((1, DVIT), _F32)
    cls_token = jnp.zeros((1, DVIT), _F32)
    pos_emb = 0.02 * jax.random.normal(nxt(), (SEQ, DVIT), _F32)
    # token base = [CLS + pos0, pos1..pos4, zeros for padded rows]
    p['tok_base'] = jnp.concatenate(
        [cls_token + pos_emb[0:1], pos_emb[1:SEQ],
         jnp.zeros((SEQ_PAD - SEQ, DVIT), _F32)], axis=0)          # (SEQ_PAD, DVIT)
    p['attn_bias'] = jnp.concatenate(
        [jnp.zeros((1, SEQ), _F32),
         jnp.full((1, SEQ_PAD - SEQ), -1e9, _F32)], axis=1)        # (1, SEQ_PAD)

    ln1_w, ln1_b, wqkv, bqkv, wo, bo = [], [], [], [], [], []
    ln2_w, ln2_b, w1, b1, w2, b2 = [], [], [], [], [], []
    for _ in range(NLAYERS):
        ln1_w.append(jnp.ones((1, DVIT), _F32)); ln1_b.append(jnp.zeros((1, DVIT), _F32))
        wqkv.append(_xavier(nxt(), (DVIT, 3 * DVIT)).astype(_BF16))
        bqkv.append(jnp.zeros((1, 3 * DVIT), _F32))
        wo.append(_xavier(nxt(), (DVIT, DVIT)).astype(_BF16))
        bo.append(jnp.zeros((1, DVIT), _F32))
        ln2_w.append(jnp.ones((1, DVIT), _F32)); ln2_b.append(jnp.zeros((1, DVIT), _F32))
        w1.append(_xavier(nxt(), (DVIT, MLP)).astype(_BF16))
        b1.append(jnp.zeros((1, MLP), _F32))
        w2.append(_xavier(nxt(), (MLP, DVIT)).astype(_BF16))
        b2.append(jnp.zeros((1, DVIT), _F32))
    p['ln1_w'] = jnp.stack(ln1_w); p['ln1_b'] = jnp.stack(ln1_b)
    p['wqkv_t'] = jnp.stack(wqkv); p['bqkv'] = jnp.stack(bqkv)
    p['wo_t'] = jnp.stack(wo);     p['bo'] = jnp.stack(bo)
    p['ln2_w'] = jnp.stack(ln2_w); p['ln2_b'] = jnp.stack(ln2_b)
    p['w1_t'] = jnp.stack(w1);     p['b1'] = jnp.stack(b1)
    p['w2_t'] = jnp.stack(w2);     p['b2'] = jnp.stack(b2)
    p['lnf_w'] = jnp.ones((1, DVIT), _F32); p['lnf_b'] = jnp.zeros((1, DVIT), _F32)

    # --- NCN head ---
    p['wa1_t'] = _xavier(nxt(), (DVIT, CONCEPT_DIM)).astype(_BF16)
    p['ba1'] = jnp.zeros((1, CONCEPT_DIM), _F32)
    p['wa2_t'] = _xavier(nxt(), (CONCEPT_DIM, NUM_CONCEPTS)).astype(_BF16)
    p['ba2'] = jnp.zeros((1, NUM_CONCEPTS), _F32)
    p['concepts'] = jax.random.normal(nxt(), (NUM_CONCEPTS, CONCEPT_DIM), _F32)
    p['wgat_t'] = _xavier(nxt(), (CONCEPT_DIM, GAT_HEADS * CONCEPT_DIM)).astype(_BF16)

    att_src = _xavier(nxt(), (GAT_HEADS, CONCEPT_DIM))
    att_dst = _xavier(nxt(), (GAT_HEADS, CONCEPT_DIM))

    def block_diag(att):   # (H, CD) -> (H*CD, H) block-diagonal for a single matmul
        m = jnp.zeros((GAT_HEADS * CONCEPT_DIM, GAT_HEADS), _F32)
        for h in range(GAT_HEADS):
            m = m.at[h * CONCEPT_DIM:(h + 1) * CONCEPT_DIM, h].set(att[h])
        return m.astype(_BF16)

    p['att_src_bd'] = block_diag(att_src)
    p['att_dst_bd'] = block_diag(att_dst)
    p['bgat'] = jnp.zeros((1, CONCEPT_DIM), _F32)
    p['bn_g'] = jnp.ones((1, CONCEPT_DIM), _F32)
    p['bn_b'] = jnp.zeros((1, CONCEPT_DIM), _F32)
    p['bn_m'] = jnp.zeros((1, CONCEPT_DIM), _F32)
    p['bn_v'] = jnp.ones((1, CONCEPT_DIM), _F32)
    p['wagg_t'] = _xavier(nxt(), (CONCEPT_DIM, 1)).astype(_BF16)
    p['bagg'] = jnp.zeros((1, 1), _F32)
    p['wc1_t'] = _xavier(nxt(), (CONCEPT_DIM, CLS_HID)).astype(_BF16)
    p['bc1'] = jnp.zeros((1, CLS_HID), _F32)
    p['wc2_t'] = _xavier(nxt(), (CLS_HID, NUM_CLASSES)).astype(_BF16)
    p['bc2'] = jnp.zeros((1, NUM_CLASSES), _F32)
    return p


# ----------------------------- forward wrapper ------------------------------
def ncn_forward(x, p):
    # Patchify (single host-side XLA transpose; matches Conv2d(patch, stride=patch)).
    patches = x.reshape(B, 3, IMG // PATCH, PATCH, IMG // PATCH, PATCH)
    patches = patches.transpose(0, 2, 4, 1, 3, 5).reshape(B, NPATCH, PATCH_DIM)

    args = [
        patches, p['tok_base'], p['attn_bias'],
        p['conv_w_t'], p['conv_b'],
        p['ln1_w'], p['ln1_b'], p['wqkv_t'], p['bqkv'], p['wo_t'], p['bo'],
        p['ln2_w'], p['ln2_b'], p['w1_t'], p['b1'], p['w2_t'], p['b2'],
        p['lnf_w'], p['lnf_b'],
        p['wa1_t'], p['ba1'], p['wa2_t'], p['ba2'], p['concepts'],
        p['wgat_t'], p['att_src_bd'], p['att_dst_bd'], p['bgat'],
        p['bn_g'], p['bn_b'], p['bn_m'], p['bn_v'],
        p['wagg_t'], p['bagg'], p['wc1_t'], p['bc1'], p['wc2_t'], p['bc2'],
    ]

    def batch_spec(a):
        # leading axis is batch: one block per grid step, full extent elsewhere
        return pl.BlockSpec((1,) + a.shape[1:],
                            lambda b: (b,) + (0,) * (a.ndim - 1))

    def full_spec(a):
        # whole array resident; same block for every grid step (fetched once)
        return pl.BlockSpec(a.shape, lambda b: (0,) * a.ndim)

    in_specs = [batch_spec(patches)] + [full_spec(a) for a in args[1:]]

    out = pl.pallas_call(
        ncn_kernel,
        out_shape=jax.ShapeDtypeStruct((B, 1, NUM_CLASSES), _F32),
        grid=(B,),
        in_specs=in_specs,
        out_specs=pl.BlockSpec((1, 1, NUM_CLASSES), lambda b: (b, 0, 0)),
        compiler_params=pltpu.CompilerParams(
            dimension_semantics=("parallel",)),
    )(*args)
    return out[:, 0, :]


if __name__ == "__main__":
    key = jax.random.PRNGKey(0)
    kx, kp = jax.random.split(key)
    x = jax.random.normal(kx, (B, 3, IMG, IMG), _F32)
    params = init_params(kp)
    logits = ncn_forward(x, params)
    jax.block_until_ready(logits)
    assert logits.shape == (B, NUM_CLASSES)
    assert bool(jnp.all(jnp.isfinite(logits)))
    print("KERNEL_OK")
</pallas_src>

<mosaic_0001>
module attributes {stable_mosaic.version = 11 : i64} {
  func.func @ncn_kernel(%arg0: i32, %arg1: memref<1x4x768xf32, #tpu.memory_space<vmem>>, %arg2: memref<8x128xf32, #tpu.memory_space<vmem>>, %arg3: memref<1x8xf32, #tpu.memory_space<vmem>>, %arg4: memref<768x128xbf16, #tpu.memory_space<vmem>>, %arg5: memref<1x128xf32, #tpu.memory_space<vmem>>, %arg6: memref<2x1x128xf32, #tpu.memory_space<vmem>>, %arg7: memref<2x1x128xf32, #tpu.memory_space<vmem>>, %arg8: memref<2x128x384xbf16, #tpu.memory_space<vmem>>, %arg9: memref<2x1x384xf32, #tpu.memory_space<vmem>>, %arg10: memref<2x128x128xbf16, #tpu.memory_space<vmem>>, %arg11: memref<2x1x128xf32, #tpu.memory_space<vmem>>, %arg12: memref<2x1x128xf32, #tpu.memory_space<vmem>>, %arg13: memref<2x1x128xf32, #tpu.memory_space<vmem>>, %arg14: memref<2x128x256xbf16, #tpu.memory_space<vmem>>, %arg15: memref<2x1x256xf32, #tpu.memory_space<vmem>>, %arg16: memref<2x256x128xbf16, #tpu.memory_space<vmem>>, %arg17: memref<2x1x128xf32, #tpu.memory_space<vmem>>, %arg18: memref<1x128xf32, #tpu.memory_space<vmem>>, %arg19: memref<1x128xf32, #tpu.memory_space<vmem>>, %arg20: memref<128x128xbf16, #tpu.memory_space<vmem>>, %arg21: memref<1x128xf32, #tpu.memory_space<vmem>>, %arg22: memref<128x16xbf16, #tpu.memory_space<vmem>>, %arg23: memref<1x16xf32, #tpu.memory_space<vmem>>, %arg24: memref<16x128xf32, #tpu.memory_space<vmem>>, %arg25: memref<128x512xbf16, #tpu.memory_space<vmem>>, %arg26: memref<512x4xbf16, #tpu.memory_space<vmem>>, %arg27: memref<512x4xbf16, #tpu.memory_space<vmem>>, %arg28: memref<1x128xf32, #tpu.memory_space<vmem>>, %arg29: memref<1x128xf32, #tpu.memory_space<vmem>>, %arg30: memref<1x128xf32, #tpu.memory_space<vmem>>, %arg31: memref<1x128xf32, #tpu.memory_space<vmem>>, %arg32: memref<1x128xf32, #tpu.memory_space<vmem>>, %arg33: memref<128x1xbf16, #tpu.memory_space<vmem>>, %arg34: memref<1x1xf32, #tpu.memory_space<vmem>>, %arg35: memref<128x512xbf16, #tpu.memory_space<vmem>>, %arg36: memref<1x512xf32, #tpu.memory_space<vmem>>, %arg37: memref<512x10xbf16, #tpu.memory_space<vmem>>, %arg38: memref<1x10xf32, #tpu.memory_space<vmem>>, %arg39: memref<1x1x10xf32, #tpu.memory_space<vmem>>) attributes {dimension_semantics = [#tpu.dimension_semantics<parallel>], iteration_bounds = array<i64: 2>, scalar_prefetch = 0 : i64, scratch_operands = 0 : i64, tpu.core_type = #tpu.core_type<tc>, window_params = [{transform_indices = @transform_0, window_bounds = array<i64: 1, 4, 768>}, {pipeline_mode = #tpu.pipeline_mode<synchronous>, transform_indices = @transform_1, window_bounds = array<i64: 8, 128>}, {pipeline_mode = #tpu.pipeline_mode<synchronous>, transform_indices = @transform_2, window_bounds = array<i64: 1, 8>}, {pipeline_mode = #tpu.pipeline_mode<synchronous>, transform_indices = @transform_3, window_bounds = array<i64: 768, 128>}, {pipeline_mode = #tpu.pipeline_mode<synchronous>, transform_indices = @transform_4, window_bounds = array<i64: 1, 128>}, {pipeline_mode = #tpu.pipeline_mode<synchronous>, transform_indices = @transform_5, window_bounds = array<i64: 2, 1, 128>}, {pipeline_mode = #tpu.pipeline_mode<synchronous>, transform_indices = @transform_6, window_bounds = array<i64: 2, 1, 128>}, {pipeline_mode = #tpu.pipeline_mode<synchronous>, transform_indices = @transform_7, window_bounds = array<i64: 2, 128, 384>}, {pipeline_mode = #tpu.pipeline_mode<synchronous>, transform_indices = @transform_8, window_bounds = array<i64: 2, 1, 384>}, {pipeline_mode = #tpu.pipeline_mode<synchronous>, transform_indices = @transform_9, window_bounds = array<i64: 2, 128, 128>}, {pipeline_mode = #tpu.pipeline_mode<synchronous>, transform_indices = @transform_10, window_bounds = array<i64: 2, 1, 128>}, {pipeline_mode = #tpu.pipeline_mode<synchronous>, transform_indices = @transform_11, window_bounds = array<i64: 2, 1, 128>}, {pipeline_mode = #tpu.pipeline_mode<synchronous>, transform_indices = @transform_12, window_bounds = array<i64: 2, 1, 128>}, {pipeline_mode = #tpu.pipeline_mode<synchronous>, transform_indices = @transform_13, window_bounds = array<i64: 2, 128, 256>}, {pipeline_mode = #tpu.pipeline_mode<synchronous>, transform_indices = @transform_14, window_bounds = array<i64: 2, 1, 256>}, {pipeline_mode = #tpu.pipeline_mode<synchronous>, transform_indices = @transform_15, window_bounds = array<i64: 2, 256, 128>}, {pipeline_mode = #tpu.pipeline_mode<synchronous>, transform_indices = @transform_16, window_bounds = array<i64: 2, 1, 128>}, {pipeline_mode = #tpu.pipeline_mode<synchronous>, transform_indices = @transform_17, window_bounds = array<i64: 1, 128>}, {pipeline_mode = #tpu.pipeline_mode<synchronous>, transform_indices = @transform_18, window_bounds = array<i64: 1, 128>}, {pipeline_mode = #tpu.pipeline_mode<synchronous>, transform_indices = @transform_19, window_bounds = array<i64: 128, 128>}, {pipeline_mode = #tpu.pipeline_mode<synchronous>, transform_indices = @transform_20, window_bounds = array<i64: 1, 128>}, {pipeline_mode = #tpu.pipeline_mode<synchronous>, transform_indices = @transform_21, window_bounds = array<i64: 128, 16>}, {pipeline_mode = #tpu.pipeline_mode<synchronous>, transform_indices = @transform_22, window_bounds = array<i64: 1, 16>}, {pipeline_mode = #tpu.pipeline_mode<synchronous>, transform_indices = @transform_23, window_bounds = array<i64: 16, 128>}, {pipeline_mode = #tpu.pipeline_mode<synchronous>, transform_indices = @transform_24, window_bounds = array<i64: 128, 512>}, {pipeline_mode = #tpu.pipeline_mode<synchronous>, transform_indices = @transform_25, window_bounds = array<i64: 512, 4>}, {pipeline_mode = #tpu.pipeline_mode<synchronous>, transform_indices = @transform_26, window_bounds = array<i64: 512, 4>}, {pipeline_mode = #tpu.pipeline_mode<synchronous>, transform_indices = @transform_27, window_bounds = array<i64: 1, 128>}, {pipeline_mode = #tpu.pipeline_mode<synchronous>, transform_indices = @transform_28, window_bounds = array<i64: 1, 128>}, {pipeline_mode = #tpu.pipeline_mode<synchronous>, transform_indices = @transform_29, window_bounds = array<i64: 1, 128>}, {pipeline_mode = #tpu.pipeline_mode<synchronous>, transform_indices = @transform_30, window_bounds = array<i64: 1, 128>}, {pipeline_mode = #tpu.pipeline_mode<synchronous>, transform_indices = @transform_31, window_bounds = array<i64: 1, 128>}, {pipeline_mode = #tpu.pipeline_mode<synchronous>, transform_indices = @transform_32, window_bounds = array<i64: 128, 1>}, {pipeline_mode = #tpu.pipeline_mode<synchronous>, transform_indices = @transform_33, window_bounds = array<i64: 1, 1>}, {pipeline_mode = #tpu.pipeline_mode<synchronous>, transform_indices = @transform_34, window_bounds = array<i64: 128, 512>}, {pipeline_mode = #tpu.pipeline_mode<synchronous>, transform_indices = @transform_35, window_bounds = array<i64: 1, 512>}, {pipeline_mode = #tpu.pipeline_mode<synchronous>, transform_indices = @transform_36, window_bounds = array<i64: 512, 10>}, {pipeline_mode = #tpu.pipeline_mode<synchronous>, transform_indices = @transform_37, window_bounds = array<i64: 1, 10>}, {transform_indices = @transform_38, window_bounds = array<i64: 1, 1, 10>}]} {
    %c0 = arith.constant 0 : index
    %c0_0 = arith.constant 0 : index
    %c0_1 = arith.constant 0 : index
    %0 = vector.load %arg1[%c0, %c0_0, %c0_1] : memref<1x4x768xf32, #tpu.memory_space<vmem>>, vector<1x4x768xf32>
    %1 = vector.shape_cast %0 : vector<1x4x768xf32> to vector<4x768xf32>
    %c0_2 = arith.constant 0 : index
    %c0_3 = arith.constant 0 : index
    %2 = vector.load %arg4[%c0_2, %c0_3] : memref<768x128xbf16, #tpu.memory_space<vmem>>, vector<768x128xbf16>
    %3 = arith.truncf %1 : vector<4x768xf32> to vector<4x768xbf16>
    %cst = arith.constant dense<0.000000e+00> : vector<4x128xf32>
    %4 = tpu.matmul %3, %2, %cst {dimension_numbers = #tpu.dot_dimension_numbers<[1], [0], [0], [1], [0, 0, 1, 1], [], []>} : vector<4x768xbf16>, vector<768x128xbf16>, vector<4x128xf32> -> vector<4x128xf32>
    %c0_4 = arith.constant 0 : index
    %c0_5 = arith.constant 0 : index
    %5 = vector.load %arg5[%c0_4, %c0_5] : memref<1x128xf32, #tpu.memory_space<vmem>>, vector<1x128xf32>
    %6 = vector.broadcast %5 : vector<1x128xf32> to vector<4x128xf32>
    %7 = arith.addf %4, %6 : vector<4x128xf32>
    %c0_6 = arith.constant 0 : index
    %c0_7 = arith.constant 0 : index
    %8 = vector.load %arg2[%c0_6, %c0_7] : memref<8x128xf32, #tpu.memory_space<vmem>>, vector<8x128xf32>
    %cst_8 = arith.constant 0.000000e+00 : f32
    %9 = vector.broadcast %cst_8 : f32 to vector<1x128xf32>
    %cst_9 = arith.constant 0.000000e+00 : f32
    %10 = vector.broadcast %cst_9 : f32 to vector<3x128xf32>
    %11 = tpu.concatenate %9, %7, %10 in 0 : vector<1x128xf32>, vector<4x128xf32>, vector<3x128xf32> -> vector<8x128xf32>
    %12 = arith.addf %8, %11 : vector<8x128xf32>
    %c0_10 = arith.constant 0 : index
    %c0_11 = arith.constant 0 : index
    %13 = vector.load %arg3[%c0_10, %c0_11] : memref<1x8xf32, #tpu.memory_space<vmem>>, vector<1x8xf32>
    %c0_12 = arith.constant 0 : index
    %c0_13 = arith.constant 0 : index
    %c0_14 = arith.constant 0 : index
    %14 = vector.load %arg6[%c0_12, %c0_13, %c0_14] : memref<2x1x128xf32, #tpu.memory_space<vmem>>, vector<1x1x128xf32>
    %15 = vector.shape_cast %14 : vector<1x1x128xf32> to vector<1x128xf32>
    %c0_15 = arith.constant 0 : index
    %c0_16 = arith.constant 0 : index
    %c0_17 = arith.constant 0 : index
    %16 = vector.load %arg7[%c0_15, %c0_16, %c0_17] : memref<2x1x128xf32, #tpu.memory_space<vmem>>, vector<1x1x128xf32>
    %17 = vector.shape_cast %16 : vector<1x1x128xf32> to vector<1x128xf32>
    %cst_18 = arith.constant dense<0.000000e+00> : vector<8xf32>
    %18 = vector.multi_reduction <add>, %12, %cst_18 [1] : vector<8x128xf32> to vector<8xf32>
    %19 = vector.shape_cast %18 : vector<8xf32> to vector<8x1xf32>
    %cst_19 = arith.constant 1.280000e+02 : f32
    %20 = vector.broadcast %cst_19 : f32 to vector<8x1xf32>
    %21 = arith.divf %19, %20 : vector<8x1xf32>
    %22 = vector.broadcast %21 : vector<8x1xf32> to vector<8x128xf32>
    %23 = arith.subf %12, %22 : vector<8x128xf32>
    %24 = arith.mulf %23, %23 : vector<8x128xf32>
    %cst_20 = arith.constant dense<0.000000e+00> : vector<8xf32>
    %25 = vector.multi_reduction <add>, %24, %cst_20 [1] : vector<8x128xf32> to vector<8xf32>
    %26 = vector.shape_cast %25 : vector<8xf32> to vector<8x1xf32>
    %cst_21 = arith.constant 1.280000e+02 : f32
    %27 = vector.broadcast %cst_21 : f32 to vector<8x1xf32>
    %28 = arith.divf %26, %27 : vector<8x1xf32>
    %29 = vector.broadcast %21 : vector<8x1xf32> to vector<8x128xf32>
    %30 = arith.subf %12, %29 : vector<8x128xf32>
    %cst_22 = arith.constant 9.99999997E-7 : f32
    %31 = vector.broadcast %cst_22 : f32 to vector<8x1xf32>
    %32 = arith.addf %28, %31 : vector<8x1xf32>
    %33 = math.rsqrt %32 : vector<8x1xf32>
    %34 = vector.broadcast %33 : vector<8x1xf32> to vector<8x128xf32>
    %35 = arith.mulf %30, %34 : vector<8x128xf32>
    %36 = vector.broadcast %15 : vector<1x128xf32> to vector<8x128xf32>
    %37 = arith.mulf %35, %36 : vector<8x128xf32>
    %38 = vector.broadcast %17 : vector<1x128xf32> to vector<8x128xf32>
    %39 = arith.addf %37, %38 : vector<8x128xf32>
    %c0_23 = arith.constant 0 : index
    %c0_24 = arith.constant 0 : index
    %c0_25 = arith.constant 0 : index
    %40 = vector.load %arg8[%c0_23, %c0_24, %c0_25] : memref<2x128x384xbf16, #tpu.memory_space<vmem>>, vector<1x128x384xbf16>
    %41 = vector.shape_cast %40 : vector<1x128x384xbf16> to vector<128x384xbf16>
    %42 = arith.truncf %39 : vector<8x128xf32> to vector<8x128xbf16>
    %cst_26 = arith.constant dense<0.000000e+00> : vector<8x384xf32>
    %43 = tpu.matmul %42, %41, %cst_26 {dimension_numbers = #tpu.dot_dimension_numbers<[1], [0], [0], [1], [0, 0, 1, 1], [], []>} : vector<8x128xbf16>, vector<128x384xbf16>, vector<8x384xf32> -> vector<8x384xf32>
    %c0_27 = arith.constant 0 : index
    %c0_28 = arith.constant 0 : index
    %c0_29 = arith.constant 0 : index
    %44 = vector.load %arg9[%c0_27, %c0_28, %c0_29] : memref<2x1x384xf32, #tpu.memory_space<vmem>>, vector<1x1x384xf32>
    %45 = vector.shape_cast %44 : vector<1x1x384xf32> to vector<1x384xf32>
    %46 = vector.broadcast %45 : vector<1x384xf32> to vector<8x384xf32>
    %47 = arith.addf %43, %46 : vector<8x384xf32>
    %48 = vector.extract_strided_slice %47 {offsets = [0, 0], sizes = [8, 128], strides = [1, 1]} : vector<8x384xf32> to vector<8x128xf32>
    %49 = vector.extract_strided_slice %47 {offsets = [0, 128], sizes = [8, 128], strides = [1, 1]} : vector<8x384xf32> to vector<8x128xf32>
    %50 = vector.extract_strided_slice %47 {offsets = [0, 256], sizes = [8, 128], strides = [1, 1]} : vector<8x384xf32> to vector<8x128xf32>
    %51 = vector.extract_strided_slice %48 {offsets = [0, 0], sizes = [8, 32], strides = [1, 1]} : vector<8x128xf32> to vector<8x32xf32>
    %52 = vector.extract_strided_slice %48 {offsets = [0, 32], sizes = [8, 32], strides = [1, 1]} : vector<8x128xf32> to vector<8x32xf32>
    %53 = vector.extract_strided_slice %48 {offsets = [0, 64], sizes = [8, 32], strides = [1, 1]} : vector<8x128xf32> to vector<8x32xf32>
    %54 = vector.extract_strided_slice %48 {offsets = [0, 96], sizes = [8, 32], strides = [1, 1]} : vector<8x128xf32> to vector<8x32xf32>
    %55 = vector.shape_cast %51 : vector<8x32xf32> to vector<1x8x32xf32>
    %56 = vector.shape_cast %52 : vector<8x32xf32> to vector<1x8x32xf32>
    %57 = vector.shape_cast %53 : vector<8x32xf32> to vector<1x8x32xf32>
    %58 = vector.shape_cast %54 : vector<8x32xf32> to vector<1x8x32xf32>
    %59 = tpu.concatenate %55, %56, %57, %58 in 0 : vector<1x8x32xf32>, vector<1x8x32xf32>, vector<1x8x32xf32>, vector<1x8x32xf32> -> vector<4x8x32xf32>
    %60 = vector.extract_strided_slice %49 {offsets = [0, 0], sizes = [8, 32], strides = [1, 1]} : vector<8x128xf32> to vector<8x32xf32>
    %61 = vector.extract_strided_slice %49 {offsets = [0, 32], sizes = [8, 32], strides = [1, 1]} : vector<8x128xf32> to vector<8x32xf32>
    %62 = vector.extract_strided_slice %49 {offsets = [0, 64], sizes = [8, 32], strides = [1, 1]} : vector<8x128xf32> to vector<8x32xf32>
    %63 = vector.extract_strided_slice %49 {offsets = [0, 96], sizes = [8, 32], strides = [1, 1]} : vector<8x128xf32> to vector<8x32xf32>
    %64 = vector.shape_cast %60 : vector<8x32xf32> to vector<1x8x32xf32>
    %65 = vector.shape_cast %61 : vector<8x32xf32> to vector<1x8x32xf32>
    %66 = vector.shape_cast %62 : vector<8x32xf32> to vector<1x8x32xf32>
    %67 = vector.shape_cast %63 : vector<8x32xf32> to vector<1x8x32xf32>
    %68 = tpu.concatenate %64, %65, %66, %67 in 0 : vector<1x8x32xf32>, vector<1x8x32xf32>, vector<1x8x32xf32>, vector<1x8x32xf32> -> vector<4x8x32xf32>
    %69 = vector.extract_strided_slice %50 {offsets = [0, 0], sizes = [8, 32], strides = [1, 1]} : vector<8x128xf32> to vector<8x32xf32>
    %70 = vector.extract_strided_slice %50 {offsets = [0, 32], sizes = [8, 32], strides = [1, 1]} : vector<8x128xf32> to vector<8x32xf32>
    %71 = vector.extract_strided_slice %50 {offsets = [0, 64], sizes = [8, 32], strides = [1, 1]} : vector<8x128xf32> to vector<8x32xf32>
    %72 = vector.extract_strided_slice %50 {offsets = [0, 96], sizes = [8, 32], strides = [1, 1]} : vector<8x128xf32> to vector<8x32xf32>
    %73 = vector.shape_cast %69 : vector<8x32xf32> to vector<1x8x32xf32>
    %74 = vector.shape_cast %70 : vector<8x32xf32> to vector<1x8x32xf32>
    %75 = vector.shape_cast %71 : vector<8x32xf32> to vector<1x8x32xf32>
    %76 = vector.shape_cast %72 : vector<8x32xf32> to vector<1x8x32xf32>
    %77 = tpu.concatenate %73, %74, %75, %76 in 0 : vector<1x8x32xf32>, vector<1x8x32xf32>, vector<1x8x32xf32>, vector<1x8x32xf32> -> vector<4x8x32xf32>
    %78 = arith.truncf %59 : vector<4x8x32xf32> to vector<4x8x32xbf16>
    %79 = arith.truncf %68 : vector<4x8x32xf32> to vector<4x8x32xbf16>
    "tpu.trace_start"() <{level = 10 : i32, message = "htd,hsd->hts"}> : () -> ()
    %cst_30 = arith.constant dense<0.000000e+00> : vector<4x8x8xf32>
    %80 = tpu.matmul %78, %79, %cst_30 {dimension_numbers = #tpu.dot_dimension_numbers<[2], [2], [1], [1], [0, 0, 0, 1, 1, 1], [0], [0]>} : vector<4x8x32xbf16>, vector<4x8x32xbf16>, vector<4x8x8xf32> -> vector<4x8x8xf32>
    "tpu.trace_stop"() : () -> ()
    %cst_31 = arith.constant 0.176776692 : f32
    %81 = vector.broadcast %cst_31 : f32 to vector<4x8x8xf32>
    %82 = arith.mulf %80, %81 : vector<4x8x8xf32>
    %83 = vector.shape_cast %13 : vector<1x8xf32> to vector<1x1x8xf32>
    %84 = vector.broadcast %83 : vector<1x1x8xf32> to vector<4x8x8xf32>
    %85 = arith.addf %82, %84 : vector<4x8x8xf32>
    %cst_32 = arith.constant dense<0xFF800000> : vector<4x8xf32>
    %86 = vector.multi_reduction <maximumf>, %85, %cst_32 [2] : vector<4x8x8xf32> to vector<4x8xf32>
    %cst_33 = arith.constant 0xFF800000 : f32
    %87 = vector.broadcast %cst_33 : f32 to vector<4x8xf32>
    %88 = arith.maximumf %87, %86 : vector<4x8xf32>
    %89 = vector.shape_cast %88 : vector<4x8xf32> to vector<4x8x1xf32>
    %90 = vector.broadcast %89 : vector<4x8x1xf32> to vector<4x8x8xf32>
    %91 = arith.subf %85, %90 : vector<4x8x8xf32>
    %92 = math.exp %91 : vector<4x8x8xf32>
    %cst_34 = arith.constant dense<0.000000e+00> : vector<4x8xf32>
    %93 = vector.multi_reduction <add>, %92, %cst_34 [2] : vector<4x8x8xf32> to vector<4x8xf32>
    %94 = vector.shape_cast %93 : vector<4x8xf32> to vector<4x8x1xf32>
    %95 = vector.broadcast %94 : vector<4x8x1xf32> to vector<4x8x8xf32>
    %96 = arith.divf %92, %95 : vector<4x8x8xf32>
    %97 = arith.truncf %96 : vector<4x8x8xf32> to vector<4x8x8xbf16>
    %98 = arith.truncf %77 : vector<4x8x32xf32> to vector<4x8x32xbf16>
    "tpu.trace_start"() <{level = 10 : i32, message = "hts,hsd->htd"}> : () -> ()
    %cst_35 = arith.constant dense<0.000000e+00> : vector<4x8x32xf32>
    %99 = tpu.matmul %97, %98, %cst_35 {dimension_numbers = #tpu.dot_dimension_numbers<[2], [1], [1], [2], [0, 0, 0, 1, 1, 2], [0], [0]>} : vector<4x8x8xbf16>, vector<4x8x32xbf16>, vector<4x8x32xf32> -> vector<4x8x32xf32>
    "tpu.trace_stop"() : () -> ()
    %100 = vector.extract_strided_slice %99 {offsets = [0, 0, 0], sizes = [1, 8, 32], strides = [1, 1, 1]} : vector<4x8x32xf32> to vector<1x8x32xf32>
    %101 = vector.shape_cast %100 : vector<1x8x32xf32> to vector<8x32xf32>
    %102 = vector.extract_strided_slice %99 {offsets = [1, 0, 0], sizes = [1, 8, 32], strides = [1, 1, 1]} : vector<4x8x32xf32> to vector<1x8x32xf32>
    %103 = vector.shape_cast %102 : vector<1x8x32xf32> to vector<8x32xf32>
    %104 = vector.extract_strided_slice %99 {offsets = [2, 0, 0], sizes = [1, 8, 32], strides = [1, 1, 1]} : vector<4x8x32xf32> to vector<1x8x32xf32>
    %105 = vector.shape_cast %104 : vector<1x8x32xf32> to vector<8x32xf32>
    %106 = vector.extract_strided_slice %99 {offsets = [3, 0, 0], sizes = [1, 8, 32], strides = [1, 1, 1]} : vector<4x8x32xf32> to vector<1x8x32xf32>
    %107 = vector.shape_cast %106 : vector<1x8x32xf32> to vector<8x32xf32>
    %108 = tpu.concatenate %101, %103, %105, %107 in 1 : vector<8x32xf32>, vector<8x32xf32>, vector<8x32xf32>, vector<8x32xf32> -> vector<8x128xf32>
    %c0_36 = arith.constant 0 : index
    %c0_37 = arith.constant 0 : index
    %c0_38 = arith.constant 0 : index
    %109 = vector.load %arg10[%c0_36, %c0_37, %c0_38] : memref<2x128x128xbf16, #tpu.memory_space<vmem>>, vector<1x128x128xbf16>
    %110 = vector.shape_cast %109 : vector<1x128x128xbf16> to vector<128x128xbf16>
    %111 = arith.truncf %108 : vector<8x128xf32> to vector<8x128xbf16>
    %cst_39 = arith.constant dense<0.000000e+00> : vector<8x128xf32>
    %112 = tpu.matmul %111, %110, %cst_39 {dimension_numbers = #tpu.dot_dimension_numbers<[1], [0], [0], [1], [0, 0, 1, 1], [], []>} : vector<8x128xbf16>, vector<128x128xbf16>, vector<8x128xf32> -> vector<8x128xf32>
    %113 = arith.addf %12, %112 : vector<8x128xf32>
    %c0_40 = arith.constant 0 : index
    %c0_41 = arith.constant 0 : index
    %c0_42 = arith.constant 0 : index
    %114 = vector.load %arg11[%c0_40, %c0_41, %c0_42] : memref<2x1x128xf32, #tpu.memory_space<vmem>>, vector<1x1x128xf32>
    %115 = vector.shape_cast %114 : vector<1x1x128xf32> to vector<1x128xf32>
    %116 = vector.broadcast %115 : vector<1x128xf32> to vector<8x128xf32>
    %117 = arith.addf %113, %116 : vector<8x128xf32>
    %c0_43 = arith.constant 0 : index
    %c0_44 = arith.constant 0 : index
    %c0_45 = arith.constant 0 : index
    %118 = vector.load %arg12[%c0_43, %c0_44, %c0_45] : memref<2x1x128xf32, #tpu.memory_space<vmem>>, vector<1x1x128xf32>
    %119 = vector.shape_cast %118 : vector<1x1x128xf32> to vector<1x128xf32>
    %c0_46 = arith.constant 0 : index
    %c0_47 = arith.constant 0 : index
    %c0_48 = arith.constant 0 : index
    %120 = vector.load %arg13[%c0_46, %c0_47, %c0_48] : memref<2x1x128xf32, #tpu.memory_space<vmem>>, vector<1x1x128xf32>
    %121 = vector.shape_cast %120 : vector<1x1x128xf32> to vector<1x128xf32>
    %cst_49 = arith.constant dense<0.000000e+00> : vector<8xf32>
    %122 = vector.multi_reduction <add>, %117, %cst_49 [1] : vector<8x128xf32> to vector<8xf32>
    %123 = vector.shape_cast %122 : vector<8xf32> to vector<8x1xf32>
    %cst_50 = arith.constant 1.280000e+02 : f32
    %124 = vector.broadcast %cst_50 : f32 to vector<8x1xf32>
    %125 = arith.divf %123, %124 : vector<8x1xf32>
    %126 = vector.broadcast %125 : vector<8x1xf32> to vector<8x128xf32>
    %127 = arith.subf %117, %126 : vector<8x128xf32>
    %128 = arith.mulf %127, %127 : vector<8x128xf32>
    %cst_51 = arith.constant dense<0.000000e+00> : vector<8xf32>
    %129 = vector.multi_reduction <add>, %128, %cst_51 [1] : vector<8x128xf32> to vector<8xf32>
    %130 = vector.shape_cast %129 : vector<8xf32> to vector<8x1xf32>
    %cst_52 = arith.constant 1.280000e+02 : f32
    %131 = vector.broadcast %cst_52 : f32 to vector<8x1xf32>
    %132 = arith.divf %130, %131 : vector<8x1xf32>
    %133 = vector.broadcast %125 : vector<8x1xf32> to vector<8x128xf32>
    %134 = arith.subf %117, %133 : vector<8x128xf32>
    %cst_53 = arith.constant 9.99999997E-7 : f32
    %135 = vector.broadcast %cst_53 : f32 to vector<8x1xf32>
    %136 = arith.addf %132, %135 : vector<8x1xf32>
    %137 = math.rsqrt %136 : vector<8x1xf32>
    %138 = vector.broadcast %137 : vector<8x1xf32> to vector<8x128xf32>
    %139 = arith.mulf %134, %138 : vector<8x128xf32>
    %140 = vector.broadcast %119 : vector<1x128xf32> to vector<8x128xf32>
    %141 = arith.mulf %139, %140 : vector<8x128xf32>
    %142 = vector.broadcast %121 : vector<1x128xf32> to vector<8x128xf32>
    %143 = arith.addf %141, %142 : vector<8x128xf32>
    %c0_54 = arith.constant 0 : index
    %c0_55 = arith.constant 0 : index
    %c0_56 = arith.constant 0 : index
    %144 = vector.load %arg14[%c0_54, %c0_55, %c0_56] : memref<2x128x256xbf16, #tpu.memory_space<vmem>>, vector<1x128x256xbf16>
    %145 = vector.shape_cast %144 : vector<1x128x256xbf16> to vector<128x256xbf16>
    %146 = arith.truncf %143 : vector<8x128xf32> to vector<8x128xbf16>
    %cst_57 = arith.constant dense<0.000000e+00> : vector<8x256xf32>
    %147 = tpu.matmul %146, %145, %cst_57 {dimension_numbers = #tpu.dot_dimension_numbers<[1], [0], [0], [1], [0, 0, 1, 1], [], []>} : vector<8x128xbf16>, vector<128x256xbf16>, vector<8x256xf32> -> vector<8x256xf32>
    %c0_58 = arith.constant 0 : index
    %c0_59 = arith.constant 0 : index
    %c0_60 = arith.constant 0 : index
    %148 = vector.load %arg15[%c0_58, %c0_59, %c0_60] : memref<2x1x256xf32, #tpu.memory_space<vmem>>, vector<1x1x256xf32>
    %149 = vector.shape_cast %148 : vector<1x1x256xf32> to vector<1x256xf32>
    %150 = vector.broadcast %149 : vector<1x256xf32> to vector<8x256xf32>
    %151 = arith.addf %147, %150 : vector<8x256xf32>
    %152 = arith.mulf %151, %151 : vector<8x256xf32>
    %153 = arith.mulf %151, %152 : vector<8x256xf32>
    %cst_61 = arith.constant 4.471500e-02 : f32
    %154 = vector.broadcast %cst_61 : f32 to vector<8x256xf32>
    %155 = arith.mulf %154, %153 : vector<8x256xf32>
    %156 = arith.addf %151, %155 : vector<8x256xf32>
    %cst_62 = arith.constant 0.797884583 : f32
    %157 = vector.broadcast %cst_62 : f32 to vector<8x256xf32>
    %158 = arith.mulf %157, %156 : vector<8x256xf32>
    %159 = math.tanh %158 : vector<8x256xf32>
    %cst_63 = arith.constant 1.000000e+00 : f32
    %160 = vector.broadcast %cst_63 : f32 to vector<8x256xf32>
    %161 = arith.addf %160, %159 : vector<8x256xf32>
    %cst_64 = arith.constant 5.000000e-01 : f32
    %162 = vector.broadcast %cst_64 : f32 to vector<8x256xf32>
    %163 = arith.mulf %162, %161 : vector<8x256xf32>
    %164 = arith.mulf %151, %163 : vector<8x256xf32>
    %c0_65 = arith.constant 0 : index
    %c0_66 = arith.constant 0 : index
    %c0_67 = arith.constant 0 : index
    %165 = vector.load %arg16[%c0_65, %c0_66, %c0_67] : memref<2x256x128xbf16, #tpu.memory_space<vmem>>, vector<1x256x128xbf16>
    %166 = vector.shape_cast %165 : vector<1x256x128xbf16> to vector<256x128xbf16>
    %167 = arith.truncf %164 : vector<8x256xf32> to vector<8x256xbf16>
    %cst_68 = arith.constant dense<0.000000e+00> : vector<8x128xf32>
    %168 = tpu.matmul %167, %166, %cst_68 {dimension_numbers = #tpu.dot_dimension_numbers<[1], [0], [0], [1], [0, 0, 1, 1], [], []>} : vector<8x256xbf16>, vector<256x128xbf16>, vector<8x128xf32> -> vector<8x128xf32>
    %c0_69 = arith.constant 0 : index
    %c0_70 = arith.constant 0 : index
    %c0_71 = arith.constant 0 : index
    %169 = vector.load %arg17[%c0_69, %c0_70, %c0_71] : memref<2x1x128xf32, #tpu.memory_space<vmem>>, vector<1x1x128xf32>
    %170 = vector.shape_cast %169 : vector<1x1x128xf32> to vector<1x128xf32>
    %171 = vector.broadcast %170 : vector<1x128xf32> to vector<8x128xf32>
    %172 = arith.addf %168, %171 : vector<8x128xf32>
    %173 = arith.addf %117, %172 : vector<8x128xf32>
    %c1 = arith.constant 1 : index
    %c0_72 = arith.constant 0 : index
    %c0_73 = arith.constant 0 : index
    %174 = vector.load %arg6[%c1, %c0_72, %c0_73] : memref<2x1x128xf32, #tpu.memory_space<vmem>>, vector<1x1x128xf32>
    %175 = vector.shape_cast %174 : vector<1x1x128xf32> to vector<1x128xf32>
    %c1_74 = arith.constant 1 : index
    %c0_75 = arith.constant 0 : index
    %c0_76 = arith.constant 0 : index
    %176 = vector.load %arg7[%c1_74, %c0_75, %c0_76] : memref<2x1x128xf32, #tpu.memory_space<vmem>>, vector<1x1x128xf32>
    %177 = vector.shape_cast %176 : vector<1x1x128xf32> to vector<1x128xf32>
    %cst_77 = arith.constant dense<0.000000e+00> : vector<8xf32>
    %178 = vector.multi_reduction <add>, %173, %cst_77 [1] : vector<8x128xf32> to vector<8xf32>
    %179 = vector.shape_cast %178 : vector<8xf32> to vector<8x1xf32>
    %cst_78 = arith.constant 1.280000e+02 : f32
    %180 = vector.broadcast %cst_78 : f32 to vector<8x1xf32>
    %181 = arith.divf %179, %180 : vector<8x1xf32>
    %182 = vector.broadcast %181 : vector<8x1xf32> to vector<8x128xf32>
    %183 = arith.subf %173, %182 : vector<8x128xf32>
    %184 = arith.mulf %183, %183 : vector<8x128xf32>
    %cst_79 = arith.constant dense<0.000000e+00> : vector<8xf32>
    %185 = vector.multi_reduction <add>, %184, %cst_79 [1] : vector<8x128xf32> to vector<8xf32>
    %186 = vector.shape_cast %185 : vector<8xf32> to vector<8x1xf32>
    %cst_80 = arith.constant 1.280000e+02 : f32
    %187 = vector.broadcast %cst_80 : f32 to vector<8x1xf32>
    %188 = arith.divf %186, %187 : vector<8x1xf32>
    %189 = vector.broadcast %181 : vector<8x1xf32> to vector<8x128xf32>
    %190 = arith.subf %173, %189 : vector<8x128xf32>
    %cst_81 = arith.constant 9.99999997E-7 : f32
    %191 = vector.broadcast %cst_81 : f32 to vector<8x1xf32>
    %192 = arith.addf %188, %191 : vector<8x1xf32>
    %193 = math.rsqrt %192 : vector<8x1xf32>
    %194 = vector.broadcast %193 : vector<8x1xf32> to vector<8x128xf32>
    %195 = arith.mulf %190, %194 : vector<8x128xf32>
    %196 = vector.broadcast %175 : vector<1x128xf32> to vector<8x128xf32>
    %197 = arith.mulf %195, %196 : vector<8x128xf32>
    %198 = vector.broadcast %177 : vector<1x128xf32> to vector<8x128xf32>
    %199 = arith.addf %197, %198 : vector<8x128xf32>
    %c1_82 = arith.constant 1 : index
    %c0_83 = arith.constant 0 : index
    %c0_84 = arith.constant 0 : index
    %200 = vector.load %arg8[%c1_82, %c0_83, %c0_84] : memref<2x128x384xbf16, #tpu.memory_space<vmem>>, vector<1x128x384xbf16>
    %201 = vector.shape_cast %200 : vector<1x128x384xbf16> to vector<128x384xbf16>
    %202 = arith.truncf %199 : vector<8x128xf32> to vector<8x128xbf16>
    %cst_85 = arith.constant dense<0.000000e+00> : vector<8x384xf32>
    %203 = tpu.matmul %202, %201, %cst_85 {dimension_numbers = #tpu.dot_dimension_numbers<[1], [0], [0], [1], [0, 0, 1, 1], [], []>} : vector<8x128xbf16>, vector<128x384xbf16>, vector<8x384xf32> -> vector<8x384xf32>
    %c1_86 = arith.constant 1 : index
    %c0_87 = arith.constant 0 : index
    %c0_88 = arith.constant 0 : index
    %204 = vector.load %arg9[%c1_86, %c0_87, %c0_88] : memref<2x1x384xf32, #tpu.memory_space<vmem>>, vector<1x1x384xf32>
    %205 = vector.shape_cast %204 : vector<1x1x384xf32> to vector<1x384xf32>
    %206 = vector.broadcast %205 : vector<1x384xf32> to vector<8x384xf32>
    %207 = arith.addf %203, %206 : vector<8x384xf32>
    %208 = vector.extract_strided_slice %207 {offsets = [0, 0], sizes = [8, 128], strides = [1, 1]} : vector<8x384xf32> to vector<8x128xf32>
    %209 = vector.extract_strided_slice %207 {offsets = [0, 128], sizes = [8, 128], strides = [1, 1]} : vector<8x384xf32> to vector<8x128xf32>
    %210 = vector.extract_strided_slice %207 {offsets = [0, 256], sizes = [8, 128], strides = [1, 1]} : vector<8x384xf32> to vector<8x128xf32>
    %211 = vector.extract_strided_slice %208 {offsets = [0, 0], sizes = [8, 32], strides = [1, 1]} : vector<8x128xf32> to vector<8x32xf32>
    %212 = vector.extract_strided_slice %208 {offsets = [0, 32], sizes = [8, 32], strides = [1, 1]} : vector<8x128xf32> to vector<8x32xf32>
    %213 = vector.extract_strided_slice %208 {offsets = [0, 64], sizes = [8, 32], strides = [1, 1]} : vector<8x128xf32> to vector<8x32xf32>
    %214 = vector.extract_strided_slice %208 {offsets = [0, 96], sizes = [8, 32], strides = [1, 1]} : vector<8x128xf32> to vector<8x32xf32>
    %215 = vector.shape_cast %211 : vector<8x32xf32> to vector<1x8x32xf32>
    %216 = vector.shape_cast %212 : vector<8x32xf32> to vector<1x8x32xf32>
    %217 = vector.shape_cast %213 : vector<8x32xf32> to vector<1x8x32xf32>
    %218 = vector.shape_cast %214 : vector<8x32xf32> to vector<1x8x32xf32>
    %219 = tpu.concatenate %215, %216, %217, %218 in 0 : vector<1x8x32xf32>, vector<1x8x32xf32>, vector<1x8x32xf32>, vector<1x8x32xf32> -> vector<4x8x32xf32>
    %220 = vector.extract_strided_slice %209 {offsets = [0, 0], sizes = [8, 32], strides = [1, 1]} : vector<8x128xf32> to vector<8x32xf32>
    %221 = vector.extract_strided_slice %209 {offsets = [0, 32], sizes = [8, 32], strides = [1, 1]} : vector<8x128xf32> to vector<8x32xf32>
    %222 = vector.extract_strided_slice %209 {offsets = [0, 64], sizes = [8, 32], strides = [1, 1]} : vector<8x128xf32> to vector<8x32xf32>
    %223 = vector.extract_strided_slice %209 {offsets = [0, 96], sizes = [8, 32], strides = [1, 1]} : vector<8x128xf32> to vector<8x32xf32>
    %224 = vector.shape_cast %220 : vector<8x32xf32> to vector<1x8x32xf32>
    %225 = vector.shape_cast %221 : vector<8x32xf32> to vector<1x8x32xf32>
    %226 = vector.shape_cast %222 : vector<8x32xf32> to vector<1x8x32xf32>
    %227 = vector.shape_cast %223 : vector<8x32xf32> to vector<1x8x32xf32>
    %228 = tpu.concatenate %224, %225, %226, %227 in 0 : vector<1x8x32xf32>, vector<1x8x32xf32>, vector<1x8x32xf32>, vector<1x8x32xf32> -> vector<4x8x32xf32>
    %229 = vector.extract_strided_slice %210 {offsets = [0, 0], sizes = [8, 32], strides = [1, 1]} : vector<8x128xf32> to vector<8x32xf32>
    %230 = vector.extract_strided_slice %210 {offsets = [0, 32], sizes = [8, 32], strides = [1, 1]} : vector<8x128xf32> to vector<8x32xf32>
    %231 = vector.extract_strided_slice %210 {offsets = [0, 64], sizes = [8, 32], strides = [1, 1]} : vector<8x128xf32> to vector<8x32xf32>
    %232 = vector.extract_strided_slice %210 {offsets = [0, 96], sizes = [8, 32], strides = [1, 1]} : vector<8x128xf32> to vector<8x32xf32>
    %233 = vector.shape_cast %229 : vector<8x32xf32> to vector<1x8x32xf32>
    %234 = vector.shape_cast %230 : vector<8x32xf32> to vector<1x8x32xf32>
    %235 = vector.shape_cast %231 : vector<8x32xf32> to vector<1x8x32xf32>
    %236 = vector.shape_cast %232 : vector<8x32xf32> to vector<1x8x32xf32>
    %237 = tpu.concatenate %233, %234, %235, %236 in 0 : vector<1x8x32xf32>, vector<1x8x32xf32>, vector<1x8x32xf32>, vector<1x8x32xf32> -> vector<4x8x32xf32>
    %238 = arith.truncf %219 : vector<4x8x32xf32> to vector<4x8x32xbf16>
    %239 = arith.truncf %228 : vector<4x8x32xf32> to vector<4x8x32xbf16>
    "tpu.trace_start"() <{level = 10 : i32, message = "htd,hsd->hts"}> : () -> ()
    %cst_89 = arith.constant dense<0.000000e+00> : vector<4x8x8xf32>
    %240 = tpu.matmul %238, %239, %cst_89 {dimension_numbers = #tpu.dot_dimension_numbers<[2], [2], [1], [1], [0, 0, 0, 1, 1, 1], [0], [0]>} : vector<4x8x32xbf16>, vector<4x8x32xbf16>, vector<4x8x8xf32> -> vector<4x8x8xf32>
    "tpu.trace_stop"() : () -> ()
    %cst_90 = arith.constant 0.176776692 : f32
    %241 = vector.broadcast %cst_90 : f32 to vector<4x8x8xf32>
    %242 = arith.mulf %240, %241 : vector<4x8x8xf32>
    %243 = vector.shape_cast %13 : vector<1x8xf32> to vector<1x1x8xf32>
    %244 = vector.broadcast %243 : vector<1x1x8xf32> to vector<4x8x8xf32>
    %245 = arith.addf %242, %244 : vector<4x8x8xf32>
    %cst_91 = arith.constant dense<0xFF800000> : vector<4x8xf32>
    %246 = vector.multi_reduction <maximumf>, %245, %cst_91 [2] : vector<4x8x8xf32> to vector<4x8xf32>
    %cst_92 = arith.constant 0xFF800000 : f32
    %247 = vector.broadcast %cst_92 : f32 to vector<4x8xf32>
    %248 = arith.maximumf %247, %246 : vector<4x8xf32>
    %249 = vector.shape_cast %248 : vector<4x8xf32> to vector<4x8x1xf32>
    %250 = vector.broadcast %249 : vector<4x8x1xf32> to vector<4x8x8xf32>
    %251 = arith.subf %245, %250 : vector<4x8x8xf32>
    %252 = math.exp %251 : vector<4x8x8xf32>
    %cst_93 = arith.constant dense<0.000000e+00> : vector<4x8xf32>
    %253 = vector.multi_reduction <add>, %252, %cst_93 [2] : vector<4x8x8xf32> to vector<4x8xf32>
    %254 = vector.shape_cast %253 : vector<4x8xf32> to vector<4x8x1xf32>
    %255 = vector.broadcast %254 : vector<4x8x1xf32> to vector<4x8x8xf32>
    %256 = arith.divf %252, %255 : vector<4x8x8xf32>
    %257 = arith.truncf %256 : vector<4x8x8xf32> to vector<4x8x8xbf16>
    %258 = arith.truncf %237 : vector<4x8x32xf32> to vector<4x8x32xbf16>
    "tpu.trace_start"() <{level = 10 : i32, message = "hts,hsd->htd"}> : () -> ()
    %cst_94 = arith.constant dense<0.000000e+00> : vector<4x8x32xf32>
    %259 = tpu.matmul %257, %258, %cst_94 {dimension_numbers = #tpu.dot_dimension_numbers<[2], [1], [1], [2], [0, 0, 0, 1, 1, 2], [0], [0]>} : vector<4x8x8xbf16>, vector<4x8x32xbf16>, vector<4x8x32xf32> -> vector<4x8x32xf32>
    "tpu.trace_stop"() : () -> ()
    %260 = vector.extract_strided_slice %259 {offsets = [0, 0, 0], sizes = [1, 8, 32], strides = [1, 1, 1]} : vector<4x8x32xf32> to vector<1x8x32xf32>
    %261 = vector.shape_cast %260 : vector<1x8x32xf32> to vector<8x32xf32>
    %262 = vector.extract_strided_slice %259 {offsets = [1, 0, 0], sizes = [1, 8, 32], strides = [1, 1, 1]} : vector<4x8x32xf32> to vector<1x8x32xf32>
    %263 = vector.shape_cast %262 : vector<1x8x32xf32> to vector<8x32xf32>
    %264 = vector.extract_strided_slice %259 {offsets = [2, 0, 0], sizes = [1, 8, 32], strides = [1, 1, 1]} : vector<4x8x32xf32> to vector<1x8x32xf32>
    %265 = vector.shape_cast %264 : vector<1x8x32xf32> to vector<8x32xf32>
    %266 = vector.extract_strided_slice %259 {offsets = [3, 0, 0], sizes = [1, 8, 32], strides = [1, 1, 1]} : vector<4x8x32xf32> to vector<1x8x32xf32>
    %267 = vector.shape_cast %266 : vector<1x8x32xf32> to vector<8x32xf32>
    %268 = tpu.concatenate %261, %263, %265, %267 in 1 : vector<8x32xf32>, vector<8x32xf32>, vector<8x32xf32>, vector<8x32xf32> -> vector<8x128xf32>
    %c1_95 = arith.constant 1 : index
    %c0_96 = arith.constant 0 : index
    %c0_97 = arith.constant 0 : index
    %269 = vector.load %arg10[%c1_95, %c0_96, %c0_97] : memref<2x128x128xbf16, #tpu.memory_space<vmem>>, vector<1x128x128xbf16>
    %270 = vector.shape_cast %269 : vector<1x128x128xbf16> to vector<128x128xbf16>
    %271 = arith.truncf %268 : vector<8x128xf32> to vector<8x128xbf16>
    %cst_98 = arith.constant dense<0.000000e+00> : vector<8x128xf32>
    %272 = tpu.matmul %271, %270, %cst_98 {dimension_numbers = #tpu.dot_dimension_numbers<[1], [0], [0], [1], [0, 0, 1, 1], [], []>} : vector<8x128xbf16>, vector<128x128xbf16>, vector<8x128xf32> -> vector<8x128xf32>
    %273 = arith.addf %173, %272 : vector<8x128xf32>
    %c1_99 = arith.constant 1 : index
    %c0_100 = arith.constant 0 : index
    %c0_101 = arith.constant 0 : index
    %274 = vector.load %arg11[%c1_99, %c0_100, %c0_101] : memref<2x1x128xf32, #tpu.memory_space<vmem>>, vector<1x1x128xf32>
    %275 = vector.shape_cast %274 : vector<1x1x128xf32> to vector<1x128xf32>
    %276 = vector.broadcast %275 : vector<1x128xf32> to vector<8x128xf32>
    %277 = arith.addf %273, %276 : vector<8x128xf32>
    %c1_102 = arith.constant 1 : index
    %c0_103 = arith.constant 0 : index
    %c0_104 = arith.constant 0 : index
    %278 = vector.load %arg12[%c1_102, %c0_103, %c0_104] : memref<2x1x128xf32, #tpu.memory_space<vmem>>, vector<1x1x128xf32>
    %279 = vector.shape_cast %278 : vector<1x1x128xf32> to vector<1x128xf32>
    %c1_105 = arith.constant 1 : index
    %c0_106 = arith.constant 0 : index
    %c0_107 = arith.constant 0 : index
    %280 = vector.load %arg13[%c1_105, %c0_106, %c0_107] : memref<2x1x128xf32, #tpu.memory_space<vmem>>, vector<1x1x128xf32>
    %281 = vector.shape_cast %280 : vector<1x1x128xf32> to vector<1x128xf32>
    %cst_108 = arith.constant dense<0.000000e+00> : vector<8xf32>
    %282 = vector.multi_reduction <add>, %277, %cst_108 [1] : vector<8x128xf32> to vector<8xf32>
    %283 = vector.shape_cast %282 : vector<8xf32> to vector<8x1xf32>
    %cst_109 = arith.constant 1.280000e+02 : f32
    %284 = vector.broadcast %cst_109 : f32 to vector<8x1xf32>
    %285 = arith.divf %283, %284 : vector<8x1xf32>
    %286 = vector.broadcast %285 : vector<8x1xf32> to vector<8x128xf32>
    %287 = arith.subf %277, %286 : vector<8x128xf32>
    %288 = arith.mulf %287, %287 : vector<8x128xf32>
    %cst_110 = arith.constant dense<0.000000e+00> : vector<8xf32>
    %289 = vector.multi_reduction <add>, %288, %cst_110 [1] : vector<8x128xf32> to vector<8xf32>
    %290 = vector.shape_cast %289 : vector<8xf32> to vector<8x1xf32>
    %cst_111 = arith.constant 1.280000e+02 : f32
    %291 = vector.broadcast %cst_111 : f32 to vector<8x1xf32>
    %292 = arith.divf %290, %291 : vector<8x1xf32>
    %293 = vector.broadcast %285 : vector<8x1xf32> to vector<8x128xf32>
    %294 = arith.subf %277, %293 : vector<8x128xf32>
    %cst_112 = arith.constant 9.99999997E-7 : f32
    %295 = vector.broadcast %cst_112 : f32 to vector<8x1xf32>
    %296 = arith.addf %292, %295 : vector<8x1xf32>
    %297 = math.rsqrt %296 : vector<8x1xf32>
    %298 = vector.broadcast %297 : vector<8x1xf32> to vector<8x128xf32>
    %299 = arith.mulf %294, %298 : vector<8x128xf32>
    %300 = vector.broadcast %279 : vector<1x128xf32> to vector<8x128xf32>
    %301 = arith.mulf %299, %300 : vector<8x128xf32>
    %302 = vector.broadcast %281 : vector<1x128xf32> to vector<8x128xf32>
    %303 = arith.addf %301, %302 : vector<8x128xf32>
    %c1_113 = arith.constant 1 : index
    %c0_114 = arith.constant 0 : index
    %c0_115 = arith.constant 0 : index
    %304 = vector.load %arg14[%c1_113, %c0_114, %c0_115] : memref<2x128x256xbf16, #tpu.memory_space<vmem>>, vector<1x128x256xbf16>
    %305 = vector.shape_cast %304 : vector<1x128x256xbf16> to vector<128x256xbf16>
    %306 = arith.truncf %303 : vector<8x128xf32> to vector<8x128xbf16>
    %cst_116 = arith.constant dense<0.000000e+00> : vector<8x256xf32>
    %307 = tpu.matmul %306, %305, %cst_116 {dimension_numbers = #tpu.dot_dimension_numbers<[1], [0], [0], [1], [0, 0, 1, 1], [], []>} : vector<8x128xbf16>, vector<128x256xbf16>, vector<8x256xf32> -> vector<8x256xf32>
    %c1_117 = arith.constant 1 : index
    %c0_118 = arith.constant 0 : index
    %c0_119 = arith.constant 0 : index
    %308 = vector.load %arg15[%c1_117, %c0_118, %c0_119] : memref<2x1x256xf32, #tpu.memory_space<vmem>>, vector<1x1x256xf32>
    %309 = vector.shape_cast %308 : vector<1x1x256xf32> to vector<1x256xf32>
    %310 = vector.broadcast %309 : vector<1x256xf32> to vector<8x256xf32>
    %311 = arith.addf %307, %310 : vector<8x256xf32>
    %312 = arith.mulf %311, %311 : vector<8x256xf32>
    %313 = arith.mulf %311, %312 : vector<8x256xf32>
    %cst_120 = arith.constant 4.471500e-02 : f32
    %314 = vector.broadcast %cst_120 : f32 to vector<8x256xf32>
    %315 = arith.mulf %314, %313 : vector<8x256xf32>
    %316 = arith.addf %311, %315 : vector<8x256xf32>
    %cst_121 = arith.constant 0.797884583 : f32
    %317 = vector.broadcast %cst_121 : f32 to vector<8x256xf32>
    %318 = arith.mulf %317, %316 : vector<8x256xf32>
    %319 = math.tanh %318 : vector<8x256xf32>
    %cst_122 = arith.constant 1.000000e+00 : f32
    %320 = vector.broadcast %cst_122 : f32 to vector<8x256xf32>
    %321 = arith.addf %320, %319 : vector<8x256xf32>
    %cst_123 = arith.constant 5.000000e-01 : f32
    %322 = vector.broadcast %cst_123 : f32 to vector<8x256xf32>
    %323 = arith.mulf %322, %321 : vector<8x256xf32>
    %324 = arith.mulf %311, %323 : vector<8x256xf32>
    %c1_124 = arith.constant 1 : index
    %c0_125 = arith.constant 0 : index
    %c0_126 = arith.constant 0 : index
    %325 = vector.load %arg16[%c1_124, %c0_125, %c0_126] : memref<2x256x128xbf16, #tpu.memory_space<vmem>>, vector<1x256x128xbf16>
    %326 = vector.shape_cast %325 : vector<1x256x128xbf16> to vector<256x128xbf16>
    %327 = arith.truncf %324 : vector<8x256xf32> to vector<8x256xbf16>
    %cst_127 = arith.constant dense<0.000000e+00> : vector<8x128xf32>
    %328 = tpu.matmul %327, %326, %cst_127 {dimension_numbers = #tpu.dot_dimension_numbers<[1], [0], [0], [1], [0, 0, 1, 1], [], []>} : vector<8x256xbf16>, vector<256x128xbf16>, vector<8x128xf32> -> vector<8x128xf32>
    %c1_128 = arith.constant 1 : index
    %c0_129 = arith.constant 0 : index
    %c0_130 = arith.constant 0 : index
    %329 = vector.load %arg17[%c1_128, %c0_129, %c0_130] : memref<2x1x128xf32, #tpu.memory_space<vmem>>, vector<1x1x128xf32>
    %330 = vector.shape_cast %329 : vector<1x1x128xf32> to vector<1x128xf32>
    %331 = vector.broadcast %330 : vector<1x128xf32> to vector<8x128xf32>
    %332 = arith.addf %328, %331 : vector<8x128xf32>
    %333 = arith.addf %277, %332 : vector<8x128xf32>
    %334 = vector.extract_strided_slice %333 {offsets = [0, 0], sizes = [1, 128], strides = [1, 1]} : vector<8x128xf32> to vector<1x128xf32>
    %c0_131 = arith.constant 0 : index
    %c0_132 = arith.constant 0 : index
    %335 = vector.load %arg18[%c0_131, %c0_132] : memref<1x128xf32, #tpu.memory_space<vmem>>, vector<1x128xf32>
    %c0_133 = arith.constant 0 : index
    %c0_134 = arith.constant 0 : index
    %336 = vector.load %arg19[%c0_133, %c0_134] : memref<1x128xf32, #tpu.memory_space<vmem>>, vector<1x128xf32>
    %cst_135 = arith.constant dense<0.000000e+00> : vector<1xf32>
    %337 = vector.multi_reduction <add>, %334, %cst_135 [1] : vector<1x128xf32> to vector<1xf32>
    %338 = vector.shape_cast %337 : vector<1xf32> to vector<1x1xf32>
    %cst_136 = arith.constant 1.280000e+02 : f32
    %339 = vector.broadcast %cst_136 : f32 to vector<1x1xf32>
    %340 = arith.divf %338, %339 : vector<1x1xf32>
    %341 = vector.broadcast %340 : vector<1x1xf32> to vector<1x128xf32>
    %342 = arith.subf %334, %341 : vector<1x128xf32>
    %343 = arith.mulf %342, %342 : vector<1x128xf32>
    %cst_137 = arith.constant dense<0.000000e+00> : vector<1xf32>
    %344 = vector.multi_reduction <add>, %343, %cst_137 [1] : vector<1x128xf32> to vector<1xf32>
    %345 = vector.shape_cast %344 : vector<1xf32> to vector<1x1xf32>
    %cst_138 = arith.constant 1.280000e+02 : f32
    %346 = vector.broadcast %cst_138 : f32 to vector<1x1xf32>
    %347 = arith.divf %345, %346 : vector<1x1xf32>
    %348 = vector.broadcast %340 : vector<1x1xf32> to vector<1x128xf32>
    %349 = arith.subf %334, %348 : vector<1x128xf32>
    %cst_139 = arith.constant 9.99999997E-7 : f32
    %350 = vector.broadcast %cst_139 : f32 to vector<1x1xf32>
    %351 = arith.addf %347, %350 : vector<1x1xf32>
    %352 = math.rsqrt %351 : vector<1x1xf32>
    %353 = vector.broadcast %352 : vector<1x1xf32> to vector<1x128xf32>
    %354 = arith.mulf %349, %353 : vector<1x128xf32>
    %355 = arith.mulf %354, %335 : vector<1x128xf32>
    %356 = arith.addf %355, %336 : vector<1x128xf32>
    %c0_140 = arith.constant 0 : index
    %c0_141 = arith.constant 0 : index
    %357 = vector.load %arg20[%c0_140, %c0_141] : memref<128x128xbf16, #tpu.memory_space<vmem>>, vector<128x128xbf16>
    %358 = arith.truncf %356 : vector<1x128xf32> to vector<1x128xbf16>
    %cst_142 = arith.constant dense<0.000000e+00> : vector<1x128xf32>
    %359 = tpu.matmul %358, %357, %cst_142 {dimension_numbers = #tpu.dot_dimension_numbers<[1], [0], [0], [1], [0, 0, 1, 1], [], []>} : vector<1x128xbf16>, vector<128x128xbf16>, vector<1x128xf32> -> vector<1x128xf32>
    %c0_143 = arith.constant 0 : index
    %c0_144 = arith.constant 0 : index
    %360 = vector.load %arg21[%c0_143, %c0_144] : memref<1x128xf32, #tpu.memory_space<vmem>>, vector<1x128xf32>
    %361 = arith.addf %359, %360 : vector<1x128xf32>
    %362 = math.tanh %361 : vector<1x128xf32>
    %c0_145 = arith.constant 0 : index
    %c0_146 = arith.constant 0 : index
    %363 = vector.load %arg22[%c0_145, %c0_146] : memref<128x16xbf16, #tpu.memory_space<vmem>>, vector<128x16xbf16>
    %364 = arith.truncf %362 : vector<1x128xf32> to vector<1x128xbf16>
    %cst_147 = arith.constant dense<0.000000e+00> : vector<1x16xf32>
    %365 = tpu.matmul %364, %363, %cst_147 {dimension_numbers = #tpu.dot_dimension_numbers<[1], [0], [0], [1], [0, 0, 1, 1], [], []>} : vector<1x128xbf16>, vector<128x16xbf16>, vector<1x16xf32> -> vector<1x16xf32>
    %c0_148 = arith.constant 0 : index
    %c0_149 = arith.constant 0 : index
    %366 = vector.load %arg23[%c0_148, %c0_149] : memref<1x16xf32, #tpu.memory_space<vmem>>, vector<1x16xf32>
    %367 = arith.addf %365, %366 : vector<1x16xf32>
    %cst_150 = arith.constant dense<0xFF800000> : vector<1xf32>
    %368 = vector.multi_reduction <maximumf>, %367, %cst_150 [1] : vector<1x16xf32> to vector<1xf32>
    %cst_151 = arith.constant 0xFF800000 : f32
    %369 = vector.broadcast %cst_151 : f32 to vector<1xf32>
    %370 = arith.maximumf %369, %368 : vector<1xf32>
    %371 = vector.shape_cast %370 : vector<1xf32> to vector<1x1xf32>
    %372 = vector.broadcast %371 : vector<1x1xf32> to vector<1x16xf32>
    %373 = arith.subf %367, %372 : vector<1x16xf32>
    %374 = math.exp %373 : vector<1x16xf32>
    %cst_152 = arith.constant dense<0.000000e+00> : vector<1xf32>
    %375 = vector.multi_reduction <add>, %374, %cst_152 [1] : vector<1x16xf32> to vector<1xf32>
    %376 = vector.shape_cast %375 : vector<1xf32> to vector<1x1xf32>
    %377 = vector.broadcast %376 : vector<1x1xf32> to vector<1x16xf32>
    %378 = arith.divf %374, %377 : vector<1x16xf32>
    %c0_153 = arith.constant 0 : index
    %c0_154 = arith.constant 0 : index
    %379 = vector.load %arg24[%c0_153, %c0_154] : memref<16x128xf32, #tpu.memory_space<vmem>>, vector<16x128xf32>
    %380 = vector.shape_cast %379 : vector<16x128xf32> to vector<1x16x128xf32>
    %381 = vector.shape_cast %378 : vector<1x16xf32> to vector<1x16x1xf32>
    %382 = vector.broadcast %381 : vector<1x16x1xf32> to vector<1x16x128xf32>
    %383 = arith.mulf %380, %382 : vector<1x16x128xf32>
    %384 = vector.shape_cast %383 : vector<1x16x128xf32> to vector<16x128xf32>
    %c0_155 = arith.constant 0 : index
    %c0_156 = arith.constant 0 : index
    %385 = vector.load %arg25[%c0_155, %c0_156] : memref<128x512xbf16, #tpu.memory_space<vmem>>, vector<128x512xbf16>
    %386 = arith.truncf %384 : vector<16x128xf32> to vector<16x128xbf16>
    %cst_157 = arith.constant dense<0.000000e+00> : vector<16x512xf32>
    %387 = tpu.matmul %386, %385, %cst_157 {dimension_numbers = #tpu.dot_dimension_numbers<[1], [0], [0], [1], [0, 0, 1, 1], [], []>} : vector<16x128xbf16>, vector<128x512xbf16>, vector<16x512xf32> -> vector<16x512xf32>
    %c0_158 = arith.constant 0 : index
    %c0_159 = arith.constant 0 : index
    %388 = vector.load %arg26[%c0_158, %c0_159] : memref<512x4xbf16, #tpu.memory_space<vmem>>, vector<512x4xbf16>
    %389 = arith.truncf %387 : vector<16x512xf32> to vector<16x512xbf16>
    %cst_160 = arith.constant dense<0.000000e+00> : vector<16x4xf32>
    %390 = tpu.matmul %389, %388, %cst_160 {dimension_numbers = #tpu.dot_dimension_numbers<[1], [0], [0], [1], [0, 0, 1, 1], [], []>} : vector<16x512xbf16>, vector<512x4xbf16>, vector<16x4xf32> -> vector<16x4xf32>
    %c0_161 = arith.constant 0 : index
    %c0_162 = arith.constant 0 : index
    %391 = vector.load %arg27[%c0_161, %c0_162] : memref<512x4xbf16, #tpu.memory_space<vmem>>, vector<512x4xbf16>
    %392 = arith.truncf %387 : vector<16x512xf32> to vector<16x512xbf16>
    %cst_163 = arith.constant dense<0.000000e+00> : vector<16x4xf32>
    %393 = tpu.matmul %392, %391, %cst_163 {dimension_numbers = #tpu.dot_dimension_numbers<[1], [0], [0], [1], [0, 0, 1, 1], [], []>} : vector<16x512xbf16>, vector<512x4xbf16>, vector<16x4xf32> -> vector<16x4xf32>
    %c1_i32 = arith.constant 1 : i32
    %394 = tpu.dynamic_rotate %390 by %c1_i32 dim 0 : vector<16x4xf32>, i32 -> vector<16x4xf32>
    %c15_i32 = arith.constant 15 : i32
    %395 = tpu.dynamic_rotate %390 by %c15_i32 dim 0 : vector<16x4xf32>, i32 -> vector<16x4xf32>
    %396 = arith.addf %394, %393 : vector<16x4xf32>
    %cst_164 = arith.constant 0.000000e+00 : f32
    %397 = vector.broadcast %cst_164 : f32 to vector<16x4xf32>
    %398 = arith.cmpf ogt, %396, %397 : vector<16x4xf32>
    %cst_165 = arith.constant 2.000000e-01 : f32
    %399 = vector.broadcast %cst_165 : f32 to vector<16x4xf32>
    %400 = arith.mulf %399, %396 : vector<16x4xf32>
    %401 = arith.select %398, %396, %400 : vector<16x4xi1>, vector<16x4xf32>
    %402 = arith.addf %395, %393 : vector<16x4xf32>
    %cst_166 = arith.constant 0.000000e+00 : f32
    %403 = vector.broadcast %cst_166 : f32 to vector<16x4xf32>
    %404 = arith.cmpf ogt, %402, %403 : vector<16x4xf32>
    %cst_167 = arith.constant 2.000000e-01 : f32
    %405 = vector.broadcast %cst_167 : f32 to vector<16x4xf32>
    %406 = arith.mulf %405, %402 : vector<16x4xf32>
    %407 = arith.select %404, %402, %406 : vector<16x4xi1>, vector<16x4xf32>
    %408 = arith.addf %390, %393 : vector<16x4xf32>
    %cst_168 = arith.constant 0.000000e+00 : f32
    %409 = vector.broadcast %cst_168 : f32 to vector<16x4xf32>
    %410 = arith.cmpf ogt, %408, %409 : vector<16x4xf32>
    %cst_169 = arith.constant 2.000000e-01 : f32
    %411 = vector.broadcast %cst_169 : f32 to vector<16x4xf32>
    %412 = arith.mulf %411, %408 : vector<16x4xf32>
    %413 = arith.select %410, %408, %412 : vector<16x4xi1>, vector<16x4xf32>
    %414 = arith.maximumf %401, %407 : vector<16x4xf32>
    %415 = arith.maximumf %414, %413 : vector<16x4xf32>
    %416 = arith.subf %401, %415 : vector<16x4xf32>
    %417 = math.exp %416 : vector<16x4xf32>
    %418 = arith.subf %407, %415 : vector<16x4xf32>
    %419 = math.exp %418 : vector<16x4xf32>
    %420 = arith.subf %413, %415 : vector<16x4xf32>
    %421 = math.exp %420 : vector<16x4xf32>
    %422 = arith.addf %417, %419 : vector<16x4xf32>
    %423 = arith.addf %422, %421 : vector<16x4xf32>
    %cst_170 = arith.constant 1.000000e+00 : f32
    %424 = vector.broadcast %cst_170 : f32 to vector<16x4xf32>
    %425 = arith.divf %424, %423 : vector<16x4xf32>
    %426 = arith.mulf %417, %425 : vector<16x4xf32>
    %427 = arith.mulf %419, %425 : vector<16x4xf32>
    %428 = arith.mulf %421, %425 : vector<16x4xf32>
    %c1_i32_171 = arith.constant 1 : i32
    %429 = tpu.dynamic_rotate %387 by %c1_i32_171 dim 0 : vector<16x512xf32>, i32 -> vector<16x512xf32>
    %c15_i32_172 = arith.constant 15 : i32
    %430 = tpu.dynamic_rotate %387 by %c15_i32_172 dim 0 : vector<16x512xf32>, i32 -> vector<16x512xf32>
    %431 = vector.shape_cast %387 : vector<16x512xf32> to vector<16x4x128xf32>
    %432 = vector.shape_cast %429 : vector<16x512xf32> to vector<16x4x128xf32>
    %433 = vector.shape_cast %430 : vector<16x512xf32> to vector<16x4x128xf32>
    %434 = vector.shape_cast %426 : vector<16x4xf32> to vector<16x4x1xf32>
    %435 = vector.broadcast %434 : vector<16x4x1xf32> to vector<16x4x128xf32>
    %436 = arith.mulf %435, %432 : vector<16x4x128xf32>
    %437 = vector.shape_cast %427 : vector<16x4xf32> to vector<16x4x1xf32>
    %438 = vector.broadcast %437 : vector<16x4x1xf32> to vector<16x4x128xf32>
    %439 = arith.mulf %438, %433 : vector<16x4x128xf32>
    %440 = arith.addf %436, %439 : vector<16x4x128xf32>
    %441 = vector.shape_cast %428 : vector<16x4xf32> to vector<16x4x1xf32>
    %442 = vector.broadcast %441 : vector<16x4x1xf32> to vector<16x4x128xf32>
    %443 = arith.mulf %442, %431 : vector<16x4x128xf32>
    %444 = arith.addf %440, %443 : vector<16x4x128xf32>
    %cst_173 = arith.constant dense<0.000000e+00> : vector<16x128xf32>
    %445 = vector.multi_reduction <add>, %444, %cst_173 [1] : vector<16x4x128xf32> to vector<16x128xf32>
    %cst_174 = arith.constant 4.000000e+00 : f32
    %446 = vector.broadcast %cst_174 : f32 to vector<16x128xf32>
    %447 = arith.divf %445, %446 : vector<16x128xf32>
    %c0_175 = arith.constant 0 : index
    %c0_176 = arith.constant 0 : index
    %448 = vector.load %arg28[%c0_175, %c0_176] : memref<1x128xf32, #tpu.memory_space<vmem>>, vector<1x128xf32>
    %449 = vector.broadcast %448 : vector<1x128xf32> to vector<16x128xf32>
    %450 = arith.addf %447, %449 : vector<16x128xf32>
    %c0_177 = arith.constant 0 : index
    %c0_178 = arith.constant 0 : index
    %451 = vector.load %arg31[%c0_177, %c0_178] : memref<1x128xf32, #tpu.memory_space<vmem>>, vector<1x128xf32>
    %452 = vector.broadcast %451 : vector<1x128xf32> to vector<16x128xf32>
    %453 = arith.subf %450, %452 : vector<16x128xf32>
    %c0_179 = arith.constant 0 : index
    %c0_180 = arith.constant 0 : index
    %454 = vector.load %arg32[%c0_179, %c0_180] : memref<1x128xf32, #tpu.memory_space<vmem>>, vector<1x128xf32>
    %cst_181 = arith.constant 9.99999974E-6 : f32
    %455 = vector.broadcast %cst_181 : f32 to vector<1x128xf32>
    %456 = arith.addf %454, %455 : vector<1x128xf32>
    %457 = math.rsqrt %456 : vector<1x128xf32>
    %458 = vector.broadcast %457 : vector<1x128xf32> to vector<16x128xf32>
    %459 = arith.mulf %453, %458 : vector<16x128xf32>
    %c0_182 = arith.constant 0 : index
    %c0_183 = arith.constant 0 : index
    %460 = vector.load %arg29[%c0_182, %c0_183] : memref<1x128xf32, #tpu.memory_space<vmem>>, vector<1x128xf32>
    %461 = vector.broadcast %460 : vector<1x128xf32> to vector<16x128xf32>
    %462 = arith.mulf %459, %461 : vector<16x128xf32>
    %c0_184 = arith.constant 0 : index
    %c0_185 = arith.constant 0 : index
    %463 = vector.load %arg30[%c0_184, %c0_185] : memref<1x128xf32, #tpu.memory_space<vmem>>, vector<1x128xf32>
    %464 = vector.broadcast %463 : vector<1x128xf32> to vector<16x128xf32>
    %465 = arith.addf %462, %464 : vector<16x128xf32>
    %cst_186 = arith.constant 0.000000e+00 : f32
    %466 = vector.broadcast %cst_186 : f32 to vector<16x128xf32>
    %467 = arith.maximumf %465, %466 : vector<16x128xf32>
    %c0_187 = arith.constant 0 : index
    %c0_188 = arith.constant 0 : index
    %468 = vector.load %arg33[%c0_187, %c0_188] : memref<128x1xbf16, #tpu.memory_space<vmem>>, vector<128x1xbf16>
    %469 = arith.truncf %467 : vector<16x128xf32> to vector<16x128xbf16>
    %cst_189 = arith.constant dense<0.000000e+00> : vector<16x1xf32>
    %470 = tpu.matmul %469, %468, %cst_189 {dimension_numbers = #tpu.dot_dimension_numbers<[1], [0], [0], [1], [0, 0, 1, 1], [], []>} : vector<16x128xbf16>, vector<128x1xbf16>, vector<16x1xf32> -> vector<16x1xf32>
    %c0_190 = arith.constant 0 : index
    %c0_191 = arith.constant 0 : index
    %471 = vector.load %arg34[%c0_190, %c0_191] : memref<1x1xf32, #tpu.memory_space<vmem>>, vector<1x1xf32>
    %472 = vector.broadcast %471 : vector<1x1xf32> to vector<16x1xf32>
    %473 = arith.addf %470, %472 : vector<16x1xf32>
    %cst_192 = arith.constant dense<0xFF800000> : vector<1xf32>
    %474 = vector.multi_reduction <maximumf>, %473, %cst_192 [0] : vector<16x1xf32> to vector<1xf32>
    %cst_193 = arith.constant 0xFF800000 : f32
    %475 = vector.broadcast %cst_193 : f32 to vector<1xf32>
    %476 = arith.maximumf %475, %474 : vector<1xf32>
    %477 = vector.shape_cast %476 : vector<1xf32> to vector<1x1xf32>
    %478 = vector.broadcast %477 : vector<1x1xf32> to vector<16x1xf32>
    %479 = arith.subf %473, %478 : vector<16x1xf32>
    %480 = math.exp %479 : vector<16x1xf32>
    %cst_194 = arith.constant dense<0.000000e+00> : vector<1xf32>
    %481 = vector.multi_reduction <add>, %480, %cst_194 [0] : vector<16x1xf32> to vector<1xf32>
    %482 = vector.shape_cast %481 : vector<1xf32> to vector<1x1xf32>
    %483 = vector.broadcast %482 : vector<1x1xf32> to vector<16x1xf32>
    %484 = arith.divf %480, %483 : vector<16x1xf32>
    %485 = vector.broadcast %484 : vector<16x1xf32> to vector<16x128xf32>
    %486 = arith.mulf %485, %467 : vector<16x128xf32>
    %cst_195 = arith.constant dense<0.000000e+00> : vector<128xf32>
    %487 = vector.multi_reduction <add>, %486, %cst_195 [0] : vector<16x128xf32> to vector<128xf32>
    %488 = vector.shape_cast %487 : vector<128xf32> to vector<1x128xf32>
    %c0_196 = arith.constant 0 : index
    %c0_197 = arith.constant 0 : index
    %489 = vector.load %arg35[%c0_196, %c0_197] : memref<128x512xbf16, #tpu.memory_space<vmem>>, vector<128x512xbf16>
    %490 = arith.truncf %488 : vector<1x128xf32> to vector<1x128xbf16>
    %cst_198 = arith.constant dense<0.000000e+00> : vector<1x512xf32>
    %491 = tpu.matmul %490, %489, %cst_198 {dimension_numbers = #tpu.dot_dimension_numbers<[1], [0], [0], [1], [0, 0, 1, 1], [], []>} : vector<1x128xbf16>, vector<128x512xbf16>, vector<1x512xf32> -> vector<1x512xf32>
    %c0_199 = arith.constant 0 : index
    %c0_200 = arith.constant 0 : index
    %492 = vector.load %arg36[%c0_199, %c0_200] : memref<1x512xf32, #tpu.memory_space<vmem>>, vector<1x512xf32>
    %493 = arith.addf %491, %492 : vector<1x512xf32>
    %cst_201 = arith.constant 0.000000e+00 : f32
    %494 = vector.broadcast %cst_201 : f32 to vector<1x512xf32>
    %495 = arith.maximumf %493, %494 : vector<1x512xf32>
    %c0_202 = arith.constant 0 : index
    %c0_203 = arith.constant 0 : index
    %496 = vector.load %arg37[%c0_202, %c0_203] : memref<512x10xbf16, #tpu.memory_space<vmem>>, vector<512x10xbf16>
    %497 = arith.truncf %495 : vector<1x512xf32> to vector<1x512xbf16>
    %cst_204 = arith.constant dense<0.000000e+00> : vector<1x10xf32>
    %498 = tpu.matmul %497, %496, %cst_204 {dimension_numbers = #tpu.dot_dimension_numbers<[1], [0], [0], [1], [0, 0, 1, 1], [], []>} : vector<1x512xbf16>, vector<512x10xbf16>, vector<1x10xf32> -> vector<1x10xf32>
    %c0_205 = arith.constant 0 : index
    %c0_206 = arith.constant 0 : index
    %499 = vector.load %arg38[%c0_205, %c0_206] : memref<1x10xf32, #tpu.memory_space<vmem>>, vector<1x10xf32>
    %500 = arith.addf %498, %499 : vector<1x10xf32>
    %c0_207 = arith.constant 0 : index
    %c0_208 = arith.constant 0 : index
    %c0_209 = arith.constant 0 : index
    %501 = vector.load %arg39[%c0_207, %c0_208, %c0_209] : memref<1x1x10xf32, #tpu.memory_space<vmem>>, vector<1x1x10xf32>
    %502 = vector.shape_cast %501 : vector<1x1x10xf32> to vector<1x10xf32>
    %503 = vector.shape_cast %500 : vector<1x10xf32> to vector<1x1x10xf32>
    tpu.vector_store %arg39[%c0_207, %c0_208, %c0_209], %503 {strides = array<i32>} : memref<1x1x10xf32, #tpu.memory_space<vmem>>, vector<1x1x10xf32>,
    return
  }
  func.func @transform_0(%arg0: i32) -> (i32, i32, i32) {
    %c0_i32 = arith.constant 0 : i32
    %c0_i32_0 = arith.constant 0 : i32
    %c0_i32_1 = arith.constant 0 : i32
    return %arg0, %c0_i32, %c0_i32_0 : i32, i32, i32
  }
  func.func @transform_1(%arg0: i32) -> (i32, i32) {
    %c0_i32 = arith.constant 0 : i32
    %c0_i32_0 = arith.constant 0 : i32
    %c0_i32_1 = arith.constant 0 : i32
    return %c0_i32, %c0_i32_0 : i32, i32
  }
  func.func @transform_2(%arg0: i32) -> (i32, i32) {
    %c0_i32 = arith.constant 0 : i32
    %c0_i32_0 = arith.constant 0 : i32
    %c0_i32_1 = arith.constant 0 : i32
    return %c0_i32, %c0_i32_0 : i32, i32
  }
  func.func @transform_3(%arg0: i32) -> (i32, i32) {
    %c0_i32 = arith.constant 0 : i32
    %c0_i32_0 = arith.constant 0 : i32
    %c0_i32_1 = arith.constant 0 : i32
    return %c0_i32, %c0_i32_0 : i32, i32
  }
  func.func @transform_4(%arg0: i32) -> (i32, i32) {
    %c0_i32 = arith.constant 0 : i32
    %c0_i32_0 = arith.constant 0 : i32
    %c0_i32_1 = arith.constant 0 : i32
    return %c0_i32, %c0_i32_0 : i32, i32
  }
  func.func @transform_5(%arg0: i32) -> (i32, i32, i32) {
    %c0_i32 = arith.constant 0 : i32
    %c0_i32_0 = arith.constant 0 : i32
    %c0_i32_1 = arith.constant 0 : i32
    %c0_i32_2 = arith.constant 0 : i32
    return %c0_i32, %c0_i32_0, %c0_i32_1 : i32, i32, i32
  }
  func.func @transform_6(%arg0: i32) -> (i32, i32, i32) {
    %c0_i32 = arith.constant 0 : i32
    %c0_i32_0 = arith.constant 0 : i32
    %c0_i32_1 = arith.constant 0 : i32
    %c0_i32_2 = arith.constant 0 : i32
    return %c0_i32, %c0_i32_0, %c0_i32_1 : i32, i32, i32
  }
  func.func @transform_7(%arg0: i32) -> (i32, i32, i32) {
    %c0_i32 = arith.constant 0 : i32
    %c0_i32_0 = arith.constant 0 : i32
    %c0_i32_1 = arith.constant 0 : i32
    %c0_i32_2 = arith.constant 0 : i32
    return %c0_i32, %c0_i32_0, %c0_i32_1 : i32, i32, i32
  }
  func.func @transform_8(%arg0: i32) -> (i32, i32, i32) {
    %c0_i32 = arith.constant 0 : i32
    %c0_i32_0 = arith.constant 0 : i32
    %c0_i32_1 = arith.constant 0 : i32
    %c0_i32_2 = arith.constant 0 : i32
    return %c0_i32, %c0_i32_0, %c0_i32_1 : i32, i32, i32
  }
  func.func @transform_9(%arg0: i32) -> (i32, i32, i32) {
    %c0_i32 = arith.constant 0 : i32
    %c0_i32_0 = arith.constant 0 : i32
    %c0_i32_1 = arith.constant 0 : i32
    %c0_i32_2 = arith.constant 0 : i32
    return %c0_i32, %c0_i32_0, %c0_i32_1 : i32, i32, i32
  }
  func.func @transform_10(%arg0: i32) -> (i32, i32, i32) {
    %c0_i32 = arith.constant 0 : i32
    %c0_i32_0 = arith.constant 0 : i32
    %c0_i32_1 = arith.constant 0 : i32
    %c0_i32_2 = arith.constant 0 : i32
    return %c0_i32, %c0_i32_0, %c0_i32_1 : i32, i32, i32
  }
  func.func @transform_11(%arg0: i32) -> (i32, i32, i32) {
    %c0_i32 = arith.constant 0 : i32
    %c0_i32_0 = arith.constant 0 : i32
    %c0_i32_1 = arith.constant 0 : i32
    %c0_i32_2 = arith.constant 0 : i32
    return %c0_i32, %c0_i32_0, %c0_i32_1 : i32, i32, i32
  }
  func.func @transform_12(%arg0: i32) -> (i32, i32, i32) {
    %c0_i32 = arith.constant 0 : i32
    %c0_i32_0 = arith.constant 0 : i32
    %c0_i32_1 = arith.constant 0 : i32
    %c0_i32_2 = arith.constant 0 : i32
    return %c0_i32, %c0_i32_0, %c0_i32_1 : i32, i32, i32
  }
  func.func @transform_13(%arg0: i32) -> (i32, i32, i32) {
    %c0_i32 = arith.constant 0 : i32
    %c0_i32_0 = arith.constant 0 : i32
    %c0_i32_1 = arith.constant 0 : i32
    %c0_i32_2 = arith.constant 0 : i32
    return %c0_i32, %c0_i32_0, %c0_i32_1 : i32, i32, i32
  }
  func.func @transform_14(%arg0: i32) -> (i32, i32, i32) {
    %c0_i32 = arith.constant 0 : i32
    %c0_i32_0 = arith.constant 0 : i32
    %c0_i32_1 = arith.constant 0 : i32
    %c0_i32_2 = arith.constant 0 : i32
    return %c0_i32, %c0_i32_0, %c0_i32_1 : i32, i32, i32
  }
  func.func @transform_15(%arg0: i32) -> (i32, i32, i32) {
    %c0_i32 = arith.constant 0 : i32
    %c0_i32_0 = arith.constant 0 : i32
    %c0_i32_1 = arith.constant 0 : i32
    %c0_i32_2 = arith.constant 0 : i32
    return %c0_i32, %c0_i32_0, %c0_i32_1 : i32, i32, i32
  }
  func.func @transform_16(%arg0: i32) -> (i32, i32, i32) {
    %c0_i32 = arith.constant 0 : i32
    %c0_i32_0 = arith.constant 0 : i32
    %c0_i32_1 = arith.constant 0 : i32
    %c0_i32_2 = arith.constant 0 : i32
    return %c0_i32, %c0_i32_0, %c0_i32_1 : i32, i32, i32
  }
  func.func @transform_17(%arg0: i32) -> (i32, i32) {
    %c0_i32 = arith.constant 0 : i32
    %c0_i32_0 = arith.constant 0 : i32
    %c0_i32_1 = arith.constant 0 : i32
    return %c0_i32, %c0_i32_0 : i32, i32
  }
  func.func @transform_18(%arg0: i32) -> (i32, i32) {
    %c0_i32 = arith.constant 0 : i32
    %c0_i32_0 = arith.constant 0 : i32
    %c0_i32_1 = arith.constant 0 : i32
    return %c0_i32, %c0_i32_0 : i32, i32
  }
  func.func @transform_19(%arg0: i32) -> (i32, i32) {
    %c0_i32 = arith.constant 0 : i32
    %c0_i32_0 = arith.constant 0 : i32
    %c0_i32_1 = arith.constant 0 : i32
    return %c0_i32, %c0_i32_0 : i32, i32
  }
  func.func @transform_20(%arg0: i32) -> (i32, i32) {
    %c0_i32 = arith.constant 0 : i32
    %c0_i32_0 = arith.constant 0 : i32
    %c0_i32_1 = arith.constant 0 : i32
    return %c0_i32, %c0_i32_0 : i32, i32
  }
  func.func @transform_21(%arg0: i32) -> (i32, i32) {
    %c0_i32 = arith.constant 0 : i32
    %c0_i32_0 = arith.constant 0 : i32
    %c0_i32_1 = arith.constant 0 : i32
    return %c0_i32, %c0_i32_0 : i32, i32
  }
  func.func @transform_22(%arg0: i32) -> (i32, i32) {
    %c0_i32 = arith.constant 0 : i32
    %c0_i32_0 = arith.constant 0 : i32
    %c0_i32_1 = arith.constant 0 : i32
    return %c0_i32, %c0_i32_0 : i32, i32
  }
  func.func @transform_23(%arg0: i32) -> (i32, i32) {
    %c0_i32 = arith.constant 0 : i32
    %c0_i32_0 = arith.constant 0 : i32
    %c0_i32_1 = arith.constant 0 : i32
    return %c0_i32, %c0_i32_0 : i32, i32
  }
  func.func @transform_24(%arg0: i32) -> (i32, i32) {
    %c0_i32 = arith.constant 0 : i32
    %c0_i32_0 = arith.constant 0 : i32
    %c0_i32_1 = arith.constant 0 : i32
    return %c0_i32, %c0_i32_0 : i32, i32
  }
  func.func @transform_25(%arg0: i32) -> (i32, i32) {
    %c0_i32 = arith.constant 0 : i32
    %c0_i32_0 = arith.constant 0 : i32
    %c0_i32_1 = arith.constant 0 : i32
    return %c0_i32, %c0_i32_0 : i32, i32
  }
  func.func @transform_26(%arg0: i32) -> (i32, i32) {
    %c0_i32 = arith.constant 0 : i32
    %c0_i32_0 = arith.constant 0 : i32
    %c0_i32_1 = arith.constant 0 : i32
    return %c0_i32, %c0_i32_0 : i32, i32
  }
  func.func @transform_27(%arg0: i32) -> (i32, i32) {
    %c0_i32 = arith.constant 0 : i32
    %c0_i32_0 = arith.constant 0 : i32
    %c0_i32_1 = arith.constant 0 : i32
    return %c0_i32, %c0_i32_0 : i32, i32
  }
  func.func @transform_28(%arg0: i32) -> (i32, i32) {
    %c0_i32 = arith.constant 0 : i32
    %c0_i32_0 = arith.constant 0 : i32
    %c0_i32_1 = arith.constant 0 : i32
    return %c0_i32, %c0_i32_0 : i32, i32
  }
  func.func @transform_29(%arg0: i32) -> (i32, i32) {
    %c0_i32 = arith.constant 0 : i32
    %c0_i32_0 = arith.constant 0 : i32
    %c0_i32_1 = arith.constant 0 : i32
    return %c0_i32, %c0_i32_0 : i32, i32
  }
  func.func @transform_30(%arg0: i32) -> (i32, i32) {
    %c0_i32 = arith.constant 0 : i32
    %c0_i32_0 = arith.constant 0 : i32
    %c0_i32_1 = arith.constant 0 : i32
    return %c0_i32, %c0_i32_0 : i32, i32
  }
  func.func @transform_31(%arg0: i32) -> (i32, i32) {
    %c0_i32 = arith.constant 0 : i32
    %c0_i32_0 = arith.constant 0 : i32
    %c0_i32_1 = arith.constant 0 : i32
    return %c0_i32, %c0_i32_0 : i32, i32
  }
  func.func @transform_32(%arg0: i32) -> (i32, i32) {
    %c0_i32 = arith.constant 0 : i32
    %c0_i32_0 = arith.constant 0 : i32
    %c0_i32_1 = arith.constant 0 : i32
    return %c0_i32, %c0_i32_0 : i32, i32
  }
  func.func @transform_33(%arg0: i32) -> (i32, i32) {
    %c0_i32 = arith.constant 0 : i32
    %c0_i32_0 = arith.constant 0 : i32
    %c0_i32_1 = arith.constant 0 : i32
    return %c0_i32, %c0_i32_0 : i32, i32
  }
  func.func @transform_34(%arg0: i32) -> (i32, i32) {
    %c0_i32 = arith.constant 0 : i32
    %c0_i32_0 = arith.constant 0 : i32
    %c0_i32_1 = arith.constant 0 : i32
    return %c0_i32, %c0_i32_0 : i32, i32
  }
  func.func @transform_35(%arg0: i32) -> (i32, i32) {
    %c0_i32 = arith.constant 0 : i32
    %c0_i32_0 = arith.constant 0 : i32
    %c0_i32_1 = arith.constant 0 : i32
    return %c0_i32, %c0_i32_0 : i32, i32
  }
  func.func @transform_36(%arg0: i32) -> (i32, i32) {
    %c0_i32 = arith.constant 0 : i32
    %c0_i32_0 = arith.constant 0 : i32
    %c0_i32_1 = arith.constant 0 : i32
    return %c0_i32, %c0_i32_0 : i32, i32
  }
  func.func @transform_37(%arg0: i32) -> (i32, i32) {
    %c0_i32 = arith.constant 0 : i32
    %c0_i32_0 = arith.constant 0 : i32
    %c0_i32_1 = arith.constant 0 : i32
    return %c0_i32, %c0_i32_0 : i32, i32
  }
  func.func @transform_38(%arg0: i32) -> (i32, i32, i32) {
    %c0_i32 = arith.constant 0 : i32
    %c0_i32_0 = arith.constant 0 : i32
    %c0_i32_1 = arith.constant 0 : i32
    return %arg0, %c0_i32, %c0_i32_0 : i32, i32, i32
  }
}

</mosaic_0001>

<llo_original>
// kernel: tpu_custom_call.1
$region0: #{tpu_custom_call.1}
  #allocation0 [shape = 'u32[]', space=smem, size = 0x4, offset = 0x4, fixed_abs, tag = 'smem constant byte address 0x4 - core index']
  #allocation1 [shape = 'u32[144,128]{1,0:T(1,128)}', space=vmem, size = 0x12000, scoped, tag = 'internal scratch']
  #allocation2 [shape = 'f32[1,1]{1,0:T(1,128)S(1)}', space=vmem, size = 0x200, scoped, tag = 'scoped memory for tpu_custom_call.1']
  %s0 = inlined_call_operand.smem [shape: u32[39], index: -1, kind: input, shape index: {}]
  %s1 = sld [smem:[%s0]]
  %s2 = scalar_lea.smem %s0, 1
  %s3 = sld [smem:[%s2]]
  %s4 = scalar_lea.smem %s0, 2
  %s5 = sld [smem:[%s4]]
  %s6 = scalar_lea.smem %s0, 3
  %s7 = sld [smem:[%s6]]
  %s8 = scalar_lea.smem %s0, 4
  %s9 = sld [smem:[%s8]]
  %s10 = scalar_lea.smem %s0, 5
  %s11 = sld [smem:[%s10]]
  %s12 = scalar_lea.smem %s0, 6
  %s13 = sld [smem:[%s12]]
  %s14 = scalar_lea.smem %s0, 7
  %s15 = sld [smem:[%s14]]
  %s16 = scalar_lea.smem %s0, 8
  %s17 = sld [smem:[%s16]]
  %s18 = scalar_lea.smem %s0, 9
  %s19 = sld [smem:[%s18]]
  %s20 = scalar_lea.smem %s0, 10
  %s21 = sld [smem:[%s20]]
  %s22 = scalar_lea.smem %s0, 11
  %s23 = sld [smem:[%s22]]
  %s24 = scalar_lea.smem %s0, 12
  %s25 = sld [smem:[%s24]]
  %s26 = scalar_lea.smem %s0, 13
  %s27 = sld [smem:[%s26]]
  %s28 = scalar_lea.smem %s0, 14
  %s29 = sld [smem:[%s28]]
  %s30 = scalar_lea.smem %s0, 15
  %s31 = sld [smem:[%s30]]
  %s32 = scalar_lea.smem %s0, 16
  %s33 = sld [smem:[%s32]]
  %s34 = scalar_lea.smem %s0, 17
  %s35 = sld [smem:[%s34]]
  %s36 = scalar_lea.smem %s0, 18
  %s37 = sld [smem:[%s36]]
  %s38 = scalar_lea.smem %s0, 19
  %s39 = sld [smem:[%s38]]
  %s40 = scalar_lea.smem %s0, 20
  %s41 = sld [smem:[%s40]]
  %s42 = scalar_lea.smem %s0, 21
  %s43 = sld [smem:[%s42]]
  %s44 = scalar_lea.smem %s0, 22
  %s45 = sld [smem:[%s44]]
  %s46 = scalar_lea.smem %s0, 23
  %s47 = sld [smem:[%s46]]
  %s48 = scalar_lea.smem %s0, 24
  %s49 = sld [smem:[%s48]]
  %s50 = scalar_lea.smem %s0, 25
  %s51 = sld [smem:[%s50]]
  %s52 = scalar_lea.smem %s0, 26
  %s53 = sld [smem:[%s52]]
  %s54 = scalar_lea.smem %s0, 27
  %s55 = sld [smem:[%s54]]
  %s56 = scalar_lea.smem %s0, 28
  %s57 = sld [smem:[%s56]]
  %s58 = scalar_lea.smem %s0, 29
  %s59 = sld [smem:[%s58]]
  %s60 = scalar_lea.smem %s0, 30
  %s61 = sld [smem:[%s60]]
  %s62 = scalar_lea.smem %s0, 31
  %s63 = sld [smem:[%s62]]
  %s64 = scalar_lea.smem %s0, 32
  %s65 = sld [smem:[%s64]]
  %s66 = scalar_lea.smem %s0, 33
  %s67 = sld [smem:[%s66]]
  %s68 = scalar_lea.smem %s0, 34
  %s69 = sld [smem:[%s68]]
  %s70 = scalar_lea.smem %s0, 35
  %s71 = sld [smem:[%s70]]
  %s72 = scalar_lea.smem %s0, 36
  %s73 = sld [smem:[%s72]]
  %s74 = scalar_lea.smem %s0, 37
  %s75 = sld [smem:[%s74]]
  %s76 = scalar_lea.smem %s0, 38
  %s77 = sld [smem:[%s76]]
  %s78 = sld [smem:[#allocation0]]
  $region285: #{tpu_custom_call.1} parent=0
    _
  %s80 = ssub.s32 1, %s78
  %s81 = scalar_select 0, %s80, %s78
  %v82 = vstv %s67
  %83 = vst [vmem:[#allocation2] sm:$0x1] %v82
  $region1: #{tpu_custom_call.1} parent=0
    #allocation3 [shape = 'u8[24576]{0}', space=vmem, size = 0x6000, scoped, tag = 'input window, operand 0']
    #allocation4 [shape = 's32[2]{0}', space=sflag, size = 0x8, scoped, tag = 'scoped memory for tpu_custom_call.1']
    #allocation5 [shape = 's32[2]{0}', space=sflag, size = 0x8, scoped, tag = 'scoped memory for tpu_custom_call.1']
    #allocation6 [shape = 'u8[512]{0}', space=vmem, size = 0x400, scoped, tag = 'input window, operand 2, single buffered']
    #allocation7 [shape = 's32[1]{0}', space=sflag, size = 0x4, scoped, tag = 'scoped memory for tpu_custom_call.1']
    #allocation8 [shape = 'u8[512]{0}', space=vmem, size = 0x400, scoped, tag = 'input window, operand 4, single buffered']
    #allocation9 [shape = 'u8[1024]{0}', space=vmem, size = 0x400, scoped, tag = 'input window, operand 5, single buffered']
    #allocation10 [shape = 's32[1]{0}', space=sflag, size = 0x4, scoped, tag = 'scoped memory for tpu_custom_call.1']
    #allocation11 [shape = 'u8[1024]{0}', space=vmem, size = 0x400, scoped, tag = 'input window, operand 6, single buffered']
    #allocation12 [shape = 'u8[3072]{0}', space=vmem, size = 0xc00, scoped, tag = 'input window, operand 8, single buffered']
    #allocation13 [shape = 's32[1]{0}', space=sflag, size = 0x4, scoped, tag = 'scoped memory for tpu_custom_call.1']
    #allocation14 [shape = 'u8[65536]{0}', space=vmem, size = 0x10000, scoped, tag = 'input window, operand 9, single buffered']
    #allocation15 [shape = 'u8[1024]{0}', space=vmem, size = 0x400, scoped, tag = 'input window, operand 10, single buffered']
    #allocation16 [shape = 's32[1]{0}', space=sflag, size = 0x4, scoped, tag = 'scoped memory for tpu_custom_call.1']
    #allocation17 [shape = 'u8[1024]{0}', space=vmem, size = 0x400, scoped, tag = 'input window, operand 11, single buffered']
    #allocation18 [shape = 'u8[1024]{0}', space=vmem, size = 0x400, scoped, tag = 'input window, operand 12, single buffered']
    #allocation19 [shape = 's32[1]{0}', space=sflag, size = 0x4, scoped, tag = 'scoped memory for tpu_custom_call.1']
    #allocation20 [shape = 'u8[131072]{0}', space=vmem, size = 0x20000, scoped, tag = 'input window, operand 13, single buffered']
    #allocation21 [shape = 'u8[2048]{0}', space=vmem, size = 0x800, scoped, tag = 'input window, operand 14, single buffered']
    #allocation22 [shape = 's32[1]{0}', space=sflag, size = 0x4, scoped, tag = 'scoped memory for tpu_custom_call.1']
    #allocation23 [shape = 'u8[131072]{0}', space=vmem, size = 0x20000, scoped, tag = 'input window, operand 15, single buffered']
    #allocation24 [shape = 'u8[1024]{0}', space=vmem, size = 0x400, scoped, tag = 'input window, operand 16, single buffered']
    #allocation25 [shape = 's32[1]{0}', space=sflag, size = 0x4, scoped, tag = 'scoped memory for tpu_custom_call.1']
    #allocation26 [shape = 'u8[512]{0}', space=vmem, size = 0x400, scoped, tag = 'input window, operand 17, single buffered']
    #allocation27 [shape = 'u8[512]{0}', space=vmem, size = 0x400, scoped, tag = 'input window, operand 18, single buffered']
    #allocation28 [shape = 's32[1]{0}', space=sflag, size = 0x4, scoped, tag = 'scoped memory for tpu_custom_call.1']
    #allocation29 [shape = 'u8[32768]{0}', space=vmem, size = 0x8000, scoped, tag = 'input window, operand 19, single buffered']
    #allocation30 [shape = 'u8[512]{0}', space=vmem, size = 0x400, scoped, tag = 'input window, operand 20, single buffered']
    #allocation31 [shape = 's32[1]{0}', space=sflag, size = 0x4, scoped, tag = 'scoped memory for tpu_custom_call.1']
    #allocation32 [shape = 'u8[512]{0}', space=vmem, size = 0x400, scoped, tag = 'input window, operand 22, single buffered']
    #allocation33 [shape = 'u8[8192]{0}', space=vmem, size = 0x2000, scoped, tag = 'input window, operand 23, single buffered']
    #allocation34 [shape = 's32[1]{0}', space=sflag, size = 0x4, scoped, tag = 'scoped memory for tpu_custom_call.1']
    #allocation35 [shape = 'u8[512]{0}', space=vmem, size = 0x400, scoped, tag = 'input window, operand 28, single buffered']
    #allocation36 [shape = 'u8[512]{0}', space=vmem, size = 0x400, scoped, tag = 'input window, operand 29, single buffered']
    #allocation37 [shape = 's32[1]{0}', space=sflag, size = 0x4, scoped, tag = 'scoped memory for tpu_custom_call.1']
    #allocation38 [shape = 'u8[512]{0}', space=vmem, size = 0x400, scoped, tag = 'input window, operand 30, single buffered']
    #allocation39 [shape = 'u8[512]{0}', space=vmem, size = 0x400, scoped, tag = 'input window, operand 31, single buffered']
    #allocation40 [shape = 's32[1]{0}', space=sflag, size = 0x4, scoped, tag = 'scoped memory for tpu_custom_call.1']
    #allocation41 [shape = 'u8[131072]{0}', space=vmem, size = 0x20000, scoped, tag = 'input window, operand 34, single buffered']
    #allocation42 [shape = 'u8[1024]{0}', space=vmem, size = 0x400, scoped, tag = 'output window, operand 0']
    %84 = vsyncpa [#allocation4], 0
    %s85 = scalar_lea.sflag [#allocation4], 1
    %86 = vsyncpa %s85, 0
    %87 = vsyncpa [#allocation7], 0
    %88 = vsyncpa [#allocation10], 0
    %89 = vsyncpa [#allocation13], 0
    %90 = vsyncpa [#allocation16], 0
    %91 = vsyncpa [#allocation19], 0
    %92 = vsyncpa [#allocation22], 0
    %93 = vsyncpa [#allocation25], 0
    %94 = vsyncpa [#allocation28], 0
    %95 = vsyncpa [#allocation31], 0
    %96 = vsyncpa [#allocation34], 0
    %97 = vsyncpa [#allocation37], 0
    %98 = vsyncpa [#allocation40], 0
    %99 = vsyncpa [#allocation5], 0
    %s100 = scalar_lea.sflag [#allocation5], 1
    %101 = vsyncpa %s100, 0
    loop: start=0, step=1, limit=4
    $region2: #{tpu_custom_call.1} parent=1 // loop_pre_header
      _
    $region3: #{tpu_custom_call.1} parent=1 // loop_header
      %s103 = sphi 0, %s107
      %p104 = scmp.ge.s32.totalorder %s103, 4
      %s113 = sphi 0, %s115
      %s116 = sphi 0, %s113
      %s117 = sphi 0, %s116
      %s133 = sphi 0, %s117
      %s137 = sphi 0, %s137
      %s139 = sphi 0, %s137
      %s140 = sphi 0, %s139
      %s154 = sphi 0, %s140
      %s158 = sphi 0, %s158
      %s160 = sphi 0, %s158
      %s161 = sphi 0, %s160
      %s175 = sphi 0, %s161
      %s179 = sphi 0, %s179
      %s181 = sphi 0, %s179
      %s182 = sphi 0, %s181
      %s196 = sphi 0, %s182
      %s200 = sphi 0, %s200
      %s202 = sphi 0, %s200
      %s203 = sphi 0, %s202
      %s217 = sphi 0, %s203
      %s221 = sphi 0, %s221
      %s223 = sphi 0, %s221
      %s224 = sphi 0, %s223
      %s238 = sphi 0, %s224
      %s242 = sphi 0, %s242
      %s244 = sphi 0, %s242
      %s245 = sphi 0, %s244
      %s259 = sphi 0, %s245
      %s263 = sphi 0, %s263
      %s265 = sphi 0, %s263
      %s266 = sphi 0, %s265
      %s280 = sphi 0, %s266
      %s284 = sphi 0, %s284
      %s286 = sphi 0, %s284
      %s287 = sphi 0, %s286
      %s301 = sphi 0, %s287
      %s305 = sphi 0, %s305
      %s307 = sphi 0, %s305
      %s308 = sphi 0, %s307
      %s322 = sphi 0, %s308
      %s326 = sphi 0, %s326
      %s328 = sphi 0, %s326
      %s329 = sphi 0, %s328
      %s343 = sphi 0, %s329
      %s347 = sphi 0, %s347
      %s349 = sphi 0, %s347
      %s350 = sphi 0, %s349
      %s364 = sphi 0, %s350
      %s368 = sphi 0, %s368
      %s370 = sphi 0, %s368
      %s371 = sphi 0, %s370
      %s385 = sphi 0, %s371
      %s389 = sphi 0, %s389
      %s391 = sphi 0, %s389
      %s392 = sphi 0, %s391
      %s406 = sphi 0, %s392
      %s410 = sphi 0, %s410
      %s412 = sphi 0, %s410
      %s413 = sphi 0, %s412
      %s427 = sphi 0, %s413
      %s431 = sphi 0, %s431
      %s433 = sphi 0, %s431
      %s434 = sphi 0, %s433
      %s448 = sphi 0, %s434
      %s452 = sphi 0, %s452
      %s454 = sphi 0, %s452
      %s455 = sphi 0, %s454
      %s469 = sphi 0, %s455
      %s473 = sphi 0, %s473
      %s475 = sphi 0, %s473
      %s476 = sphi 0, %s475
      %s490 = sphi 0, %s476
      %s494 = sphi 0, %s494
      %s496 = sphi 0, %s494
      %s497 = sphi 0, %s496
      %s511 = sphi 0, %s497
      %s515 = sphi 0, %s515
      %s517 = sphi 0, %s515
      %s518 = sphi 0, %s517
      %s532 = sphi 0, %s518
      %s536 = sphi 0, %s536
      %s538 = sphi 0, %s536
      %s539 = sphi 0, %s538
      %s553 = sphi 0, %s539
      %s557 = sphi 0, %s557
      %s559 = sphi 0, %s557
      %s560 = sphi 0, %s559
      %s574 = sphi 0, %s560
      %s578 = sphi 0, %s578
      %s580 = sphi 0, %s578
      %s581 = sphi 0, %s580
      %s595 = sphi 0, %s581
      %s599 = sphi 0, %s599
      %s601 = sphi 0, %s599
      %s602 = sphi 0, %s601
      %s616 = sphi 0, %s602
      %s620 = sphi 0, %s620
      %s622 = sphi 0, %s620
      %s623 = sphi 0, %s622
      %s637 = sphi 0, %s623
      %s641 = sphi 0, %s641
      %s643 = sphi 0, %s641
      %s644 = sphi 0, %s643
      %s658 = sphi 0, %s644
      %s662 = sphi 0, %s662
      %s664 = sphi 0, %s662
      %s665 = sphi 0, %s664
      %s679 = sphi 0, %s665
      %s683 = sphi 0, %s683
      %s685 = sphi 0, %s683
      %s686 = sphi 0, %s685
      %s700 = sphi 0, %s686
      %s704 = sphi 0, %s704
      %s706 = sphi 0, %s704
      %s707 = sphi 0, %s706
      %s721 = sphi 0, %s707
      %s725 = sphi 0, %s725
      %s727 = sphi 0, %s725
      %s728 = sphi 0, %s727
      %s742 = sphi 0, %s728
      %s746 = sphi 0, %s746
      %s748 = sphi 0, %s746
      %s749 = sphi 0, %s748
      %s763 = sphi 0, %s749
      %s767 = sphi 0, %s767
      %s769 = sphi 0, %s767
      %s770 = sphi 0, %s769
      %s784 = sphi 0, %s770
      %s788 = sphi 0, %s788
      %s790 = sphi 0, %s788
      %s791 = sphi 0, %s790
      %s805 = sphi 0, %s791
      %s809 = sphi 0, %s809
      %s811 = sphi 0, %s809
      %s812 = sphi 0, %s811
      %s826 = sphi 0, %s812
      %s830 = sphi 0, %s830
      %s832 = sphi 0, %s830
      %s833 = sphi 0, %s832
      %s847 = sphi 0, %s833
      %s851 = sphi 0, %s851
      %s853 = sphi 0, %s851
      %s854 = sphi 0, %s853
      %s868 = sphi 0, %s854
      %s872 = sphi 0, %s872
      %s874 = sphi 0, %s872
      %s875 = sphi 0, %s874
      %s889 = sphi 0, %s875
      %s893 = sphi 0, %s893
      %s895 = sphi 0, %s893
      %s896 = sphi 0, %s895
      %s910 = sphi 0, %s896
      %s916 = sphi 0, %s918
      %s919 = sphi 0, %s916
      %s920 = sphi 0, %s919
      %s936 = sphi 0, %s920
    $region4: #{tpu_custom_call.1} parent=1 // loop_header_branch
      %106 = sbr.rel (%p104) target = $region8
    $region5: #{tpu_custom_call.1} parent=1 // loop_body
      %s108 = ssub.s32 %s103, 1
      %s109 = ssub.s32 %s103, 2
      %s110 = sadd.s32 %s103, 1
      %s111 = ssub.s32 %s103, %s110
      %p112 = scmp.eq.s32.totalorder %s111, 0
      %s114 = sadd.s32 %s113, 1
      %s115 = scalar_select %p112, %s113, %s114
      %p118 = pneg %p112
      %p119 = scmp.eq.s32.totalorder %s103, 1
      %p120 = por %p118, %p119
      %p121 = scmp.ne.s32.totalorder %s113, %s116
      %p122 = scmp.eq.s32.totalorder %s103, 0
      %p123 = por %p121, %p122
      %p124 = scmp.ne.s32.totalorder %s113, %s116
      %p125 = scmp.eq.s32.totalorder %s108, 1
      %p126 = por %p124, %p125
      %p127 = scmp.ne.s32.totalorder %s116, %s117
      %p128 = scmp.eq.s32.totalorder %s108, 0
      %p129 = por %p127, %p128
      %p130 = scmp.ne.s32.totalorder %s116, %s117
      %p131 = scmp.eq.s32.totalorder %s109, 1
      %p132 = por %p130, %p131
      %p134 = scmp.ne.s32.totalorder %s117, %s133
      %p135 = scmp.eq.s32.totalorder %s109, 0
      %p136 = por %p134, %p135
      %s138 = sadd.s32 %s137, 1
      %p141 = scmp.eq.s32.totalorder %s103, 1
      %p142 = scmp.ne.s32.totalorder %s137, %s139
      %p143 = scmp.eq.s32.totalorder %s103, 0
      %p144 = por %p142, %p143
      %p145 = scmp.ne.s32.totalorder %s137, %s139
      %p146 = scmp.eq.s32.totalorder %s108, 1
      %p147 = por %p145, %p146
      %p148 = scmp.ne.s32.totalorder %s139, %s140
      %p149 = scmp.eq.s32.totalorder %s108, 0
      %p150 = por %p148, %p149
      %p151 = scmp.ne.s32.totalorder %s139, %s140
      %p152 = scmp.eq.s32.totalorder %s109, 1
      %p153 = por %p151, %p152
      %p155 = scmp.ne.s32.totalorder %s140, %s154
      %p156 = scmp.eq.s32.totalorder %s109, 0
      %p157 = por %p155, %p156
      %s159 = sadd.s32 %s158, 1
      %p162 = scmp.eq.s32.totalorder %s103, 1
      %p163 = scmp.ne.s32.totalorder %s158, %s160
      %p164 = scmp.eq.s32.totalorder %s103, 0
      %p165 = por %p163, %p164
      %p166 = scmp.ne.s32.totalorder %s158, %s160
      %p167 = scmp.eq.s32.totalorder %s108, 1
      %p168 = por %p166, %p167
      %p169 = scmp.ne.s32.totalorder %s160, %s161
      %p170 = scmp.eq.s32.totalorder %s108, 0
      %p171 = por %p169, %p170
      %p172 = scmp.ne.s32.totalorder %s160, %s161
      %p173 = scmp.eq.s32.totalorder %s109, 1
      %p174 = por %p172, %p173
      %p176 = scmp.ne.s32.totalorder %s161, %s175
      %p177 = scmp.eq.s32.totalorder %s109, 0
      %p178 = por %p176, %p177
      %s180 = sadd.s32 %s179, 1
      %p183 = scmp.eq.s32.totalorder %s103, 1
      %p184 = scmp.ne.s32.totalorder %s179, %s181
      %p185 = scmp.eq.s32.totalorder %s103, 0
      %p186 = por %p184, %p185
      %p187 = scmp.ne.s32.totalorder %s179, %s181
      %p188 = scmp.eq.s32.totalorder %s108, 1
      %p189 = por %p187, %p188
      %p190 = scmp.ne.s32.totalorder %s181, %s182
      %p191 = scmp.eq.s32.totalorder %s108, 0
      %p192 = por %p190, %p191
      %p193 = scmp.ne.s32.totalorder %s181, %s182
      %p194 = scmp.eq.s32.totalorder %s109, 1
      %p195 = por %p193, %p194
      %p197 = scmp.ne.s32.totalorder %s182, %s196
      %p198 = scmp.eq.s32.totalorder %s109, 0
      %p199 = por %p197, %p198
      %s201 = sadd.s32 %s200, 1
      %p204 = scmp.eq.s32.totalorder %s103, 1
      %p205 = scmp.ne.s32.totalorder %s200, %s202
      %p206 = scmp.eq.s32.totalorder %s103, 0
      %p207 = por %p205, %p206
      %p208 = scmp.ne.s32.totalorder %s200, %s202
      %p209 = scmp.eq.s32.totalorder %s108, 1
      %p210 = por %p208, %p209
      %p211 = scmp.ne.s32.totalorder %s202, %s203
      %p212 = scmp.eq.s32.totalorder %s108, 0
      %p213 = por %p211, %p212
      %p214 = scmp.ne.s32.totalorder %s202, %s203
      %p215 = scmp.eq.s32.totalorder %s109, 1
      %p216 = por %p214, %p215
      %p218 = scmp.ne.s32.totalorder %s203, %s217
      %p219 = scmp.eq.s32.totalorder %s109, 0
      %p220 = por %p218, %p219
      %s222 = sadd.s32 %s221, 1
      %p225 = scmp.eq.s32.totalorder %s103, 1
      %p226 = scmp.ne.s32.totalorder %s221, %s223
      %p227 = scmp.eq.s32.totalorder %s103, 0
      %p228 = por %p226, %p227
      %p229 = scmp.ne.s32.totalorder %s221, %s223
      %p230 = scmp.eq.s32.totalorder %s108, 1
      %p231 = por %p229, %p230
      %p232 = scmp.ne.s32.totalorder %s223, %s224
      %p233 = scmp.eq.s32.totalorder %s108, 0
      %p234 = por %p232, %p233
      %p235 = scmp.ne.s32.totalorder %s223, %s224
      %p236 = scmp.eq.s32.totalorder %s109, 1
      %p237 = por %p235, %p236
      %p239 = scmp.ne.s32.totalorder %s224, %s238
      %p240 = scmp.eq.s32.totalorder %s109, 0
      %p241 = por %p239, %p240
      %s243 = sadd.s32 %s242, 1
      %p246 = scmp.eq.s32.totalorder %s103, 1
      %p247 = scmp.ne.s32.totalorder %s242, %s244
      %p248 = scmp.eq.s32.totalorder %s103, 0
      %p249 = por %p247, %p248
      %p250 = scmp.ne.s32.totalorder %s242, %s244
      %p251 = scmp.eq.s32.totalorder %s108, 1
      %p252 = por %p250, %p251
      %p253 = scmp.ne.s32.totalorder %s244, %s245
      %p254 = scmp.eq.s32.totalorder %s108, 0
      %p255 = por %p253, %p254
      %p256 = scmp.ne.s32.totalorder %s244, %s245
      %p257 = scmp.eq.s32.totalorder %s109, 1
      %p258 = por %p256, %p257
      %p260 = scmp.ne.s32.totalorder %s245, %s259
      %p261 = scmp.eq.s32.totalorder %s109, 0
      %p262 = por %p260, %p261
      %s264 = sadd.s32 %s263, 1
      %p267 = scmp.eq.s32.totalorder %s103, 1
      %p268 = scmp.ne.s32.totalorder %s263, %s265
      %p269 = scmp.eq.s32.totalorder %s103, 0
      %p270 = por %p268, %p269
      %p271 = scmp.ne.s32.totalorder %s263, %s265
      %p272 = scmp.eq.s32.totalorder %s108, 1
      %p273 = por %p271, %p272
      %p274 = scmp.ne.s32.totalorder %s265, %s266
      %p275 = scmp.eq.s32.totalorder %s108, 0
      %p276 = por %p274, %p275
      %p277 = scmp.ne.s32.totalorder %s265, %s266
      %p278 = scmp.eq.s32.totalorder %s109, 1
      %p279 = por %p277, %p278
      %p281 = scmp.ne.s32.totalorder %s266, %s280
      %p282 = scmp.eq.s32.totalorder %s109, 0
      %p283 = por %p281, %p282
      %s285 = sadd.s32 %s284, 1
      %p288 = scmp.eq.s32.totalorder %s103, 1
      %p289 = scmp.ne.s32.totalorder %s284, %s286
      %p290 = scmp.eq.s32.totalorder %s103, 0
      %p291 = por %p289, %p290
      %p292 = scmp.ne.s32.totalorder %s284, %s286
      %p293 = scmp.eq.s32.totalorder %s108, 1
      %p294 = por %p292, %p293
      %p295 = scmp.ne.s32.totalorder %s286, %s287
      %p296 = scmp.eq.s32.totalorder %s108, 0
      %p297 = por %p295, %p296
      %p298 = scmp.ne.s32.totalorder %s286, %s287
      %p299 = scmp.eq.s32.totalorder %s109, 1
      %p300 = por %p298, %p299
      %p302 = scmp.ne.s32.totalorder %s287, %s301
      %p303 = scmp.eq.s32.totalorder %s109, 0
      %p304 = por %p302, %p303
      %s306 = sadd.s32 %s305, 1
      %p309 = scmp.eq.s32.totalorder %s103, 1
      %p310 = scmp.ne.s32.totalorder %s305, %s307
      %p311 = scmp.eq.s32.totalorder %s103, 0
      %p312 = por %p310, %p311
      %p313 = scmp.ne.s32.totalorder %s305, %s307
      %p314 = scmp.eq.s32.totalorder %s108, 1
      %p315 = por %p313, %p314
      %p316 = scmp.ne.s32.totalorder %s307, %s308
      %p317 = scmp.eq.s32.totalorder %s108, 0
      %p318 = por %p316, %p317
      %p319 = scmp.ne.s32.totalorder %s307, %s308
      %p320 = scmp.eq.s32.totalorder %s109, 1
      %p321 = por %p319, %p320
      %p323 = scmp.ne.s32.totalorder %s308, %s322
      %p324 = scmp.eq.s32.totalorder %s109, 0
      %p325 = por %p323, %p324
      %s327 = sadd.s32 %s326, 1
      %p330 = scmp.eq.s32.totalorder %s103, 1
      %p331 = scmp.ne.s32.totalorder %s326, %s328
      %p332 = scmp.eq.s32.totalorder %s103, 0
      %p333 = por %p331, %p332
      %p334 = scmp.ne.s32.totalorder %s326, %s328
      %p335 = scmp.eq.s32.totalorder %s108, 1
      %p336 = por %p334, %p335
      %p337 = scmp.ne.s32.totalorder %s328, %s329
      %p338 = scmp.eq.s32.totalorder %s108, 0
      %p339 = por %p337, %p338
      %p340 = scmp.ne.s32.totalorder %s328, %s329
      %p341 = scmp.eq.s32.totalorder %s109, 1
      %p342 = por %p340, %p341
      %p344 = scmp.ne.s32.totalorder %s329, %s343
      %p345 = scmp.eq.s32.totalorder %s109, 0
      %p346 = por %p344, %p345
      %s348 = sadd.s32 %s347, 1
      %p351 = scmp.eq.s32.totalorder %s103, 1
      %p352 = scmp.ne.s32.totalorder %s347, %s349
      %p353 = scmp.eq.s32.totalorder %s103, 0
      %p354 = por %p352, %p353
      %p355 = scmp.ne.s32.totalorder %s347, %s349
      %p356 = scmp.eq.s32.totalorder %s108, 1
      %p357 = por %p355, %p356
      %p358 = scmp.ne.s32.totalorder %s349, %s350
      %p359 = scmp.eq.s32.totalorder %s108, 0
      %p360 = por %p358, %p359
      %p361 = scmp.ne.s32.totalorder %s349, %s350
      %p362 = scmp.eq.s32.totalorder %s109, 1
      %p363 = por %p361, %p362
      %p365 = scmp.ne.s32.totalorder %s350, %s364
      %p366 = scmp.eq.s32.totalorder %s109, 0
      %p367 = por %p365, %p366
      %s369 = sadd.s32 %s368, 1
      %p372 = scmp.eq.s32.totalorder %s103, 1
      %p373 = scmp.ne.s32.totalorder %s368, %s370
      %p374 = scmp.eq.s32.totalorder %s103, 0
      %p375 = por %p373, %p374
      %p376 = scmp.ne.s32.totalorder %s368, %s370
      %p377 = scmp.eq.s32.totalorder %s108, 1
      %p378 = por %p376, %p377
      %p379 = scmp.ne.s32.totalorder %s370, %s371
      %p380 = scmp.eq.s32.totalorder %s108, 0
      %p381 = por %p379, %p380
      %p382 = scmp.ne.s32.totalorder %s370, %s371
      %p383 = scmp.eq.s32.totalorder %s109, 1
      %p384 = por %p382, %p383
      %p386 = scmp.ne.s32.totalorder %s371, %s385
      %p387 = scmp.eq.s32.totalorder %s109, 0
      %p388 = por %p386, %p387
      %s390 = sadd.s32 %s389, 1
      %p393 = scmp.eq.s32.totalorder %s103, 1
      %p394 = scmp.ne.s32.totalorder %s389, %s391
      %p395 = scmp.eq.s32.totalorder %s103, 0
      %p396 = por %p394, %p395
      %p397 = scmp.ne.s32.totalorder %s389, %s391
      %p398 = scmp.eq.s32.totalorder %s108, 1
      %p399 = por %p397, %p398
      %p400 = scmp.ne.s32.totalorder %s391, %s392
      %p401 = scmp.eq.s32.totalorder %s108, 0
      %p402 = por %p400, %p401
      %p403 = scmp.ne.s32.totalorder %s391, %s392
      %p404 = scmp.eq.s32.totalorder %s109, 1
      %p405 = por %p403, %p404
      %p407 = scmp.ne.s32.totalorder %s392, %s406
      %p408 = scmp.eq.s32.totalorder %s109, 0
      %p409 = por %p407, %p408
      %s411 = sadd.s32 %s410, 1
      %p414 = scmp.eq.s32.totalorder %s103, 1
      %p415 = scmp.ne.s32.totalorder %s410, %s412
      %p416 = scmp.eq.s32.totalorder %s103, 0
      %p417 = por %p415, %p416
      %p418 = scmp.ne.s32.totalorder %s410, %s412
      %p419 = scmp.eq.s32.totalorder %s108, 1
      %p420 = por %p418, %p419
      %p421 = scmp.ne.s32.totalorder %s412, %s413
      %p422 = scmp.eq.s32.totalorder %s108, 0
      %p423 = por %p421, %p422
      %p424 = scmp.ne.s32.totalorder %s412, %s413
      %p425 = scmp.eq.s32.totalorder %s109, 1
      %p426 = por %p424, %p425
      %p428 = scmp.ne.s32.totalorder %s413, %s427
      %p429 = scmp.eq.s32.totalorder %s109, 0
      %p430 = por %p428, %p429
      %s432 = sadd.s32 %s431, 1
      %p435 = scmp.eq.s32.totalorder %s103, 1
      %p436 = scmp.ne.s32.totalorder %s431, %s433
      %p437 = scmp.eq.s32.totalorder %s103, 0
      %p438 = por %p436, %p437
      %p439 = scmp.ne.s32.totalorder %s431, %s433
      %p440 = scmp.eq.s32.totalorder %s108, 1
      %p441 = por %p439, %p440
      %p442 = scmp.ne.s32.totalorder %s433, %s434
      %p443 = scmp.eq.s32.totalorder %s108, 0
      %p444 = por %p442, %p443
      %p445 = scmp.ne.s32.totalorder %s433, %s434
      %p446 = scmp.eq.s32.totalorder %s109, 1
      %p447 = por %p445, %p446
      %p449 = scmp.ne.s32.totalorder %s434, %s448
      %p450 = scmp.eq.s32.totalorder %s109, 0
      %p451 = por %p449, %p450
      %s453 = sadd.s32 %s452, 1
      %p456 = scmp.eq.s32.totalorder %s103, 1
      %p457 = scmp.ne.s32.totalorder %s452, %s454
      %p458 = scmp.eq.s32.totalorder %s103, 0
      %p459 = por %p457, %p458
      %p460 = scmp.ne.s32.totalorder %s452, %s454
      %p461 = scmp.eq.s32.totalorder %s108, 1
      %p462 = por %p460, %p461
      %p463 = scmp.ne.s32.totalorder %s454, %s455
      %p464 = scmp.eq.s32.totalorder %s108, 0
      %p465 = por %p463, %p464
      %p466 = scmp.ne.s32.totalorder %s454, %s455
      %p467 = scmp.eq.s32.totalorder %s109, 1
      %p468 = por %p466, %p467
      %p470 = scmp.ne.s32.totalorder %s455, %s469
      %p471 = scmp.eq.s32.totalorder %s109, 0
      %p472 = por %p470, %p471
      %s474 = sadd.s32 %s473, 1
      %p477 = scmp.eq.s32.totalorder %s103, 1
      %p478 = scmp.ne.s32.totalorder %s473, %s475
      %p479 = scmp.eq.s32.totalorder %s103, 0
      %p480 = por %p478, %p479
      %p481 = scmp.ne.s32.totalorder %s473, %s475
      %p482 = scmp.eq.s32.totalorder %s108, 1
      %p483 = por %p481, %p482
      %p484 = scmp.ne.s32.totalorder %s475, %s476
      %p485 = scmp.eq.s32.totalorder %s108, 0
      %p486 = por %p484, %p485
      %p487 = scmp.ne.s32.totalorder %s475, %s476
      %p488 = scmp.eq.s32.totalorder %s109, 1
      %p489 = por %p487, %p488
      %p491 = scmp.ne.s32.totalorder %s476, %s490
      %p492 = scmp.eq.s32.totalorder %s109, 0
      %p493 = por %p491, %p492
      %s495 = sadd.s32 %s494, 1
      %p498 = scmp.eq.s32.totalorder %s103, 1
      %p499 = scmp.ne.s32.totalorder %s494, %s496
      %p500 = scmp.eq.s32.totalorder %s103, 0
      %p501 = por %p499, %p500
      %p502 = scmp.ne.s32.totalorder %s494, %s496
      %p503 = scmp.eq.s32.totalorder %s108, 1
      %p504 = por %p502, %p503
      %p505 = scmp.ne.s32.totalorder %s496, %s497
      %p506 = scmp.eq.s32.totalorder %s108, 0
      %p507 = por %p505, %p506
      %p508 = scmp.ne.s32.totalorder %s496, %s497
      %p509 = scmp.eq.s32.totalorder %s109, 1
      %p510 = por %p508, %p509
      %p512 = scmp.ne.s32.totalorder %s497, %s511
      %p513 = scmp.eq.s32.totalorder %s109, 0
      %p514 = por %p512, %p513
      %s516 = sadd.s32 %s515, 1
      %p519 = scmp.eq.s32.totalorder %s103, 1
      %p520 = scmp.ne.s32.totalorder %s515, %s517
      %p521 = scmp.eq.s32.totalorder %s103, 0
      %p522 = por %p520, %p521
      %p523 = scmp.ne.s32.totalorder %s515, %s517
      %p524 = scmp.eq.s32.totalorder %s108, 1
      %p525 = por %p523, %p524
      %p526 = scmp.ne.s32.totalorder %s517, %s518
      %p527 = scmp.eq.s32.totalorder %s108, 0
      %p528 = por %p526, %p527
      %p529 = scmp.ne.s32.totalorder %s517, %s518
      %p530 = scmp.eq.s32.totalorder %s109, 1
      %p531 = por %p529, %p530
      %p533 = scmp.ne.s32.totalorder %s518, %s532
      %p534 = scmp.eq.s32.totalorder %s109, 0
      %p535 = por %p533, %p534
      %s537 = sadd.s32 %s536, 1
      %p540 = scmp.eq.s32.totalorder %s103, 1
      %p541 = scmp.ne.s32.totalorder %s536, %s538
      %p542 = scmp.eq.s32.totalorder %s103, 0
      %p543 = por %p541, %p542
      %p544 = scmp.ne.s32.totalorder %s536, %s538
      %p545 = scmp.eq.s32.totalorder %s108, 1
      %p546 = por %p544, %p545
      %p547 = scmp.ne.s32.totalorder %s538, %s539
      %p548 = scmp.eq.s32.totalorder %s108, 0
      %p549 = por %p547, %p548
      %p550 = scmp.ne.s32.totalorder %s538, %s539
      %p551 = scmp.eq.s32.totalorder %s109, 1
      %p552 = por %p550, %p551
      %p554 = scmp.ne.s32.totalorder %s539, %s553
      %p555 = scmp.eq.s32.totalorder %s109, 0
      %p556 = por %p554, %p555
      %s558 = sadd.s32 %s557, 1
      %p561 = scmp.eq.s32.totalorder %s103, 1
      %p562 = scmp.ne.s32.totalorder %s557, %s559
      %p563 = scmp.eq.s32.totalorder %s103, 0
      %p564 = por %p562, %p563
      %p565 = scmp.ne.s32.totalorder %s557, %s559
      %p566 = scmp.eq.s32.totalorder %s108, 1
      %p567 = por %p565, %p566
      %p568 = scmp.ne.s32.totalorder %s559, %s560
      %p569 = scmp.eq.s32.totalorder %s108, 0
      %p570 = por %p568, %p569
      %p571 = scmp.ne.s32.totalorder %s559, %s560
      %p572 = scmp.eq.s32.totalorder %s109, 1
      %p573 = por %p571, %p572
      %p575 = scmp.ne.s32.totalorder %s560, %s574
      %p576 = scmp.eq.s32.totalorder %s109, 0
      %p577 = por %p575, %p576
      %s579 = sadd.s32 %s578, 1
      %p582 = scmp.eq.s32.totalorder %s103, 1
      %p583 = scmp.ne.s32.totalorder %s578, %s580
      %p584 = scmp.eq.s32.totalorder %s103, 0
      %p585 = por %p583, %p584
      %p586 = scmp.ne.s32.totalorder %s578, %s580
      %p587 = scmp.eq.s32.totalorder %s108, 1
      %p588 = por %p586, %p587
      %p589 = scmp.ne.s32.totalorder %s580, %s581
      %p590 = scmp.eq.s32.totalorder %s108, 0
      %p591 = por %p589, %p590
      %p592 = scmp.ne.s32.totalorder %s580, %s581
      %p593 = scmp.eq.s32.totalorder %s109, 1
      %p594 = por %p592, %p593
      %p596 = scmp.ne.s32.totalorder %s581, %s595
      %p597 = scmp.eq.s32.totalorder %s109, 0
      %p598 = por %p596, %p597
      %s600 = sadd.s32 %s599, 1
      %p603 = scmp.eq.s32.totalorder %s103, 1
      %p604 = scmp.ne.s32.totalorder %s599, %s601
      %p605 = scmp.eq.s32.totalorder %s103, 0
      %p606 = por %p604, %p605
      %p607 = scmp.ne.s32.totalorder %s599, %s601
      %p608 = scmp.eq.s32.totalorder %s108, 1
      %p609 = por %p607, %p608
      %p610 = scmp.ne.s32.totalorder %s601, %s602
      %p611 = scmp.eq.s32.totalorder %s108, 0
      %p612 = por %p610, %p611
      %p613 = scmp.ne.s32.totalorder %s601, %s602
      %p614 = scmp.eq.s32.totalorder %s109, 1
      %p615 = por %p613, %p614
      %p617 = scmp.ne.s32.totalorder %s602, %s616
      %p618 = scmp.eq.s32.totalorder %s109, 0
      %p619 = por %p617, %p618
      %s621 = sadd.s32 %s620, 1
      %p624 = scmp.eq.s32.totalorder %s103, 1
      %p625 = scmp.ne.s32.totalorder %s620, %s622
      %p626 = scmp.eq.s32.totalorder %s103, 0
      %p627 = por %p625, %p626
      %p628 = scmp.ne.s32.totalorder %s620, %s622
      %p629 = scmp.eq.s32.totalorder %s108, 1
      %p630 = por %p628, %p629
      %p631 = scmp.ne.s32.totalorder %s622, %s623
      %p632 = scmp.eq.s32.totalorder %s108, 0
      %p633 = por %p631, %p632
      %p634 = scmp.ne.s32.totalorder %s622, %s623
      %p635 = scmp.eq.s32.totalorder %s109, 1
      %p636 = por %p634, %p635
      %p638 = scmp.ne.s32.totalorder %s623, %s637
      %p639 = scmp.eq.s32.totalorder %s109, 0
      %p640 = por %p638, %p639
      %s642 = sadd.s32 %s641, 1
      %p645 = scmp.eq.s32.totalorder %s103, 1
      %p646 = scmp.ne.s32.totalorder %s641, %s643
      %p647 = scmp.eq.s32.totalorder %s103, 0
      %p648 = por %p646, %p647
      %p649 = scmp.ne.s32.totalorder %s641, %s643
      %p650 = scmp.eq.s32.totalorder %s108, 1
      %p651 = por %p649, %p650
      %p652 = scmp.ne.s32.totalorder %s643, %s644
      %p653 = scmp.eq.s32.totalorder %s108, 0
      %p654 = por %p652, %p653
      %p655 = scmp.ne.s32.totalorder %s643, %s644
      %p656 = scmp.eq.s32.totalorder %s109, 1
      %p657 = por %p655, %p656
      %p659 = scmp.ne.s32.totalorder %s644, %s658
      %p660 = scmp.eq.s32.totalorder %s109, 0
      %p661 = por %p659, %p660
      %s663 = sadd.s32 %s662, 1
      %p666 = scmp.eq.s32.totalorder %s103, 1
      %p667 = scmp.ne.s32.totalorder %s662, %s664
      %p668 = scmp.eq.s32.totalorder %s103, 0
      %p669 = por %p667, %p668
      %p670 = scmp.ne.s32.totalorder %s662, %s664
      %p671 = scmp.eq.s32.totalorder %s108, 1
      %p672 = por %p670, %p671
      %p673 = scmp.ne.s32.totalorder %s664, %s665
      %p674 = scmp.eq.s32.totalorder %s108, 0
      %p675 = por %p673, %p674
      %p676 = scmp.ne.s32.totalorder %s664, %s665
      %p677 = scmp.eq.s32.totalorder %s109, 1
      %p678 = por %p676, %p677
      %p680 = scmp.ne.s32.totalorder %s665, %s679
      %p681 = scmp.eq.s32.totalorder %s109, 0
      %p682 = por %p680, %p681
      %s684 = sadd.s32 %s683, 1
      %p687 = scmp.eq.s32.totalorder %s103, 1
      %p688 = scmp.ne.s32.totalorder %s683, %s685
      %p689 = scmp.eq.s32.totalorder %s103, 0
      %p690 = por %p688, %p689
      %p691 = scmp.ne.s32.totalorder %s683, %s685
      %p692 = scmp.eq.s32.totalorder %s108, 1
      %p693 = por %p691, %p692
      %p694 = scmp.ne.s32.totalorder %s685, %s686
      %p695 = scmp.eq.s32.totalorder %s108, 0
      %p696 = por %p694, %p695
      %p697 = scmp.ne.s32.totalorder %s685, %s686
      %p698 = scmp.eq.s32.totalorder %s109, 1
      %p699 = por %p697, %p698
      %p701 = scmp.ne.s32.totalorder %s686, %s700
      %p702 = scmp.eq.s32.totalorder %s109, 0
      %p703 = por %p701, %p702
      %s705 = sadd.s32 %s704, 1
      %p708 = scmp.eq.s32.totalorder %s103, 1
      %p709 = scmp.ne.s32.totalorder %s704, %s706
      %p710 = scmp.eq.s32.totalorder %s103, 0
      %p711 = por %p709, %p710
      %p712 = scmp.ne.s32.totalorder %s704, %s706
      %p713 = scmp.eq.s32.totalorder %s108, 1
      %p714 = por %p712, %p713
      %p715 = scmp.ne.s32.totalorder %s706, %s707
      %p716 = scmp.eq.s32.totalorder %s108, 0
      %p717 = por %p715, %p716
      %p718 = scmp.ne.s32.totalorder %s706, %s707
      %p719 = scmp.eq.s32.totalorder %s109, 1
      %p720 = por %p718, %p719
      %p722 = scmp.ne.s32.totalorder %s707, %s721
      %p723 = scmp.eq.s32.totalorder %s109, 0
      %p724 = por %p722, %p723
      %s726 = sadd.s32 %s725, 1
      %p729 = scmp.eq.s32.totalorder %s103, 1
      %p730 = scmp.ne.s32.totalorder %s725, %s727
      %p731 = scmp.eq.s32.totalorder %s103, 0
      %p732 = por %p730, %p731
      %p733 = scmp.ne.s32.totalorder %s725, %s727
      %p734 = scmp.eq.s32.totalorder %s108, 1
      %p735 = por %p733, %p734
      %p736 = scmp.ne.s32.totalorder %s727, %s728
      %p737 = scmp.eq.s32.totalorder %s108, 0
      %p738 = por %p736, %p737
      %p739 = scmp.ne.s32.totalorder %s727, %s728
      %p740 = scmp.eq.s32.totalorder %s109, 1
      %p741 = por %p739, %p740
      %p743 = scmp.ne.s32.totalorder %s728, %s742
      %p744 = scmp.eq.s32.totalorder %s109, 0
      %p745 = por %p743, %p744
      %s747 = sadd.s32 %s746, 1
      %p750 = scmp.eq.s32.totalorder %s103, 1
      %p751 = scmp.ne.s32.totalorder %s746, %s748
      %p752 = scmp.eq.s32.totalorder %s103, 0
      %p753 = por %p751, %p752
      %p754 = scmp.ne.s32.totalorder %s746, %s748
      %p755 = scmp.eq.s32.totalorder %s108, 1
      %p756 = por %p754, %p755
      %p757 = scmp.ne.s32.totalorder %s748, %s749
      %p758 = scmp.eq.s32.totalorder %s108, 0
      %p759 = por %p757, %p758
      %p760 = scmp.ne.s32.totalorder %s748, %s749
      %p761 = scmp.eq.s32.totalorder %s109, 1
      %p762 = por %p760, %p761
      %p764 = scmp.ne.s32.totalorder %s749, %s763
      %p765 = scmp.eq.s32.totalorder %s109, 0
      %p766 = por %p764, %p765
      %s768 = sadd.s32 %s767, 1
      %p771 = scmp.eq.s32.totalorder %s103, 1
      %p772 = scmp.ne.s32.totalorder %s767, %s769
      %p773 = scmp.eq.s32.totalorder %s103, 0
      %p774 = por %p772, %p773
      %p775 = scmp.ne.s32.totalorder %s767, %s769
      %p776 = scmp.eq.s32.totalorder %s108, 1
      %p777 = por %p775, %p776
      %p778 = scmp.ne.s32.totalorder %s769, %s770
      %p779 = scmp.eq.s32.totalorder %s108, 0
      %p780 = por %p778, %p779
      %p781 = scmp.ne.s32.totalorder %s769, %s770
      %p782 = scmp.eq.s32.totalorder %s109, 1
      %p783 = por %p781, %p782
      %p785 = scmp.ne.s32.totalorder %s770, %s784
      %p786 = scmp.eq.s32.totalorder %s109, 0
      %p787 = por %p785, %p786
      %s789 = sadd.s32 %s788, 1
      %p792 = scmp.eq.s32.totalorder %s103, 1
      %p793 = scmp.ne.s32.totalorder %s788, %s790
      %p794 = scmp.eq.s32.totalorder %s103, 0
      %p795 = por %p793, %p794
      %p796 = scmp.ne.s32.totalorder %s788, %s790
      %p797 = scmp.eq.s32.totalorder %s108, 1
      %p798 = por %p796, %p797
      %p799 = scmp.ne.s32.totalorder %s790, %s791
      %p800 = scmp.eq.s32.totalorder %s108, 0
      %p801 = por %p799, %p800
      %p802 = scmp.ne.s32.totalorder %s790, %s791
      %p803 = scmp.eq.s32.totalorder %s109, 1
      %p804 = por %p802, %p803
      %p806 = scmp.ne.s32.totalorder %s791, %s805
      %p807 = scmp.eq.s32.totalorder %s109, 0
      %p808 = por %p806, %p807
      %s810 = sadd.s32 %s809, 1
      %p813 = scmp.eq.s32.totalorder %s103, 1
      %p814 = scmp.ne.s32.totalorder %s809, %s811
      %p815 = scmp.eq.s32.totalorder %s103, 0
      %p816 = por %p814, %p815
      %p817 = scmp.ne.s32.totalorder %s809, %s811
      %p818 = scmp.eq.s32.totalorder %s108, 1
      %p819 = por %p817, %p818
      %p820 = scmp.ne.s32.totalorder %s811, %s812
      %p821 = scmp.eq.s32.totalorder %s108, 0
      %p822 = por %p820, %p821
      %p823 = scmp.ne.s32.totalorder %s811, %s812
      %p824 = scmp.eq.s32.totalorder %s109, 1
      %p825 = por %p823, %p824
      %p827 = scmp.ne.s32.totalorder %s812, %s826
      %p828 = scmp.eq.s32.totalorder %s109, 0
      %p829 = por %p827, %p828
      %s831 = sadd.s32 %s830, 1
      %p834 = scmp.eq.s32.totalorder %s103, 1
      %p835 = scmp.ne.s32.totalorder %s830, %s832
      %p836 = scmp.eq.s32.totalorder %s103, 0
      %p837 = por %p835, %p836
      %p838 = scmp.ne.s32.totalorder %s830, %s832
      %p839 = scmp.eq.s32.totalorder %s108, 1
      %p840 = por %p838, %p839
      %p841 = scmp.ne.s32.totalorder %s832, %s833
      %p842 = scmp.eq.s32.totalorder %s108, 0
      %p843 = por %p841, %p842
      %p844 = scmp.ne.s32.totalorder %s832, %s833
      %p845 = scmp.eq.s32.totalorder %s109, 1
      %p846 = por %p844, %p845
      %p848 = scmp.ne.s32.totalorder %s833, %s847
      %p849 = scmp.eq.s32.totalorder %s109, 0
      %p850 = por %p848, %p849
      %s852 = sadd.s32 %s851, 1
      %p855 = scmp.eq.s32.totalorder %s103, 1
      %p856 = scmp.ne.s32.totalorder %s851, %s853
      %p857 = scmp.eq.s32.totalorder %s103, 0
      %p858 = por %p856, %p857
      %p859 = scmp.ne.s32.totalorder %s851, %s853
      %p860 = scmp.eq.s32.totalorder %s108, 1
      %p861 = por %p859, %p860
      %p862 = scmp.ne.s32.totalorder %s853, %s854
      %p863 = scmp.eq.s32.totalorder %s108, 0
      %p864 = por %p862, %p863
      %p865 = scmp.ne.s32.totalorder %s853, %s854
      %p866 = scmp.eq.s32.totalorder %s109, 1
      %p867 = por %p865, %p866
      %p869 = scmp.ne.s32.totalorder %s854, %s868
      %p870 = scmp.eq.s32.totalorder %s109, 0
      %p871 = por %p869, %p870
      %s873 = sadd.s32 %s872, 1
      %p876 = scmp.eq.s32.totalorder %s103, 1
      %p877 = scmp.ne.s32.totalorder %s872, %s874
      %p878 = scmp.eq.s32.totalorder %s103, 0
      %p879 = por %p877, %p878
      %p880 = scmp.ne.s32.totalorder %s872, %s874
      %p881 = scmp.eq.s32.totalorder %s108, 1
      %p882 = por %p880, %p881
      %p883 = scmp.ne.s32.totalorder %s874, %s875
      %p884 = scmp.eq.s32.totalorder %s108, 0
      %p885 = por %p883, %p884
      %p886 = scmp.ne.s32.totalorder %s874, %s875
      %p887 = scmp.eq.s32.totalorder %s109, 1
      %p888 = por %p886, %p887
      %p890 = scmp.ne.s32.totalorder %s875, %s889
      %p891 = scmp.eq.s32.totalorder %s109, 0
      %p892 = por %p890, %p891
      %s894 = sadd.s32 %s893, 1
      %p897 = scmp.eq.s32.totalorder %s103, 1
      %p898 = scmp.ne.s32.totalorder %s893, %s895
      %p899 = scmp.eq.s32.totalorder %s103, 0
      %p900 = por %p898, %p899
      %p901 = scmp.ne.s32.totalorder %s893, %s895
      %p902 = scmp.eq.s32.totalorder %s108, 1
      %p903 = por %p901, %p902
      %p904 = scmp.ne.s32.totalorder %s895, %s896
      %p905 = scmp.eq.s32.totalorder %s108, 0
      %p906 = por %p904, %p905
      %p907 = scmp.ne.s32.totalorder %s895, %s896
      %p908 = scmp.eq.s32.totalorder %s109, 1
      %p909 = por %p907, %p908
      %p911 = scmp.ne.s32.totalorder %s896, %s910
      %p912 = scmp.eq.s32.totalorder %s109, 0
      %p913 = por %p911, %p912
      %s914 = ssub.s32 %s103, %s110
      %p915 = scmp.eq.s32.totalorder %s914, 0
      %s917 = sadd.s32 %s916, 1
      %s918 = scalar_select %p915, %s916, %s917
      %p921 = pneg %p915
      %p922 = scmp.eq.s32.totalorder %s103, 1
      %p923 = por %p921, %p922
      %p924 = scmp.ne.s32.totalorder %s916, %s919
      %p925 = scmp.eq.s32.totalorder %s103, 0
      %p926 = por %p924, %p925
      %p927 = scmp.ne.s32.totalorder %s916, %s919
      %p928 = scmp.eq.s32.totalorder %s108, 1
      %p929 = por %p927, %p928
      %p930 = scmp.ne.s32.totalorder %s919, %s920
      %p931 = scmp.eq.s32.totalorder %s108, 0
      %p932 = por %p930, %p931
      %p933 = scmp.ne.s32.totalorder %s919, %s920
      %p934 = scmp.eq.s32.totalorder %s109, 1
      %p935 = por %p933, %p934
      %p937 = scmp.ne.s32.totalorder %s920, %s936
      %p938 = scmp.eq.s32.totalorder %s109, 0
      %p939 = por %p937, %p938
      %p940 = scmp.le.s32.totalorder 1, %s103
      %p941 = scmp.lt.s32.totalorder %s103, 3
      %p942 = pnand %p940, %p941
      %p943 = pneg %p942
      // Predicated region
      $region9: #{tpu_custom_call.1} parent=5 // pred_check
        _
      $region10: #{tpu_custom_call.1} parent=5 // pred_check_branch
        %945 = sbr.rel (%p942) target = $region12
      $region11: #{tpu_custom_call.1} parent=5 // pred_region
        %s946 = ssub.s32 %s103, 1
        // Predicated region
        $region13: #{tpu_custom_call.1} parent=11 // pred_check
          %p947 = pneg %p150
        $region14: #{tpu_custom_call.1} parent=11 // pred_check_branch
          %949 = sbr.rel (%p947) target = $region16
        $region15: #{tpu_custom_call.1} parent=11 // pred_region
          _
        $region16: #{tpu_custom_call.1} parent=11 // pred_fallthru
          _
        // Predicated region
        $region17: #{tpu_custom_call.1} parent=11 // pred_check
          %p950 = pneg %p171
        $region18: #{tpu_custom_call.1} parent=11 // pred_check_branch
          %952 = sbr.rel (%p950) target = $region20
        $region19: #{tpu_custom_call.1} parent=11 // pred_region
          %s954 = ssub.s32 16, 16
          %955 = vsyncadd [#allocation7], %s954
          %s957 = sshll.u32 [#allocation6], 4
          %s958 = int_to_ptr.vmem [resolvable:$true] %s957
          %960 = dma.hbm_to_vmem [thread:$0]  %s5, 16, %s958, [#allocation7]
        $region20: #{tpu_custom_call.1} parent=11 // pred_fallthru
          _
        // Predicated region
        $region21: #{tpu_custom_call.1} parent=11 // pred_check
          %p961 = pneg %p192
        $region22: #{tpu_custom_call.1} parent=11 // pred_check_branch
          %963 = sbr.rel (%p961) target = $region24
        $region23: #{tpu_custom_call.1} parent=11 // pred_region
          _
        $region24: #{tpu_custom_call.1} parent=11 // pred_fallthru
          _
        // Predicated region
        $region25: #{tpu_custom_call.1} parent=11 // pred_check
          %p964 = pneg %p213
        $region26: #{tpu_custom_call.1} parent=11 // pred_check_branch
          %966 = sbr.rel (%p964) target = $region28
        $region27: #{tpu_custom_call.1} parent=11 // pred_region
          %s968 = ssub.s32 16, 16
          %969 = vsyncadd [#allocation7], %s968
          %s971 = sshll.u32 [#allocation8], 4
          %s972 = int_to_ptr.vmem [resolvable:$true] %s971
          %974 = dma.hbm_to_vmem [thread:$0]  %s9, 16, %s972, [#allocation7]
        $region28: #{tpu_custom_call.1} parent=11 // pred_fallthru
          _
        // Predicated region
        $region29: #{tpu_custom_call.1} parent=11 // pred_check
          %p975 = pneg %p234
        $region30: #{tpu_custom_call.1} parent=11 // pred_check_branch
          %977 = sbr.rel (%p975) target = $region32
        $region31: #{tpu_custom_call.1} parent=11 // pred_region
          %s979 = ssub.s32 32, 32
          %980 = vsyncadd [#allocation10], %s979
          %s981 = sshll.u32 [#allocation9], 4
          %s982 = int_to_ptr.vmem [resolvable:$true] %s981
          %987 = dma.hbm_to_vmem [thread:$0]  %s11, 32, %s982, [#allocation10], 16, 16, 1
        $region32: #{tpu_custom_call.1} parent=11 // pred_fallthru
          _
        // Predicated region
        $region33: #{tpu_custom_call.1} parent=11 // pred_check
          %p988 = pneg %p255
        $region34: #{tpu_custom_call.1} parent=11 // pred_check_branch
          %990 = sbr.rel (%p988) target = $region36
        $region35: #{tpu_custom_call.1} parent=11 // pred_region
          %s992 = ssub.s32 32, 32
          %993 = vsyncadd [#allocation10], %s992
          %s994 = sshll.u32 [#allocation11], 4
          %s995 = int_to_ptr.vmem [resolvable:$true] %s994
          %1000 = dma.hbm_to_vmem [thread:$0]  %s13, 32, %s995, [#allocation10], 16, 16, 1
        $region36: #{tpu_custom_call.1} parent=11 // pred_fallthru
          _
        // Predicated region
        $region37: #{tpu_custom_call.1} parent=11 // pred_check
          %p1001 = pneg %p276
        $region38: #{tpu_custom_call.1} parent=11 // pred_check_branch
          %1003 = sbr.rel (%p1001) target = $region40
        $region39: #{tpu_custom_call.1} parent=11 // pred_region
          _
        $region40: #{tpu_custom_call.1} parent=11 // pred_fallthru
          _
        // Predicated region
        $region41: #{tpu_custom_call.1} parent=11 // pred_check
          %p1004 = pneg %p297
        $region42: #{tpu_custom_call.1} parent=11 // pred_check_branch
          %1006 = sbr.rel (%p1004) target = $region44
        $region43: #{tpu_custom_call.1} parent=11 // pred_region
          %s1008 = ssub.s32 96, 96
          %1009 = vsyncadd [#allocation13], %s1008
          %s1010 = sshll.u32 [#allocation12], 4
          %s1011 = int_to_ptr.vmem [resolvable:$true] %s1010
          %1016 = dma.hbm_to_vmem [thread:$0]  %s17, 96, %s1011, [#allocation13], 48, 48, 3
        $region44: #{tpu_custom_call.1} parent=11 // pred_fallthru
          _
        // Predicated region
        $region45: #{tpu_custom_call.1} parent=11 // pred_check
          %p1017 = pneg %p318
        $region46: #{tpu_custom_call.1} parent=11 // pred_check_branch
          %1019 = sbr.rel (%p1017) target = $region48
        $region47: #{tpu_custom_call.1} parent=11 // pred_region
          %s1021 = ssub.s32 2048, 2048
          %1022 = vsyncadd [#allocation13], %s1021
          %s1023 = sshll.u32 [#allocation14], 4
          %s1024 = int_to_ptr.vmem [resolvable:$true] %s1023
          %1029 = dma.hbm_to_vmem [thread:$0]  %s19, 2048, %s1024, [#allocation13], 64, 64, 4
        $region48: #{tpu_custom_call.1} parent=11 // pred_fallthru
          _
        // Predicated region
        $region49: #{tpu_custom_call.1} parent=11 // pred_check
          %p1030 = pneg %p339
        $region50: #{tpu_custom_call.1} parent=11 // pred_check_branch
          %1032 = sbr.rel (%p1030) target = $region52
        $region51: #{tpu_custom_call.1} parent=11 // pred_region
          %s1034 = ssub.s32 32, 32
          %1035 = vsyncadd [#allocation16], %s1034
          %s1036 = sshll.u32 [#allocation15], 4
          %s1037 = int_to_ptr.vmem [resolvable:$true] %s1036
          %1042 = dma.hbm_to_vmem [thread:$0]  %s21, 32, %s1037, [#allocation16], 16, 16, 1
        $region52: #{tpu_custom_call.1} parent=11 // pred_fallthru
          _
        // Predicated region
        $region53: #{tpu_custom_call.1} parent=11 // pred_check
          %p1043 = pneg %p360
        $region54: #{tpu_custom_call.1} parent=11 // pred_check_branch
          %1045 = sbr.rel (%p1043) target = $region56
        $region55: #{tpu_custom_call.1} parent=11 // pred_region
          %s1047 = ssub.s32 32, 32
          %1048 = vsyncadd [#allocation16], %s1047
          %s1049 = sshll.u32 [#allocation17], 4
          %s1050 = int_to_ptr.vmem [resolvable:$true] %s1049
          %1055 = dma.hbm_to_vmem [thread:$0]  %s23, 32, %s1050, [#allocation16], 16, 16, 1
        $region56: #{tpu_custom_call.1} parent=11 // pred_fallthru
          _
        // Predicated region
        $region57: #{tpu_custom_call.1} parent=11 // pred_check
          %p1056 = pneg %p381
        $region58: #{tpu_custom_call.1} parent=11 // pred_check_branch
          %1058 = sbr.rel (%p1056) target = $region60
        $region59: #{tpu_custom_call.1} parent=11 // pred_region
          %s1060 = ssub.s32 32, 32
          %1061 = vsyncadd [#allocation19], %s1060
          %s1062 = sshll.u32 [#allocation18], 4
          %s1063 = int_to_ptr.vmem [resolvable:$true] %s1062
          %1068 = dma.hbm_to_vmem [thread:$0]  %s25, 32, %s1063, [#allocation19], 16, 16, 1
        $region60: #{tpu_custom_call.1} parent=11 // pred_fallthru
          _
        // Predicated region
        $region61: #{tpu_custom_call.1} parent=11 // pred_check
          %p1069 = pneg %p402
        $region62: #{tpu_custom_call.1} parent=11 // pred_check_branch
          %1071 = sbr.rel (%p1069) target = $region64
        $region63: #{tpu_custom_call.1} parent=11 // pred_region
          %s1073 = ssub.s32 4096, 4096
          %1074 = vsyncadd [#allocation19], %s1073
          %s1075 = sshll.u32 [#allocation20], 4
          %s1076 = int_to_ptr.vmem [resolvable:$true] %s1075
          %1081 = dma.hbm_to_vmem [thread:$0]  %s27, 4096, %s1076, [#allocation19], 128, 128, 8
        $region64: #{tpu_custom_call.1} parent=11 // pred_fallthru
          _
        // Predicated region
        $region65: #{tpu_custom_call.1} parent=11 // pred_check
          %p1082 = pneg %p423
        $region66: #{tpu_custom_call.1} parent=11 // pred_check_branch
          %1084 = sbr.rel (%p1082) target = $region68
        $region67: #{tpu_custom_call.1} parent=11 // pred_region
          %s1086 = ssub.s32 64, 64
          %1087 = vsyncadd [#allocation22], %s1086
          %s1088 = sshll.u32 [#allocation21], 4
          %s1089 = int_to_ptr.vmem [resolvable:$true] %s1088
          %1094 = dma.hbm_to_vmem [thread:$0]  %s29, 64, %s1089, [#allocation22], 32, 32, 2
        $region68: #{tpu_custom_call.1} parent=11 // pred_fallthru
          _
        // Predicated region
        $region69: #{tpu_custom_call.1} parent=11 // pred_check
          %p1095 = pneg %p444
        $region70: #{tpu_custom_call.1} parent=11 // pred_check_branch
          %1097 = sbr.rel (%p1095) target = $region72
        $region71: #{tpu_custom_call.1} parent=11 // pred_region
          %s1099 = ssub.s32 4096, 4096
          %1100 = vsyncadd [#allocation22], %s1099
          %s1101 = sshll.u32 [#allocation23], 4
          %s1102 = int_to_ptr.vmem [resolvable:$true] %s1101
          %1107 = dma.hbm_to_vmem [thread:$0]  %s31, 4096, %s1102, [#allocation22], 64, 64, 4
        $region72: #{tpu_custom_call.1} parent=11 // pred_fallthru
          _
        // Predicated region
        $region73: #{tpu_custom_call.1} parent=11 // pred_check
          %p1108 = pneg %p465
        $region74: #{tpu_custom_call.1} parent=11 // pred_check_branch
          %1110 = sbr.rel (%p1108) target = $region76
        $region75: #{tpu_custom_call.1} parent=11 // pred_region
          %s1112 = ssub.s32 32, 32
          %1113 = vsyncadd [#allocation25], %s1112
          %s1114 = sshll.u32 [#allocation24], 4
          %s1115 = int_to_ptr.vmem [resolvable:$true] %s1114
          %1120 = dma.hbm_to_vmem [thread:$0]  %s33, 32, %s1115, [#allocation25], 16, 16, 1
        $region76: #{tpu_custom_call.1} parent=11 // pred_fallthru
          _
        // Predicated region
        $region77: #{tpu_custom_call.1} parent=11 // pred_check
          %p1121 = pneg %p486
        $region78: #{tpu_custom_call.1} parent=11 // pred_check_branch
          %1123 = sbr.rel (%p1121) target = $region80
        $region79: #{tpu_custom_call.1} parent=11 // pred_region
          %s1125 = ssub.s32 16, 16
          %1126 = vsyncadd [#allocation25], %s1125
          %s1128 = sshll.u32 [#allocation26], 4
          %s1129 = int_to_ptr.vmem [resolvable:$true] %s1128
          %1131 = dma.hbm_to_vmem [thread:$0]  %s35, 16, %s1129, [#allocation25]
        $region80: #{tpu_custom_call.1} parent=11 // pred_fallthru
          _
        // Predicated region
        $region81: #{tpu_custom_call.1} parent=11 // pred_check
          %p1132 = pneg %p507
        $region82: #{tpu_custom_call.1} parent=11 // pred_check_branch
          %1134 = sbr.rel (%p1132) target = $region84
        $region83: #{tpu_custom_call.1} parent=11 // pred_region
          %s1136 = ssub.s32 16, 16
          %1137 = vsyncadd [#allocation28], %s1136
          %s1139 = sshll.u32 [#allocation27], 4
          %s1140 = int_to_ptr.vmem [resolvable:$true] %s1139
          %1142 = dma.hbm_to_vmem [thread:$0]  %s37, 16, %s1140, [#allocation28]
        $region84: #{tpu_custom_call.1} parent=11 // pred_fallthru
          _
        // Predicated region
        $region85: #{tpu_custom_call.1} parent=11 // pred_check
          %p1143 = pneg %p528
        $region86: #{tpu_custom_call.1} parent=11 // pred_check_branch
          %1145 = sbr.rel (%p1143) target = $region88
        $region87: #{tpu_custom_call.1} parent=11 // pred_region
          %s1147 = ssub.s32 1024, 1024
          %1148 = vsyncadd [#allocation28], %s1147
          %s1149 = sshll.u32 [#allocation29], 4
          %s1150 = int_to_ptr.vmem [resolvable:$true] %s1149
          %1155 = dma.hbm_to_vmem [thread:$0]  %s39, 1024, %s1150, [#allocation28], 64, 64, 4
        $region88: #{tpu_custom_call.1} parent=11 // pred_fallthru
          _
        // Predicated region
        $region89: #{tpu_custom_call.1} parent=11 // pred_check
          %p1156 = pneg %p549
        $region90: #{tpu_custom_call.1} parent=11 // pred_check_branch
          %1158 = sbr.rel (%p1156) target = $region92
        $region91: #{tpu_custom_call.1} parent=11 // pred_region
          %s1160 = ssub.s32 16, 16
          %1161 = vsyncadd [#allocation31], %s1160
          %s1163 = sshll.u32 [#allocation30], 4
          %s1164 = int_to_ptr.vmem [resolvable:$true] %s1163
          %1166 = dma.hbm_to_vmem [thread:$0]  %s41, 16, %s1164, [#allocation31]
        $region92: #{tpu_custom_call.1} parent=11 // pred_fallthru
          _
        // Predicated region
        $region93: #{tpu_custom_call.1} parent=11 // pred_check
          %p1167 = pneg %p570
        $region94: #{tpu_custom_call.1} parent=11 // pred_check_branch
          %1169 = sbr.rel (%p1167) target = $region96
        $region95: #{tpu_custom_call.1} parent=11 // pred_region
          _
        $region96: #{tpu_custom_call.1} parent=11 // pred_fallthru
          _
        // Predicated region
        $region97: #{tpu_custom_call.1} parent=11 // pred_check
          %p1170 = pneg %p591
        $region98: #{tpu_custom_call.1} parent=11 // pred_check_branch
          %1172 = sbr.rel (%p1170) target = $region100
        $region99: #{tpu_custom_call.1} parent=11 // pred_region
          %s1174 = ssub.s32 16, 16
          %1175 = vsyncadd [#allocation31], %s1174
          %s1177 = sshll.u32 [#allocation32], 4
          %s1178 = int_to_ptr.vmem [resolvable:$true] %s1177
          %1180 = dma.hbm_to_vmem [thread:$0]  %s45, 16, %s1178, [#allocation31]
        $region100: #{tpu_custom_call.1} parent=11 // pred_fallthru
          _
        // Predicated region
        $region101: #{tpu_custom_call.1} parent=11 // pred_check
          %p1181 = pneg %p612
        $region102: #{tpu_custom_call.1} parent=11 // pred_check_branch
          %1183 = sbr.rel (%p1181) target = $region104
        $region103: #{tpu_custom_call.1} parent=11 // pred_region
          %s1185 = ssub.s32 256, 256
          %1186 = vsyncadd [#allocation34], %s1185
          %s1187 = sshll.u32 [#allocation33], 4
          %s1188 = int_to_ptr.vmem [resolvable:$true] %s1187
          %1193 = dma.hbm_to_vmem [thread:$0]  %s47, 256, %s1188, [#allocation34], 128, 128, 8
        $region104: #{tpu_custom_call.1} parent=11 // pred_fallthru
          _
        // Predicated region
        $region105: #{tpu_custom_call.1} parent=11 // pred_check
          %p1194 = pneg %p633
        $region106: #{tpu_custom_call.1} parent=11 // pred_check_branch
          %1196 = sbr.rel (%p1194) target = $region108
        $region107: #{tpu_custom_call.1} parent=11 // pred_region
          _
        $region108: #{tpu_custom_call.1} parent=11 // pred_fallthru
          _
        // Predicated region
        $region109: #{tpu_custom_call.1} parent=11 // pred_check
          %p1197 = pneg %p654
        $region110: #{tpu_custom_call.1} parent=11 // pred_check_branch
          %1199 = sbr.rel (%p1197) target = $region112
        $region111: #{tpu_custom_call.1} parent=11 // pred_region
          _
        $region112: #{tpu_custom_call.1} parent=11 // pred_fallthru
          _
        // Predicated region
        $region113: #{tpu_custom_call.1} parent=11 // pred_check
          %p1200 = pneg %p675
        $region114: #{tpu_custom_call.1} parent=11 // pred_check_branch
          %1202 = sbr.rel (%p1200) target = $region116
        $region115: #{tpu_custom_call.1} parent=11 // pred_region
          _
        $region116: #{tpu_custom_call.1} parent=11 // pred_fallthru
          _
        // Predicated region
        $region117: #{tpu_custom_call.1} parent=11 // pred_check
          %p1203 = pneg %p696
        $region118: #{tpu_custom_call.1} parent=11 // pred_check_branch
          %1205 = sbr.rel (%p1203) target = $region120
        $region119: #{tpu_custom_call.1} parent=11 // pred_region
          _
        $region120: #{tpu_custom_call.1} parent=11 // pred_fallthru
          _
        // Predicated region
        $region121: #{tpu_custom_call.1} parent=11 // pred_check
          %p1206 = pneg %p717
        $region122: #{tpu_custom_call.1} parent=11 // pred_check_branch
          %1208 = sbr.rel (%p1206) target = $region124
        $region123: #{tpu_custom_call.1} parent=11 // pred_region
          %s1210 = ssub.s32 16, 16
          %1211 = vsyncadd [#allocation34], %s1210
          %s1213 = sshll.u32 [#allocation35], 4
          %s1214 = int_to_ptr.vmem [resolvable:$true] %s1213
          %1216 = dma.hbm_to_vmem [thread:$0]  %s57, 16, %s1214, [#allocation34]
        $region124: #{tpu_custom_call.1} parent=11 // pred_fallthru
          _
        // Predicated region
        $region125: #{tpu_custom_call.1} parent=11 // pred_check
          %p1217 = pneg %p738
        $region126: #{tpu_custom_call.1} parent=11 // pred_check_branch
          %1219 = sbr.rel (%p1217) target = $region128
        $region127: #{tpu_custom_call.1} parent=11 // pred_region
          %s1221 = ssub.s32 16, 16
          %1222 = vsyncadd [#allocation37], %s1221
          %s1224 = sshll.u32 [#allocation36], 4
          %s1225 = int_to_ptr.vmem [resolvable:$true] %s1224
          %1227 = dma.hbm_to_vmem [thread:$0]  %s59, 16, %s1225, [#allocation37]
        $region128: #{tpu_custom_call.1} parent=11 // pred_fallthru
          _
        // Predicated region
        $region129: #{tpu_custom_call.1} parent=11 // pred_check
          %p1228 = pneg %p759
        $region130: #{tpu_custom_call.1} parent=11 // pred_check_branch
          %1230 = sbr.rel (%p1228) target = $region132
        $region131: #{tpu_custom_call.1} parent=11 // pred_region
          %s1232 = ssub.s32 16, 16
          %1233 = vsyncadd [#allocation37], %s1232
          %s1235 = sshll.u32 [#allocation38], 4
          %s1236 = int_to_ptr.vmem [resolvable:$true] %s1235
          %1238 = dma.hbm_to_vmem [thread:$0]  %s61, 16, %s1236, [#allocation37]
        $region132: #{tpu_custom_call.1} parent=11 // pred_fallthru
          _
        // Predicated region
        $region133: #{tpu_custom_call.1} parent=11 // pred_check
          %p1239 = pneg %p780
        $region134: #{tpu_custom_call.1} parent=11 // pred_check_branch
          %1241 = sbr.rel (%p1239) target = $region136
        $region135: #{tpu_custom_call.1} parent=11 // pred_region
          %s1243 = ssub.s32 16, 16
          %1244 = vsyncadd [#allocation40], %s1243
          %s1246 = sshll.u32 [#allocation39], 4
          %s1247 = int_to_ptr.vmem [resolvable:$true] %s1246
          %1249 = dma.hbm_to_vmem [thread:$0]  %s63, 16, %s1247, [#allocation40]
        $region136: #{tpu_custom_call.1} parent=11 // pred_fallthru
          _
        // Predicated region
        $region137: #{tpu_custom_call.1} parent=11 // pred_check
          %p1250 = pneg %p801
        $region138: #{tpu_custom_call.1} parent=11 // pred_check_branch
          %1252 = sbr.rel (%p1250) target = $region140
        $region139: #{tpu_custom_call.1} parent=11 // pred_region
          _
        $region140: #{tpu_custom_call.1} parent=11 // pred_fallthru
          _
        // Predicated region
        $region141: #{tpu_custom_call.1} parent=11 // pred_check
          %p1253 = pneg %p822
        $region142: #{tpu_custom_call.1} parent=11 // pred_check_branch
          %1255 = sbr.rel (%p1253) target = $region144
        $region143: #{tpu_custom_call.1} parent=11 // pred_region
          _
        $region144: #{tpu_custom_call.1} parent=11 // pred_fallthru
          _
        // Predicated region
        $region145: #{tpu_custom_call.1} parent=11 // pred_check
          %p1256 = pneg %p843
        $region146: #{tpu_custom_call.1} parent=11 // pred_check_branch
          %1258 = sbr.rel (%p1256) target = $region148
        $region147: #{tpu_custom_call.1} parent=11 // pred_region
          %s1260 = ssub.s32 4096, 4096
          %1261 = vsyncadd [#allocation40], %s1260
          %s1262 = sshll.u32 [#allocation41], 4
          %s1263 = int_to_ptr.vmem [resolvable:$true] %s1262
          %1268 = dma.hbm_to_vmem [thread:$0]  %s69, 4096, %s1263, [#allocation40], 256, 256, 16
        $region148: #{tpu_custom_call.1} parent=11 // pred_fallthru
          _
        // Predicated region
        $region149: #{tpu_custom_call.1} parent=11 // pred_check
          %p1269 = pneg %p864
        $region150: #{tpu_custom_call.1} parent=11 // pred_check_branch
          %1271 = sbr.rel (%p1269) target = $region152
        $region151: #{tpu_custom_call.1} parent=11 // pred_region
          _
        $region152: #{tpu_custom_call.1} parent=11 // pred_fallthru
          _
        // Predicated region
        $region153: #{tpu_custom_call.1} parent=11 // pred_check
          %p1272 = pneg %p885
        $region154: #{tpu_custom_call.1} parent=11 // pred_check_branch
          %1274 = sbr.rel (%p1272) target = $region156
        $region155: #{tpu_custom_call.1} parent=11 // pred_region
          _
        $region156: #{tpu_custom_call.1} parent=11 // pred_fallthru
          _
        // Predicated region
        $region157: #{tpu_custom_call.1} parent=11 // pred_check
          %p1275 = pneg %p906
        $region158: #{tpu_custom_call.1} parent=11 // pred_check_branch
          %1277 = sbr.rel (%p1275) target = $region160
        $region159: #{tpu_custom_call.1} parent=11 // pred_region
          _
        $region160: #{tpu_custom_call.1} parent=11 // pred_fallthru
          _
      $region12: #{tpu_custom_call.1} parent=5 // pred_fallthru
        _
      %p1278 = scmp.lt.s32.totalorder %s103, 2
      // Predicated region
      $region161: #{tpu_custom_call.1} parent=5 // pred_check
        %p1279 = pneg %p1278
      $region162: #{tpu_custom_call.1} parent=5 // pred_check_branch
        %1281 = sbr.rel (%p1279) target = $region164
      $region163: #{tpu_custom_call.1} parent=5 // pred_region
        // Predicated region
        $region165: #{tpu_custom_call.1} parent=163 // pred_check
          %p1282 = pneg %p123
        $region166: #{tpu_custom_call.1} parent=163 // pred_check_branch
          %1284 = sbr.rel (%p1282) target = $region168
        $region167: #{tpu_custom_call.1} parent=163 // pred_region
          %s1285 = sand.u32 %s113, 1
          %s1286 = scalar_lea.sflag [#allocation4], %s1285
          %s1287 = sand.u32 %s113, 1
          %s1288 = smul.addr %s1287, 24
          %s1289 = scalar_lea.vmem [#allocation3], %s1288
          %s1291 = ssub.s32 384, 384
          %1292 = vsyncadd %s1286, %s1291
          %s1293 = smul.addr %s103, 6
          %s1294 = smul.addr %s1293, 64
          %s1295 = scalar_lea.hbm %s1, %s1294
          %s1297 = sshll.u32 %s1289, 4
          %s1298 = int_to_ptr.vmem [resolvable:$true] %s1297
          %1300 = dma.hbm_to_vmem [thread:$0]  %s1295, 384, %s1298, %s1286
        $region168: #{tpu_custom_call.1} parent=163 // pred_fallthru
          _
      $region164: #{tpu_custom_call.1} parent=5 // pred_fallthru
        _
      %p1301 = scmp.le.s32.totalorder 1, %s103
      %p1302 = scmp.lt.s32.totalorder %s103, 3
      %p1303 = pnand %p1301, %p1302
      %p1304 = pneg %p1303
      // Predicated region
      $region169: #{tpu_custom_call.1} parent=5 // pred_check
        _
      $region170: #{tpu_custom_call.1} parent=5 // pred_check_branch
        %1306 = sbr.rel (%p1303) target = $region172
      $region171: #{tpu_custom_call.1} parent=5 // pred_region
        %s1307 = ssub.s32 %s103, 1
        %s1308 = sand.u32 %s116, 1
        %s1309 = scalar_lea.sflag [#allocation4], %s1308
        %s1310 = sand.u32 %s116, 1
        %s1311 = smul.addr %s1310, 24
        %s1312 = scalar_lea.vmem [#allocation3], %s1311
        // Predicated region
        $region173: #{tpu_custom_call.1} parent=171 // pred_check
          %p1313 = pneg %p129
        $region174: #{tpu_custom_call.1} parent=171 // pred_check_branch
          %1315 = sbr.rel (%p1313) target = $region176
        $region175: #{tpu_custom_call.1} parent=171 // pred_region
          %1316 = dma.done %s1309, 384
        $region176: #{tpu_custom_call.1} parent=171 // pred_fallthru
          _
        // Predicated region
        $region177: #{tpu_custom_call.1} parent=171 // pred_check
          %p1317 = pneg %p171
        $region178: #{tpu_custom_call.1} parent=171 // pred_check_branch
          %1319 = sbr.rel (%p1317) target = $region180
        $region179: #{tpu_custom_call.1} parent=171 // pred_region
          %1320 = dma.done [#allocation7], 16
        $region180: #{tpu_custom_call.1} parent=171 // pred_fallthru
          _
        // Predicated region
        $region181: #{tpu_custom_call.1} parent=171 // pred_check
          %p1321 = pneg %p213
        $region182: #{tpu_custom_call.1} parent=171 // pred_check_branch
          %1323 = sbr.rel (%p1321) target = $region184
        $region183: #{tpu_custom_call.1} parent=171 // pred_region
          %1324 = dma.done [#allocation7], 16
        $region184: #{tpu_custom_call.1} parent=171 // pred_fallthru
          _
        // Predicated region
        $region185: #{tpu_custom_call.1} parent=171 // pred_check
          %p1325 = pneg %p234
        $region186: #{tpu_custom_call.1} parent=171 // pred_check_branch
          %1327 = sbr.rel (%p1325) target = $region188
        $region187: #{tpu_custom_call.1} parent=171 // pred_region
          %1328 = dma.done [#allocation10], 32
        $region188: #{tpu_custom_call.1} parent=171 // pred_fallthru
          _
        // Predicated region
        $region189: #{tpu_custom_call.1} parent=171 // pred_check
          %p1329 = pneg %p255
        $region190: #{tpu_custom_call.1} parent=171 // pred_check_branch
          %1331 = sbr.rel (%p1329) target = $region192
        $region191: #{tpu_custom_call.1} parent=171 // pred_region
          %1332 = dma.done [#allocation10], 32
        $region192: #{tpu_custom_call.1} parent=171 // pred_fallthru
          _
        // Predicated region
        $region193: #{tpu_custom_call.1} parent=171 // pred_check
          %p1333 = pneg %p297
        $region194: #{tpu_custom_call.1} parent=171 // pred_check_branch
          %1335 = sbr.rel (%p1333) target = $region196
        $region195: #{tpu_custom_call.1} parent=171 // pred_region
          %1336 = dma.done [#allocation13], 96
        $region196: #{tpu_custom_call.1} parent=171 // pred_fallthru
          _
        // Predicated region
        $region197: #{tpu_custom_call.1} parent=171 // pred_check
          %p1337 = pneg %p318
        $region198: #{tpu_custom_call.1} parent=171 // pred_check_branch
          %1339 = sbr.rel (%p1337) target = $region200
        $region199: #{tpu_custom_call.1} parent=171 // pred_region
          %1340 = dma.done [#allocation13], 2048
        $region200: #{tpu_custom_call.1} parent=171 // pred_fallthru
          _
        // Predicated region
        $region201: #{tpu_custom_call.1} parent=171 // pred_check
          %p1341 = pneg %p339
        $region202: #{tpu_custom_call.1} parent=171 // pred_check_branch
          %1343 = sbr.rel (%p1341) target = $region204
        $region203: #{tpu_custom_call.1} parent=171 // pred_region
          %1344 = dma.done [#allocation16], 32
        $region204: #{tpu_custom_call.1} parent=171 // pred_fallthru
          _
        // Predicated region
        $region205: #{tpu_custom_call.1} parent=171 // pred_check
          %p1345 = pneg %p360
        $region206: #{tpu_custom_call.1} parent=171 // pred_check_branch
          %1347 = sbr.rel (%p1345) target = $region208
        $region207: #{tpu_custom_call.1} parent=171 // pred_region
          %1348 = dma.done [#allocation16], 32
        $region208: #{tpu_custom_call.1} parent=171 // pred_fallthru
          _
        // Predicated region
        $region209: #{tpu_custom_call.1} parent=171 // pred_check
          %p1349 = pneg %p381
        $region210: #{tpu_custom_call.1} parent=171 // pred_check_branch
          %1351 = sbr.rel (%p1349) target = $region212
        $region211: #{tpu_custom_call.1} parent=171 // pred_region
          %1352 = dma.done [#allocation19], 32
        $region212: #{tpu_custom_call.1} parent=171 // pred_fallthru
          _
        // Predicated region
        $region213: #{tpu_custom_call.1} parent=171 // pred_check
          %p1353 = pneg %p402
        $region214: #{tpu_custom_call.1} parent=171 // pred_check_branch
          %1355 = sbr.rel (%p1353) target = $region216
        $region215: #{tpu_custom_call.1} parent=171 // pred_region
          %1356 = dma.done [#allocation19], 4096
        $region216: #{tpu_custom_call.1} parent=171 // pred_fallthru
          _
        // Predicated region
        $region217: #{tpu_custom_call.1} parent=171 // pred_check
          %p1357 = pneg %p423
        $region218: #{tpu_custom_call.1} parent=171 // pred_check_branch
          %1359 = sbr.rel (%p1357) target = $region220
        $region219: #{tpu_custom_call.1} parent=171 // pred_region
          %1360 = dma.done [#allocation22], 64
        $region220: #{tpu_custom_call.1} parent=171 // pred_fallthru
          _
        // Predicated region
        $region221: #{tpu_custom_call.1} parent=171 // pred_check
          %p1361 = pneg %p444
        $region222: #{tpu_custom_call.1} parent=171 // pred_check_branch
          %1363 = sbr.rel (%p1361) target = $region224
        $region223: #{tpu_custom_call.1} parent=171 // pred_region
          %1364 = dma.done [#allocation22], 4096
        $region224: #{tpu_custom_call.1} parent=171 // pred_fallthru
          _
        // Predicated region
        $region225: #{tpu_custom_call.1} parent=171 // pred_check
          %p1365 = pneg %p465
        $region226: #{tpu_custom_call.1} parent=171 // pred_check_branch
          %1367 = sbr.rel (%p1365) target = $region228
        $region227: #{tpu_custom_call.1} parent=171 // pred_region
          %1368 = dma.done [#allocation25], 32
        $region228: #{tpu_custom_call.1} parent=171 // pred_fallthru
          _
        // Predicated region
        $region229: #{tpu_custom_call.1} parent=171 // pred_check
          %p1369 = pneg %p486
        $region230: #{tpu_custom_call.1} parent=171 // pred_check_branch
          %1371 = sbr.rel (%p1369) target = $region232
        $region231: #{tpu_custom_call.1} parent=171 // pred_region
          %1372 = dma.done [#allocation25], 16
        $region232: #{tpu_custom_call.1} parent=171 // pred_fallthru
          _
        // Predicated region
        $region233: #{tpu_custom_call.1} parent=171 // pred_check
          %p1373 = pneg %p507
        $region234: #{tpu_custom_call.1} parent=171 // pred_check_branch
          %1375 = sbr.rel (%p1373) target = $region236
        $region235: #{tpu_custom_call.1} parent=171 // pred_region
          %1376 = dma.done [#allocation28], 16
        $region236: #{tpu_custom_call.1} parent=171 // pred_fallthru
          _
        // Predicated region
        $region237: #{tpu_custom_call.1} parent=171 // pred_check
          %p1377 = pneg %p528
        $region238: #{tpu_custom_call.1} parent=171 // pred_check_branch
          %1379 = sbr.rel (%p1377) target = $region240
        $region239: #{tpu_custom_call.1} parent=171 // pred_region
          %1380 = dma.done [#allocation28], 1024
        $region240: #{tpu_custom_call.1} parent=171 // pred_fallthru
          _
        // Predicated region
        $region241: #{tpu_custom_call.1} parent=171 // pred_check
          %p1381 = pneg %p549
        $region242: #{tpu_custom_call.1} parent=171 // pred_check_branch
          %1383 = sbr.rel (%p1381) target = $region244
        $region243: #{tpu_custom_call.1} parent=171 // pred_region
          %1384 = dma.done [#allocation31], 16
        $region244: #{tpu_custom_call.1} parent=171 // pred_fallthru
          _
        // Predicated region
        $region245: #{tpu_custom_call.1} parent=171 // pred_check
          %p1385 = pneg %p591
        $region246: #{tpu_custom_call.1} parent=171 // pred_check_branch
          %1387 = sbr.rel (%p1385) target = $region248
        $region247: #{tpu_custom_call.1} parent=171 // pred_region
          %1388 = dma.done [#allocation31], 16
        $region248: #{tpu_custom_call.1} parent=171 // pred_fallthru
          _
        // Predicated region
        $region249: #{tpu_custom_call.1} parent=171 // pred_check
          %p1389 = pneg %p612
        $region250: #{tpu_custom_call.1} parent=171 // pred_check_branch
          %1391 = sbr.rel (%p1389) target = $region252
        $region251: #{tpu_custom_call.1} parent=171 // pred_region
          %1392 = dma.done [#allocation34], 256
        $region252: #{tpu_custom_call.1} parent=171 // pred_fallthru
          _
        // Predicated region
        $region253: #{tpu_custom_call.1} parent=171 // pred_check
          %p1393 = pneg %p717
        $region254: #{tpu_custom_call.1} parent=171 // pred_check_branch
          %1395 = sbr.rel (%p1393) target = $region256
        $region255: #{tpu_custom_call.1} parent=171 // pred_region
          %1396 = dma.done [#allocation34], 16
        $region256: #{tpu_custom_call.1} parent=171 // pred_fallthru
          _
        // Predicated region
        $region257: #{tpu_custom_call.1} parent=171 // pred_check
          %p1397 = pneg %p738
        $region258: #{tpu_custom_call.1} parent=171 // pred_check_branch
          %1399 = sbr.rel (%p1397) target = $region260
        $region259: #{tpu_custom_call.1} parent=171 // pred_region
          %1400 = dma.done [#allocation37], 16
        $region260: #{tpu_custom_call.1} parent=171 // pred_fallthru
          _
        // Predicated region
        $region261: #{tpu_custom_call.1} parent=171 // pred_check
          %p1401 = pneg %p759
        $region262: #{tpu_custom_call.1} parent=171 // pred_check_branch
          %1403 = sbr.rel (%p1401) target = $region264
        $region263: #{tpu_custom_call.1} parent=171 // pred_region
          %1404 = dma.done [#allocation37], 16
        $region264: #{tpu_custom_call.1} parent=171 // pred_fallthru
          _
        // Predicated region
        $region265: #{tpu_custom_call.1} parent=171 // pred_check
          %p1405 = pneg %p780
        $region266: #{tpu_custom_call.1} parent=171 // pred_check_branch
          %1407 = sbr.rel (%p1405) target = $region268
        $region267: #{tpu_custom_call.1} parent=171 // pred_region
          %1408 = dma.done [#allocation40], 16
        $region268: #{tpu_custom_call.1} parent=171 // pred_fallthru
          _
        // Predicated region
        $region269: #{tpu_custom_call.1} parent=171 // pred_check
          %p1409 = pneg %p843
        $region270: #{tpu_custom_call.1} parent=171 // pred_check_branch
          %1411 = sbr.rel (%p1409) target = $region272
        $region271: #{tpu_custom_call.1} parent=171 // pred_region
          %1412 = dma.done [#allocation40], 4096
        $region272: #{tpu_custom_call.1} parent=171 // pred_fallthru
          _
        %s1413 = sand.u32 %s116, 1
        %s1414 = scalar_lea.sflag [#allocation4], %s1413
        %s1415 = sand.u32 %s116, 1
        %s1416 = smul.addr %s1415, 24
        %s1417 = scalar_lea.vmem [#allocation3], %s1416
        %p1418 = pneg %p129
        %p1419 = pneg %p126
        %p1420 = pneg %p150
        %p1421 = pneg %p147
        %p1422 = pneg %p171
        %p1423 = pneg %p168
        %p1424 = pneg %p192
        %p1425 = pneg %p189
        %p1426 = pneg %p213
        %p1427 = pneg %p210
        %p1428 = pneg %p234
        %p1429 = pneg %p231
        %p1430 = pneg %p255
        %p1431 = pneg %p252
        %p1432 = pneg %p276
        %p1433 = pneg %p273
        %p1434 = pneg %p297
        %p1435 = pneg %p294
        %p1436 = pneg %p318
        %p1437 = pneg %p315
        %p1438 = pneg %p339
        %p1439 = pneg %p336
        %p1440 = pneg %p360
        %p1441 = pneg %p357
        %p1442 = pneg %p381
        %p1443 = pneg %p378
        %p1444 = pneg %p402
        %p1445 = pneg %p399
        %p1446 = pneg %p423
        %p1447 = pneg %p420
        %p1448 = pneg %p444
        %p1449 = pneg %p441
        %p1450 = pneg %p465
        %p1451 = pneg %p462
        %p1452 = pneg %p486
        %p1453 = pneg %p483
        %p1454 = pneg %p507
        %p1455 = pneg %p504
        %p1456 = pneg %p528
        %p1457 = pneg %p525
        %p1458 = pneg %p549
        %p1459 = pneg %p546
        %p1460 = pneg %p570
        %p1461 = pneg %p567
        %p1462 = pneg %p591
        %p1463 = pneg %p588
        %p1464 = pneg %p612
        %p1465 = pneg %p609
        %p1466 = pneg %p633
        %p1467 = pneg %p630
        %p1468 = pneg %p654
        %p1469 = pneg %p651
        %p1470 = pneg %p675
        %p1471 = pneg %p672
        %p1472 = pneg %p696
        %p1473 = pneg %p693
        %p1474 = pneg %p717
        %p1475 = pneg %p714
        %p1476 = pneg %p738
        %p1477 = pneg %p735
        %p1478 = pneg %p759
        %p1479 = pneg %p756
        %p1480 = pneg %p780
        %p1481 = pneg %p777
        %p1482 = pneg %p801
        %p1483 = pneg %p798
        %p1484 = pneg %p822
        %p1485 = pneg %p819
        %p1486 = pneg %p843
        %p1487 = pneg %p840
        %p1488 = pneg %p864
        %p1489 = pneg %p861
        %p1490 = pneg %p885
        %p1491 = pneg %p882
        %p1492 = pneg %p906
        %p1493 = pneg %p903
        %p1494 = pneg %p932
        %p1495 = pneg %p929
        %s1496 = sand.u32 %s919, 1
        %s1497 = scalar_lea.sflag [#allocation5], %s1496
        %s1498 = sand.u32 %s919, 1
        %s1499 = scalar_lea.vmem [#allocation42], %s1498
        %v1501 = vld [vmem:[%s1312] sm:$0xff]
        %v1502 = vld [vmem:[%s1312 + $0x8] sm:$0xff]
        %v1503 = vld [vmem:[%s1312 + $0x10] sm:$0xff]
        %v1504 = vld [vmem:[%s7] sm:$0xf]
        %v1505 = vld [vmem:[%s7 + $0x4] sm:$0xf]
        %v1506 = vld [vmem:[%s7 + $0x8] sm:$0xf]
        %v1507 = vld [vmem:[%s7 + $0xc] sm:$0xf]
        %v1508 = vld [vmem:[%s7 + $0x10] sm:$0xf]
        %v1509 = vld [vmem:[%s7 + $0x14] sm:$0xf]
        %v1510 = vld [vmem:[%s7 + $0x18] sm:$0xf]
        %v1511 = vld [vmem:[%s7 + $0x1c] sm:$0xf]
        %v1512 = vld [vmem:[%s7 + $0x20] sm:$0xf]
        %v1513 = vld [vmem:[%s7 + $0x24] sm:$0xf]
        %v1514 = vld [vmem:[%s7 + $0x28] sm:$0xf]
        %v1515 = vld [vmem:[%s7 + $0x2c] sm:$0xf]
        %v1516 = vld [vmem:[%s7 + $0x30] sm:$0xf]
        %v1517 = vld [vmem:[%s7 + $0x34] sm:$0xf]
        %v1518 = vld [vmem:[%s7 + $0x38] sm:$0xf]
        %v1519 = vld [vmem:[%s7 + $0x3c] sm:$0xf]
        %v1520 = vld [vmem:[%s7 + $0x40] sm:$0xf]
        %v1521 = vld [vmem:[%s7 + $0x44] sm:$0xf]
        %v1522 = vld [vmem:[%s7 + $0x48] sm:$0xf]
        %v1523 = vld [vmem:[%s7 + $0x4c] sm:$0xf]
        %v1524 = vld [vmem:[%s7 + $0x50] sm:$0xf]
        %v1525 = vld [vmem:[%s7 + $0x54] sm:$0xf]
        %v1526 = vld [vmem:[%s7 + $0x58] sm:$0xf]
        %v1527 = vld [vmem:[%s7 + $0x5c] sm:$0xf]
        %v1528 = vld [vmem:[%s7 + $0x60] sm:$0xf]
        %v1529 = vld [vmem:[%s7 + $0x64] sm:$0xf]
        %v1530 = vld [vmem:[%s7 + $0x68] sm:$0xf]
        %v1531 = vld [vmem:[%s7 + $0x6c] sm:$0xf]
        %v1532 = vld [vmem:[%s7 + $0x70] sm:$0xf]
        %v1533 = vld [vmem:[%s7 + $0x74] sm:$0xf]
        %v1534 = vld [vmem:[%s7 + $0x78] sm:$0xf]
        %v1535 = vld [vmem:[%s7 + $0x7c] sm:$0xf]
        %v1536 = vld [vmem:[%s7 + $0x80] sm:$0xf]
        %v1537 = vld [vmem:[%s7 + $0x84] sm:$0xf]
        %v1538 = vld [vmem:[%s7 + $0x88] sm:$0xf]
        %v1539 = vld [vmem:[%s7 + $0x8c] sm:$0xf]
        %v1540 = vld [vmem:[%s7 + $0x90] sm:$0xf]
        %v1541 = vld [vmem:[%s7 + $0x94] sm:$0xf]
        %v1542 = vld [vmem:[%s7 + $0x98] sm:$0xf]
        %v1543 = vld [vmem:[%s7 + $0x9c] sm:$0xf]
        %v1544 = vld [vmem:[%s7 + $0xa0] sm:$0xf]
        %v1545 = vld [vmem:[%s7 + $0xa4] sm:$0xf]
        %v1546 = vld [vmem:[%s7 + $0xa8] sm:$0xf]
        %v1547 = vld [vmem:[%s7 + $0xac] sm:$0xf]
        %v1548 = vld [vmem:[%s7 + $0xb0] sm:$0xf]
        %v1549 = vld [vmem:[%s7 + $0xb4] sm:$0xf]
        %v1550 = vld [vmem:[%s7 + $0xb8] sm:$0xf]
        %v1551 = vld [vmem:[%s7 + $0xbc] sm:$0xf]
        %v1552 = vld [vmem:[%s7 + $0xc0] sm:$0xf]
        %v1553 = vld [vmem:[%s7 + $0xc4] sm:$0xf]
        %v1554 = vld [vmem:[%s7 + $0xc8] sm:$0xf]
        %v1555 = vld [vmem:[%s7 + $0xcc] sm:$0xf]
        %v1556 = vld [vmem:[%s7 + $0xd0] sm:$0xf]
        %v1557 = vld [vmem:[%s7 + $0xd4] sm:$0xf]
        %v1558 = vld [vmem:[%s7 + $0xd8] sm:$0xf]
        %v1559 = vld [vmem:[%s7 + $0xdc] sm:$0xf]
        %v1560 = vld [vmem:[%s7 + $0xe0] sm:$0xf]
        %v1561 = vld [vmem:[%s7 + $0xe4] sm:$0xf]
        %v1562 = vld [vmem:[%s7 + $0xe8] sm:$0xf]
        %v1563 = vld [vmem:[%s7 + $0xec] sm:$0xf]
        %v1564 = vld [vmem:[%s7 + $0xf0] sm:$0xf]
        %v1565 = vld [vmem:[%s7 + $0xf4] sm:$0xf]
        %v1566 = vld [vmem:[%s7 + $0xf8] sm:$0xf]
        %v1567 = vld [vmem:[%s7 + $0xfc] sm:$0xf]
        %v1568 = vld [vmem:[%s7 + $0x100] sm:$0xf]
        %v1569 = vld [vmem:[%s7 + $0x104] sm:$0xf]
        %v1570 = vld [vmem:[%s7 + $0x108] sm:$0xf]
        %v1571 = vld [vmem:[%s7 + $0x10c] sm:$0xf]
        %v1572 = vld [vmem:[%s7 + $0x110] sm:$0xf]
        %v1573 = vld [vmem:[%s7 + $0x114] sm:$0xf]
        %v1574 = vld [vmem:[%s7 + $0x118] sm:$0xf]
        %v1575 = vld [vmem:[%s7 + $0x11c] sm:$0xf]
        %v1576 = vld [vmem:[%s7 + $0x120] sm:$0xf]
        %v1577 = vld [vmem:[%s7 + $0x124] sm:$0xf]
        %v1578 = vld [vmem:[%s7 + $0x128] sm:$0xf]
        %v1579 = vld [vmem:[%s7 + $0x12c] sm:$0xf]
        %v1580 = vld [vmem:[%s7 + $0x130] sm:$0xf]
        %v1581 = vld [vmem:[%s7 + $0x134] sm:$0xf]
        %v1582 = vld [vmem:[%s7 + $0x138] sm:$0xf]
        %v1583 = vld [vmem:[%s7 + $0x13c] sm:$0xf]
        %v1584 = vld [vmem:[%s7 + $0x140] sm:$0xf]
        %v1585 = vld [vmem:[%s7 + $0x144] sm:$0xf]
        %v1586 = vld [vmem:[%s7 + $0x148] sm:$0xf]
        %v1587 = vld [vmem:[%s7 + $0x14c] sm:$0xf]
        %v1588 = vld [vmem:[%s7 + $0x150] sm:$0xf]
        %v1589 = vld [vmem:[%s7 + $0x154] sm:$0xf]
        %v1590 = vld [vmem:[%s7 + $0x158] sm:$0xf]
        %v1591 = vld [vmem:[%s7 + $0x15c] sm:$0xf]
        %v1592 = vld [vmem:[%s7 + $0x160] sm:$0xf]
        %v1593 = vld [vmem:[%s7 + $0x164] sm:$0xf]
        %v1594 = vld [vmem:[%s7 + $0x168] sm:$0xf]
        %v1595 = vld [vmem:[%s7 + $0x16c] sm:$0xf]
        %v1596 = vld [vmem:[%s7 + $0x170] sm:$0xf]
        %v1597 = vld [vmem:[%s7 + $0x174] sm:$0xf]
        %v1598 = vld [vmem:[%s7 + $0x178] sm:$0xf]
        %v1599 = vld [vmem:[%s7 + $0x17c] sm:$0xf]
        %v1603 = vcombine.high %v1501, %v1501
        %v1604 = vcombine.high %v1502, %v1502
        %v1605 = vcombine.high %v1503, %v1503
        %v1609 = vpack.c.bf16 %v1501, %v1501
        %v1610 = vpack.c.bf16 %v1603, %v1603
        %v1611 = vpack.c.bf16 %v1502, %v1502
        %v1612 = vpack.c.bf16 %v1604, %v1604
        %v1613 = vpack.c.bf16 %v1503, %v1503
        %v1614 = vpack.c.bf16 %v1605, %v1605
        %v1615 = vld [vmem:[#allocation8] sm:$0x1]
        %v1617 = vlaneseq
        %v1618 = vshrl.u32 %v1617, 7
        %v1619 = vsub.s32 0, %v1618
        %v1620 = vrot.slane %v1615, %v1619
        %v1718 = vunpack.c.l.b16 %v1504
        %v1719 = vunpack.c.l.b16 %v1505
        %v1720 = vunpack.c.l.b16 %v1506
        %v1721 = vunpack.c.l.b16 %v1507
        %v1722 = vunpack.c.l.b16 %v1508
        %v1723 = vunpack.c.l.b16 %v1509
        %v1724 = vunpack.c.l.b16 %v1510
        %v1725 = vunpack.c.l.b16 %v1511
        %v1726 = vunpack.c.l.b16 %v1512
        %v1727 = vunpack.c.l.b16 %v1513
        %v1728 = vunpack.c.l.b16 %v1514
        %v1729 = vunpack.c.l.b16 %v1515
        %v1730 = vunpack.c.l.b16 %v1516
        %v1731 = vunpack.c.l.b16 %v1517
        %v1732 = vunpack.c.l.b16 %v1518
        %v1733 = vunpack.c.l.b16 %v1519
        %v1734 = vunpack.c.l.b16 %v1520
        %v1735 = vunpack.c.l.b16 %v1521
        %v1736 = vunpack.c.l.b16 %v1522
        %v1737 = vunpack.c.l.b16 %v1523
        %v1738 = vunpack.c.l.b16 %v1524
        %v1739 = vunpack.c.l.b16 %v1525
        %v1740 = vunpack.c.l.b16 %v1526
        %v1741 = vunpack.c.l.b16 %v1527
        %v1742 = vunpack.c.l.b16 %v1528
        %v1743 = vunpack.c.l.b16 %v1529
        %v1744 = vunpack.c.l.b16 %v1530
        %v1745 = vunpack.c.l.b16 %v1531
        %v1746 = vunpack.c.l.b16 %v1532
        %v1747 = vunpack.c.l.b16 %v1533
        %v1748 = vunpack.c.l.b16 %v1534
        %v1749 = vunpack.c.l.b16 %v1535
        %v1750 = vunpack.c.l.b16 %v1536
        %v1751 = vunpack.c.l.b16 %v1537
        %v1752 = vunpack.c.l.b16 %v1538
        %v1753 = vunpack.c.l.b16 %v1539
        %v1754 = vunpack.c.l.b16 %v1540
        %v1755 = vunpack.c.l.b16 %v1541
        %v1756 = vunpack.c.l.b16 %v1542
        %v1757 = vunpack.c.l.b16 %v1543
        %v1758 = vunpack.c.l.b16 %v1544
        %v1759 = vunpack.c.l.b16 %v1545
        %v1760 = vunpack.c.l.b16 %v1546
        %v1761 = vunpack.c.l.b16 %v1547
        %v1762 = vunpack.c.l.b16 %v1548
        %v1763 = vunpack.c.l.b16 %v1549
        %v1764 = vunpack.c.l.b16 %v1550
        %v1765 = vunpack.c.l.b16 %v1551
        %v1766 = vunpack.c.l.b16 %v1552
        %v1767 = vunpack.c.l.b16 %v1553
        %v1768 = vunpack.c.l.b16 %v1554
        %v1769 = vunpack.c.l.b16 %v1555
        %v1770 = vunpack.c.l.b16 %v1556
        %v1771 = vunpack.c.l.b16 %v1557
        %v1772 = vunpack.c.l.b16 %v1558
        %v1773 = vunpack.c.l.b16 %v1559
        %v1774 = vunpack.c.l.b16 %v1560
        %v1775 = vunpack.c.l.b16 %v1561
        %v1776 = vunpack.c.l.b16 %v1562
        %v1777 = vunpack.c.l.b16 %v1563
        %v1778 = vunpack.c.l.b16 %v1564
        %v1779 = vunpack.c.l.b16 %v1565
        %v1780 = vunpack.c.l.b16 %v1566
        %v1781 = vunpack.c.l.b16 %v1567
        %v1782 = vunpack.c.l.b16 %v1568
        %v1783 = vunpack.c.l.b16 %v1569
        %v1784 = vunpack.c.l.b16 %v1570
        %v1785 = vunpack.c.l.b16 %v1571
        %v1786 = vunpack.c.l.b16 %v1572
        %v1787 = vunpack.c.l.b16 %v1573
        %v1788 = vunpack.c.l.b16 %v1574
        %v1789 = vunpack.c.l.b16 %v1575
        %v1790 = vunpack.c.l.b16 %v1576
        %v1791 = vunpack.c.l.b16 %v1577
        %v1792 = vunpack.c.l.b16 %v1578
        %v1793 = vunpack.c.l.b16 %v1579
        %v1794 = vunpack.c.l.b16 %v1580
        %v1795 = vunpack.c.l.b16 %v1581
        %v1796 = vunpack.c.l.b16 %v1582
        %v1797 = vunpack.c.l.b16 %v1583
        %v1798 = vunpack.c.l.b16 %v1584
        %v1799 = vunpack.c.l.b16 %v1585
        %v1800 = vunpack.c.l.b16 %v1586
        %v1801 = vunpack.c.l.b16 %v1587
        %v1802 = vunpack.c.l.b16 %v1588
        %v1803 = vunpack.c.l.b16 %v1589
        %v1804 = vunpack.c.l.b16 %v1590
        %v1805 = vunpack.c.l.b16 %v1591
        %v1806 = vunpack.c.l.b16 %v1592
        %v1807 = vunpack.c.l.b16 %v1593
        %v1808 = vunpack.c.l.b16 %v1594
        %v1809 = vunpack.c.l.b16 %v1595
        %v1810 = vunpack.c.l.b16 %v1596
        %v1811 = vunpack.c.l.b16 %v1597
        %v1812 = vunpack.c.l.b16 %v1598
        %v1813 = vunpack.c.l.b16 %v1599
        %v1814 = vpack.c.b16 %v1719, %v1718
        %v1815 = vpack.c.b16 %v1721, %v1720
        %v1816 = vpack.c.b16 %v1723, %v1722
        %v1817 = vpack.c.b16 %v1725, %v1724
        %v1818 = vpack.c.b16 %v1727, %v1726
        %v1819 = vpack.c.b16 %v1729, %v1728
        %v1820 = vpack.c.b16 %v1731, %v1730
        %v1821 = vpack.c.b16 %v1733, %v1732
        %v1822 = vpack.c.b16 %v1735, %v1734
        %v1823 = vpack.c.b16 %v1737, %v1736
        %v1824 = vpack.c.b16 %v1739, %v1738
        %v1825 = vpack.c.b16 %v1741, %v1740
        %v1826 = vpack.c.b16 %v1743, %v1742
        %v1827 = vpack.c.b16 %v1745, %v1744
        %v1828 = vpack.c.b16 %v1747, %v1746
        %v1829 = vpack.c.b16 %v1749, %v1748
        %v1830 = vpack.c.b16 %v1751, %v1750
        %v1831 = vpack.c.b16 %v1753, %v1752
        %v1832 = vpack.c.b16 %v1755, %v1754
        %v1833 = vpack.c.b16 %v1757, %v1756
        %v1834 = vpack.c.b16 %v1759, %v1758
        %v1835 = vpack.c.b16 %v1761, %v1760
        %v1836 = vpack.c.b16 %v1763, %v1762
        %v1837 = vpack.c.b16 %v1765, %v1764
        %v1838 = vpack.c.b16 %v1767, %v1766
        %v1839 = vpack.c.b16 %v1769, %v1768
        %v1840 = vpack.c.b16 %v1771, %v1770
        %v1841 = vpack.c.b16 %v1773, %v1772
        %v1842 = vpack.c.b16 %v1775, %v1774
        %v1843 = vpack.c.b16 %v1777, %v1776
        %v1844 = vpack.c.b16 %v1779, %v1778
        %v1845 = vpack.c.b16 %v1781, %v1780
        %v1846 = vpack.c.b16 %v1783, %v1782
        %v1847 = vpack.c.b16 %v1785, %v1784
        %v1848 = vpack.c.b16 %v1787, %v1786
        %v1849 = vpack.c.b16 %v1789, %v1788
        %v1850 = vpack.c.b16 %v1791, %v1790
        %v1851 = vpack.c.b16 %v1793, %v1792
        %v1852 = vpack.c.b16 %v1795, %v1794
        %v1853 = vpack.c.b16 %v1797, %v1796
        %v1854 = vpack.c.b16 %v1799, %v1798
        %v1855 = vpack.c.b16 %v1801, %v1800
        %v1856 = vpack.c.b16 %v1803, %v1802
        %v1857 = vpack.c.b16 %v1805, %v1804
        %v1858 = vpack.c.b16 %v1807, %v1806
        %v1859 = vpack.c.b16 %v1809, %v1808
        %v1860 = vpack.c.b16 %v1811, %v1810
        %v1861 = vpack.c.b16 %v1813, %v1812
        %1910 = vmatprep.subr.bf16.mxu0 0
        %1911 = vmatpush1.bf16.msra.mxu0 %v1814
        %1912 = vmatprep.subr.bf16.mxu0 0
        %1913 = vmatpush1.bf16.msra.mxu0 %v1815
        %1914 = vmatprep.subr.bf16.mxu0 0
        %1915 = vmatpush1.bf16.msra.mxu0 %v1816
        %1916 = vmatprep.subr.bf16.mxu0 0
        %1917 = vmatpush1.bf16.msra.mxu0 %v1817
        %1918 = vmatprep.subr.bf16.mxu0 0
        %1919 = vmatpush1.bf16.msra.mxu0 %v1818
        %1920 = vmatprep.subr.bf16.mxu0 0
        %1921 = vmatpush1.bf16.msra.mxu0 %v1819
        %1922 = vmatprep.subr.bf16.mxu0 0
        %1923 = vmatpush1.bf16.msra.mxu0 %v1820
        %1924 = vmatprep.subr.bf16.mxu0 0
        %1925 = vmatpush1.bf16.msra.mxu0 %v1821
        %1926 = vmatprep.subr.bf16.mxu0 0
        %1927 = vmatpush1.bf16.msra.mxu0 %v1822
        %1928 = vmatprep.subr.bf16.mxu0 0
        %1929 = vmatpush1.bf16.msra.mxu0 %v1823
        %1930 = vmatprep.subr.bf16.mxu0 0
        %1931 = vmatpush1.bf16.msra.mxu0 %v1824
        %1932 = vmatprep.subr.bf16.mxu0 0
        %1933 = vmatpush1.bf16.msra.mxu0 %v1825
        %1934 = vmatprep.subr.bf16.mxu0 0
        %1935 = vmatpush1.bf16.msra.mxu0 %v1826
        %1936 = vmatprep.subr.bf16.mxu0 0
        %1937 = vmatpush1.bf16.msra.mxu0 %v1827
        %1938 = vmatprep.subr.bf16.mxu0 0
        %1939 = vmatpush1.bf16.msra.mxu0 %v1828
        %1940 = vmatprep.subr.bf16.mxu0 0
        %1941 = vmatpush1.bf16.msra.mxu0 %v1829
        %1942 = vmatprep.mubr.bf16.mxu0 %v1610
        %1943 = vmatmul.mubr.bf16.gmra.mrb[0].mxu0 %v1609
        %v1944 = vpop.f32.mrb[0].mxu0
        %v1945 = vadd.f32 %v1620, %v1944
        %v1946 = vpop.f32.mrb[0].mxu0
        %v1947 = vpop.f32.mrb[0].mxu0
        %v1948 = vpop.f32.mrb[0].mxu0
        %1949 = vdwg.mxu0
        %1950 = vmatprep.subr.bf16.mxu0 0
        %1951 = vmatpush1.bf16.msra.mxu0 %v1830
        %1952 = vmatprep.subr.bf16.mxu0 0
        %1953 = vmatpush1.bf16.msra.mxu0 %v1831
        %1954 = vmatprep.subr.bf16.mxu0 0
        %1955 = vmatpush1.bf16.msra.mxu0 %v1832
        %1956 = vmatprep.subr.bf16.mxu0 0
        %1957 = vmatpush1.bf16.msra.mxu0 %v1833
        %1958 = vmatprep.subr.bf16.mxu0 0
        %1959 = vmatpush1.bf16.msra.mxu0 %v1834
        %1960 = vmatprep.subr.bf16.mxu0 0
        %1961 = vmatpush1.bf16.msra.mxu0 %v1835
        %1962 = vmatprep.subr.bf16.mxu0 0
        %1963 = vmatpush1.bf16.msra.mxu0 %v1836
        %1964 = vmatprep.subr.bf16.mxu0 0
        %1965 = vmatpush1.bf16.msra.mxu0 %v1837
        %1966 = vmatprep.subr.bf16.mxu0 0
        %1967 = vmatpush1.bf16.msra.mxu0 %v1838
        %1968 = vmatprep.subr.bf16.mxu0 0
        %1969 = vmatpush1.bf16.msra.mxu0 %v1839
        %1970 = vmatprep.subr.bf16.mxu0 0
        %1971 = vmatpush1.bf16.msra.mxu0 %v1840
        %1972 = vmatprep.subr.bf16.mxu0 0
        %1973 = vmatpush1.bf16.msra.mxu0 %v1841
        %1974 = vmatprep.subr.bf16.mxu0 0
        %1975 = vmatpush1.bf16.msra.mxu0 %v1842
        %1976 = vmatprep.subr.bf16.mxu0 0
        %1977 = vmatpush1.bf16.msra.mxu0 %v1843
        %1978 = vmatprep.subr.bf16.mxu0 0
        %1979 = vmatpush1.bf16.msra.mxu0 %v1844
        %1980 = vmatprep.subr.bf16.mxu0 0
        %1981 = vmatpush1.bf16.msra.mxu0 %v1845
        %1982 = vmatprep.mubr.bf16.mxu0 %v1612
        %1983 = vmatmul.mubr.bf16.gmra.mrb[0].mxu0 %v1611
        %v1984 = vpop.f32.mrb[0].mxu0
        %v1985 = vadd.f32 %v1945, %v1984
        %v1986 = vpop.f32.mrb[0].mxu0
        %v1987 = vpop.f32.mrb[0].mxu0
        %v1988 = vpop.f32.mrb[0].mxu0
        %1989 = vdwg.mxu0
        %1990 = vmatprep.subr.bf16.mxu0 0
        %1991 = vmatpush1.bf16.msra.mxu0 %v1846
        %1992 = vmatprep.subr.bf16.mxu0 0
        %1993 = vmatpush1.bf16.msra.mxu0 %v1847
        %1994 = vmatprep.subr.bf16.mxu0 0
        %1995 = vmatpush1.bf16.msra.mxu0 %v1848
        %1996 = vmatprep.subr.bf16.mxu0 0
        %1997 = vmatpush1.bf16.msra.mxu0 %v1849
        %1998 = vmatprep.subr.bf16.mxu0 0
        %1999 = vmatpush1.bf16.msra.mxu0 %v1850
        %2000 = vmatprep.subr.bf16.mxu0 0
        %2001 = vmatpush1.bf16.msra.mxu0 %v1851
        %2002 = vmatprep.subr.bf16.mxu0 0
        %2003 = vmatpush1.bf16.msra.mxu0 %v1852
        %2004 = vmatprep.subr.bf16.mxu0 0
        %2005 = vmatpush1.bf16.msra.mxu0 %v1853
        %2006 = vmatprep.subr.bf16.mxu0 0
        %2007 = vmatpush1.bf16.msra.mxu0 %v1854
        %2008 = vmatprep.subr.bf16.mxu0 0
        %2009 = vmatpush1.bf16.msra.mxu0 %v1855
        %2010 = vmatprep.subr.bf16.mxu0 0
        %2011 = vmatpush1.bf16.msra.mxu0 %v1856
        %2012 = vmatprep.subr.bf16.mxu0 0
        %2013 = vmatpush1.bf16.msra.mxu0 %v1857
        %2014 = vmatprep.subr.bf16.mxu0 0
        %2015 = vmatpush1.bf16.msra.mxu0 %v1858
        %2016 = vmatprep.subr.bf16.mxu0 0
        %2017 = vmatpush1.bf16.msra.mxu0 %v1859
        %2018 = vmatprep.subr.bf16.mxu0 0
        %2019 = vmatpush1.bf16.msra.mxu0 %v1860
        %2020 = vmatprep.subr.bf16.mxu0 0
        %2021 = vmatpush1.bf16.msra.mxu0 %v1861
        %2022 = vmatprep.mubr.bf16.mxu0 %v1614
        %2023 = vmatmul.mubr.bf16.gmra.mrb[0].mxu0 %v1613
        %v2024 = vpop.f32.mrb[0].mxu0
        %v2025 = vadd.f32 %v1985, %v2024
        %v2026 = vpop.f32.mrb[0].mxu0
        %v2027 = vpop.f32.mrb[0].mxu0
        %v2028 = vpop.f32.mrb[0].mxu0
        %2029 = vdwg.mxu0
        %v2030 = vld [vmem:[%s3] sm:$0xff]
        %v2032 = vrot.slane %v2025, 7
        %vm2034 = vcmask 1040384
        %v2035 = vsel %vm2034, 0.0, %v2032
        %vm2036 = vcmask 1044480
        %v2037 = vsel %vm2036, %v2035, 0.0
        %v2038 = vadd.f32 %v2030, %v2037
        %v2039 = vld [vmem:[#allocation6] sm:$0x1]
        %v2040 = vld [vmem:[#allocation9] sm:$0x1]
        %v2041 = vld [vmem:[#allocation11] sm:$0x1]
        %2042 = vadd.xlane.f32.xlu0 %v2038
        %v2043 = vpop.xlane.xlu0 %2042
        %v2044 = vrcp.pop 128.0
        %v2045 = vmul.f32 %v2043, %v2044
        %v2046 = vsub.f32 %v2038, %v2045
        %v2047 = vmul.f32 %v2046, %v2046
        %2048 = vadd.xlane.f32.xlu0 %v2047
        %v2049 = vpop.xlane.xlu0 %2048
        %v2050 = vmul.f32 %v2049, %v2044
        %v2051 = vadd.f32 %v2050, 1e-06
        %v2052 = vrsqrt.pop %v2051
        %v2053 = vmul.f32 %v2046, %v2052
        %v2055 = vlaneseq
        %v2056 = vshrl.u32 %v2055, 7
        %v2057 = vsub.s32 0, %v2056
        %v2058 = vrot.slane %v2040, %v2057
        %v2060 = vmul.f32 %v2053, %v2058
        %v2062 = vlaneseq
        %v2063 = vshrl.u32 %v2062, 7
        %v2064 = vsub.s32 0, %v2063
        %v2065 = vrot.slane %v2041, %v2064
        %v2067 = vadd.f32 %v2060, %v2065
        %v2068 = vld [vmem:[%s15] sm:$0xff]
        %v2069 = vld [vmem:[%s15 + $0x8] sm:$0xf]
        %v2070 = vld [vmem:[%s15 + $0xc] sm:$0xff]
        %v2071 = vld [vmem:[%s15 + $0x14] sm:$0xf]
        %v2072 = vld [vmem:[%s15 + $0x18] sm:$0xff]
        %v2073 = vld [vmem:[%s15 + $0x20] sm:$0xf]
        %v2074 = vld [vmem:[%s15 + $0x24] sm:$0xff]
        %v2075 = vld [vmem:[%s15 + $0x2c] sm:$0xf]
        %v2076 = vld [vmem:[%s15 + $0x30] sm:$0xff]
        %v2077 = vld [vmem:[%s15 + $0x38] sm:$0xf]
        %v2078 = vld [vmem:[%s15 + $0x3c] sm:$0xff]
        %v2079 = vld [vmem:[%s15 + $0x44] sm:$0xf]
        %v2080 = vld [vmem:[%s15 + $0x48] sm:$0xff]
        %v2081 = vld [vmem:[%s15 + $0x50] sm:$0xf]
        %v2082 = vld [vmem:[%s15 + $0x54] sm:$0xff]
        %v2083 = vld [vmem:[%s15 + $0x5c] sm:$0xf]
        %v2084 = vld [vmem:[%s15 + $0x60] sm:$0xff]
        %v2085 = vld [vmem:[%s15 + $0x68] sm:$0xf]
        %v2086 = vld [vmem:[%s15 + $0x6c] sm:$0xff]
        %v2087 = vld [vmem:[%s15 + $0x74] sm:$0xf]
        %v2088 = vld [vmem:[%s15 + $0x78] sm:$0xff]
        %v2089 = vld [vmem:[%s15 + $0x80] sm:$0xf]
        %v2090 = vld [vmem:[%s15 + $0x84] sm:$0xff]
        %v2091 = vld [vmem:[%s15 + $0x8c] sm:$0xf]
        %v2092 = vld [vmem:[%s15 + $0x90] sm:$0xff]
        %v2093 = vld [vmem:[%s15 + $0x98] sm:$0xf]
        %v2094 = vld [vmem:[%s15 + $0x9c] sm:$0xff]
        %v2095 = vld [vmem:[%s15 + $0xa4] sm:$0xf]
        %v2096 = vld [vmem:[%s15 + $0xa8] sm:$0xff]
        %v2097 = vld [vmem:[%s15 + $0xb0] sm:$0xf]
        %v2098 = vld [vmem:[%s15 + $0xb4] sm:$0xff]
        %v2099 = vld [vmem:[%s15 + $0xbc] sm:$0xf]
        %v2100 = vpack.c.bf16 %v2067, %v2067
        %v2101 = vld [vmem:[#allocation12] sm:$0x7]
        %v2103 = vlaneseq
        %v2104 = vshrl.u32 %v2103, 7
        %v2105 = vsub.s32 0, %v2104
        %v2106 = vrot.slane %v2101, %v2105
        %v2107 = vlaneseq
        %v2108 = vshrl.u32 %v2107, 7
        %v2109 = vsub.s32 1, %v2108
        %v2110 = vrot.slane %v2101, %v2109
        %v2111 = vlaneseq
        %v2112 = vshrl.u32 %v2111, 7
        %v2113 = vsub.s32 2, %v2112
        %v2114 = vrot.slane %v2101, %v2113
        %v2150 = vunpack.c.l.b16 %v2068
        %v2151 = vunpack.c.h.b16 %v2068
        %v2152 = vunpack.c.l.b16 %v2069
        %v2153 = vunpack.c.l.b16 %v2070
        %v2154 = vunpack.c.h.b16 %v2070
        %v2155 = vunpack.c.l.b16 %v2071
        %v2156 = vunpack.c.l.b16 %v2072
        %v2157 = vunpack.c.h.b16 %v2072
        %v2158 = vunpack.c.l.b16 %v2073
        %v2159 = vunpack.c.l.b16 %v2074
        %v2160 = vunpack.c.h.b16 %v2074
        %v2161 = vunpack.c.l.b16 %v2075
        %v2162 = vunpack.c.l.b16 %v2076
        %v2163 = vunpack.c.h.b16 %v2076
        %v2164 = vunpack.c.l.b16 %v2077
        %v2165 = vunpack.c.l.b16 %v2078
        %v2166 = vunpack.c.h.b16 %v2078
        %v2167 = vunpack.c.l.b16 %v2079
        %v2168 = vunpack.c.l.b16 %v2080
        %v2169 = vunpack.c.h.b16 %v2080
        %v2170 = vunpack.c.l.b16 %v2081
        %v2171 = vunpack.c.l.b16 %v2082
        %v2172 = vunpack.c.h.b16 %v2082
        %v2173 = vunpack.c.l.b16 %v2083
        %v2174 = vunpack.c.l.b16 %v2084
        %v2175 = vunpack.c.h.b16 %v2084
        %v2176 = vunpack.c.l.b16 %v2085
        %v2177 = vunpack.c.l.b16 %v2086
        %v2178 = vunpack.c.h.b16 %v2086
        %v2179 = vunpack.c.l.b16 %v2087
        %v2180 = vunpack.c.l.b16 %v2088
        %v2181 = vunpack.c.h.b16 %v2088
        %v2182 = vunpack.c.l.b16 %v2089
        %v2183 = vunpack.c.l.b16 %v2090
        %v2184 = vunpack.c.h.b16 %v2090
        %v2185 = vunpack.c.l.b16 %v2091
        %v2186 = vunpack.c.l.b16 %v2092
        %v2187 = vunpack.c.h.b16 %v2092
        %v2188 = vunpack.c.l.b16 %v2093
        %v2189 = vunpack.c.l.b16 %v2094
        %v2190 = vunpack.c.h.b16 %v2094
        %v2191 = vunpack.c.l.b16 %v2095
        %v2192 = vunpack.c.l.b16 %v2096
        %v2193 = vunpack.c.h.b16 %v2096
        %v2194 = vunpack.c.l.b16 %v2097
        %v2195 = vunpack.c.l.b16 %v2098
        %v2196 = vunpack.c.h.b16 %v2098
        %v2197 = vunpack.c.l.b16 %v2099
        %v2198 = vpack.c.b16 %v2153, %v2150
        %v2199 = vpack.c.b16 %v2154, %v2151
        %v2200 = vpack.c.b16 %v2155, %v2152
        %v2201 = vpack.c.b16 %v2159, %v2156
        %v2202 = vpack.c.b16 %v2160, %v2157
        %v2203 = vpack.c.b16 %v2161, %v2158
        %v2204 = vpack.c.b16 %v2165, %v2162
        %v2205 = vpack.c.b16 %v2166, %v2163
        %v2206 = vpack.c.b16 %v2167, %v2164
        %v2207 = vpack.c.b16 %v2171, %v2168
        %v2208 = vpack.c.b16 %v2172, %v2169
        %v2209 = vpack.c.b16 %v2173, %v2170
        %v2210 = vpack.c.b16 %v2177, %v2174
        %v2211 = vpack.c.b16 %v2178, %v2175
        %v2212 = vpack.c.b16 %v2179, %v2176
        %v2213 = vpack.c.b16 %v2183, %v2180
        %v2214 = vpack.c.b16 %v2184, %v2181
        %v2215 = vpack.c.b16 %v2185, %v2182
        %v2216 = vpack.c.b16 %v2189, %v2186
        %v2217 = vpack.c.b16 %v2190, %v2187
        %v2218 = vpack.c.b16 %v2191, %v2188
        %v2219 = vpack.c.b16 %v2195, %v2192
        %v2220 = vpack.c.b16 %v2196, %v2193
        %v2221 = vpack.c.b16 %v2197, %v2194
        %2246 = vmatprep.subr.bf16.mxu0 %v2199
        %2247 = vmatpush1.bf16.msra.mxu0 %v2198
        %2248 = vmatprep.subr.bf16.mxu0 %v2202
        %2249 = vmatpush1.bf16.msra.mxu0 %v2201
        %2250 = vmatprep.subr.bf16.mxu0 %v2205
        %2251 = vmatpush1.bf16.msra.mxu0 %v2204
        %2252 = vmatprep.subr.bf16.mxu0 %v2208
        %2253 = vmatpush1.bf16.msra.mxu0 %v2207
        %2254 = vmatprep.subr.bf16.mxu0 %v2211
        %2255 = vmatpush1.bf16.msra.mxu0 %v2210
        %2256 = vmatprep.subr.bf16.mxu0 %v2214
        %2257 = vmatpush1.bf16.msra.mxu0 %v2213
        %2258 = vmatprep.subr.bf16.mxu0 %v2217
        %2259 = vmatpush1.bf16.msra.mxu0 %v2216
        %2260 = vmatprep.subr.bf16.mxu0 %v2220
        %2261 = vmatpush1.bf16.msra.mxu0 %v2219
        %2262 = vmatprep.subr.bf16.mxu0 0
        %2263 = vmatpush1.bf16.msra.mxu0 0
        %2264 = vmatprep.subr.bf16.mxu0 0
        %2265 = vmatpush1.bf16.msra.mxu0 0
        %2266 = vmatprep.subr.bf16.mxu0 0
        %2267 = vmatpush1.bf16.msra.mxu0 0
        %2268 = vmatprep.subr.bf16.mxu0 0
        %2269 = vmatpush1.bf16.msra.mxu0 0
        %2270 = vmatprep.subr.bf16.mxu0 0
        %2271 = vmatpush1.bf16.msra.mxu0 0
        %2272 = vmatprep.subr.bf16.mxu0 0
        %2273 = vmatpush1.bf16.msra.mxu0 0
        %2274 = vmatprep.subr.bf16.mxu0 0
        %2275 = vmatpush1.bf16.msra.mxu0 0
        %2276 = vmatprep.subr.bf16.mxu0 0
        %2277 = vmatpush1.bf16.msra.mxu0 0
        %2278 = vmatprep.mubr.bf16.mxu0 0
        %2279 = vmatmul.mubr.bf16.gmra.mrb[0].mxu0 %v2100
        %v2280 = vpop.f32.mrb[0].mxu0
        %v2281 = vadd.f32 %v2106, %v2280
        %v2282 = vpop.f32.mrb[0].mxu0
        %v2283 = vadd.f32 %v2110, %v2282
        %v2284 = vpop.f32.mrb[0].mxu0
        %v2285 = vpop.f32.mrb[0].mxu0
        %2286 = vdwg.mxu0
        %2287 = vmatprep.subr.bf16.mxu0 0
        %2288 = vmatpush1.bf16.msra.mxu0 %v2200
        %2289 = vmatprep.subr.bf16.mxu0 0
        %2290 = vmatpush1.bf16.msra.mxu0 %v2203
        %2291 = vmatprep.subr.bf16.mxu0 0
        %2292 = vmatpush1.bf16.msra.mxu0 %v2206
        %2293 = vmatprep.subr.bf16.mxu0 0
        %2294 = vmatpush1.bf16.msra.mxu0 %v2209
        %2295 = vmatprep.subr.bf16.mxu0 0
        %2296 = vmatpush1.bf16.msra.mxu0 %v2212
        %2297 = vmatprep.subr.bf16.mxu0 0
        %2298 = vmatpush1.bf16.msra.mxu0 %v2215
        %2299 = vmatprep.subr.bf16.mxu0 0
        %2300 = vmatpush1.bf16.msra.mxu0 %v2218
        %2301 = vmatprep.subr.bf16.mxu0 0
        %2302 = vmatpush1.bf16.msra.mxu0 %v2221
        %2303 = vmatprep.subr.bf16.mxu0 0
        %2304 = vmatpush1.bf16.msra.mxu0 0
        %2305 = vmatprep.subr.bf16.mxu0 0
        %2306 = vmatpush1.bf16.msra.mxu0 0
        %2307 = vmatprep.subr.bf16.mxu0 0
        %2308 = vmatpush1.bf16.msra.mxu0 0
        %2309 = vmatprep.subr.bf16.mxu0 0
        %2310 = vmatpush1.bf16.msra.mxu0 0
        %2311 = vmatprep.subr.bf16.mxu0 0
        %2312 = vmatpush1.bf16.msra.mxu0 0
        %2313 = vmatprep.subr.bf16.mxu0 0
        %2314 = vmatpush1.bf16.msra.mxu0 0
        %2315 = vmatprep.subr.bf16.mxu0 0
        %2316 = vmatpush1.bf16.msra.mxu0 0
        %2317 = vmatprep.subr.bf16.mxu0 0
        %2318 = vmatpush1.bf16.msra.mxu0 0
        %2319 = vmatprep.mubr.bf16.mxu0 0
        %2320 = vmatmul.mubr.bf16.gmra.mrb[0].mxu0 %v2100
        %v2321 = vpop.f32.mrb[0].mxu0
        %v2322 = vadd.f32 %v2114, %v2321
        %v2323 = vpop.f32.mrb[0].mxu0
        %v2324 = vpop.f32.mrb[0].mxu0
        %v2325 = vpop.f32.mrb[0].mxu0
        %2326 = vdwg.mxu0
        %2328 = vrot.lane.b32.xlu0 %v2281, 96
        %v2329 = vpop.permute.xlu0 %2328
        %2331 = vrot.lane.b32.xlu0 %v2281, 64
        %v2332 = vpop.permute.xlu0 %2331
        %2334 = vrot.lane.b32.xlu0 %v2281, 32
        %v2335 = vpop.permute.xlu0 %2334
        %2338 = vrot.lane.b32.xlu0 %v2283, 96
        %v2339 = vpop.permute.xlu0 %2338
        %2341 = vrot.lane.b32.xlu0 %v2283, 64
        %v2342 = vpop.permute.xlu0 %2341
        %2344 = vrot.lane.b32.xlu0 %v2283, 32
        %v2345 = vpop.permute.xlu0 %2344
        %2348 = vrot.lane.b32.xlu0 %v2322, 96
        %v2349 = vpop.permute.xlu0 %2348
        %2351 = vrot.lane.b32.xlu0 %v2322, 64
        %v2352 = vpop.permute.xlu0 %2351
        %2354 = vrot.lane.b32.xlu0 %v2322, 32
        %v2355 = vpop.permute.xlu0 %2354
        %v2357 = vpack.c.bf16 %v2281, %v2281
        %v2358 = vpack.c.bf16 %v2329, %v2329
        %v2359 = vpack.c.bf16 %v2332, %v2332
        %v2360 = vpack.c.bf16 %v2335, %v2335
        %v2361 = vpack.c.bf16 %v2283, %v2283
        %v2362 = vpack.c.bf16 %v2339, %v2339
        %v2363 = vpack.c.bf16 %v2342, %v2342
        %v2364 = vpack.c.bf16 %v2345, %v2345
        %vm2365 = vcmask 261120
        %v2367 = vsel %vm2365, %v2357, 0
        %v2370 = vsel %vm2365, %v2361, 0
        %2372 = vmatprep.subr.bf16.mxu0 0
        %2373 = vmatpush1.bf16.xpose.msra.mxu0 %v2370
        %2374 = vmatprep.subr.bf16.mxu0 0
        %2375 = vmatpush1.bf16.xpose.msra.mxu0 0
        %2376 = vmatprep.subr.bf16.mxu0 0
        %2377 = vmatpush1.bf16.xpose.msra.mxu0 0
        %2378 = vmatprep.subr.bf16.mxu0 0
        %2379 = vmatpush1.bf16.xpose.msra.mxu0 0
        %2380 = vmatprep.subr.bf16.mxu0 0
        %2381 = vmatpush1.bf16.xpose.msra.mxu0 0
        %2382 = vmatprep.subr.bf16.mxu0 0
        %2383 = vmatpush1.bf16.xpose.msra.mxu0 0
        %2384 = vmatprep.subr.bf16.mxu0 0
        %2385 = vmatpush1.bf16.xpose.msra.mxu0 0
        %2386 = vmatprep.subr.bf16.mxu0 0
        %2387 = vmatpush1.bf16.xpose.msra.mxu0 0
        %2388 = vmatprep.subr.bf16.mxu0 0
        %2389 = vmatpush1.bf16.xpose.msra.mxu0 0
        %2390 = vmatprep.subr.bf16.mxu0 0
        %2391 = vmatpush1.bf16.xpose.msra.mxu0 0
        %2392 = vmatprep.subr.bf16.mxu0 0
        %2393 = vmatpush1.bf16.xpose.msra.mxu0 0
        %2394 = vmatprep.subr.bf16.mxu0 0
        %2395 = vmatpush1.bf16.xpose.msra.mxu0 0
        %2396 = vmatprep.subr.bf16.mxu0 0
        %2397 = vmatpush1.bf16.xpose.msra.mxu0 0
        %2398 = vmatprep.subr.bf16.mxu0 0
        %2399 = vmatpush1.bf16.xpose.msra.mxu0 0
        %2400 = vmatprep.subr.bf16.mxu0 0
        %2401 = vmatpush1.bf16.xpose.msra.mxu0 0
        %2402 = vmatprep.subr.bf16.mxu0 0
        %2403 = vmatpush1.bf16.xpose.msra.mxu0 0
        %2404 = vmatprep.mubr.bf16.mxu0 0
        %2405 = vmatmul.mubr.bf16.gmra.mrb[0].mxu0 %v2367
        %v2406 = vpop.f32.mrb[0].mxu0
        %v2407 = vadd.f32 0.0, %v2406
        %v2408 = vpop.f32.mrb[0].mxu0
        %v2409 = vpop.f32.mrb[0].mxu0
        %v2410 = vpop.f32.mrb[0].mxu0
        %2411 = vdwg.mxu0
        %v2413 = vsel %vm2365, %v2358, 0
        %v2416 = vsel %vm2365, %v2362, 0
        %2418 = vmatprep.subr.bf16.mxu0 0
        %2419 = vmatpush1.bf16.xpose.msra.mxu0 %v2416
        %2420 = vmatprep.subr.bf16.mxu0 0
        %2421 = vmatpush1.bf16.xpose.msra.mxu0 0
        %2422 = vmatprep.subr.bf16.mxu0 0
        %2423 = vmatpush1.bf16.xpose.msra.mxu0 0
        %2424 = vmatprep.subr.bf16.mxu0 0
        %2425 = vmatpush1.bf16.xpose.msra.mxu0 0
        %2426 = vmatprep.subr.bf16.mxu0 0
        %2427 = vmatpush1.bf16.xpose.msra.mxu0 0
        %2428 = vmatprep.subr.bf16.mxu0 0
        %2429 = vmatpush1.bf16.xpose.msra.mxu0 0
        %2430 = vmatprep.subr.bf16.mxu0 0
        %2431 = vmatpush1.bf16.xpose.msra.mxu0 0
        %2432 = vmatprep.subr.bf16.mxu0 0
        %2433 = vmatpush1.bf16.xpose.msra.mxu0 0
        %2434 = vmatprep.subr.bf16.mxu0 0
        %2435 = vmatpush1.bf16.xpose.msra.mxu0 0
        %2436 = vmatprep.subr.bf16.mxu0 0
        %2437 = vmatpush1.bf16.xpose.msra.mxu0 0
        %2438 = vmatprep.subr.bf16.mxu0 0
        %2439 = vmatpush1.bf16.xpose.msra.mxu0 0
        %2440 = vmatprep.subr.bf16.mxu0 0
        %2441 = vmatpush1.bf16.xpose.msra.mxu0 0
        %2442 = vmatprep.subr.bf16.mxu0 0
        %2443 = vmatpush1.bf16.xpose.msra.mxu0 0
        %2444 = vmatprep.subr.bf16.mxu0 0
        %2445 = vmatpush1.bf16.xpose.msra.mxu0 0
        %2446 = vmatprep.subr.bf16.mxu0 0
        %2447 = vmatpush1.bf16.xpose.msra.mxu0 0
        %2448 = vmatprep.subr.bf16.mxu0 0
        %2449 = vmatpush1.bf16.xpose.msra.mxu0 0
        %2450 = vmatprep.mubr.bf16.mxu0 0
        %2451 = vmatmul.mubr.bf16.gmra.mrb[0].mxu0 %v2413
        %v2452 = vpop.f32.mrb[0].mxu0
        %v2453 = vadd.f32 0.0, %v2452
        %v2454 = vpop.f32.mrb[0].mxu0
        %v2455 = vpop.f32.mrb[0].mxu0
        %v2456 = vpop.f32.mrb[0].mxu0
        %2457 = vdwg.mxu0
        %v2459 = vsel %vm2365, %v2359, 0
        %v2462 = vsel %vm2365, %v2363, 0
        %2464 = vmatprep.subr.bf16.mxu0 0
        %2465 = vmatpush1.bf16.xpose.msra.mxu0 %v2462
        %2466 = vmatprep.subr.bf16.mxu0 0
        %2467 = vmatpush1.bf16.xpose.msra.mxu0 0
        %2468 = vmatprep.subr.bf16.mxu0 0
        %2469 = vmatpush1.bf16.xpose.msra.mxu0 0
        %2470 = vmatprep.subr.bf16.mxu0 0
        %2471 = vmatpush1.bf16.xpose.msra.mxu0 0
        %2472 = vmatprep.subr.bf16.mxu0 0
        %2473 = vmatpush1.bf16.xpose.msra.mxu0 0
        %2474 = vmatprep.subr.bf16.mxu0 0
        %2475 = vmatpush1.bf16.xpose.msra.mxu0 0
        %2476 = vmatprep.subr.bf16.mxu0 0
        %2477 = vmatpush1.bf16.xpose.msra.mxu0 0
        %2478 = vmatprep.subr.bf16.mxu0 0
        %2479 = vmatpush1.bf16.xpose.msra.mxu0 0
        %2480 = vmatprep.subr.bf16.mxu0 0
        %2481 = vmatpush1.bf16.xpose.msra.mxu0 0
        %2482 = vmatprep.subr.bf16.mxu0 0
        %2483 = vmatpush1.bf16.xpose.msra.mxu0 0
        %2484 = vmatprep.subr.bf16.mxu0 0
        %2485 = vmatpush1.bf16.xpose.msra.mxu0 0
        %2486 = vmatprep.subr.bf16.mxu0 0
        %2487 = vmatpush1.bf16.xpose.msra.mxu0 0
        %2488 = vmatprep.subr.bf16.mxu0 0
        %2489 = vmatpush1.bf16.xpose.msra.mxu0 0
        %2490 = vmatprep.subr.bf16.mxu0 0
        %2491 = vmatpush1.bf16.xpose.msra.mxu0 0
        %2492 = vmatprep.subr.bf16.mxu0 0
        %2493 = vmatpush1.bf16.xpose.msra.mxu0 0
        %2494 = vmatprep.subr.bf16.mxu0 0
        %2495 = vmatpush1.bf16.xpose.msra.mxu0 0
        %2496 = vmatprep.mubr.bf16.mxu0 0
        %2497 = vmatmul.mubr.bf16.gmra.mrb[0].mxu0 %v2459
        %v2498 = vpop.f32.mrb[0].mxu0
        %v2499 = vadd.f32 0.0, %v2498
        %v2500 = vpop.f32.mrb[0].mxu0
        %v2501 = vpop.f32.mrb[0].mxu0
        %v2502 = vpop.f32.mrb[0].mxu0
        %2503 = vdwg.mxu0
        %v2505 = vsel %vm2365, %v2360, 0
        %v2508 = vsel %vm2365, %v2364, 0
        %2510 = vmatprep.subr.bf16.mxu0 0
        %2511 = vmatpush1.bf16.xpose.msra.mxu0 %v2508
        %2512 = vmatprep.subr.bf16.mxu0 0
        %2513 = vmatpush1.bf16.xpose.msra.mxu0 0
        %2514 = vmatprep.subr.bf16.mxu0 0
        %2515 = vmatpush1.bf16.xpose.msra.mxu0 0
        %2516 = vmatprep.subr.bf16.mxu0 0
        %2517 = vmatpush1.bf16.xpose.msra.mxu0 0
        %2518 = vmatprep.subr.bf16.mxu0 0
        %2519 = vmatpush1.bf16.xpose.msra.mxu0 0
        %2520 = vmatprep.subr.bf16.mxu0 0
        %2521 = vmatpush1.bf16.xpose.msra.mxu0 0
        %2522 = vmatprep.subr.bf16.mxu0 0
        %2523 = vmatpush1.bf16.xpose.msra.mxu0 0
        %2524 = vmatprep.subr.bf16.mxu0 0
        %2525 = vmatpush1.bf16.xpose.msra.mxu0 0
        %2526 = vmatprep.subr.bf16.mxu0 0
        %2527 = vmatpush1.bf16.xpose.msra.mxu0 0
        %2528 = vmatprep.subr.bf16.mxu0 0
        %2529 = vmatpush1.bf16.xpose.msra.mxu0 0
        %2530 = vmatprep.subr.bf16.mxu0 0
        %2531 = vmatpush1.bf16.xpose.msra.mxu0 0
        %2532 = vmatprep.subr.bf16.mxu0 0
        %2533 = vmatpush1.bf16.xpose.msra.mxu0 0
        %2534 = vmatprep.subr.bf16.mxu0 0
        %2535 = vmatpush1.bf16.xpose.msra.mxu0 0
        %2536 = vmatprep.subr.bf16.mxu0 0
        %2537 = vmatpush1.bf16.xpose.msra.mxu0 0
        %2538 = vmatprep.subr.bf16.mxu0 0
        %2539 = vmatpush1.bf16.xpose.msra.mxu0 0
        %2540 = vmatprep.subr.bf16.mxu0 0
        %2541 = vmatpush1.bf16.xpose.msra.mxu0 0
        %2542 = vmatprep.mubr.bf16.mxu0 0
        %2543 = vmatmul.mubr.bf16.gmra.mrb[0].mxu0 %v2505
        %v2544 = vpop.f32.mrb[0].mxu0
        %v2545 = vadd.f32 0.0, %v2544
        %v2546 = vpop.f32.mrb[0].mxu0
        %v2547 = vpop.f32.mrb[0].mxu0
        %v2548 = vpop.f32.mrb[0].mxu0
        %2549 = vdwg.mxu0
        %v2550 = vmul.f32 %v2407, 0.17677669
        %v2551 = vmul.f32 %v2453, 0.17677669
        %v2552 = vmul.f32 %v2499, 0.17677669
        %v2553 = vmul.f32 %v2545, 0.17677669
        %v2555 = vlaneseq
        %v2556 = vshrl.u32 %v2555, 7
        %v2557 = vsub.s32 0, %v2556
        %v2558 = vrot.slane %v2039, %v2557
        %v2560 = vadd.f32 %v2550, %v2558
        %v2561 = vadd.f32 %v2551, %v2558
        %v2562 = vadd.f32 %v2552, %v2558
        %v2563 = vadd.f32 %v2553, %v2558
        %vm2564 = vcmask 64512
        %v2565 = vsel %vm2564, %v2560, -inf
        %2566 = vmax.xlane.f32.xlu0 %v2565
        %v2567 = vpop.xlane.xlu0 %2566
        %v2568 = vsel %vm2564, %v2561, -inf
        %2569 = vmax.xlane.f32.xlu0 %v2568
        %v2570 = vpop.xlane.xlu0 %2569
        %v2571 = vsel %vm2564, %v2562, -inf
        %2572 = vmax.xlane.f32.xlu0 %v2571
        %v2573 = vpop.xlane.xlu0 %2572
        %v2574 = vsel %vm2564, %v2563, -inf
        %2575 = vmax.xlane.f32.xlu0 %v2574
        %v2576 = vpop.xlane.xlu0 %2575
        %v2577 = vsub.f32 %v2560, %v2567
        %v2578 = vsub.f32 %v2561, %v2570
        %v2579 = vsub.f32 %v2562, %v2573
        %v2580 = vsub.f32 %v2563, %v2576
        %v2581 = vmul.f32 %v2577, 1.442695
        %v2582 = vpow.pop %v2581
        %v2583 = vmul.f32 %v2578, 1.442695
        %v2584 = vpow.pop %v2583
        %v2585 = vmul.f32 %v2579, 1.442695
        %v2586 = vpow.pop %v2585
        %v2587 = vmul.f32 %v2580, 1.442695
        %v2588 = vpow.pop %v2587
        %v2589 = vsel %vm2564, %v2582, 0.0
        %2590 = vadd.xlane.f32.xlu0 %v2589
        %v2591 = vpop.xlane.xlu0 %2590
        %v2592 = vsel %vm2564, %v2584, 0.0
        %2593 = vadd.xlane.f32.xlu0 %v2592
        %v2594 = vpop.xlane.xlu0 %2593
        %v2595 = vsel %vm2564, %v2586, 0.0
        %2596 = vadd.xlane.f32.xlu0 %v2595
        %v2597 = vpop.xlane.xlu0 %2596
        %v2598 = vsel %vm2564, %v2588, 0.0
        %2599 = vadd.xlane.f32.xlu0 %v2598
        %v2600 = vpop.xlane.xlu0 %2599
        %v2601 = vrcp.pop %v2591
        %v2602 = vmul.f32 %v2582, %v2601
        %v2603 = vrcp.pop %v2594
        %v2604 = vmul.f32 %v2584, %v2603
        %v2605 = vrcp.pop %v2597
        %v2606 = vmul.f32 %v2586, %v2605
        %v2607 = vrcp.pop %v2600
        %v2608 = vmul.f32 %v2588, %v2607
        %v2609 = vpack.c.bf16 %v2602, %v2602
        %v2610 = vpack.c.bf16 %v2604, %v2604
        %v2611 = vpack.c.bf16 %v2606, %v2606
        %v2612 = vpack.c.bf16 %v2608, %v2608
        %v2613 = vpack.c.bf16 %v2322, %v2322
        %v2614 = vpack.c.bf16 %v2349, %v2349
        %v2615 = vpack.c.bf16 %v2352, %v2352
        %v2616 = vpack.c.bf16 %v2355, %v2355
        %v2618 = vsel %vm2564, %v2609, 0
        %vm2620 = vcmask 1043456
        %v2622 = vsel %vm2620, %v2613, 0
        %2624 = vmatprep.subr.bf16.mxu0 0
        %2625 = vmatpush1.bf16.msra.mxu0 %v2622
        %2626 = vmatprep.subr.bf16.mxu0 0
        %2627 = vmatpush1.bf16.msra.mxu0 0
        %2628 = vmatprep.subr.bf16.mxu0 0
        %2629 = vmatpush1.bf16.msra.mxu0 0
        %2630 = vmatprep.subr.bf16.mxu0 0
        %2631 = vmatpush1.bf16.msra.mxu0 0
        %2632 = vmatprep.subr.bf16.mxu0 0
        %2633 = vmatpush1.bf16.msra.mxu0 0
        %2634 = vmatprep.subr.bf16.mxu0 0
        %2635 = vmatpush1.bf16.msra.mxu0 0
        %2636 = vmatprep.subr.bf16.mxu0 0
        %2637 = vmatpush1.bf16.msra.mxu0 0
        %2638 = vmatprep.subr.bf16.mxu0 0
        %2639 = vmatpush1.bf16.msra.mxu0 0
        %2640 = vmatprep.subr.bf16.mxu0 0
        %2641 = vmatpush1.bf16.msra.mxu0 0
        %2642 = vmatprep.subr.bf16.mxu0 0
        %2643 = vmatpush1.bf16.msra.mxu0 0
        %2644 = vmatprep.subr.bf16.mxu0 0
        %2645 = vmatpush1.bf16.msra.mxu0 0
        %2646 = vmatprep.subr.bf16.mxu0 0
        %2647 = vmatpush1.bf16.msra.mxu0 0
        %2648 = vmatprep.subr.bf16.mxu0 0
        %2649 = vmatpush1.bf16.msra.mxu0 0
        %2650 = vmatprep.subr.bf16.mxu0 0
        %2651 = vmatpush1.bf16.msra.mxu0 0
        %2652 = vmatprep.subr.bf16.mxu0 0
        %2653 = vmatpush1.bf16.msra.mxu0 0
        %2654 = vmatprep.subr.bf16.mxu0 0
        %2655 = vmatpush1.bf16.msra.mxu0 0
        %2656 = vmatprep.mubr.bf16.mxu0 0
        %2657 = vmatmul.mubr.bf16.gmra.mrb[0].mxu0 %v2618
        %v2658 = vpop.f32.mrb[0].mxu0
        %v2659 = vadd.f32 0.0, %v2658
        %v2660 = vpop.f32.mrb[0].mxu0
        %v2661 = vpop.f32.mrb[0].mxu0
        %v2662 = vpop.f32.mrb[0].mxu0
        %2663 = vdwg.mxu0
        %v2665 = vsel %vm2564, %v2610, 0
        %v2668 = vsel %vm2620, %v2614, 0
        %2670 = vmatprep.subr.bf16.mxu0 0
        %2671 = vmatpush1.bf16.msra.mxu0 %v2668
        %2672 = vmatprep.subr.bf16.mxu0 0
        %2673 = vmatpush1.bf16.msra.mxu0 0
        %2674 = vmatprep.subr.bf16.mxu0 0
        %2675 = vmatpush1.bf16.msra.mxu0 0
        %2676 = vmatprep.subr.bf16.mxu0 0
        %2677 = vmatpush1.bf16.msra.mxu0 0
        %2678 = vmatprep.subr.bf16.mxu0 0
        %2679 = vmatpush1.bf16.msra.mxu0 0
        %2680 = vmatprep.subr.bf16.mxu0 0
        %2681 = vmatpush1.bf16.msra.mxu0 0
        %2682 = vmatprep.subr.bf16.mxu0 0
        %2683 = vmatpush1.bf16.msra.mxu0 0
        %2684 = vmatprep.subr.bf16.mxu0 0
        %2685 = vmatpush1.bf16.msra.mxu0 0
        %2686 = vmatprep.subr.bf16.mxu0 0
        %2687 = vmatpush1.bf16.msra.mxu0 0
        %2688 = vmatprep.subr.bf16.mxu0 0
        %2689 = vmatpush1.bf16.msra.mxu0 0
        %2690 = vmatprep.subr.bf16.mxu0 0
        %2691 = vmatpush1.bf16.msra.mxu0 0
        %2692 = vmatprep.subr.bf16.mxu0 0
        %2693 = vmatpush1.bf16.msra.mxu0 0
        %2694 = vmatprep.subr.bf16.mxu0 0
        %2695 = vmatpush1.bf16.msra.mxu0 0
        %2696 = vmatprep.subr.bf16.mxu0 0
        %2697 = vmatpush1.bf16.msra.mxu0 0
        %2698 = vmatprep.subr.bf16.mxu0 0
        %2699 = vmatpush1.bf16.msra.mxu0 0
        %2700 = vmatprep.subr.bf16.mxu0 0
        %2701 = vmatpush1.bf16.msra.mxu0 0
        %2702 = vmatprep.mubr.bf16.mxu0 0
        %2703 = vmatmul.mubr.bf16.gmra.mrb[0].mxu0 %v2665
        %v2704 = vpop.f32.mrb[0].mxu0
        %v2705 = vadd.f32 0.0, %v2704
        %v2706 = vpop.f32.mrb[0].mxu0
        %v2707 = vpop.f32.mrb[0].mxu0
        %v2708 = vpop.f32.mrb[0].mxu0
        %2709 = vdwg.mxu0
        %v2711 = vsel %vm2564, %v2611, 0
        %v2714 = vsel %vm2620, %v2615, 0
        %2716 = vmatprep.subr.bf16.mxu0 0
        %2717 = vmatpush1.bf16.msra.mxu0 %v2714
        %2718 = vmatprep.subr.bf16.mxu0 0
        %2719 = vmatpush1.bf16.msra.mxu0 0
        %2720 = vmatprep.subr.bf16.mxu0 0
        %2721 = vmatpush1.bf16.msra.mxu0 0
        %2722 = vmatprep.subr.bf16.mxu0 0
        %2723 = vmatpush1.bf16.msra.mxu0 0
        %2724 = vmatprep.subr.bf16.mxu0 0
        %2725 = vmatpush1.bf16.msra.mxu0 0
        %2726 = vmatprep.subr.bf16.mxu0 0
        %2727 = vmatpush1.bf16.msra.mxu0 0
        %2728 = vmatprep.subr.bf16.mxu0 0
        %2729 = vmatpush1.bf16.msra.mxu0 0
        %2730 = vmatprep.subr.bf16.mxu0 0
        %2731 = vmatpush1.bf16.msra.mxu0 0
        %2732 = vmatprep.subr.bf16.mxu0 0
        %2733 = vmatpush1.bf16.msra.mxu0 0
        %2734 = vmatprep.subr.bf16.mxu0 0
        %2735 = vmatpush1.bf16.msra.mxu0 0
        %2736 = vmatprep.subr.bf16.mxu0 0
        %2737 = vmatpush1.bf16.msra.mxu0 0
        %2738 = vmatprep.subr.bf16.mxu0 0
        %2739 = vmatpush1.bf16.msra.mxu0 0
        %2740 = vmatprep.subr.bf16.mxu0 0
        %2741 = vmatpush1.bf16.msra.mxu0 0
        %2742 = vmatprep.subr.bf16.mxu0 0
        %2743 = vmatpush1.bf16.msra.mxu0 0
        %2744 = vmatprep.subr.bf16.mxu0 0
        %2745 = vmatpush1.bf16.msra.mxu0 0
        %2746 = vmatprep.subr.bf16.mxu0 0
        %2747 = vmatpush1.bf16.msra.mxu0 0
        %2748 = vmatprep.mubr.bf16.mxu0 0
        %2749 = vmatmul.mubr.bf16.gmra.mrb[0].mxu0 %v2711
        %v2750 = vpop.f32.mrb[0].mxu0
        %v2751 = vadd.f32 0.0, %v2750
        %v2752 = vpop.f32.mrb[0].mxu0
        %v2753 = vpop.f32.mrb[0].mxu0
        %v2754 = vpop.f32.mrb[0].mxu0
        %2755 = vdwg.mxu0
        %v2757 = vsel %vm2564, %v2612, 0
        %v2760 = vsel %vm2620, %v2616, 0
        %2762 = vmatprep.subr.bf16.mxu0 0
        %2763 = vmatpush1.bf16.msra.mxu0 %v2760
        %2764 = vmatprep.subr.bf16.mxu0 0
        %2765 = vmatpush1.bf16.msra.mxu0 0
        %2766 = vmatprep.subr.bf16.mxu0 0
        %2767 = vmatpush1.bf16.msra.mxu0 0
        %2768 = vmatprep.subr.bf16.mxu0 0
        %2769 = vmatpush1.bf16.msra.mxu0 0
        %2770 = vmatprep.subr.bf16.mxu0 0
        %2771 = vmatpush1.bf16.msra.mxu0 0
        %2772 = vmatprep.subr.bf16.mxu0 0
        %2773 = vmatpush1.bf16.msra.mxu0 0
        %2774 = vmatprep.subr.bf16.mxu0 0
        %2775 = vmatpush1.bf16.msra.mxu0 0
        %2776 = vmatprep.subr.bf16.mxu0 0
        %2777 = vmatpush1.bf16.msra.mxu0 0
        %2778 = vmatprep.subr.bf16.mxu0 0
        %2779 = vmatpush1.bf16.msra.mxu0 0
        %2780 = vmatprep.subr.bf16.mxu0 0
        %2781 = vmatpush1.bf16.msra.mxu0 0
        %2782 = vmatprep.subr.bf16.mxu0 0
        %2783 = vmatpush1.bf16.msra.mxu0 0
        %2784 = vmatprep.subr.bf16.mxu0 0
        %2785 = vmatpush1.bf16.msra.mxu0 0
        %2786 = vmatprep.subr.bf16.mxu0 0
        %2787 = vmatpush1.bf16.msra.mxu0 0
        %2788 = vmatprep.subr.bf16.mxu0 0
        %2789 = vmatpush1.bf16.msra.mxu0 0
        %2790 = vmatprep.subr.bf16.mxu0 0
        %2791 = vmatpush1.bf16.msra.mxu0 0
        %2792 = vmatprep.subr.bf16.mxu0 0
        %2793 = vmatpush1.bf16.msra.mxu0 0
        %2794 = vmatprep.mubr.bf16.mxu0 0
        %2795 = vmatmul.mubr.bf16.gmra.mrb[0].mxu0 %v2757
        %v2796 = vpop.f32.mrb[0].mxu0
        %v2797 = vadd.f32 0.0, %v2796
        %v2798 = vpop.f32.mrb[0].mxu0
        %v2799 = vpop.f32.mrb[0].mxu0
        %v2800 = vpop.f32.mrb[0].mxu0
        %2801 = vdwg.mxu0
        %2803 = vrot.lane.b32.xlu0 %v2705, 32
        %v2804 = vpop.permute.xlu0 %2803
        %2807 = vrot.lane.b32.xlu0 %v2751, 64
        %v2808 = vpop.permute.xlu0 %2807
        %2811 = vrot.lane.b32.xlu0 %v2797, 96
        %v2812 = vpop.permute.xlu0 %2811
        %v2814 = vsel %vm2365, %v2659, %v2804
        %vm2815 = vcmask 523264
        %v2816 = vsel %vm2815, %v2814, %v2808
        %vm2817 = vcmask 785408
        %v2818 = vsel %vm2817, %v2816, %v2812
        %v2819 = vld [vmem:[#allocation14] sm:$0xf]
        %v2820 = vld [vmem:[#allocation14 + $0x4] sm:$0xf]
        %v2821 = vld [vmem:[#allocation14 + $0x8] sm:$0xf]
        %v2822 = vld [vmem:[#allocation14 + $0xc] sm:$0xf]
        %v2823 = vld [vmem:[#allocation14 + $0x10] sm:$0xf]
        %v2824 = vld [vmem:[#allocation14 + $0x14] sm:$0xf]
        %v2825 = vld [vmem:[#allocation14 + $0x18] sm:$0xf]
        %v2826 = vld [vmem:[#allocation14 + $0x1c] sm:$0xf]
        %v2827 = vld [vmem:[#allocation14 + $0x20] sm:$0xf]
        %v2828 = vld [vmem:[#allocation14 + $0x24] sm:$0xf]
        %v2829 = vld [vmem:[#allocation14 + $0x28] sm:$0xf]
        %v2830 = vld [vmem:[#allocation14 + $0x2c] sm:$0xf]
        %v2831 = vld [vmem:[#allocation14 + $0x30] sm:$0xf]
        %v2832 = vld [vmem:[#allocation14 + $0x34] sm:$0xf]
        %v2833 = vld [vmem:[#allocation14 + $0x38] sm:$0xf]
        %v2834 = vld [vmem:[#allocation14 + $0x3c] sm:$0xf]
        %v2835 = vpack.c.bf16 %v2818, %v2818
        %v2852 = vunpack.c.l.b16 %v2819
        %v2853 = vunpack.c.l.b16 %v2820
        %v2854 = vunpack.c.l.b16 %v2821
        %v2855 = vunpack.c.l.b16 %v2822
        %v2856 = vunpack.c.l.b16 %v2823
        %v2857 = vunpack.c.l.b16 %v2824
        %v2858 = vunpack.c.l.b16 %v2825
        %v2859 = vunpack.c.l.b16 %v2826
        %v2860 = vunpack.c.l.b16 %v2827
        %v2861 = vunpack.c.l.b16 %v2828
        %v2862 = vunpack.c.l.b16 %v2829
        %v2863 = vunpack.c.l.b16 %v2830
        %v2864 = vunpack.c.l.b16 %v2831
        %v2865 = vunpack.c.l.b16 %v2832
        %v2866 = vunpack.c.l.b16 %v2833
        %v2867 = vunpack.c.l.b16 %v2834
        %v2868 = vpack.c.b16 %v2853, %v2852
        %v2869 = vpack.c.b16 %v2855, %v2854
        %v2870 = vpack.c.b16 %v2857, %v2856
        %v2871 = vpack.c.b16 %v2859, %v2858
        %v2872 = vpack.c.b16 %v2861, %v2860
        %v2873 = vpack.c.b16 %v2863, %v2862
        %v2874 = vpack.c.b16 %v2865, %v2864
        %v2875 = vpack.c.b16 %v2867, %v2866
        %2884 = vmatprep.subr.bf16.mxu0 0
        %2885 = vmatpush1.bf16.msra.mxu0 %v2868
        %2886 = vmatprep.subr.bf16.mxu0 0
        %2887 = vmatpush1.bf16.msra.mxu0 %v2869
        %2888 = vmatprep.subr.bf16.mxu0 0
        %2889 = vmatpush1.bf16.msra.mxu0 %v2870
        %2890 = vmatprep.subr.bf16.mxu0 0
        %2891 = vmatpush1.bf16.msra.mxu0 %v2871
        %2892 = vmatprep.subr.bf16.mxu0 0
        %2893 = vmatpush1.bf16.msra.mxu0 %v2872
        %2894 = vmatprep.subr.bf16.mxu0 0
        %2895 = vmatpush1.bf16.msra.mxu0 %v2873
        %2896 = vmatprep.subr.bf16.mxu0 0
        %2897 = vmatpush1.bf16.msra.mxu0 %v2874
        %2898 = vmatprep.subr.bf16.mxu0 0
        %2899 = vmatpush1.bf16.msra.mxu0 %v2875
        %2900 = vmatprep.subr.bf16.mxu0 0
        %2901 = vmatpush1.bf16.msra.mxu0 0
        %2902 = vmatprep.subr.bf16.mxu0 0
        %2903 = vmatpush1.bf16.msra.mxu0 0
        %2904 = vmatprep.subr.bf16.mxu0 0
        %2905 = vmatpush1.bf16.msra.mxu0 0
        %2906 = vmatprep.subr.bf16.mxu0 0
        %2907 = vmatpush1.bf16.msra.mxu0 0
        %2908 = vmatprep.subr.bf16.mxu0 0
        %2909 = vmatpush1.bf16.msra.mxu0 0
        %2910 = vmatprep.subr.bf16.mxu0 0
        %2911 = vmatpush1.bf16.msra.mxu0 0
        %2912 = vmatprep.subr.bf16.mxu0 0
        %2913 = vmatpush1.bf16.msra.mxu0 0
        %2914 = vmatprep.subr.bf16.mxu0 0
        %2915 = vmatpush1.bf16.msra.mxu0 0
        %2916 = vmatprep.mubr.bf16.mxu0 0
        %2917 = vmatmul.mubr.bf16.gmra.mrb[0].mxu0 %v2835
        %v2918 = vpop.f32.mrb[0].mxu0
        %v2919 = vadd.f32 0.0, %v2918
        %v2920 = vpop.f32.mrb[0].mxu0
        %v2921 = vpop.f32.mrb[0].mxu0
        %v2922 = vpop.f32.mrb[0].mxu0
        %2923 = vdwg.mxu0
        %v2924 = vadd.f32 %v2038, %v2919
        %v2925 = vld [vmem:[#allocation15] sm:$0x1]
        %v2927 = vlaneseq
        %v2928 = vshrl.u32 %v2927, 7
        %v2929 = vsub.s32 0, %v2928
        %v2930 = vrot.slane %v2925, %v2929
        %v2932 = vadd.f32 %v2924, %v2930
        %v2933 = vld [vmem:[#allocation17] sm:$0x1]
        %v2934 = vld [vmem:[#allocation18] sm:$0x1]
        %2935 = vadd.xlane.f32.xlu0 %v2932
        %v2936 = vpop.xlane.xlu0 %2935
        %v2937 = vmul.f32 %v2936, %v2044
        %v2938 = vsub.f32 %v2932, %v2937
        %v2939 = vmul.f32 %v2938, %v2938
        %2940 = vadd.xlane.f32.xlu0 %v2939
        %v2941 = vpop.xlane.xlu0 %2940
        %v2942 = vmul.f32 %v2941, %v2044
        %v2943 = vadd.f32 %v2942, 1e-06
        %v2944 = vrsqrt.pop %v2943
        %v2945 = vmul.f32 %v2938, %v2944
        %v2947 = vlaneseq
        %v2948 = vshrl.u32 %v2947, 7
        %v2949 = vsub.s32 0, %v2948
        %v2950 = vrot.slane %v2933, %v2949
        %v2952 = vmul.f32 %v2945, %v2950
        %v2954 = vlaneseq
        %v2955 = vshrl.u32 %v2954, 7
        %v2956 = vsub.s32 0, %v2955
        %v2957 = vrot.slane %v2934, %v2956
        %v2959 = vadd.f32 %v2952, %v2957
        %v2960 = vld [vmem:[#allocation20] sm:$0xff]
        %v2961 = vld [vmem:[#allocation20 + $0x8] sm:$0xff]
        %v2962 = vld [vmem:[#allocation20 + $0x10] sm:$0xff]
        %v2963 = vld [vmem:[#allocation20 + $0x18] sm:$0xff]
        %v2964 = vld [vmem:[#allocation20 + $0x20] sm:$0xff]
        %v2965 = vld [vmem:[#allocation20 + $0x28] sm:$0xff]
        %v2966 = vld [vmem:[#allocation20 + $0x30] sm:$0xff]
        %v2967 = vld [vmem:[#allocation20 + $0x38] sm:$0xff]
        %v2968 = vld [vmem:[#allocation20 + $0x40] sm:$0xff]
        %v2969 = vld [vmem:[#allocation20 + $0x48] sm:$0xff]
        %v2970 = vld [vmem:[#allocation20 + $0x50] sm:$0xff]
        %v2971 = vld [vmem:[#allocation20 + $0x58] sm:$0xff]
        %v2972 = vld [vmem:[#allocation20 + $0x60] sm:$0xff]
        %v2973 = vld [vmem:[#allocation20 + $0x68] sm:$0xff]
        %v2974 = vld [vmem:[#allocation20 + $0x70] sm:$0xff]
        %v2975 = vld [vmem:[#allocation20 + $0x78] sm:$0xff]
        %v2976 = vpack.c.bf16 %v2959, %v2959
        %v2977 = vld [vmem:[#allocation21] sm:$0x3]
        %v2979 = vlaneseq
        %v2980 = vshrl.u32 %v2979, 7
        %v2981 = vsub.s32 0, %v2980
        %v2982 = vrot.slane %v2977, %v2981
        %v2983 = vlaneseq
        %v2984 = vshrl.u32 %v2983, 7
        %v2985 = vsub.s32 1, %v2984
        %v2986 = vrot.slane %v2977, %v2985
        %v3005 = vunpack.c.l.b16 %v2960
        %v3006 = vunpack.c.h.b16 %v2960
        %v3007 = vunpack.c.l.b16 %v2961
        %v3008 = vunpack.c.h.b16 %v2961
        %v3009 = vunpack.c.l.b16 %v2962
        %v3010 = vunpack.c.h.b16 %v2962
        %v3011 = vunpack.c.l.b16 %v2963
        %v3012 = vunpack.c.h.b16 %v2963
        %v3013 = vunpack.c.l.b16 %v2964
        %v3014 = vunpack.c.h.b16 %v2964
        %v3015 = vunpack.c.l.b16 %v2965
        %v3016 = vunpack.c.h.b16 %v2965
        %v3017 = vunpack.c.l.b16 %v2966
        %v3018 = vunpack.c.h.b16 %v2966
        %v3019 = vunpack.c.l.b16 %v2967
        %v3020 = vunpack.c.h.b16 %v2967
        %v3021 = vunpack.c.l.b16 %v2968
        %v3022 = vunpack.c.h.b16 %v2968
        %v3023 = vunpack.c.l.b16 %v2969
        %v3024 = vunpack.c.h.b16 %v2969
        %v3025 = vunpack.c.l.b16 %v2970
        %v3026 = vunpack.c.h.b16 %v2970
        %v3027 = vunpack.c.l.b16 %v2971
        %v3028 = vunpack.c.h.b16 %v2971
        %v3029 = vunpack.c.l.b16 %v2972
        %v3030 = vunpack.c.h.b16 %v2972
        %v3031 = vunpack.c.l.b16 %v2973
        %v3032 = vunpack.c.h.b16 %v2973
        %v3033 = vunpack.c.l.b16 %v2974
        %v3034 = vunpack.c.h.b16 %v2974
        %v3035 = vunpack.c.l.b16 %v2975
        %v3036 = vunpack.c.h.b16 %v2975
        %v3037 = vpack.c.b16 %v3007, %v3005
        %v3038 = vpack.c.b16 %v3008, %v3006
        %v3039 = vpack.c.b16 %v3011, %v3009
        %v3040 = vpack.c.b16 %v3012, %v3010
        %v3041 = vpack.c.b16 %v3015, %v3013
        %v3042 = vpack.c.b16 %v3016, %v3014
        %v3043 = vpack.c.b16 %v3019, %v3017
        %v3044 = vpack.c.b16 %v3020, %v3018
        %v3045 = vpack.c.b16 %v3023, %v3021
        %v3046 = vpack.c.b16 %v3024, %v3022
        %v3047 = vpack.c.b16 %v3027, %v3025
        %v3048 = vpack.c.b16 %v3028, %v3026
        %v3049 = vpack.c.b16 %v3031, %v3029
        %v3050 = vpack.c.b16 %v3032, %v3030
        %v3051 = vpack.c.b16 %v3035, %v3033
        %v3052 = vpack.c.b16 %v3036, %v3034
        %3069 = vmatprep.subr.bf16.mxu0 %v3038
        %3070 = vmatpush1.bf16.msra.mxu0 %v3037
        %3071 = vmatprep.subr.bf16.mxu0 %v3040
        %3072 = vmatpush1.bf16.msra.mxu0 %v3039
        %3073 = vmatprep.subr.bf16.mxu0 %v3042
        %3074 = vmatpush1.bf16.msra.mxu0 %v3041
        %3075 = vmatprep.subr.bf16.mxu0 %v3044
        %3076 = vmatpush1.bf16.msra.mxu0 %v3043
        %3077 = vmatprep.subr.bf16.mxu0 %v3046
        %3078 = vmatpush1.bf16.msra.mxu0 %v3045
        %3079 = vmatprep.subr.bf16.mxu0 %v3048
        %3080 = vmatpush1.bf16.msra.mxu0 %v3047
        %3081 = vmatprep.subr.bf16.mxu0 %v3050
        %3082 = vmatpush1.bf16.msra.mxu0 %v3049
        %3083 = vmatprep.subr.bf16.mxu0 %v3052
        %3084 = vmatpush1.bf16.msra.mxu0 %v3051
        %3085 = vmatprep.subr.bf16.mxu0 0
        %3086 = vmatpush1.bf16.msra.mxu0 0
        %3087 = vmatprep.subr.bf16.mxu0 0
        %3088 = vmatpush1.bf16.msra.mxu0 0
        %3089 = vmatprep.subr.bf16.mxu0 0
        %3090 = vmatpush1.bf16.msra.mxu0 0
        %3091 = vmatprep.subr.bf16.mxu0 0
        %3092 = vmatpush1.bf16.msra.mxu0 0
        %3093 = vmatprep.subr.bf16.mxu0 0
        %3094 = vmatpush1.bf16.msra.mxu0 0
        %3095 = vmatprep.subr.bf16.mxu0 0
        %3096 = vmatpush1.bf16.msra.mxu0 0
        %3097 = vmatprep.subr.bf16.mxu0 0
        %3098 = vmatpush1.bf16.msra.mxu0 0
        %3099 = vmatprep.subr.bf16.mxu0 0
        %3100 = vmatpush1.bf16.msra.mxu0 0
        %3101 = vmatprep.mubr.bf16.mxu0 0
        %3102 = vmatmul.mubr.bf16.gmra.mrb[0].mxu0 %v2976
        %v3103 = vpop.f32.mrb[0].mxu0
        %v3104 = vadd.f32 %v2982, %v3103
        %v3105 = vpop.f32.mrb[0].mxu0
        %v3106 = vadd.f32 %v2986, %v3105
        %v3107 = vpop.f32.mrb[0].mxu0
        %v3108 = vpop.f32.mrb[0].mxu0
        %3109 = vdwg.mxu0
        %v3110 = vmul.f32 %v3104, %v3104
        %v3111 = vmul.f32 %v3106, %v3106
        %v3112 = vmul.f32 %v3104, %v3110
        %v3113 = vmul.f32 %v3106, %v3111
        %v3114 = vmul.f32 %v3112, 0.044715
        %v3115 = vmul.f32 %v3113, 0.044715
        %v3116 = vadd.f32 %v3104, %v3114
        %v3117 = vadd.f32 %v3106, %v3115
        %v3118 = vmul.f32 %v3116, 0.7978846
        %v3119 = vmul.f32 %v3117, 0.7978846
        %v3120 = vtanh.pop %v3118
        %v3121 = vtanh.pop %v3119
        %v3122 = vadd.f32 %v3120, 1.0
        %v3123 = vadd.f32 %v3121, 1.0
        %v3124 = vmul.f32 %v3122, 0.5
        %v3125 = vmul.f32 %v3123, 0.5
        %v3126 = vmul.f32 %v3104, %v3124
        %v3127 = vmul.f32 %v3106, %v3125
        %v3128 = vld [vmem:[#allocation23] sm:$0xf]
        %v3129 = vld [vmem:[#allocation23 + $0x4] sm:$0xf]
        %v3130 = vld [vmem:[#allocation23 + $0x8] sm:$0xf]
        %v3131 = vld [vmem:[#allocation23 + $0xc] sm:$0xf]
        %v3132 = vld [vmem:[#allocation23 + $0x10] sm:$0xf]
        %v3133 = vld [vmem:[#allocation23 + $0x14] sm:$0xf]
        %v3134 = vld [vmem:[#allocation23 + $0x18] sm:$0xf]
        %v3135 = vld [vmem:[#allocation23 + $0x1c] sm:$0xf]
        %v3136 = vld [vmem:[#allocation23 + $0x20] sm:$0xf]
        %v3137 = vld [vmem:[#allocation23 + $0x24] sm:$0xf]
        %v3138 = vld [vmem:[#allocation23 + $0x28] sm:$0xf]
        %v3139 = vld [vmem:[#allocation23 + $0x2c] sm:$0xf]
        %v3140 = vld [vmem:[#allocation23 + $0x30] sm:$0xf]
        %v3141 = vld [vmem:[#allocation23 + $0x34] sm:$0xf]
        %v3142 = vld [vmem:[#allocation23 + $0x38] sm:$0xf]
        %v3143 = vld [vmem:[#allocation23 + $0x3c] sm:$0xf]
        %v3144 = vld [vmem:[#allocation23 + $0x40] sm:$0xf]
        %v3145 = vld [vmem:[#allocation23 + $0x44] sm:$0xf]
        %v3146 = vld [vmem:[#allocation23 + $0x48] sm:$0xf]
        %v3147 = vld [vmem:[#allocation23 + $0x4c] sm:$0xf]
        %v3148 = vld [vmem:[#allocation23 + $0x50] sm:$0xf]
        %v3149 = vld [vmem:[#allocation23 + $0x54] sm:$0xf]
        %v3150 = vld [vmem:[#allocation23 + $0x58] sm:$0xf]
        %v3151 = vld [vmem:[#allocation23 + $0x5c] sm:$0xf]
        %v3152 = vld [vmem:[#allocation23 + $0x60] sm:$0xf]
        %v3153 = vld [vmem:[#allocation23 + $0x64] sm:$0xf]
        %v3154 = vld [vmem:[#allocation23 + $0x68] sm:$0xf]
        %v3155 = vld [vmem:[#allocation23 + $0x6c] sm:$0xf]
        %v3156 = vld [vmem:[#allocation23 + $0x70] sm:$0xf]
        %v3157 = vld [vmem:[#allocation23 + $0x74] sm:$0xf]
        %v3158 = vld [vmem:[#allocation23 + $0x78] sm:$0xf]
        %v3159 = vld [vmem:[#allocation23 + $0x7c] sm:$0xf]
        %v3160 = vpack.c.bf16 %v3126, %v3126
        %v3161 = vpack.c.bf16 %v3127, %v3127
        %v3162 = vld [vmem:[#allocation24] sm:$0x1]
        %v3164 = vlaneseq
        %v3165 = vshrl.u32 %v3164, 7
        %v3166 = vsub.s32 0, %v3165
        %v3167 = vrot.slane %v3162, %v3166
        %v3201 = vunpack.c.l.b16 %v3128
        %v3202 = vunpack.c.l.b16 %v3129
        %v3203 = vunpack.c.l.b16 %v3130
        %v3204 = vunpack.c.l.b16 %v3131
        %v3205 = vunpack.c.l.b16 %v3132
        %v3206 = vunpack.c.l.b16 %v3133
        %v3207 = vunpack.c.l.b16 %v3134
        %v3208 = vunpack.c.l.b16 %v3135
        %v3209 = vunpack.c.l.b16 %v3136
        %v3210 = vunpack.c.l.b16 %v3137
        %v3211 = vunpack.c.l.b16 %v3138
        %v3212 = vunpack.c.l.b16 %v3139
        %v3213 = vunpack.c.l.b16 %v3140
        %v3214 = vunpack.c.l.b16 %v3141
        %v3215 = vunpack.c.l.b16 %v3142
        %v3216 = vunpack.c.l.b16 %v3143
        %v3217 = vunpack.c.l.b16 %v3144
        %v3218 = vunpack.c.l.b16 %v3145
        %v3219 = vunpack.c.l.b16 %v3146
        %v3220 = vunpack.c.l.b16 %v3147
        %v3221 = vunpack.c.l.b16 %v3148
        %v3222 = vunpack.c.l.b16 %v3149
        %v3223 = vunpack.c.l.b16 %v3150
        %v3224 = vunpack.c.l.b16 %v3151
        %v3225 = vunpack.c.l.b16 %v3152
        %v3226 = vunpack.c.l.b16 %v3153
        %v3227 = vunpack.c.l.b16 %v3154
        %v3228 = vunpack.c.l.b16 %v3155
        %v3229 = vunpack.c.l.b16 %v3156
        %v3230 = vunpack.c.l.b16 %v3157
        %v3231 = vunpack.c.l.b16 %v3158
        %v3232 = vunpack.c.l.b16 %v3159
        %v3233 = vpack.c.b16 %v3202, %v3201
        %v3234 = vpack.c.b16 %v3204, %v3203
        %v3235 = vpack.c.b16 %v3206, %v3205
        %v3236 = vpack.c.b16 %v3208, %v3207
        %v3237 = vpack.c.b16 %v3210, %v3209
        %v3238 = vpack.c.b16 %v3212, %v3211
        %v3239 = vpack.c.b16 %v3214, %v3213
        %v3240 = vpack.c.b16 %v3216, %v3215
        %v3241 = vpack.c.b16 %v3218, %v3217
        %v3242 = vpack.c.b16 %v3220, %v3219
        %v3243 = vpack.c.b16 %v3222, %v3221
        %v3244 = vpack.c.b16 %v3224, %v3223
        %v3245 = vpack.c.b16 %v3226, %v3225
        %v3246 = vpack.c.b16 %v3228, %v3227
        %v3247 = vpack.c.b16 %v3230, %v3229
        %v3248 = vpack.c.b16 %v3232, %v3231
        %3265 = vmatprep.subr.bf16.mxu0 0
        %3266 = vmatpush1.bf16.msra.mxu0 %v3233
        %3267 = vmatprep.subr.bf16.mxu0 0
        %3268 = vmatpush1.bf16.msra.mxu0 %v3234
        %3269 = vmatprep.subr.bf16.mxu0 0
        %3270 = vmatpush1.bf16.msra.mxu0 %v3235
        %3271 = vmatprep.subr.bf16.mxu0 0
        %3272 = vmatpush1.bf16.msra.mxu0 %v3236
        %3273 = vmatprep.subr.bf16.mxu0 0
        %3274 = vmatpush1.bf16.msra.mxu0 %v3237
        %3275 = vmatprep.subr.bf16.mxu0 0
        %3276 = vmatpush1.bf16.msra.mxu0 %v3238
        %3277 = vmatprep.subr.bf16.mxu0 0
        %3278 = vmatpush1.bf16.msra.mxu0 %v3239
        %3279 = vmatprep.subr.bf16.mxu0 0
        %3280 = vmatpush1.bf16.msra.mxu0 %v3240
        %3281 = vmatprep.subr.bf16.mxu0 0
        %3282 = vmatpush1.bf16.msra.mxu0 %v3241
        %3283 = vmatprep.subr.bf16.mxu0 0
        %3284 = vmatpush1.bf16.msra.mxu0 %v3242
        %3285 = vmatprep.subr.bf16.mxu0 0
        %3286 = vmatpush1.bf16.msra.mxu0 %v3243
        %3287 = vmatprep.subr.bf16.mxu0 0
        %3288 = vmatpush1.bf16.msra.mxu0 %v3244
        %3289 = vmatprep.subr.bf16.mxu0 0
        %3290 = vmatpush1.bf16.msra.mxu0 %v3245
        %3291 = vmatprep.subr.bf16.mxu0 0
        %3292 = vmatpush1.bf16.msra.mxu0 %v3246
        %3293 = vmatprep.subr.bf16.mxu0 0
        %3294 = vmatpush1.bf16.msra.mxu0 %v3247
        %3295 = vmatprep.subr.bf16.mxu0 0
        %3296 = vmatpush1.bf16.msra.mxu0 %v3248
        %3297 = vmatprep.mubr.bf16.mxu0 %v3161
        %3298 = vmatmul.mubr.bf16.gmra.mrb[0].mxu0 %v3160
        %v3299 = vpop.f32.mrb[0].mxu0
        %v3300 = vadd.f32 %v3167, %v3299
        %v3301 = vpop.f32.mrb[0].mxu0
        %v3302 = vpop.f32.mrb[0].mxu0
        %v3303 = vpop.f32.mrb[0].mxu0
        %3304 = vdwg.mxu0
        %v3305 = vadd.f32 %v2932, %v3300
        %s3306 = scalar_lea.vmem [#allocation9], 1
        %v3307 = vld [vmem:[%s3306] sm:$0x1]
        %s3308 = scalar_lea.vmem [#allocation11], 1
        %v3309 = vld [vmem:[%s3308] sm:$0x1]
        %3310 = vadd.xlane.f32.xlu0 %v3305
        %v3311 = vpop.xlane.xlu0 %3310
        %v3312 = vmul.f32 %v3311, %v2044
        %v3313 = vsub.f32 %v3305, %v3312
        %v3314 = vmul.f32 %v3313, %v3313
        %3315 = vadd.xlane.f32.xlu0 %v3314
        %v3316 = vpop.xlane.xlu0 %3315
        %v3317 = vmul.f32 %v3316, %v2044
        %v3318 = vadd.f32 %v3317, 1e-06
        %v3319 = vrsqrt.pop %v3318
        %v3320 = vmul.f32 %v3313, %v3319
        %v3322 = vlaneseq
        %v3323 = vshrl.u32 %v3322, 7
        %v3324 = vsub.s32 0, %v3323
        %v3325 = vrot.slane %v3307, %v3324
        %v3327 = vmul.f32 %v3320, %v3325
        %v3329 = vlaneseq
        %v3330 = vshrl.u32 %v3329, 7
        %v3331 = vsub.s32 0, %v3330
        %v3332 = vrot.slane %v3309, %v3331
        %v3334 = vadd.f32 %v3327, %v3332
        %s3335 = scalar_lea.vmem %s15, 192
        %v3336 = vld [vmem:[%s3335] sm:$0xff]
        %v3337 = vld [vmem:[%s3335 + $0x8] sm:$0xf]
        %v3338 = vld [vmem:[%s3335 + $0xc] sm:$0xff]
        %v3339 = vld [vmem:[%s3335 + $0x14] sm:$0xf]
        %v3340 = vld [vmem:[%s3335 + $0x18] sm:$0xff]
        %v3341 = vld [vmem:[%s3335 + $0x20] sm:$0xf]
        %v3342 = vld [vmem:[%s3335 + $0x24] sm:$0xff]
        %v3343 = vld [vmem:[%s3335 + $0x2c] sm:$0xf]
        %v3344 = vld [vmem:[%s3335 + $0x30] sm:$0xff]
        %v3345 = vld [vmem:[%s3335 + $0x38] sm:$0xf]
        %v3346 = vld [vmem:[%s3335 + $0x3c] sm:$0xff]
        %v3347 = vld [vmem:[%s3335 + $0x44] sm:$0xf]
        %v3348 = vld [vmem:[%s3335 + $0x48] sm:$0xff]
        %v3349 = vld [vmem:[%s3335 + $0x50] sm:$0xf]
        %v3350 = vld [vmem:[%s3335 + $0x54] sm:$0xff]
        %v3351 = vld [vmem:[%s3335 + $0x5c] sm:$0xf]
        %v3352 = vld [vmem:[%s3335 + $0x60] sm:$0xff]
        %v3353 = vld [vmem:[%s3335 + $0x68] sm:$0xf]
        %v3354 = vld [vmem:[%s3335 + $0x6c] sm:$0xff]
        %v3355 = vld [vmem:[%s3335 + $0x74] sm:$0xf]
        %v3356 = vld [vmem:[%s3335 + $0x78] sm:$0xff]
        %v3357 = vld [vmem:[%s3335 + $0x80] sm:$0xf]
        %v3358 = vld [vmem:[%s3335 + $0x84] sm:$0xff]
        %v3359 = vld [vmem:[%s3335 + $0x8c] sm:$0xf]
        %v3360 = vld [vmem:[%s3335 + $0x90] sm:$0xff]
        %v3361 = vld [vmem:[%s3335 + $0x98] sm:$0xf]
        %v3362 = vld [vmem:[%s3335 + $0x9c] sm:$0xff]
        %v3363 = vld [vmem:[%s3335 + $0xa4] sm:$0xf]
        %v3364 = vld [vmem:[%s3335 + $0xa8] sm:$0xff]
        %v3365 = vld [vmem:[%s3335 + $0xb0] sm:$0xf]
        %v3366 = vld [vmem:[%s3335 + $0xb4] sm:$0xff]
        %v3367 = vld [vmem:[%s3335 + $0xbc] sm:$0xf]
        %v3368 = vpack.c.bf16 %v3334, %v3334
        %s3369 = scalar_lea.vmem [#allocation12], 3
        %v3370 = vld [vmem:[%s3369] sm:$0x7]
        %v3372 = vlaneseq
        %v3373 = vshrl.u32 %v3372, 7
        %v3374 = vsub.s32 0, %v3373
        %v3375 = vrot.slane %v3370, %v3374
        %v3376 = vlaneseq
        %v3377 = vshrl.u32 %v3376, 7
        %v3378 = vsub.s32 1, %v3377
        %v3379 = vrot.slane %v3370, %v3378
        %v3380 = vlaneseq
        %v3381 = vshrl.u32 %v3380, 7
        %v3382 = vsub.s32 2, %v3381
        %v3383 = vrot.slane %v3370, %v3382
        %v3419 = vunpack.c.l.b16 %v3336
        %v3420 = vunpack.c.h.b16 %v3336
        %v3421 = vunpack.c.l.b16 %v3337
        %v3422 = vunpack.c.l.b16 %v3338
        %v3423 = vunpack.c.h.b16 %v3338
        %v3424 = vunpack.c.l.b16 %v3339
        %v3425 = vunpack.c.l.b16 %v3340
        %v3426 = vunpack.c.h.b16 %v3340
        %v3427 = vunpack.c.l.b16 %v3341
        %v3428 = vunpack.c.l.b16 %v3342
        %v3429 = vunpack.c.h.b16 %v3342
        %v3430 = vunpack.c.l.b16 %v3343
        %v3431 = vunpack.c.l.b16 %v3344
        %v3432 = vunpack.c.h.b16 %v3344
        %v3433 = vunpack.c.l.b16 %v3345
        %v3434 = vunpack.c.l.b16 %v3346
        %v3435 = vunpack.c.h.b16 %v3346
        %v3436 = vunpack.c.l.b16 %v3347
        %v3437 = vunpack.c.l.b16 %v3348
        %v3438 = vunpack.c.h.b16 %v3348
        %v3439 = vunpack.c.l.b16 %v3349
        %v3440 = vunpack.c.l.b16 %v3350
        %v3441 = vunpack.c.h.b16 %v3350
        %v3442 = vunpack.c.l.b16 %v3351
        %v3443 = vunpack.c.l.b16 %v3352
        %v3444 = vunpack.c.h.b16 %v3352
        %v3445 = vunpack.c.l.b16 %v3353
        %v3446 = vunpack.c.l.b16 %v3354
        %v3447 = vunpack.c.h.b16 %v3354
        %v3448 = vunpack.c.l.b16 %v3355
        %v3449 = vunpack.c.l.b16 %v3356
        %v3450 = vunpack.c.h.b16 %v3356
        %v3451 = vunpack.c.l.b16 %v3357
        %v3452 = vunpack.c.l.b16 %v3358
        %v3453 = vunpack.c.h.b16 %v3358
        %v3454 = vunpack.c.l.b16 %v3359
        %v3455 = vunpack.c.l.b16 %v3360
        %v3456 = vunpack.c.h.b16 %v3360
        %v3457 = vunpack.c.l.b16 %v3361
        %v3458 = vunpack.c.l.b16 %v3362
        %v3459 = vunpack.c.h.b16 %v3362
        %v3460 = vunpack.c.l.b16 %v3363
        %v3461 = vunpack.c.l.b16 %v3364
        %v3462 = vunpack.c.h.b16 %v3364
        %v3463 = vunpack.c.l.b16 %v3365
        %v3464 = vunpack.c.l.b16 %v3366
        %v3465 = vunpack.c.h.b16 %v3366
        %v3466 = vunpack.c.l.b16 %v3367
        %v3467 = vpack.c.b16 %v3422, %v3419
        %v3468 = vpack.c.b16 %v3423, %v3420
        %v3469 = vpack.c.b16 %v3424, %v3421
        %v3470 = vpack.c.b16 %v3428, %v3425
        %v3471 = vpack.c.b16 %v3429, %v3426
        %v3472 = vpack.c.b16 %v3430, %v3427
        %v3473 = vpack.c.b16 %v3434, %v3431
        %v3474 = vpack.c.b16 %v3435, %v3432
        %v3475 = vpack.c.b16 %v3436, %v3433
        %v3476 = vpack.c.b16 %v3440, %v3437
        %v3477 = vpack.c.b16 %v3441, %v3438
        %v3478 = vpack.c.b16 %v3442, %v3439
        %v3479 = vpack.c.b16 %v3446, %v3443
        %v3480 = vpack.c.b16 %v3447, %v3444
        %v3481 = vpack.c.b16 %v3448, %v3445
        %v3482 = vpack.c.b16 %v3452, %v3449
        %v3483 = vpack.c.b16 %v3453, %v3450
        %v3484 = vpack.c.b16 %v3454, %v3451
        %v3485 = vpack.c.b16 %v3458, %v3455
        %v3486 = vpack.c.b16 %v3459, %v3456
        %v3487 = vpack.c.b16 %v3460, %v3457
        %v3488 = vpack.c.b16 %v3464, %v3461
        %v3489 = vpack.c.b16 %v3465, %v3462
        %v3490 = vpack.c.b16 %v3466, %v3463
        %3515 = vmatprep.subr.bf16.mxu0 %v3468
        %3516 = vmatpush1.bf16.msra.mxu0 %v3467
        %3517 = vmatprep.subr.bf16.mxu0 %v3471
        %3518 = vmatpush1.bf16.msra.mxu0 %v3470
        %3519 = vmatprep.subr.bf16.mxu0 %v3474
        %3520 = vmatpush1.bf16.msra.mxu0 %v3473
        %3521 = vmatprep.subr.bf16.mxu0 %v3477
        %3522 = vmatpush1.bf16.msra.mxu0 %v3476
        %3523 = vmatprep.subr.bf16.mxu0 %v3480
        %3524 = vmatpush1.bf16.msra.mxu0 %v3479
        %3525 = vmatprep.subr.bf16.mxu0 %v3483
        %3526 = vmatpush1.bf16.msra.mxu0 %v3482
        %3527 = vmatprep.subr.bf16.mxu0 %v3486
        %3528 = vmatpush1.bf16.msra.mxu0 %v3485
        %3529 = vmatprep.subr.bf16.mxu0 %v3489
        %3530 = vmatpush1.bf16.msra.mxu0 %v3488
        %3531 = vmatprep.subr.bf16.mxu0 0
        %3532 = vmatpush1.bf16.msra.mxu0 0
        %3533 = vmatprep.subr.bf16.mxu0 0
        %3534 = vmatpush1.bf16.msra.mxu0 0
        %3535 = vmatprep.subr.bf16.mxu0 0
        %3536 = vmatpush1.bf16.msra.mxu0 0
        %3537 = vmatprep.subr.bf16.mxu0 0
        %3538 = vmatpush1.bf16.msra.mxu0 0
        %3539 = vmatprep.subr.bf16.mxu0 0
        %3540 = vmatpush1.bf16.msra.mxu0 0
        %3541 = vmatprep.subr.bf16.mxu0 0
        %3542 = vmatpush1.bf16.msra.mxu0 0
        %3543 = vmatprep.subr.bf16.mxu0 0
        %3544 = vmatpush1.bf16.msra.mxu0 0
        %3545 = vmatprep.subr.bf16.mxu0 0
        %3546 = vmatpush1.bf16.msra.mxu0 0
        %3547 = vmatprep.mubr.bf16.mxu0 0
        %3548 = vmatmul.mubr.bf16.gmra.mrb[0].mxu0 %v3368
        %v3549 = vpop.f32.mrb[0].mxu0
        %v3550 = vadd.f32 %v3375, %v3549
        %v3551 = vpop.f32.mrb[0].mxu0
        %v3552 = vadd.f32 %v3379, %v3551
        %v3553 = vpop.f32.mrb[0].mxu0
        %v3554 = vpop.f32.mrb[0].mxu0
        %3555 = vdwg.mxu0
        %3556 = vmatprep.subr.bf16.mxu0 0
        %3557 = vmatpush1.bf16.msra.mxu0 %v3469
        %3558 = vmatprep.subr.bf16.mxu0 0
        %3559 = vmatpush1.bf16.msra.mxu0 %v3472
        %3560 = vmatprep.subr.bf16.mxu0 0
        %3561 = vmatpush1.bf16.msra.mxu0 %v3475
        %3562 = vmatprep.subr.bf16.mxu0 0
        %3563 = vmatpush1.bf16.msra.mxu0 %v3478
        %3564 = vmatprep.subr.bf16.mxu0 0
        %3565 = vmatpush1.bf16.msra.mxu0 %v3481
        %3566 = vmatprep.subr.bf16.mxu0 0
        %3567 = vmatpush1.bf16.msra.mxu0 %v3484
        %3568 = vmatprep.subr.bf16.mxu0 0
        %3569 = vmatpush1.bf16.msra.mxu0 %v3487
        %3570 = vmatprep.subr.bf16.mxu0 0
        %3571 = vmatpush1.bf16.msra.mxu0 %v3490
        %3572 = vmatprep.subr.bf16.mxu0 0
        %3573 = vmatpush1.bf16.msra.mxu0 0
        %3574 = vmatprep.subr.bf16.mxu0 0
        %3575 = vmatpush1.bf16.msra.mxu0 0
        %3576 = vmatprep.subr.bf16.mxu0 0
        %3577 = vmatpush1.bf16.msra.mxu0 0
        %3578 = vmatprep.subr.bf16.mxu0 0
        %3579 = vmatpush1.bf16.msra.mxu0 0
        %3580 = vmatprep.subr.bf16.mxu0 0
        %3581 = vmatpush1.bf16.msra.mxu0 0
        %3582 = vmatprep.subr.bf16.mxu0 0
        %3583 = vmatpush1.bf16.msra.mxu0 0
        %3584 = vmatprep.subr.bf16.mxu0 0
        %3585 = vmatpush1.bf16.msra.mxu0 0
        %3586 = vmatprep.subr.bf16.mxu0 0
        %3587 = vmatpush1.bf16.msra.mxu0 0
        %3588 = vmatprep.mubr.bf16.mxu0 0
        %3589 = vmatmul.mubr.bf16.gmra.mrb[0].mxu0 %v3368
        %v3590 = vpop.f32.mrb[0].mxu0
        %v3591 = vadd.f32 %v3383, %v3590
        %v3592 = vpop.f32.mrb[0].mxu0
        %v3593 = vpop.f32.mrb[0].mxu0
        %v3594 = vpop.f32.mrb[0].mxu0
        %3595 = vdwg.mxu0
        %3597 = vrot.lane.b32.xlu0 %v3550, 96
        %v3598 = vpop.permute.xlu0 %3597
        %3600 = vrot.lane.b32.xlu0 %v3550, 64
        %v3601 = vpop.permute.xlu0 %3600
        %3603 = vrot.lane.b32.xlu0 %v3550, 32
        %v3604 = vpop.permute.xlu0 %3603
        %3607 = vrot.lane.b32.xlu0 %v3552, 96
        %v3608 = vpop.permute.xlu0 %3607
        %3610 = vrot.lane.b32.xlu0 %v3552, 64
        %v3611 = vpop.permute.xlu0 %3610
        %3613 = vrot.lane.b32.xlu0 %v3552, 32
        %v3614 = vpop.permute.xlu0 %3613
        %3617 = vrot.lane.b32.xlu0 %v3591, 96
        %v3618 = vpop.permute.xlu0 %3617
        %3620 = vrot.lane.b32.xlu0 %v3591, 64
        %v3621 = vpop.permute.xlu0 %3620
        %3623 = vrot.lane.b32.xlu0 %v3591, 32
        %v3624 = vpop.permute.xlu0 %3623
        %v3626 = vpack.c.bf16 %v3550, %v3550
        %v3627 = vpack.c.bf16 %v3598, %v3598
        %v3628 = vpack.c.bf16 %v3601, %v3601
        %v3629 = vpack.c.bf16 %v3604, %v3604
        %v3630 = vpack.c.bf16 %v3552, %v3552
        %v3631 = vpack.c.bf16 %v3608, %v3608
        %v3632 = vpack.c.bf16 %v3611, %v3611
        %v3633 = vpack.c.bf16 %v3614, %v3614
        %v3635 = vsel %vm2365, %v3626, 0
        %v3638 = vsel %vm2365, %v3630, 0
        %3640 = vmatprep.subr.bf16.mxu0 0
        %3641 = vmatpush1.bf16.xpose.msra.mxu0 %v3638
        %3642 = vmatprep.subr.bf16.mxu0 0
        %3643 = vmatpush1.bf16.xpose.msra.mxu0 0
        %3644 = vmatprep.subr.bf16.mxu0 0
        %3645 = vmatpush1.bf16.xpose.msra.mxu0 0
        %3646 = vmatprep.subr.bf16.mxu0 0
        %3647 = vmatpush1.bf16.xpose.msra.mxu0 0
        %3648 = vmatprep.subr.bf16.mxu0 0
        %3649 = vmatpush1.bf16.xpose.msra.mxu0 0
        %3650 = vmatprep.subr.bf16.mxu0 0
        %3651 = vmatpush1.bf16.xpose.msra.mxu0 0
        %3652 = vmatprep.subr.bf16.mxu0 0
        %3653 = vmatpush1.bf16.xpose.msra.mxu0 0
        %3654 = vmatprep.subr.bf16.mxu0 0
        %3655 = vmatpush1.bf16.xpose.msra.mxu0 0
        %3656 = vmatprep.subr.bf16.mxu0 0
        %3657 = vmatpush1.bf16.xpose.msra.mxu0 0
        %3658 = vmatprep.subr.bf16.mxu0 0
        %3659 = vmatpush1.bf16.xpose.msra.mxu0 0
        %3660 = vmatprep.subr.bf16.mxu0 0
        %3661 = vmatpush1.bf16.xpose.msra.mxu0 0
        %3662 = vmatprep.subr.bf16.mxu0 0
        %3663 = vmatpush1.bf16.xpose.msra.mxu0 0
        %3664 = vmatprep.subr.bf16.mxu0 0
        %3665 = vmatpush1.bf16.xpose.msra.mxu0 0
        %3666 = vmatprep.subr.bf16.mxu0 0
        %3667 = vmatpush1.bf16.xpose.msra.mxu0 0
        %3668 = vmatprep.subr.bf16.mxu0 0
        %3669 = vmatpush1.bf16.xpose.msra.mxu0 0
        %3670 = vmatprep.subr.bf16.mxu0 0
        %3671 = vmatpush1.bf16.xpose.msra.mxu0 0
        %3672 = vmatprep.mubr.bf16.mxu0 0
        %3673 = vmatmul.mubr.bf16.gmra.mrb[0].mxu0 %v3635
        %v3674 = vpop.f32.mrb[0].mxu0
        %v3675 = vadd.f32 0.0, %v3674
        %v3676 = vpop.f32.mrb[0].mxu0
        %v3677 = vpop.f32.mrb[0].mxu0
        %v3678 = vpop.f32.mrb[0].mxu0
        %3679 = vdwg.mxu0
        %v3681 = vsel %vm2365, %v3627, 0
        %v3684 = vsel %vm2365, %v3631, 0
        %3686 = vmatprep.subr.bf16.mxu0 0
        %3687 = vmatpush1.bf16.xpose.msra.mxu0 %v3684
        %3688 = vmatprep.subr.bf16.mxu0 0
        %3689 = vmatpush1.bf16.xpose.msra.mxu0 0
        %3690 = vmatprep.subr.bf16.mxu0 0
        %3691 = vmatpush1.bf16.xpose.msra.mxu0 0
        %3692 = vmatprep.subr.bf16.mxu0 0
        %3693 = vmatpush1.bf16.xpose.msra.mxu0 0
        %3694 = vmatprep.subr.bf16.mxu0 0
        %3695 = vmatpush1.bf16.xpose.msra.mxu0 0
        %3696 = vmatprep.subr.bf16.mxu0 0
        %3697 = vmatpush1.bf16.xpose.msra.mxu0 0
        %3698 = vmatprep.subr.bf16.mxu0 0
        %3699 = vmatpush1.bf16.xpose.msra.mxu0 0
        %3700 = vmatprep.subr.bf16.mxu0 0
        %3701 = vmatpush1.bf16.xpose.msra.mxu0 0
        %3702 = vmatprep.subr.bf16.mxu0 0
        %3703 = vmatpush1.bf16.xpose.msra.mxu0 0
        %3704 = vmatprep.subr.bf16.mxu0 0
        %3705 = vmatpush1.bf16.xpose.msra.mxu0 0
        %3706 = vmatprep.subr.bf16.mxu0 0
        %3707 = vmatpush1.bf16.xpose.msra.mxu0 0
        %3708 = vmatprep.subr.bf16.mxu0 0
        %3709 = vmatpush1.bf16.xpose.msra.mxu0 0
        %3710 = vmatprep.subr.bf16.mxu0 0
        %3711 = vmatpush1.bf16.xpose.msra.mxu0 0
        %3712 = vmatprep.subr.bf16.mxu0 0
        %3713 = vmatpush1.bf16.xpose.msra.mxu0 0
        %3714 = vmatprep.subr.bf16.mxu0 0
        %3715 = vmatpush1.bf16.xpose.msra.mxu0 0
        %3716 = vmatprep.subr.bf16.mxu0 0
        %3717 = vmatpush1.bf16.xpose.msra.mxu0 0
        %3718 = vmatprep.mubr.bf16.mxu0 0
        %3719 = vmatmul.mubr.bf16.gmra.mrb[0].mxu0 %v3681
        %v3720 = vpop.f32.mrb[0].mxu0
        %v3721 = vadd.f32 0.0, %v3720
        %v3722 = vpop.f32.mrb[0].mxu0
        %v3723 = vpop.f32.mrb[0].mxu0
        %v3724 = vpop.f32.mrb[0].mxu0
        %3725 = vdwg.mxu0
        %v3727 = vsel %vm2365, %v3628, 0
        %v3730 = vsel %vm2365, %v3632, 0
        %3732 = vmatprep.subr.bf16.mxu0 0
        %3733 = vmatpush1.bf16.xpose.msra.mxu0 %v3730
        %3734 = vmatprep.subr.bf16.mxu0 0
        %3735 = vmatpush1.bf16.xpose.msra.mxu0 0
        %3736 = vmatprep.subr.bf16.mxu0 0
        %3737 = vmatpush1.bf16.xpose.msra.mxu0 0
        %3738 = vmatprep.subr.bf16.mxu0 0
        %3739 = vmatpush1.bf16.xpose.msra.mxu0 0
        %3740 = vmatprep.subr.bf16.mxu0 0
        %3741 = vmatpush1.bf16.xpose.msra.mxu0 0
        %3742 = vmatprep.subr.bf16.mxu0 0
        %3743 = vmatpush1.bf16.xpose.msra.mxu0 0
        %3744 = vmatprep.subr.bf16.mxu0 0
        %3745 = vmatpush1.bf16.xpose.msra.mxu0 0
        %3746 = vmatprep.subr.bf16.mxu0 0
        %3747 = vmatpush1.bf16.xpose.msra.mxu0 0
        %3748 = vmatprep.subr.bf16.mxu0 0
        %3749 = vmatpush1.bf16.xpose.msra.mxu0 0
        %3750 = vmatprep.subr.bf16.mxu0 0
        %3751 = vmatpush1.bf16.xpose.msra.mxu0 0
        %3752 = vmatprep.subr.bf16.mxu0 0
        %3753 = vmatpush1.bf16.xpose.msra.mxu0 0
        %3754 = vmatprep.subr.bf16.mxu0 0
        %3755 = vmatpush1.bf16.xpose.msra.mxu0 0
        %3756 = vmatprep.subr.bf16.mxu0 0
        %3757 = vmatpush1.bf16.xpose.msra.mxu0 0
        %3758 = vmatprep.subr.bf16.mxu0 0
        %3759 = vmatpush1.bf16.xpose.msra.mxu0 0
        %3760 = vmatprep.subr.bf16.mxu0 0
        %3761 = vmatpush1.bf16.xpose.msra.mxu0 0
        %3762 = vmatprep.subr.bf16.mxu0 0
        %3763 = vmatpush1.bf16.xpose.msra.mxu0 0
        %3764 = vmatprep.mubr.bf16.mxu0 0
        %3765 = vmatmul.mubr.bf16.gmra.mrb[0].mxu0 %v3727
        %v3766 = vpop.f32.mrb[0].mxu0
        %v3767 = vadd.f32 0.0, %v3766
        %v3768 = vpop.f32.mrb[0].mxu0
        %v3769 = vpop.f32.mrb[0].mxu0
        %v3770 = vpop.f32.mrb[0].mxu0
        %3771 = vdwg.mxu0
        %v3773 = vsel %vm2365, %v3629, 0
        %v3776 = vsel %vm2365, %v3633, 0
        %3778 = vmatprep.subr.bf16.mxu0 0
        %3779 = vmatpush1.bf16.xpose.msra.mxu0 %v3776
        %3780 = vmatprep.subr.bf16.mxu0 0
        %3781 = vmatpush1.bf16.xpose.msra.mxu0 0
        %3782 = vmatprep.subr.bf16.mxu0 0
        %3783 = vmatpush1.bf16.xpose.msra.mxu0 0
        %3784 = vmatprep.subr.bf16.mxu0 0
        %3785 = vmatpush1.bf16.xpose.msra.mxu0 0
        %3786 = vmatprep.subr.bf16.mxu0 0
        %3787 = vmatpush1.bf16.xpose.msra.mxu0 0
        %3788 = vmatprep.subr.bf16.mxu0 0
        %3789 = vmatpush1.bf16.xpose.msra.mxu0 0
        %3790 = vmatprep.subr.bf16.mxu0 0
        %3791 = vmatpush1.bf16.xpose.msra.mxu0 0
        %3792 = vmatprep.subr.bf16.mxu0 0
        %3793 = vmatpush1.bf16.xpose.msra.mxu0 0
        %3794 = vmatprep.subr.bf16.mxu0 0
        %3795 = vmatpush1.bf16.xpose.msra.mxu0 0
        %3796 = vmatprep.subr.bf16.mxu0 0
        %3797 = vmatpush1.bf16.xpose.msra.mxu0 0
        %3798 = vmatprep.subr.bf16.mxu0 0
        %3799 = vmatpush1.bf16.xpose.msra.mxu0 0
        %3800 = vmatprep.subr.bf16.mxu0 0
        %3801 = vmatpush1.bf16.xpose.msra.mxu0 0
        %3802 = vmatprep.subr.bf16.mxu0 0
        %3803 = vmatpush1.bf16.xpose.msra.mxu0 0
        %3804 = vmatprep.subr.bf16.mxu0 0
        %3805 = vmatpush1.bf16.xpose.msra.mxu0 0
        %3806 = vmatprep.subr.bf16.mxu0 0
        %3807 = vmatpush1.bf16.xpose.msra.mxu0 0
        %3808 = vmatprep.subr.bf16.mxu0 0
        %3809 = vmatpush1.bf16.xpose.msra.mxu0 0
        %3810 = vmatprep.mubr.bf16.mxu0 0
        %3811 = vmatmul.mubr.bf16.gmra.mrb[0].mxu0 %v3773
        %v3812 = vpop.f32.mrb[0].mxu0
        %v3813 = vadd.f32 0.0, %v3812
        %v3814 = vpop.f32.mrb[0].mxu0
        %v3815 = vpop.f32.mrb[0].mxu0
        %v3816 = vpop.f32.mrb[0].mxu0
        %3817 = vdwg.mxu0
        %v3818 = vmul.f32 %v3675, 0.17677669
        %v3819 = vmul.f32 %v3721, 0.17677669
        %v3820 = vmul.f32 %v3767, 0.17677669
        %v3821 = vmul.f32 %v3813, 0.17677669
        %v3822 = vadd.f32 %v3818, %v2558
        %v3823 = vadd.f32 %v3819, %v2558
        %v3824 = vadd.f32 %v3820, %v2558
        %v3825 = vadd.f32 %v3821, %v2558
        %v3826 = vsel %vm2564, %v3822, -inf
        %3827 = vmax.xlane.f32.xlu0 %v3826
        %v3828 = vpop.xlane.xlu0 %3827
        %v3829 = vsel %vm2564, %v3823, -inf
        %3830 = vmax.xlane.f32.xlu0 %v3829
        %v3831 = vpop.xlane.xlu0 %3830
        %v3832 = vsel %vm2564, %v3824, -inf
        %3833 = vmax.xlane.f32.xlu0 %v3832
        %v3834 = vpop.xlane.xlu0 %3833
        %v3835 = vsel %vm2564, %v3825, -inf
        %3836 = vmax.xlane.f32.xlu0 %v3835
        %v3837 = vpop.xlane.xlu0 %3836
        %v3838 = vsub.f32 %v3822, %v3828
        %v3839 = vsub.f32 %v3823, %v3831
        %v3840 = vsub.f32 %v3824, %v3834
        %v3841 = vsub.f32 %v3825, %v3837
        %v3842 = vmul.f32 %v3838, 1.442695
        %v3843 = vpow.pop %v3842
        %v3844 = vmul.f32 %v3839, 1.442695
        %v3845 = vpow.pop %v3844
        %v3846 = vmul.f32 %v3840, 1.442695
        %v3847 = vpow.pop %v3846
        %v3848 = vmul.f32 %v3841, 1.442695
        %v3849 = vpow.pop %v3848
        %v3850 = vsel %vm2564, %v3843, 0.0
        %3851 = vadd.xlane.f32.xlu0 %v3850
        %v3852 = vpop.xlane.xlu0 %3851
        %v3853 = vsel %vm2564, %v3845, 0.0
        %3854 = vadd.xlane.f32.xlu0 %v3853
        %v3855 = vpop.xlane.xlu0 %3854
        %v3856 = vsel %vm2564, %v3847, 0.0
        %3857 = vadd.xlane.f32.xlu0 %v3856
        %v3858 = vpop.xlane.xlu0 %3857
        %v3859 = vsel %vm2564, %v3849, 0.0
        %3860 = vadd.xlane.f32.xlu0 %v3859
        %v3861 = vpop.xlane.xlu0 %3860
        %v3862 = vrcp.pop %v3852
        %v3863 = vmul.f32 %v3843, %v3862
        %v3864 = vrcp.pop %v3855
        %v3865 = vmul.f32 %v3845, %v3864
        %v3866 = vrcp.pop %v3858
        %v3867 = vmul.f32 %v3847, %v3866
        %v3868 = vrcp.pop %v3861
        %v3869 = vmul.f32 %v3849, %v3868
        %v3870 = vpack.c.bf16 %v3863, %v3863
        %v3871 = vpack.c.bf16 %v3865, %v3865
        %v3872 = vpack.c.bf16 %v3867, %v3867
        %v3873 = vpack.c.bf16 %v3869, %v3869
        %v3874 = vpack.c.bf16 %v3591, %v3591
        %v3875 = vpack.c.bf16 %v3618, %v3618
        %v3876 = vpack.c.bf16 %v3621, %v3621
        %v3877 = vpack.c.bf16 %v3624, %v3624
        %v3879 = vsel %vm2564, %v3870, 0
        %v3882 = vsel %vm2620, %v3874, 0
        %3884 = vmatprep.subr.bf16.mxu0 0
        %3885 = vmatpush1.bf16.msra.mxu0 %v3882
        %3886 = vmatprep.subr.bf16.mxu0 0
        %3887 = vmatpush1.bf16.msra.mxu0 0
        %3888 = vmatprep.subr.bf16.mxu0 0
        %3889 = vmatpush1.bf16.msra.mxu0 0
        %3890 = vmatprep.subr.bf16.mxu0 0
        %3891 = vmatpush1.bf16.msra.mxu0 0
        %3892 = vmatprep.subr.bf16.mxu0 0
        %3893 = vmatpush1.bf16.msra.mxu0 0
        %3894 = vmatprep.subr.bf16.mxu0 0
        %3895 = vmatpush1.bf16.msra.mxu0 0
        %3896 = vmatprep.subr.bf16.mxu0 0
        %3897 = vmatpush1.bf16.msra.mxu0 0
        %3898 = vmatprep.subr.bf16.mxu0 0
        %3899 = vmatpush1.bf16.msra.mxu0 0
        %3900 = vmatprep.subr.bf16.mxu0 0
        %3901 = vmatpush1.bf16.msra.mxu0 0
        %3902 = vmatprep.subr.bf16.mxu0 0
        %3903 = vmatpush1.bf16.msra.mxu0 0
        %3904 = vmatprep.subr.bf16.mxu0 0
        %3905 = vmatpush1.bf16.msra.mxu0 0
        %3906 = vmatprep.subr.bf16.mxu0 0
        %3907 = vmatpush1.bf16.msra.mxu0 0
        %3908 = vmatprep.subr.bf16.mxu0 0
        %3909 = vmatpush1.bf16.msra.mxu0 0
        %3910 = vmatprep.subr.bf16.mxu0 0
        %3911 = vmatpush1.bf16.msra.mxu0 0
        %3912 = vmatprep.subr.bf16.mxu0 0
        %3913 = vmatpush1.bf16.msra.mxu0 0
        %3914 = vmatprep.subr.bf16.mxu0 0
        %3915 = vmatpush1.bf16.msra.mxu0 0
        %3916 = vmatprep.mubr.bf16.mxu0 0
        %3917 = vmatmul.mubr.bf16.gmra.mrb[0].mxu0 %v3879
        %v3918 = vpop.f32.mrb[0].mxu0
        %v3919 = vadd.f32 0.0, %v3918
        %v3920 = vpop.f32.mrb[0].mxu0
        %v3921 = vpop.f32.mrb[0].mxu0
        %v3922 = vpop.f32.mrb[0].mxu0
        %3923 = vdwg.mxu0
        %v3925 = vsel %vm2564, %v3871, 0
        %v3928 = vsel %vm2620, %v3875, 0
        %3930 = vmatprep.subr.bf16.mxu0 0
        %3931 = vmatpush1.bf16.msra.mxu0 %v3928
        %3932 = vmatprep.subr.bf16.mxu0 0
        %3933 = vmatpush1.bf16.msra.mxu0 0
        %3934 = vmatprep.subr.bf16.mxu0 0
        %3935 = vmatpush1.bf16.msra.mxu0 0
        %3936 = vmatprep.subr.bf16.mxu0 0
        %3937 = vmatpush1.bf16.msra.mxu0 0
        %3938 = vmatprep.subr.bf16.mxu0 0
        %3939 = vmatpush1.bf16.msra.mxu0 0
        %3940 = vmatprep.subr.bf16.mxu0 0
        %3941 = vmatpush1.bf16.msra.mxu0 0
        %3942 = vmatprep.subr.bf16.mxu0 0
        %3943 = vmatpush1.bf16.msra.mxu0 0
        %3944 = vmatprep.subr.bf16.mxu0 0
        %3945 = vmatpush1.bf16.msra.mxu0 0
        %3946 = vmatprep.subr.bf16.mxu0 0
        %3947 = vmatpush1.bf16.msra.mxu0 0
        %3948 = vmatprep.subr.bf16.mxu0 0
        %3949 = vmatpush1.bf16.msra.mxu0 0
        %3950 = vmatprep.subr.bf16.mxu0 0
        %3951 = vmatpush1.bf16.msra.mxu0 0
        %3952 = vmatprep.subr.bf16.mxu0 0
        %3953 = vmatpush1.bf16.msra.mxu0 0
        %3954 = vmatprep.subr.bf16.mxu0 0
        %3955 = vmatpush1.bf16.msra.mxu0 0
        %3956 = vmatprep.subr.bf16.mxu0 0
        %3957 = vmatpush1.bf16.msra.mxu0 0
        %3958 = vmatprep.subr.bf16.mxu0 0
        %3959 = vmatpush1.bf16.msra.mxu0 0
        %3960 = vmatprep.subr.bf16.mxu0 0
        %3961 = vmatpush1.bf16.msra.mxu0 0
        %3962 = vmatprep.mubr.bf16.mxu0 0
        %3963 = vmatmul.mubr.bf16.gmra.mrb[0].mxu0 %v3925
        %v3964 = vpop.f32.mrb[0].mxu0
        %v3965 = vadd.f32 0.0, %v3964
        %v3966 = vpop.f32.mrb[0].mxu0
        %v3967 = vpop.f32.mrb[0].mxu0
        %v3968 = vpop.f32.mrb[0].mxu0
        %3969 = vdwg.mxu0
        %v3971 = vsel %vm2564, %v3872, 0
        %v3974 = vsel %vm2620, %v3876, 0
        %3976 = vmatprep.subr.bf16.mxu0 0
        %3977 = vmatpush1.bf16.msra.mxu0 %v3974
        %3978 = vmatprep.subr.bf16.mxu0 0
        %3979 = vmatpush1.bf16.msra.mxu0 0
        %3980 = vmatprep.subr.bf16.mxu0 0
        %3981 = vmatpush1.bf16.msra.mxu0 0
        %3982 = vmatprep.subr.bf16.mxu0 0
        %3983 = vmatpush1.bf16.msra.mxu0 0
        %3984 = vmatprep.subr.bf16.mxu0 0
        %3985 = vmatpush1.bf16.msra.mxu0 0
        %3986 = vmatprep.subr.bf16.mxu0 0
        %3987 = vmatpush1.bf16.msra.mxu0 0
        %3988 = vmatprep.subr.bf16.mxu0 0
        %3989 = vmatpush1.bf16.msra.mxu0 0
        %3990 = vmatprep.subr.bf16.mxu0 0
        %3991 = vmatpush1.bf16.msra.mxu0 0
        %3992 = vmatprep.subr.bf16.mxu0 0
        %3993 = vmatpush1.bf16.msra.mxu0 0
        %3994 = vmatprep.subr.bf16.mxu0 0
        %3995 = vmatpush1.bf16.msra.mxu0 0
        %3996 = vmatprep.subr.bf16.mxu0 0
        %3997 = vmatpush1.bf16.msra.mxu0 0
        %3998 = vmatprep.subr.bf16.mxu0 0
        %3999 = vmatpush1.bf16.msra.mxu0 0
        %4000 = vmatprep.subr.bf16.mxu0 0
        %4001 = vmatpush1.bf16.msra.mxu0 0
        %4002 = vmatprep.subr.bf16.mxu0 0
        %4003 = vmatpush1.bf16.msra.mxu0 0
        %4004 = vmatprep.subr.bf16.mxu0 0
        %4005 = vmatpush1.bf16.msra.mxu0 0
        %4006 = vmatprep.subr.bf16.mxu0 0
        %4007 = vmatpush1.bf16.msra.mxu0 0
        %4008 = vmatprep.mubr.bf16.mxu0 0
        %4009 = vmatmul.mubr.bf16.gmra.mrb[0].mxu0 %v3971
        %v4010 = vpop.f32.mrb[0].mxu0
        %v4011 = vadd.f32 0.0, %v4010
        %v4012 = vpop.f32.mrb[0].mxu0
        %v4013 = vpop.f32.mrb[0].mxu0
        %v4014 = vpop.f32.mrb[0].mxu0
        %4015 = vdwg.mxu0
        %v4017 = vsel %vm2564, %v3873, 0
        %v4020 = vsel %vm2620, %v3877, 0
        %4022 = vmatprep.subr.bf16.mxu0 0
        %4023 = vmatpush1.bf16.msra.mxu0 %v4020
        %4024 = vmatprep.subr.bf16.mxu0 0
        %4025 = vmatpush1.bf16.msra.mxu0 0
        %4026 = vmatprep.subr.bf16.mxu0 0
        %4027 = vmatpush1.bf16.msra.mxu0 0
        %4028 = vmatprep.subr.bf16.mxu0 0
        %4029 = vmatpush1.bf16.msra.mxu0 0
        %4030 = vmatprep.subr.bf16.mxu0 0
        %4031 = vmatpush1.bf16.msra.mxu0 0
        %4032 = vmatprep.subr.bf16.mxu0 0
        %4033 = vmatpush1.bf16.msra.mxu0 0
        %4034 = vmatprep.subr.bf16.mxu0 0
        %4035 = vmatpush1.bf16.msra.mxu0 0
        %4036 = vmatprep.subr.bf16.mxu0 0
        %4037 = vmatpush1.bf16.msra.mxu0 0
        %4038 = vmatprep.subr.bf16.mxu0 0
        %4039 = vmatpush1.bf16.msra.mxu0 0
        %4040 = vmatprep.subr.bf16.mxu0 0
        %4041 = vmatpush1.bf16.msra.mxu0 0
        %4042 = vmatprep.subr.bf16.mxu0 0
        %4043 = vmatpush1.bf16.msra.mxu0 0
        %4044 = vmatprep.subr.bf16.mxu0 0
        %4045 = vmatpush1.bf16.msra.mxu0 0
        %4046 = vmatprep.subr.bf16.mxu0 0
        %4047 = vmatpush1.bf16.msra.mxu0 0
        %4048 = vmatprep.subr.bf16.mxu0 0
        %4049 = vmatpush1.bf16.msra.mxu0 0
        %4050 = vmatprep.subr.bf16.mxu0 0
        %4051 = vmatpush1.bf16.msra.mxu0 0
        %4052 = vmatprep.subr.bf16.mxu0 0
        %4053 = vmatpush1.bf16.msra.mxu0 0
        %4054 = vmatprep.mubr.bf16.mxu0 0
        %4055 = vmatmul.mubr.bf16.gmra.mrb[0].mxu0 %v4017
        %v4056 = vpop.f32.mrb[0].mxu0
        %v4057 = vadd.f32 0.0, %v4056
        %v4058 = vpop.f32.mrb[0].mxu0
        %v4059 = vpop.f32.mrb[0].mxu0
        %v4060 = vpop.f32.mrb[0].mxu0
        %4061 = vdwg.mxu0
        %4063 = vrot.lane.b32.xlu0 %v3965, 32
        %v4064 = vpop.permute.xlu0 %4063
        %4067 = vrot.lane.b32.xlu0 %v4011, 64
        %v4068 = vpop.permute.xlu0 %4067
        %4071 = vrot.lane.b32.xlu0 %v4057, 96
        %v4072 = vpop.permute.xlu0 %4071
        %v4074 = vsel %vm2365, %v3919, %v4064
        %v4075 = vsel %vm2815, %v4074, %v4068
        %v4076 = vsel %vm2817, %v4075, %v4072
        %s4077 = scalar_lea.vmem [#allocation14], 64
        %v4078 = vld [vmem:[%s4077] sm:$0xf]
        %v4079 = vld [vmem:[%s4077 + $0x4] sm:$0xf]
        %v4080 = vld [vmem:[%s4077 + $0x8] sm:$0xf]
        %v4081 = vld [vmem:[%s4077 + $0xc] sm:$0xf]
        %v4082 = vld [vmem:[%s4077 + $0x10] sm:$0xf]
        %v4083 = vld [vmem:[%s4077 + $0x14] sm:$0xf]
        %v4084 = vld [vmem:[%s4077 + $0x18] sm:$0xf]
        %v4085 = vld [vmem:[%s4077 + $0x1c] sm:$0xf]
        %v4086 = vld [vmem:[%s4077 + $0x20] sm:$0xf]
        %v4087 = vld [vmem:[%s4077 + $0x24] sm:$0xf]
        %v4088 = vld [vmem:[%s4077 + $0x28] sm:$0xf]
        %v4089 = vld [vmem:[%s4077 + $0x2c] sm:$0xf]
        %v4090 = vld [vmem:[%s4077 + $0x30] sm:$0xf]
        %v4091 = vld [vmem:[%s4077 + $0x34] sm:$0xf]
        %v4092 = vld [vmem:[%s4077 + $0x38] sm:$0xf]
        %v4093 = vld [vmem:[%s4077 + $0x3c] sm:$0xf]
        %v4094 = vpack.c.bf16 %v4076, %v4076
        %v4111 = vunpack.c.l.b16 %v4078
        %v4112 = vunpack.c.l.b16 %v4079
        %v4113 = vunpack.c.l.b16 %v4080
        %v4114 = vunpack.c.l.b16 %v4081
        %v4115 = vunpack.c.l.b16 %v4082
        %v4116 = vunpack.c.l.b16 %v4083
        %v4117 = vunpack.c.l.b16 %v4084
        %v4118 = vunpack.c.l.b16 %v4085
        %v4119 = vunpack.c.l.b16 %v4086
        %v4120 = vunpack.c.l.b16 %v4087
        %v4121 = vunpack.c.l.b16 %v4088
        %v4122 = vunpack.c.l.b16 %v4089
        %v4123 = vunpack.c.l.b16 %v4090
        %v4124 = vunpack.c.l.b16 %v4091
        %v4125 = vunpack.c.l.b16 %v4092
        %v4126 = vunpack.c.l.b16 %v4093
        %v4127 = vpack.c.b16 %v4112, %v4111
        %v4128 = vpack.c.b16 %v4114, %v4113
        %v4129 = vpack.c.b16 %v4116, %v4115
        %v4130 = vpack.c.b16 %v4118, %v4117
        %v4131 = vpack.c.b16 %v4120, %v4119
        %v4132 = vpack.c.b16 %v4122, %v4121
        %v4133 = vpack.c.b16 %v4124, %v4123
        %v4134 = vpack.c.b16 %v4126, %v4125
        %4143 = vmatprep.subr.bf16.mxu0 0
        %4144 = vmatpush1.bf16.msra.mxu0 %v4127
        %4145 = vmatprep.subr.bf16.mxu0 0
        %4146 = vmatpush1.bf16.msra.mxu0 %v4128
        %4147 = vmatprep.subr.bf16.mxu0 0
        %4148 = vmatpush1.bf16.msra.mxu0 %v4129
        %4149 = vmatprep.subr.bf16.mxu0 0
        %4150 = vmatpush1.bf16.msra.mxu0 %v4130
        %4151 = vmatprep.subr.bf16.mxu0 0
        %4152 = vmatpush1.bf16.msra.mxu0 %v4131
        %4153 = vmatprep.subr.bf16.mxu0 0
        %4154 = vmatpush1.bf16.msra.mxu0 %v4132
        %4155 = vmatprep.subr.bf16.mxu0 0
        %4156 = vmatpush1.bf16.msra.mxu0 %v4133
        %4157 = vmatprep.subr.bf16.mxu0 0
        %4158 = vmatpush1.bf16.msra.mxu0 %v4134
        %4159 = vmatprep.subr.bf16.mxu0 0
        %4160 = vmatpush1.bf16.msra.mxu0 0
        %4161 = vmatprep.subr.bf16.mxu0 0
        %4162 = vmatpush1.bf16.msra.mxu0 0
        %4163 = vmatprep.subr.bf16.mxu0 0
        %4164 = vmatpush1.bf16.msra.mxu0 0
        %4165 = vmatprep.subr.bf16.mxu0 0
        %4166 = vmatpush1.bf16.msra.mxu0 0
        %4167 = vmatprep.subr.bf16.mxu0 0
        %4168 = vmatpush1.bf16.msra.mxu0 0
        %4169 = vmatprep.subr.bf16.mxu0 0
        %4170 = vmatpush1.bf16.msra.mxu0 0
        %4171 = vmatprep.subr.bf16.mxu0 0
        %4172 = vmatpush1.bf16.msra.mxu0 0
        %4173 = vmatprep.subr.bf16.mxu0 0
        %4174 = vmatpush1.bf16.msra.mxu0 0
        %4175 = vmatprep.mubr.bf16.mxu0 0
        %4176 = vmatmul.mubr.bf16.gmra.mrb[0].mxu0 %v4094
        %v4177 = vpop.f32.mrb[0].mxu0
        %v4178 = vadd.f32 0.0, %v4177
        %v4179 = vpop.f32.mrb[0].mxu0
        %v4180 = vpop.f32.mrb[0].mxu0
        %v4181 = vpop.f32.mrb[0].mxu0
        %4182 = vdwg.mxu0
        %v4183 = vadd.f32 %v3305, %v4178
        %s4184 = scalar_lea.vmem [#allocation15], 1
        %v4185 = vld [vmem:[%s4184] sm:$0x1]
        %v4187 = vlaneseq
        %v4188 = vshrl.u32 %v4187, 7
        %v4189 = vsub.s32 0, %v4188
        %v4190 = vrot.slane %v4185, %v4189
        %v4192 = vadd.f32 %v4183, %v4190
        %s4193 = scalar_lea.vmem [#allocation17], 1
        %v4194 = vld [vmem:[%s4193] sm:$0x1]
        %s4195 = scalar_lea.vmem [#allocation18], 1
        %v4196 = vld [vmem:[%s4195] sm:$0x1]
        %4197 = vadd.xlane.f32.xlu0 %v4192
        %v4198 = vpop.xlane.xlu0 %4197
        %v4199 = vmul.f32 %v4198, %v2044
        %v4200 = vsub.f32 %v4192, %v4199
        %v4201 = vmul.f32 %v4200, %v4200
        %4202 = vadd.xlane.f32.xlu0 %v4201
        %v4203 = vpop.xlane.xlu0 %4202
        %v4204 = vmul.f32 %v4203, %v2044
        %v4205 = vadd.f32 %v4204, 1e-06
        %v4206 = vrsqrt.pop %v4205
        %v4207 = vmul.f32 %v4200, %v4206
        %v4209 = vlaneseq
        %v4210 = vshrl.u32 %v4209, 7
        %v4211 = vsub.s32 0, %v4210
        %v4212 = vrot.slane %v4194, %v4211
        %v4214 = vmul.f32 %v4207, %v4212
        %v4216 = vlaneseq
        %v4217 = vshrl.u32 %v4216, 7
        %v4218 = vsub.s32 0, %v4217
        %v4219 = vrot.slane %v4196, %v4218
        %v4221 = vadd.f32 %v4214, %v4219
        %s4222 = scalar_lea.vmem [#allocation20], 128
        %v4223 = vld [vmem:[%s4222] sm:$0xff]
        %v4224 = vld [vmem:[%s4222 + $0x8] sm:$0xff]
        %v4225 = vld [vmem:[%s4222 + $0x10] sm:$0xff]
        %v4226 = vld [vmem:[%s4222 + $0x18] sm:$0xff]
        %v4227 = vld [vmem:[%s4222 + $0x20] sm:$0xff]
        %v4228 = vld [vmem:[%s4222 + $0x28] sm:$0xff]
        %v4229 = vld [vmem:[%s4222 + $0x30] sm:$0xff]
        %v4230 = vld [vmem:[%s4222 + $0x38] sm:$0xff]
        %v4231 = vld [vmem:[%s4222 + $0x40] sm:$0xff]
        %v4232 = vld [vmem:[%s4222 + $0x48] sm:$0xff]
        %v4233 = vld [vmem:[%s4222 + $0x50] sm:$0xff]
        %v4234 = vld [vmem:[%s4222 + $0x58] sm:$0xff]
        %v4235 = vld [vmem:[%s4222 + $0x60] sm:$0xff]
        %v4236 = vld [vmem:[%s4222 + $0x68] sm:$0xff]
        %v4237 = vld [vmem:[%s4222 + $0x70] sm:$0xff]
        %v4238 = vld [vmem:[%s4222 + $0x78] sm:$0xff]
        %v4239 = vpack.c.bf16 %v4221, %v4221
        %s4240 = scalar_lea.vmem [#allocation21], 2
        %v4241 = vld [vmem:[%s4240] sm:$0x3]
        %v4243 = vlaneseq
        %v4244 = vshrl.u32 %v4243, 7
        %v4245 = vsub.s32 0, %v4244
        %v4246 = vrot.slane %v4241, %v4245
        %v4247 = vlaneseq
        %v4248 = vshrl.u32 %v4247, 7
        %v4249 = vsub.s32 1, %v4248
        %v4250 = vrot.slane %v4241, %v4249
        %v4269 = vunpack.c.l.b16 %v4223
        %v4270 = vunpack.c.h.b16 %v4223
        %v4271 = vunpack.c.l.b16 %v4224
        %v4272 = vunpack.c.h.b16 %v4224
        %v4273 = vunpack.c.l.b16 %v4225
        %v4274 = vunpack.c.h.b16 %v4225
        %v4275 = vunpack.c.l.b16 %v4226
        %v4276 = vunpack.c.h.b16 %v4226
        %v4277 = vunpack.c.l.b16 %v4227
        %v4278 = vunpack.c.h.b16 %v4227
        %v4279 = vunpack.c.l.b16 %v4228
        %v4280 = vunpack.c.h.b16 %v4228
        %v4281 = vunpack.c.l.b16 %v4229
        %v4282 = vunpack.c.h.b16 %v4229
        %v4283 = vunpack.c.l.b16 %v4230
        %v4284 = vunpack.c.h.b16 %v4230
        %v4285 = vunpack.c.l.b16 %v4231
        %v4286 = vunpack.c.h.b16 %v4231
        %v4287 = vunpack.c.l.b16 %v4232
        %v4288 = vunpack.c.h.b16 %v4232
        %v4289 = vunpack.c.l.b16 %v4233
        %v4290 = vunpack.c.h.b16 %v4233
        %v4291 = vunpack.c.l.b16 %v4234
        %v4292 = vunpack.c.h.b16 %v4234
        %v4293 = vunpack.c.l.b16 %v4235
        %v4294 = vunpack.c.h.b16 %v4235
        %v4295 = vunpack.c.l.b16 %v4236
        %v4296 = vunpack.c.h.b16 %v4236
        %v4297 = vunpack.c.l.b16 %v4237
        %v4298 = vunpack.c.h.b16 %v4237
        %v4299 = vunpack.c.l.b16 %v4238
        %v4300 = vunpack.c.h.b16 %v4238
        %v4301 = vpack.c.b16 %v4271, %v4269
        %v4302 = vpack.c.b16 %v4272, %v4270
        %v4303 = vpack.c.b16 %v4275, %v4273
        %v4304 = vpack.c.b16 %v4276, %v4274
        %v4305 = vpack.c.b16 %v4279, %v4277
        %v4306 = vpack.c.b16 %v4280, %v4278
        %v4307 = vpack.c.b16 %v4283, %v4281
        %v4308 = vpack.c.b16 %v4284, %v4282
        %v4309 = vpack.c.b16 %v4287, %v4285
        %v4310 = vpack.c.b16 %v4288, %v4286
        %v4311 = vpack.c.b16 %v4291, %v4289
        %v4312 = vpack.c.b16 %v4292, %v4290
        %v4313 = vpack.c.b16 %v4295, %v4293
        %v4314 = vpack.c.b16 %v4296, %v4294
        %v4315 = vpack.c.b16 %v4299, %v4297
        %v4316 = vpack.c.b16 %v4300, %v4298
        %4333 = vmatprep.subr.bf16.mxu0 %v4302
        %4334 = vmatpush1.bf16.msra.mxu0 %v4301
        %4335 = vmatprep.subr.bf16.mxu0 %v4304
        %4336 = vmatpush1.bf16.msra.mxu0 %v4303
        %4337 = vmatprep.subr.bf16.mxu0 %v4306
        %4338 = vmatpush1.bf16.msra.mxu0 %v4305
        %4339 = vmatprep.subr.bf16.mxu0 %v4308
        %4340 = vmatpush1.bf16.msra.mxu0 %v4307
        %4341 = vmatprep.subr.bf16.mxu0 %v4310
        %4342 = vmatpush1.bf16.msra.mxu0 %v4309
        %4343 = vmatprep.subr.bf16.mxu0 %v4312
        %4344 = vmatpush1.bf16.msra.mxu0 %v4311
        %4345 = vmatprep.subr.bf16.mxu0 %v4314
        %4346 = vmatpush1.bf16.msra.mxu0 %v4313
        %4347 = vmatprep.subr.bf16.mxu0 %v4316
        %4348 = vmatpush1.bf16.msra.mxu0 %v4315
        %4349 = vmatprep.subr.bf16.mxu0 0
        %4350 = vmatpush1.bf16.msra.mxu0 0
        %4351 = vmatprep.subr.bf16.mxu0 0
        %4352 = vmatpush1.bf16.msra.mxu0 0
        %4353 = vmatprep.subr.bf16.mxu0 0
        %4354 = vmatpush1.bf16.msra.mxu0 0
        %4355 = vmatprep.subr.bf16.mxu0 0
        %4356 = vmatpush1.bf16.msra.mxu0 0
        %4357 = vmatprep.subr.bf16.mxu0 0
        %4358 = vmatpush1.bf16.msra.mxu0 0
        %4359 = vmatprep.subr.bf16.mxu0 0
        %4360 = vmatpush1.bf16.msra.mxu0 0
        %4361 = vmatprep.subr.bf16.mxu0 0
        %4362 = vmatpush1.bf16.msra.mxu0 0
        %4363 = vmatprep.subr.bf16.mxu0 0
        %4364 = vmatpush1.bf16.msra.mxu0 0
        %4365 = vmatprep.mubr.bf16.mxu0 0
        %4366 = vmatmul.mubr.bf16.gmra.mrb[0].mxu0 %v4239
        %v4367 = vpop.f32.mrb[0].mxu0
        %v4368 = vadd.f32 %v4246, %v4367
        %v4369 = vpop.f32.mrb[0].mxu0
        %v4370 = vadd.f32 %v4250, %v4369
        %v4371 = vpop.f32.mrb[0].mxu0
        %v4372 = vpop.f32.mrb[0].mxu0
        %4373 = vdwg.mxu0
        %v4374 = vmul.f32 %v4368, %v4368
        %v4375 = vmul.f32 %v4370, %v4370
        %v4376 = vmul.f32 %v4368, %v4374
        %v4377 = vmul.f32 %v4370, %v4375
        %v4378 = vmul.f32 %v4376, 0.044715
        %v4379 = vmul.f32 %v4377, 0.044715
        %v4380 = vadd.f32 %v4368, %v4378
        %v4381 = vadd.f32 %v4370, %v4379
        %v4382 = vmul.f32 %v4380, 0.7978846
        %v4383 = vmul.f32 %v4381, 0.7978846
        %v4384 = vtanh.pop %v4382
        %v4385 = vtanh.pop %v4383
        %v4386 = vadd.f32 %v4384, 1.0
        %v4387 = vadd.f32 %v4385, 1.0
        %v4388 = vmul.f32 %v4386, 0.5
        %v4389 = vmul.f32 %v4387, 0.5
        %v4390 = vmul.f32 %v4368, %v4388
        %v4391 = vmul.f32 %v4370, %v4389
        %s4392 = scalar_lea.vmem [#allocation23], 128
        %v4393 = vld [vmem:[%s4392] sm:$0xf]
        %v4394 = vld [vmem:[%s4392 + $0x4] sm:$0xf]
        %v4395 = vld [vmem:[%s4392 + $0x8] sm:$0xf]
        %v4396 = vld [vmem:[%s4392 + $0xc] sm:$0xf]
        %v4397 = vld [vmem:[%s4392 + $0x10] sm:$0xf]
        %v4398 = vld [vmem:[%s4392 + $0x14] sm:$0xf]
        %v4399 = vld [vmem:[%s4392 + $0x18] sm:$0xf]
        %v4400 = vld [vmem:[%s4392 + $0x1c] sm:$0xf]
        %v4401 = vld [vmem:[%s4392 + $0x20] sm:$0xf]
        %v4402 = vld [vmem:[%s4392 + $0x24] sm:$0xf]
        %v4403 = vld [vmem:[%s4392 + $0x28] sm:$0xf]
        %v4404 = vld [vmem:[%s4392 + $0x2c] sm:$0xf]
        %v4405 = vld [vmem:[%s4392 + $0x30] sm:$0xf]
        %v4406 = vld [vmem:[%s4392 + $0x34] sm:$0xf]
        %v4407 = vld [vmem:[%s4392 + $0x38] sm:$0xf]
        %v4408 = vld [vmem:[%s4392 + $0x3c] sm:$0xf]
        %v4409 = vld [vmem:[%s4392 + $0x40] sm:$0xf]
        %v4410 = vld [vmem:[%s4392 + $0x44] sm:$0xf]
        %v4411 = vld [vmem:[%s4392 + $0x48] sm:$0xf]
        %v4412 = vld [vmem:[%s4392 + $0x4c] sm:$0xf]
        %v4413 = vld [vmem:[%s4392 + $0x50] sm:$0xf]
        %v4414 = vld [vmem:[%s4392 + $0x54] sm:$0xf]
        %v4415 = vld [vmem:[%s4392 + $0x58] sm:$0xf]
        %v4416 = vld [vmem:[%s4392 + $0x5c] sm:$0xf]
        %v4417 = vld [vmem:[%s4392 + $0x60] sm:$0xf]
        %v4418 = vld [vmem:[%s4392 + $0x64] sm:$0xf]
        %v4419 = vld [vmem:[%s4392 + $0x68] sm:$0xf]
        %v4420 = vld [vmem:[%s4392 + $0x6c] sm:$0xf]
        %v4421 = vld [vmem:[%s4392 + $0x70] sm:$0xf]
        %v4422 = vld [vmem:[%s4392 + $0x74] sm:$0xf]
        %v4423 = vld [vmem:[%s4392 + $0x78] sm:$0xf]
        %v4424 = vld [vmem:[%s4392 + $0x7c] sm:$0xf]
        %v4425 = vpack.c.bf16 %v4390, %v4390
        %v4426 = vpack.c.bf16 %v4391, %v4391
        %s4427 = scalar_lea.vmem [#allocation24], 1
        %v4428 = vld [vmem:[%s4427] sm:$0x1]
        %v4430 = vlaneseq
        %v4431 = vshrl.u32 %v4430, 7
        %v4432 = vsub.s32 0, %v4431
        %v4433 = vrot.slane %v4428, %v4432
        %v4467 = vunpack.c.l.b16 %v4393
        %v4468 = vunpack.c.l.b16 %v4394
        %v4469 = vunpack.c.l.b16 %v4395
        %v4470 = vunpack.c.l.b16 %v4396
        %v4471 = vunpack.c.l.b16 %v4397
        %v4472 = vunpack.c.l.b16 %v4398
        %v4473 = vunpack.c.l.b16 %v4399
        %v4474 = vunpack.c.l.b16 %v4400
        %v4475 = vunpack.c.l.b16 %v4401
        %v4476 = vunpack.c.l.b16 %v4402
        %v4477 = vunpack.c.l.b16 %v4403
        %v4478 = vunpack.c.l.b16 %v4404
        %v4479 = vunpack.c.l.b16 %v4405
        %v4480 = vunpack.c.l.b16 %v4406
        %v4481 = vunpack.c.l.b16 %v4407
        %v4482 = vunpack.c.l.b16 %v4408
        %v4483 = vunpack.c.l.b16 %v4409
        %v4484 = vunpack.c.l.b16 %v4410
        %v4485 = vunpack.c.l.b16 %v4411
        %v4486 = vunpack.c.l.b16 %v4412
        %v4487 = vunpack.c.l.b16 %v4413
        %v4488 = vunpack.c.l.b16 %v4414
        %v4489 = vunpack.c.l.b16 %v4415
        %v4490 = vunpack.c.l.b16 %v4416
        %v4491 = vunpack.c.l.b16 %v4417
        %v4492 = vunpack.c.l.b16 %v4418
        %v4493 = vunpack.c.l.b16 %v4419
        %v4494 = vunpack.c.l.b16 %v4420
        %v4495 = vunpack.c.l.b16 %v4421
        %v4496 = vunpack.c.l.b16 %v4422
        %v4497 = vunpack.c.l.b16 %v4423
        %v4498 = vunpack.c.l.b16 %v4424
        %v4499 = vpack.c.b16 %v4468, %v4467
        %v4500 = vpack.c.b16 %v4470, %v4469
        %v4501 = vpack.c.b16 %v4472, %v4471
        %v4502 = vpack.c.b16 %v4474, %v4473
        %v4503 = vpack.c.b16 %v4476, %v4475
        %v4504 = vpack.c.b16 %v4478, %v4477
        %v4505 = vpack.c.b16 %v4480, %v4479
        %v4506 = vpack.c.b16 %v4482, %v4481
        %v4507 = vpack.c.b16 %v4484, %v4483
        %v4508 = vpack.c.b16 %v4486, %v4485
        %v4509 = vpack.c.b16 %v4488, %v4487
        %v4510 = vpack.c.b16 %v4490, %v4489
        %v4511 = vpack.c.b16 %v4492, %v4491
        %v4512 = vpack.c.b16 %v4494, %v4493
        %v4513 = vpack.c.b16 %v4496, %v4495
        %v4514 = vpack.c.b16 %v4498, %v4497
        %4531 = vmatprep.subr.bf16.mxu0 0
        %4532 = vmatpush1.bf16.msra.mxu0 %v4499
        %4533 = vmatprep.subr.bf16.mxu0 0
        %4534 = vmatpush1.bf16.msra.mxu0 %v4500
        %4535 = vmatprep.subr.bf16.mxu0 0
        %4536 = vmatpush1.bf16.msra.mxu0 %v4501
        %4537 = vmatprep.subr.bf16.mxu0 0
        %4538 = vmatpush1.bf16.msra.mxu0 %v4502
        %4539 = vmatprep.subr.bf16.mxu0 0
        %4540 = vmatpush1.bf16.msra.mxu0 %v4503
        %4541 = vmatprep.subr.bf16.mxu0 0
        %4542 = vmatpush1.bf16.msra.mxu0 %v4504
        %4543 = vmatprep.subr.bf16.mxu0 0
        %4544 = vmatpush1.bf16.msra.mxu0 %v4505
        %4545 = vmatprep.subr.bf16.mxu0 0
        %4546 = vmatpush1.bf16.msra.mxu0 %v4506
        %4547 = vmatprep.subr.bf16.mxu0 0
        %4548 = vmatpush1.bf16.msra.mxu0 %v4507
        %4549 = vmatprep.subr.bf16.mxu0 0
        %4550 = vmatpush1.bf16.msra.mxu0 %v4508
        %4551 = vmatprep.subr.bf16.mxu0 0
        %4552 = vmatpush1.bf16.msra.mxu0 %v4509
        %4553 = vmatprep.subr.bf16.mxu0 0
        %4554 = vmatpush1.bf16.msra.mxu0 %v4510
        %4555 = vmatprep.subr.bf16.mxu0 0
        %4556 = vmatpush1.bf16.msra.mxu0 %v4511
        %4557 = vmatprep.subr.bf16.mxu0 0
        %4558 = vmatpush1.bf16.msra.mxu0 %v4512
        %4559 = vmatprep.subr.bf16.mxu0 0
        %4560 = vmatpush1.bf16.msra.mxu0 %v4513
        %4561 = vmatprep.subr.bf16.mxu0 0
        %4562 = vmatpush1.bf16.msra.mxu0 %v4514
        %4563 = vmatprep.mubr.bf16.mxu0 %v4426
        %4564 = vmatmul.mubr.bf16.gmra.mrb[0].mxu0 %v4425
        %v4565 = vpop.f32.mrb[0].mxu0
        %v4566 = vadd.f32 %v4433, %v4565
        %v4567 = vpop.f32.mrb[0].mxu0
        %v4568 = vpop.f32.mrb[0].mxu0
        %v4569 = vpop.f32.mrb[0].mxu0
        %4570 = vdwg.mxu0
        %v4571 = vadd.f32 %v4192, %v4566
        %v4572 = vld [vmem:[#allocation26] sm:$0x1]
        %v4573 = vld [vmem:[#allocation27] sm:$0x1]
        %v4574 = vsel %vm2034, %v4571, 0.0
        %4575 = vadd.xlane.f32.xlu0 %v4574
        %v4576 = vpop.xlane.xlu0 %4575
        %v4577 = vmul.f32 %v4576, %v2044
        %v4578 = vsub.f32 %v4571, %v4577
        %v4579 = vmul.f32 %v4578, %v4578
        %v4580 = vsel %vm2034, %v4579, 0.0
        %4581 = vadd.xlane.f32.xlu0 %v4580
        %v4582 = vpop.xlane.xlu0 %4581
        %v4583 = vmul.f32 %v4582, %v2044
        %v4584 = vadd.f32 %v4583, 1e-06
        %v4585 = vrsqrt.pop %v4584
        %v4586 = vmul.f32 %v4578, %v4585
        %v4587 = vmul.f32 %v4586, %v4572
        %v4588 = vadd.f32 %v4587, %v4573
        %v4589 = vld [vmem:[#allocation29] sm:$0xf]
        %v4590 = vld [vmem:[#allocation29 + $0x4] sm:$0xf]
        %v4591 = vld [vmem:[#allocation29 + $0x8] sm:$0xf]
        %v4592 = vld [vmem:[#allocation29 + $0xc] sm:$0xf]
        %v4593 = vld [vmem:[#allocation29 + $0x10] sm:$0xf]
        %v4594 = vld [vmem:[#allocation29 + $0x14] sm:$0xf]
        %v4595 = vld [vmem:[#allocation29 + $0x18] sm:$0xf]
        %v4596 = vld [vmem:[#allocation29 + $0x1c] sm:$0xf]
        %v4597 = vld [vmem:[#allocation29 + $0x20] sm:$0xf]
        %v4598 = vld [vmem:[#allocation29 + $0x24] sm:$0xf]
        %v4599 = vld [vmem:[#allocation29 + $0x28] sm:$0xf]
        %v4600 = vld [vmem:[#allocation29 + $0x2c] sm:$0xf]
        %v4601 = vld [vmem:[#allocation29 + $0x30] sm:$0xf]
        %v4602 = vld [vmem:[#allocation29 + $0x34] sm:$0xf]
        %v4603 = vld [vmem:[#allocation29 + $0x38] sm:$0xf]
        %v4604 = vld [vmem:[#allocation29 + $0x3c] sm:$0xf]
        %v4605 = vpack.c.bf16 %v4588, %v4588
        %v4606 = vld [vmem:[#allocation30] sm:$0x1]
        %v4623 = vunpack.c.l.b16 %v4589
        %v4624 = vunpack.c.l.b16 %v4590
        %v4625 = vunpack.c.l.b16 %v4591
        %v4626 = vunpack.c.l.b16 %v4592
        %v4627 = vunpack.c.l.b16 %v4593
        %v4628 = vunpack.c.l.b16 %v4594
        %v4629 = vunpack.c.l.b16 %v4595
        %v4630 = vunpack.c.l.b16 %v4596
        %v4631 = vunpack.c.l.b16 %v4597
        %v4632 = vunpack.c.l.b16 %v4598
        %v4633 = vunpack.c.l.b16 %v4599
        %v4634 = vunpack.c.l.b16 %v4600
        %v4635 = vunpack.c.l.b16 %v4601
        %v4636 = vunpack.c.l.b16 %v4602
        %v4637 = vunpack.c.l.b16 %v4603
        %v4638 = vunpack.c.l.b16 %v4604
        %v4639 = vpack.c.b16 %v4624, %v4623
        %v4640 = vpack.c.b16 %v4626, %v4625
        %v4641 = vpack.c.b16 %v4628, %v4627
        %v4642 = vpack.c.b16 %v4630, %v4629
        %v4643 = vpack.c.b16 %v4632, %v4631
        %v4644 = vpack.c.b16 %v4634, %v4633
        %v4645 = vpack.c.b16 %v4636, %v4635
        %v4646 = vpack.c.b16 %v4638, %v4637
        %4655 = vmatprep.subr.bf16.mxu0 0
        %4656 = vmatpush1.bf16.msra.mxu0 %v4639
        %4657 = vmatprep.subr.bf16.mxu0 0
        %4658 = vmatpush1.bf16.msra.mxu0 %v4640
        %4659 = vmatprep.subr.bf16.mxu0 0
        %4660 = vmatpush1.bf16.msra.mxu0 %v4641
        %4661 = vmatprep.subr.bf16.mxu0 0
        %4662 = vmatpush1.bf16.msra.mxu0 %v4642
        %4663 = vmatprep.subr.bf16.mxu0 0
        %4664 = vmatpush1.bf16.msra.mxu0 %v4643
        %4665 = vmatprep.subr.bf16.mxu0 0
        %4666 = vmatpush1.bf16.msra.mxu0 %v4644
        %4667 = vmatprep.subr.bf16.mxu0 0
        %4668 = vmatpush1.bf16.msra.mxu0 %v4645
        %4669 = vmatprep.subr.bf16.mxu0 0
        %4670 = vmatpush1.bf16.msra.mxu0 %v4646
        %4671 = vmatprep.subr.bf16.mxu0 0
        %4672 = vmatpush1.bf16.msra.mxu0 0
        %4673 = vmatprep.subr.bf16.mxu0 0
        %4674 = vmatpush1.bf16.msra.mxu0 0
        %4675 = vmatprep.subr.bf16.mxu0 0
        %4676 = vmatpush1.bf16.msra.mxu0 0
        %4677 = vmatprep.subr.bf16.mxu0 0
        %4678 = vmatpush1.bf16.msra.mxu0 0
        %4679 = vmatprep.subr.bf16.mxu0 0
        %4680 = vmatpush1.bf16.msra.mxu0 0
        %4681 = vmatprep.subr.bf16.mxu0 0
        %4682 = vmatpush1.bf16.msra.mxu0 0
        %4683 = vmatprep.subr.bf16.mxu0 0
        %4684 = vmatpush1.bf16.msra.mxu0 0
        %4685 = vmatprep.subr.bf16.mxu0 0
        %4686 = vmatpush1.bf16.msra.mxu0 0
        %4687 = vmatprep.mubr.bf16.mxu0 0
        %4688 = vmatmul.mubr.bf16.gmra.mrb[0].mxu0 %v4605
        %v4689 = vpop.f32.mrb[0].mxu0
        %v4690 = vadd.f32 %v4606, %v4689
        %v4691 = vpop.f32.mrb[0].mxu0
        %v4692 = vpop.f32.mrb[0].mxu0
        %v4693 = vpop.f32.mrb[0].mxu0
        %4694 = vdwg.mxu0
        %v4695 = vtanh.pop %v4690
        %v4696 = vld [vmem:[%s43] sm:$0xf]
        %v4697 = vld [vmem:[%s43 + $0x4] sm:$0xf]
        %v4698 = vld [vmem:[%s43 + $0x8] sm:$0xf]
        %v4699 = vld [vmem:[%s43 + $0xc] sm:$0xf]
        %v4700 = vld [vmem:[%s43 + $0x10] sm:$0xf]
        %v4701 = vld [vmem:[%s43 + $0x14] sm:$0xf]
        %v4702 = vld [vmem:[%s43 + $0x18] sm:$0xf]
        %v4703 = vld [vmem:[%s43 + $0x1c] sm:$0xf]
        %v4704 = vld [vmem:[%s43 + $0x20] sm:$0xf]
        %v4705 = vld [vmem:[%s43 + $0x24] sm:$0xf]
        %v4706 = vld [vmem:[%s43 + $0x28] sm:$0xf]
        %v4707 = vld [vmem:[%s43 + $0x2c] sm:$0xf]
        %v4708 = vld [vmem:[%s43 + $0x30] sm:$0xf]
        %v4709 = vld [vmem:[%s43 + $0x34] sm:$0xf]
        %v4710 = vld [vmem:[%s43 + $0x38] sm:$0xf]
        %v4711 = vld [vmem:[%s43 + $0x3c] sm:$0xf]
        %v4712 = vpack.c.bf16 %v4695, %v4695
        %v4713 = vld [vmem:[#allocation32] sm:$0x1]
        %v4730 = vunpack.c.l.b16 %v4696
        %v4731 = vunpack.c.l.b16 %v4697
        %v4732 = vunpack.c.l.b16 %v4698
        %v4733 = vunpack.c.l.b16 %v4699
        %v4734 = vunpack.c.l.b16 %v4700
        %v4735 = vunpack.c.l.b16 %v4701
        %v4736 = vunpack.c.l.b16 %v4702
        %v4737 = vunpack.c.l.b16 %v4703
        %v4738 = vunpack.c.l.b16 %v4704
        %v4739 = vunpack.c.l.b16 %v4705
        %v4740 = vunpack.c.l.b16 %v4706
        %v4741 = vunpack.c.l.b16 %v4707
        %v4742 = vunpack.c.l.b16 %v4708
        %v4743 = vunpack.c.l.b16 %v4709
        %v4744 = vunpack.c.l.b16 %v4710
        %v4745 = vunpack.c.l.b16 %v4711
        %v4746 = vpack.c.b16 %v4731, %v4730
        %v4747 = vpack.c.b16 %v4733, %v4732
        %v4748 = vpack.c.b16 %v4735, %v4734
        %v4749 = vpack.c.b16 %v4737, %v4736
        %v4750 = vpack.c.b16 %v4739, %v4738
        %v4751 = vpack.c.b16 %v4741, %v4740
        %v4752 = vpack.c.b16 %v4743, %v4742
        %v4753 = vpack.c.b16 %v4745, %v4744
        %4762 = vmatprep.subr.bf16.mxu0 0
        %4763 = vmatpush1.bf16.msra.mxu0 %v4746
        %4764 = vmatprep.subr.bf16.mxu0 0
        %4765 = vmatpush1.bf16.msra.mxu0 %v4747
        %4766 = vmatprep.subr.bf16.mxu0 0
        %4767 = vmatpush1.bf16.msra.mxu0 %v4748
        %4768 = vmatprep.subr.bf16.mxu0 0
        %4769 = vmatpush1.bf16.msra.mxu0 %v4749
        %4770 = vmatprep.subr.bf16.mxu0 0
        %4771 = vmatpush1.bf16.msra.mxu0 %v4750
        %4772 = vmatprep.subr.bf16.mxu0 0
        %4773 = vmatpush1.bf16.msra.mxu0 %v4751
        %4774 = vmatprep.subr.bf16.mxu0 0
        %4775 = vmatpush1.bf16.msra.mxu0 %v4752
        %4776 = vmatprep.subr.bf16.mxu0 0
        %4777 = vmatpush1.bf16.msra.mxu0 %v4753
        %4778 = vmatprep.subr.bf16.mxu0 0
        %4779 = vmatpush1.bf16.msra.mxu0 0
        %4780 = vmatprep.subr.bf16.mxu0 0
        %4781 = vmatpush1.bf16.msra.mxu0 0
        %4782 = vmatprep.subr.bf16.mxu0 0
        %4783 = vmatpush1.bf16.msra.mxu0 0
        %4784 = vmatprep.subr.bf16.mxu0 0
        %4785 = vmatpush1.bf16.msra.mxu0 0
        %4786 = vmatprep.subr.bf16.mxu0 0
        %4787 = vmatpush1.bf16.msra.mxu0 0
        %4788 = vmatprep.subr.bf16.mxu0 0
        %4789 = vmatpush1.bf16.msra.mxu0 0
        %4790 = vmatprep.subr.bf16.mxu0 0
        %4791 = vmatpush1.bf16.msra.mxu0 0
        %4792 = vmatprep.subr.bf16.mxu0 0
        %4793 = vmatpush1.bf16.msra.mxu0 0
        %4794 = vmatprep.mubr.bf16.mxu0 0
        %4795 = vmatmul.mubr.bf16.gmra.mrb[0].mxu0 %v4712
        %v4796 = vpop.f32.mrb[0].mxu0
        %v4797 = vadd.f32 %v4713, %v4796
        %v4798 = vpop.f32.mrb[0].mxu0
        %v4799 = vpop.f32.mrb[0].mxu0
        %v4800 = vpop.f32.mrb[0].mxu0
        %4801 = vdwg.mxu0
        %vm4802 = vcmask 122880
        %v4803 = vsel %vm4802, %v4797, -inf
        %4804 = vmax.xlane.f32.xlu0 %v4803
        %v4805 = vpop.xlane.xlu0 %4804
        %v4806 = vsub.f32 %v4797, %v4805
        %v4807 = vmul.f32 %v4806, 1.442695
        %v4808 = vpow.pop %v4807
        %v4809 = vsel %vm4802, %v4808, 0.0
        %4810 = vadd.xlane.f32.xlu0 %v4809
        %v4811 = vpop.xlane.xlu0 %4810
        %v4812 = vrcp.pop %v4811
        %v4813 = vmul.f32 %v4808, %v4812
        %v4814 = vld [vmem:[#allocation33] sm:$0xff]
        %v4815 = vld [vmem:[#allocation33 + $0x8] sm:$0xff]
        %v4816 = vlaneseq
        %v4817 = vshrl.u32 %v4816, 7
        %v4818 = vsub.s32 0, %v4817
        %v4819 = vrot.slane %v4813, %v4818
        %4821 = vbcast.lane.b32.xlu0 %v4819, 256
        %v4822 = vpop.permute.xlu0 %4821
        %s4824 = sor.u32 256, 8
        %4825 = vbcast.lane.b32.xlu0 %v4819, %s4824
        %v4826 = vpop.permute.xlu0 %4825
        %v4827 = vmul.f32 %v4814, %v4822
        %v4828 = vmul.f32 %v4815, %v4826
        %v4829 = vld [vmem:[%s49] sm:$0xff]
        %v4830 = vld [vmem:[%s49 + $0x8] sm:$0xff]
        %v4831 = vld [vmem:[%s49 + $0x10] sm:$0xff]
        %v4832 = vld [vmem:[%s49 + $0x18] sm:$0xff]
        %v4833 = vld [vmem:[%s49 + $0x20] sm:$0xff]
        %v4834 = vld [vmem:[%s49 + $0x28] sm:$0xff]
        %v4835 = vld [vmem:[%s49 + $0x30] sm:$0xff]
        %v4836 = vld [vmem:[%s49 + $0x38] sm:$0xff]
        %v4837 = vld [vmem:[%s49 + $0x40] sm:$0xff]
        %v4838 = vld [vmem:[%s49 + $0x48] sm:$0xff]
        %v4839 = vld [vmem:[%s49 + $0x50] sm:$0xff]
        %v4840 = vld [vmem:[%s49 + $0x58] sm:$0xff]
        %v4841 = vld [vmem:[%s49 + $0x60] sm:$0xff]
        %v4842 = vld [vmem:[%s49 + $0x68] sm:$0xff]
        %v4843 = vld [vmem:[%s49 + $0x70] sm:$0xff]
        %v4844 = vld [vmem:[%s49 + $0x78] sm:$0xff]
        %v4845 = vld [vmem:[%s49 + $0x80] sm:$0xff]
        %v4846 = vld [vmem:[%s49 + $0x88] sm:$0xff]
        %v4847 = vld [vmem:[%s49 + $0x90] sm:$0xff]
        %v4848 = vld [vmem:[%s49 + $0x98] sm:$0xff]
        %v4849 = vld [vmem:[%s49 + $0xa0] sm:$0xff]
        %v4850 = vld [vmem:[%s49 + $0xa8] sm:$0xff]
        %v4851 = vld [vmem:[%s49 + $0xb0] sm:$0xff]
        %v4852 = vld [vmem:[%s49 + $0xb8] sm:$0xff]
        %v4853 = vld [vmem:[%s49 + $0xc0] sm:$0xff]
        %v4854 = vld [vmem:[%s49 + $0xc8] sm:$0xff]
        %v4855 = vld [vmem:[%s49 + $0xd0] sm:$0xff]
        %v4856 = vld [vmem:[%s49 + $0xd8] sm:$0xff]
        %v4857 = vld [vmem:[%s49 + $0xe0] sm:$0xff]
        %v4858 = vld [vmem:[%s49 + $0xe8] sm:$0xff]
        %v4859 = vld [vmem:[%s49 + $0xf0] sm:$0xff]
        %v4860 = vld [vmem:[%s49 + $0xf8] sm:$0xff]
        %v4861 = vpack.c.bf16 %v4828, %v4827
        %v4894 = vunpack.c.l.b16 %v4829
        %v4895 = vunpack.c.h.b16 %v4829
        %v4896 = vunpack.c.l.b16 %v4830
        %v4897 = vunpack.c.h.b16 %v4830
        %v4898 = vunpack.c.l.b16 %v4831
        %v4899 = vunpack.c.h.b16 %v4831
        %v4900 = vunpack.c.l.b16 %v4832
        %v4901 = vunpack.c.h.b16 %v4832
        %v4902 = vunpack.c.l.b16 %v4833
        %v4903 = vunpack.c.h.b16 %v4833
        %v4904 = vunpack.c.l.b16 %v4834
        %v4905 = vunpack.c.h.b16 %v4834
        %v4906 = vunpack.c.l.b16 %v4835
        %v4907 = vunpack.c.h.b16 %v4835
        %v4908 = vunpack.c.l.b16 %v4836
        %v4909 = vunpack.c.h.b16 %v4836
        %v4910 = vunpack.c.l.b16 %v4837
        %v4911 = vunpack.c.h.b16 %v4837
        %v4912 = vunpack.c.l.b16 %v4838
        %v4913 = vunpack.c.h.b16 %v4838
        %v4914 = vunpack.c.l.b16 %v4839
        %v4915 = vunpack.c.h.b16 %v4839
        %v4916 = vunpack.c.l.b16 %v4840
        %v4917 = vunpack.c.h.b16 %v4840
        %v4918 = vunpack.c.l.b16 %v4841
        %v4919 = vunpack.c.h.b16 %v4841
        %v4920 = vunpack.c.l.b16 %v4842
        %v4921 = vunpack.c.h.b16 %v4842
        %v4922 = vunpack.c.l.b16 %v4843
        %v4923 = vunpack.c.h.b16 %v4843
        %v4924 = vunpack.c.l.b16 %v4844
        %v4925 = vunpack.c.h.b16 %v4844
        %v4926 = vunpack.c.l.b16 %v4845
        %v4927 = vunpack.c.h.b16 %v4845
        %v4928 = vunpack.c.l.b16 %v4846
        %v4929 = vunpack.c.h.b16 %v4846
        %v4930 = vunpack.c.l.b16 %v4847
        %v4931 = vunpack.c.h.b16 %v4847
        %v4932 = vunpack.c.l.b16 %v4848
        %v4933 = vunpack.c.h.b16 %v4848
        %v4934 = vunpack.c.l.b16 %v4849
        %v4935 = vunpack.c.h.b16 %v4849
        %v4936 = vunpack.c.l.b16 %v4850
        %v4937 = vunpack.c.h.b16 %v4850
        %v4938 = vunpack.c.l.b16 %v4851
        %v4939 = vunpack.c.h.b16 %v4851
        %v4940 = vunpack.c.l.b16 %v4852
        %v4941 = vunpack.c.h.b16 %v4852
        %v4942 = vunpack.c.l.b16 %v4853
        %v4943 = vunpack.c.h.b16 %v4853
        %v4944 = vunpack.c.l.b16 %v4854
        %v4945 = vunpack.c.h.b16 %v4854
        %v4946 = vunpack.c.l.b16 %v4855
        %v4947 = vunpack.c.h.b16 %v4855
        %v4948 = vunpack.c.l.b16 %v4856
        %v4949 = vunpack.c.h.b16 %v4856
        %v4950 = vunpack.c.l.b16 %v4857
        %v4951 = vunpack.c.h.b16 %v4857
        %v4952 = vunpack.c.l.b16 %v4858
        %v4953 = vunpack.c.h.b16 %v4858
        %v4954 = vunpack.c.l.b16 %v4859
        %v4955 = vunpack.c.h.b16 %v4859
        %v4956 = vunpack.c.l.b16 %v4860
        %v4957 = vunpack.c.h.b16 %v4860
        %v4958 = vpack.c.b16 %v4898, %v4894
        %v4959 = vpack.c.b16 %v4899, %v4895
        %v4960 = vpack.c.b16 %v4900, %v4896
        %v4961 = vpack.c.b16 %v4901, %v4897
        %v4962 = vpack.c.b16 %v4906, %v4902
        %v4963 = vpack.c.b16 %v4907, %v4903
        %v4964 = vpack.c.b16 %v4908, %v4904
        %v4965 = vpack.c.b16 %v4909, %v4905
        %v4966 = vpack.c.b16 %v4914, %v4910
        %v4967 = vpack.c.b16 %v4915, %v4911
        %v4968 = vpack.c.b16 %v4916, %v4912
        %v4969 = vpack.c.b16 %v4917, %v4913
        %v4970 = vpack.c.b16 %v4922, %v4918
        %v4971 = vpack.c.b16 %v4923, %v4919
        %v4972 = vpack.c.b16 %v4924, %v4920
        %v4973 = vpack.c.b16 %v4925, %v4921
        %v4974 = vpack.c.b16 %v4930, %v4926
        %v4975 = vpack.c.b16 %v4931, %v4927
        %v4976 = vpack.c.b16 %v4932, %v4928
        %v4977 = vpack.c.b16 %v4933, %v4929
        %v4978 = vpack.c.b16 %v4938, %v4934
        %v4979 = vpack.c.b16 %v4939, %v4935
        %v4980 = vpack.c.b16 %v4940, %v4936
        %v4981 = vpack.c.b16 %v4941, %v4937
        %v4982 = vpack.c.b16 %v4946, %v4942
        %v4983 = vpack.c.b16 %v4947, %v4943
        %v4984 = vpack.c.b16 %v4948, %v4944
        %v4985 = vpack.c.b16 %v4949, %v4945
        %v4986 = vpack.c.b16 %v4954, %v4950
        %v4987 = vpack.c.b16 %v4955, %v4951
        %v4988 = vpack.c.b16 %v4956, %v4952
        %v4989 = vpack.c.b16 %v4957, %v4953
        %5022 = vmatprep.subr.bf16.mxu0 %v4959
        %5023 = vmatpush1.bf16.msra.mxu0 %v4958
        %5024 = vmatprep.subr.bf16.mxu0 %v4963
        %5025 = vmatpush1.bf16.msra.mxu0 %v4962
        %5026 = vmatprep.subr.bf16.mxu0 %v4967
        %5027 = vmatpush1.bf16.msra.mxu0 %v4966
        %5028 = vmatprep.subr.bf16.mxu0 %v4971
        %5029 = vmatpush1.bf16.msra.mxu0 %v4970
        %5030 = vmatprep.subr.bf16.mxu0 %v4975
        %5031 = vmatpush1.bf16.msra.mxu0 %v4974
        %5032 = vmatprep.subr.bf16.mxu0 %v4979
        %5033 = vmatpush1.bf16.msra.mxu0 %v4978
        %5034 = vmatprep.subr.bf16.mxu0 %v4983
        %5035 = vmatpush1.bf16.msra.mxu0 %v4982
        %5036 = vmatprep.subr.bf16.mxu0 %v4987
        %5037 = vmatpush1.bf16.msra.mxu0 %v4986
        %5038 = vmatprep.subr.bf16.mxu0 0
        %5039 = vmatpush1.bf16.msra.mxu0 0
        %5040 = vmatprep.subr.bf16.mxu0 0
        %5041 = vmatpush1.bf16.msra.mxu0 0
        %5042 = vmatprep.subr.bf16.mxu0 0
        %5043 = vmatpush1.bf16.msra.mxu0 0
        %5044 = vmatprep.subr.bf16.mxu0 0
        %5045 = vmatpush1.bf16.msra.mxu0 0
        %5046 = vmatprep.subr.bf16.mxu0 0
        %5047 = vmatpush1.bf16.msra.mxu0 0
        %5048 = vmatprep.subr.bf16.mxu0 0
        %5049 = vmatpush1.bf16.msra.mxu0 0
        %5050 = vmatprep.subr.bf16.mxu0 0
        %5051 = vmatpush1.bf16.msra.mxu0 0
        %5052 = vmatprep.subr.bf16.mxu0 0
        %5053 = vmatpush1.bf16.msra.mxu0 0
        %5054 = vmatprep.mubr.bf16.mxu0 0
        %5055 = vmatmul.mubr.bf16.gmra.mrb[0].mxu0 %v4861
        %v5056 = vpop.f32.mrb[0].mxu0
        %v5057 = vadd.f32 0.0, %v5056
        %v5058 = vpop.f32.mrb[0].mxu0
        %v5059 = vadd.f32 0.0, %v5058
        %v5060 = vpop.f32.mrb[0].mxu0
        %v5061 = vadd.f32 0.0, %v5060
        %v5062 = vpop.f32.mrb[0].mxu0
        %v5063 = vadd.f32 0.0, %v5062
        %5064 = vdwg.mxu0
        %5065 = vmatprep.subr.bf16.mxu0 %v4961
        %5066 = vmatpush1.bf16.msra.mxu0 %v4960
        %5067 = vmatprep.subr.bf16.mxu0 %v4965
        %5068 = vmatpush1.bf16.msra.mxu0 %v4964
        %5069 = vmatprep.subr.bf16.mxu0 %v4969
        %5070 = vmatpush1.bf16.msra.mxu0 %v4968
        %5071 = vmatprep.subr.bf16.mxu0 %v4973
        %5072 = vmatpush1.bf16.msra.mxu0 %v4972
        %5073 = vmatprep.subr.bf16.mxu0 %v4977
        %5074 = vmatpush1.bf16.msra.mxu0 %v4976
        %5075 = vmatprep.subr.bf16.mxu0 %v4981
        %5076 = vmatpush1.bf16.msra.mxu0 %v4980
        %5077 = vmatprep.subr.bf16.mxu0 %v4985
        %5078 = vmatpush1.bf16.msra.mxu0 %v4984
        %5079 = vmatprep.subr.bf16.mxu0 %v4989
        %5080 = vmatpush1.bf16.msra.mxu0 %v4988
        %5081 = vmatprep.subr.bf16.mxu0 0
        %5082 = vmatpush1.bf16.msra.mxu0 0
        %5083 = vmatprep.subr.bf16.mxu0 0
        %5084 = vmatpush1.bf16.msra.mxu0 0
        %5085 = vmatprep.subr.bf16.mxu0 0
        %5086 = vmatpush1.bf16.msra.mxu0 0
        %5087 = vmatprep.subr.bf16.mxu0 0
        %5088 = vmatpush1.bf16.msra.mxu0 0
        %5089 = vmatprep.subr.bf16.mxu0 0
        %5090 = vmatpush1.bf16.msra.mxu0 0
        %5091 = vmatprep.subr.bf16.mxu0 0
        %5092 = vmatpush1.bf16.msra.mxu0 0
        %5093 = vmatprep.subr.bf16.mxu0 0
        %5094 = vmatpush1.bf16.msra.mxu0 0
        %5095 = vmatprep.subr.bf16.mxu0 0
        %5096 = vmatpush1.bf16.msra.mxu0 0
        %5097 = vmatprep.mubr.bf16.mxu0 0
        %5098 = vmatmul.mubr.bf16.gmra.mrb[0].mxu0 %v4861
        %v5099 = vpop.f32.mrb[0].mxu0
        %v5100 = vadd.f32 0.0, %v5099
        %v5101 = vpop.f32.mrb[0].mxu0
        %v5102 = vadd.f32 0.0, %v5101
        %v5103 = vpop.f32.mrb[0].mxu0
        %v5104 = vadd.f32 0.0, %v5103
        %v5105 = vpop.f32.mrb[0].mxu0
        %v5106 = vadd.f32 0.0, %v5105
        %5107 = vdwg.mxu0
        %v5108 = vld [vmem:[%s51] sm:$0xf]
        %v5109 = vld [vmem:[%s51 + $0x4] sm:$0xf]
        %v5110 = vld [vmem:[%s51 + $0x8] sm:$0xf]
        %v5111 = vld [vmem:[%s51 + $0xc] sm:$0xf]
        %v5112 = vld [vmem:[%s51 + $0x10] sm:$0xf]
        %v5113 = vld [vmem:[%s51 + $0x14] sm:$0xf]
        %v5114 = vld [vmem:[%s51 + $0x18] sm:$0xf]
        %v5115 = vld [vmem:[%s51 + $0x1c] sm:$0xf]
        %v5116 = vld [vmem:[%s51 + $0x20] sm:$0xf]
        %v5117 = vld [vmem:[%s51 + $0x24] sm:$0xf]
        %v5118 = vld [vmem:[%s51 + $0x28] sm:$0xf]
        %v5119 = vld [vmem:[%s51 + $0x2c] sm:$0xf]
        %v5120 = vld [vmem:[%s51 + $0x30] sm:$0xf]
        %v5121 = vld [vmem:[%s51 + $0x34] sm:$0xf]
        %v5122 = vld [vmem:[%s51 + $0x38] sm:$0xf]
        %v5123 = vld [vmem:[%s51 + $0x3c] sm:$0xf]
        %v5124 = vld [vmem:[%s51 + $0x40] sm:$0xf]
        %v5125 = vld [vmem:[%s51 + $0x44] sm:$0xf]
        %v5126 = vld [vmem:[%s51 + $0x48] sm:$0xf]
        %v5127 = vld [vmem:[%s51 + $0x4c] sm:$0xf]
        %v5128 = vld [vmem:[%s51 + $0x50] sm:$0xf]
        %v5129 = vld [vmem:[%s51 + $0x54] sm:$0xf]
        %v5130 = vld [vmem:[%s51 + $0x58] sm:$0xf]
        %v5131 = vld [vmem:[%s51 + $0x5c] sm:$0xf]
        %v5132 = vld [vmem:[%s51 + $0x60] sm:$0xf]
        %v5133 = vld [vmem:[%s51 + $0x64] sm:$0xf]
        %v5134 = vld [vmem:[%s51 + $0x68] sm:$0xf]
        %v5135 = vld [vmem:[%s51 + $0x6c] sm:$0xf]
        %v5136 = vld [vmem:[%s51 + $0x70] sm:$0xf]
        %v5137 = vld [vmem:[%s51 + $0x74] sm:$0xf]
        %v5138 = vld [vmem:[%s51 + $0x78] sm:$0xf]
        %v5139 = vld [vmem:[%s51 + $0x7c] sm:$0xf]
        %v5140 = vld [vmem:[%s51 + $0x80] sm:$0xf]
        %v5141 = vld [vmem:[%s51 + $0x84] sm:$0xf]
        %v5142 = vld [vmem:[%s51 + $0x88] sm:$0xf]
        %v5143 = vld [vmem:[%s51 + $0x8c] sm:$0xf]
        %v5144 = vld [vmem:[%s51 + $0x90] sm:$0xf]
        %v5145 = vld [vmem:[%s51 + $0x94] sm:$0xf]
        %v5146 = vld [vmem:[%s51 + $0x98] sm:$0xf]
        %v5147 = vld [vmem:[%s51 + $0x9c] sm:$0xf]
        %v5148 = vld [vmem:[%s51 + $0xa0] sm:$0xf]
        %v5149 = vld [vmem:[%s51 + $0xa4] sm:$0xf]
        %v5150 = vld [vmem:[%s51 + $0xa8] sm:$0xf]
        %v5151 = vld [vmem:[%s51 + $0xac] sm:$0xf]
        %v5152 = vld [vmem:[%s51 + $0xb0] sm:$0xf]
        %v5153 = vld [vmem:[%s51 + $0xb4] sm:$0xf]
        %v5154 = vld [vmem:[%s51 + $0xb8] sm:$0xf]
        %v5155 = vld [vmem:[%s51 + $0xbc] sm:$0xf]
        %v5156 = vld [vmem:[%s51 + $0xc0] sm:$0xf]
        %v5157 = vld [vmem:[%s51 + $0xc4] sm:$0xf]
        %v5158 = vld [vmem:[%s51 + $0xc8] sm:$0xf]
        %v5159 = vld [vmem:[%s51 + $0xcc] sm:$0xf]
        %v5160 = vld [vmem:[%s51 + $0xd0] sm:$0xf]
        %v5161 = vld [vmem:[%s51 + $0xd4] sm:$0xf]
        %v5162 = vld [vmem:[%s51 + $0xd8] sm:$0xf]
        %v5163 = vld [vmem:[%s51 + $0xdc] sm:$0xf]
        %v5164 = vld [vmem:[%s51 + $0xe0] sm:$0xf]
        %v5165 = vld [vmem:[%s51 + $0xe4] sm:$0xf]
        %v5166 = vld [vmem:[%s51 + $0xe8] sm:$0xf]
        %v5167 = vld [vmem:[%s51 + $0xec] sm:$0xf]
        %v5168 = vld [vmem:[%s51 + $0xf0] sm:$0xf]
        %v5169 = vld [vmem:[%s51 + $0xf4] sm:$0xf]
        %v5170 = vld [vmem:[%s51 + $0xf8] sm:$0xf]
        %v5171 = vld [vmem:[%s51 + $0xfc] sm:$0xf]
        %v5172 = vpack.c.bf16 %v5061, %v5057
        %v5173 = vpack.c.bf16 %v5063, %v5059
        %v5174 = vpack.c.bf16 %v5104, %v5100
        %v5175 = vpack.c.bf16 %v5106, %v5102
        %v5240 = vunpack.c.l.b16 %v5108
        %v5241 = vunpack.c.l.b16 %v5109
        %v5242 = vunpack.c.l.b16 %v5110
        %v5243 = vunpack.c.l.b16 %v5111
        %v5244 = vunpack.c.l.b16 %v5112
        %v5245 = vunpack.c.l.b16 %v5113
        %v5246 = vunpack.c.l.b16 %v5114
        %v5247 = vunpack.c.l.b16 %v5115
        %v5248 = vunpack.c.l.b16 %v5116
        %v5249 = vunpack.c.l.b16 %v5117
        %v5250 = vunpack.c.l.b16 %v5118
        %v5251 = vunpack.c.l.b16 %v5119
        %v5252 = vunpack.c.l.b16 %v5120
        %v5253 = vunpack.c.l.b16 %v5121
        %v5254 = vunpack.c.l.b16 %v5122
        %v5255 = vunpack.c.l.b16 %v5123
        %v5256 = vunpack.c.l.b16 %v5124
        %v5257 = vunpack.c.l.b16 %v5125
        %v5258 = vunpack.c.l.b16 %v5126
        %v5259 = vunpack.c.l.b16 %v5127
        %v5260 = vunpack.c.l.b16 %v5128
        %v5261 = vunpack.c.l.b16 %v5129
        %v5262 = vunpack.c.l.b16 %v5130
        %v5263 = vunpack.c.l.b16 %v5131
        %v5264 = vunpack.c.l.b16 %v5132
        %v5265 = vunpack.c.l.b16 %v5133
        %v5266 = vunpack.c.l.b16 %v5134
        %v5267 = vunpack.c.l.b16 %v5135
        %v5268 = vunpack.c.l.b16 %v5136
        %v5269 = vunpack.c.l.b16 %v5137
        %v5270 = vunpack.c.l.b16 %v5138
        %v5271 = vunpack.c.l.b16 %v5139
        %v5272 = vunpack.c.l.b16 %v5140
        %v5273 = vunpack.c.l.b16 %v5141
        %v5274 = vunpack.c.l.b16 %v5142
        %v5275 = vunpack.c.l.b16 %v5143
        %v5276 = vunpack.c.l.b16 %v5144
        %v5277 = vunpack.c.l.b16 %v5145
        %v5278 = vunpack.c.l.b16 %v5146
        %v5279 = vunpack.c.l.b16 %v5147
        %v5280 = vunpack.c.l.b16 %v5148
        %v5281 = vunpack.c.l.b16 %v5149
        %v5282 = vunpack.c.l.b16 %v5150
        %v5283 = vunpack.c.l.b16 %v5151
        %v5284 = vunpack.c.l.b16 %v5152
        %v5285 = vunpack.c.l.b16 %v5153
        %v5286 = vunpack.c.l.b16 %v5154
        %v5287 = vunpack.c.l.b16 %v5155
        %v5288 = vunpack.c.l.b16 %v5156
        %v5289 = vunpack.c.l.b16 %v5157
        %v5290 = vunpack.c.l.b16 %v5158
        %v5291 = vunpack.c.l.b16 %v5159
        %v5292 = vunpack.c.l.b16 %v5160
        %v5293 = vunpack.c.l.b16 %v5161
        %v5294 = vunpack.c.l.b16 %v5162
        %v5295 = vunpack.c.l.b16 %v5163
        %v5296 = vunpack.c.l.b16 %v5164
        %v5297 = vunpack.c.l.b16 %v5165
        %v5298 = vunpack.c.l.b16 %v5166
        %v5299 = vunpack.c.l.b16 %v5167
        %v5300 = vunpack.c.l.b16 %v5168
        %v5301 = vunpack.c.l.b16 %v5169
        %v5302 = vunpack.c.l.b16 %v5170
        %v5303 = vunpack.c.l.b16 %v5171
        %v5304 = vpack.c.b16 %v5241, %v5240
        %v5305 = vpack.c.b16 %v5243, %v5242
        %v5306 = vpack.c.b16 %v5245, %v5244
        %v5307 = vpack.c.b16 %v5247, %v5246
        %v5308 = vpack.c.b16 %v5249, %v5248
        %v5309 = vpack.c.b16 %v5251, %v5250
        %v5310 = vpack.c.b16 %v5253, %v5252
        %v5311 = vpack.c.b16 %v5255, %v5254
        %v5312 = vpack.c.b16 %v5257, %v5256
        %v5313 = vpack.c.b16 %v5259, %v5258
        %v5314 = vpack.c.b16 %v5261, %v5260
        %v5315 = vpack.c.b16 %v5263, %v5262
        %v5316 = vpack.c.b16 %v5265, %v5264
        %v5317 = vpack.c.b16 %v5267, %v5266
        %v5318 = vpack.c.b16 %v5269, %v5268
        %v5319 = vpack.c.b16 %v5271, %v5270
        %v5320 = vpack.c.b16 %v5273, %v5272
        %v5321 = vpack.c.b16 %v5275, %v5274
        %v5322 = vpack.c.b16 %v5277, %v5276
        %v5323 = vpack.c.b16 %v5279, %v5278
        %v5324 = vpack.c.b16 %v5281, %v5280
        %v5325 = vpack.c.b16 %v5283, %v5282
        %v5326 = vpack.c.b16 %v5285, %v5284
        %v5327 = vpack.c.b16 %v5287, %v5286
        %v5328 = vpack.c.b16 %v5289, %v5288
        %v5329 = vpack.c.b16 %v5291, %v5290
        %v5330 = vpack.c.b16 %v5293, %v5292
        %v5331 = vpack.c.b16 %v5295, %v5294
        %v5332 = vpack.c.b16 %v5297, %v5296
        %v5333 = vpack.c.b16 %v5299, %v5298
        %v5334 = vpack.c.b16 %v5301, %v5300
        %v5335 = vpack.c.b16 %v5303, %v5302
        %5368 = vmatprep.subr.bf16.mxu0 0
        %5369 = vmatpush1.bf16.msra.mxu0 %v5304
        %5370 = vmatprep.subr.bf16.mxu0 0
        %5371 = vmatpush1.bf16.msra.mxu0 %v5305
        %5372 = vmatprep.subr.bf16.mxu0 0
        %5373 = vmatpush1.bf16.msra.mxu0 %v5306
        %5374 = vmatprep.subr.bf16.mxu0 0
        %5375 = vmatpush1.bf16.msra.mxu0 %v5307
        %5376 = vmatprep.subr.bf16.mxu0 0
        %5377 = vmatpush1.bf16.msra.mxu0 %v5308
        %5378 = vmatprep.subr.bf16.mxu0 0
        %5379 = vmatpush1.bf16.msra.mxu0 %v5309
        %5380 = vmatprep.subr.bf16.mxu0 0
        %5381 = vmatpush1.bf16.msra.mxu0 %v5310
        %5382 = vmatprep.subr.bf16.mxu0 0
        %5383 = vmatpush1.bf16.msra.mxu0 %v5311
        %5384 = vmatprep.subr.bf16.mxu0 0
        %5385 = vmatpush1.bf16.msra.mxu0 %v5312
        %5386 = vmatprep.subr.bf16.mxu0 0
        %5387 = vmatpush1.bf16.msra.mxu0 %v5313
        %5388 = vmatprep.subr.bf16.mxu0 0
        %5389 = vmatpush1.bf16.msra.mxu0 %v5314
        %5390 = vmatprep.subr.bf16.mxu0 0
        %5391 = vmatpush1.bf16.msra.mxu0 %v5315
        %5392 = vmatprep.subr.bf16.mxu0 0
        %5393 = vmatpush1.bf16.msra.mxu0 %v5316
        %5394 = vmatprep.subr.bf16.mxu0 0
        %5395 = vmatpush1.bf16.msra.mxu0 %v5317
        %5396 = vmatprep.subr.bf16.mxu0 0
        %5397 = vmatpush1.bf16.msra.mxu0 %v5318
        %5398 = vmatprep.subr.bf16.mxu0 0
        %5399 = vmatpush1.bf16.msra.mxu0 %v5319
        %5400 = vmatprep.mubr.bf16.mxu0 %v5173
        %5401 = vmatmul.mubr.bf16.gmra.mrb[0].mxu0 %v5172
        %v5402 = vpop.f32.mrb[0].mxu0
        %v5403 = vadd.f32 0.0, %v5402
        %v5404 = vpop.f32.mrb[0].mxu0
        %v5405 = vpop.f32.mrb[0].mxu0
        %v5406 = vadd.f32 0.0, %v5405
        %v5407 = vpop.f32.mrb[0].mxu0
        %5408 = vdwg.mxu0
        %5409 = vmatprep.subr.bf16.mxu0 0
        %5410 = vmatpush1.bf16.msra.mxu0 %v5320
        %5411 = vmatprep.subr.bf16.mxu0 0
        %5412 = vmatpush1.bf16.msra.mxu0 %v5321
        %5413 = vmatprep.subr.bf16.mxu0 0
        %5414 = vmatpush1.bf16.msra.mxu0 %v5322
        %5415 = vmatprep.subr.bf16.mxu0 0
        %5416 = vmatpush1.bf16.msra.mxu0 %v5323
        %5417 = vmatprep.subr.bf16.mxu0 0
        %5418 = vmatpush1.bf16.msra.mxu0 %v5324
        %5419 = vmatprep.subr.bf16.mxu0 0
        %5420 = vmatpush1.bf16.msra.mxu0 %v5325
        %5421 = vmatprep.subr.bf16.mxu0 0
        %5422 = vmatpush1.bf16.msra.mxu0 %v5326
        %5423 = vmatprep.subr.bf16.mxu0 0
        %5424 = vmatpush1.bf16.msra.mxu0 %v5327
        %5425 = vmatprep.subr.bf16.mxu0 0
        %5426 = vmatpush1.bf16.msra.mxu0 %v5328
        %5427 = vmatprep.subr.bf16.mxu0 0
        %5428 = vmatpush1.bf16.msra.mxu0 %v5329
        %5429 = vmatprep.subr.bf16.mxu0 0
        %5430 = vmatpush1.bf16.msra.mxu0 %v5330
        %5431 = vmatprep.subr.bf16.mxu0 0
        %5432 = vmatpush1.bf16.msra.mxu0 %v5331
        %5433 = vmatprep.subr.bf16.mxu0 0
        %5434 = vmatpush1.bf16.msra.mxu0 %v5332
        %5435 = vmatprep.subr.bf16.mxu0 0
        %5436 = vmatpush1.bf16.msra.mxu0 %v5333
        %5437 = vmatprep.subr.bf16.mxu0 0
        %5438 = vmatpush1.bf16.msra.mxu0 %v5334
        %5439 = vmatprep.subr.bf16.mxu0 0
        %5440 = vmatpush1.bf16.msra.mxu0 %v5335
        %5441 = vmatprep.mubr.bf16.mxu0 %v5175
        %5442 = vmatmul.mubr.bf16.gmra.mrb[0].mxu0 %v5174
        %v5443 = vpop.f32.mrb[0].mxu0
        %v5444 = vadd.f32 %v5403, %v5443
        %v5445 = vpop.f32.mrb[0].mxu0
        %v5446 = vpop.f32.mrb[0].mxu0
        %v5447 = vadd.f32 %v5406, %v5446
        %v5448 = vpop.f32.mrb[0].mxu0
        %5449 = vdwg.mxu0
        %v5450 = vld [vmem:[%s53] sm:$0xf]
        %v5451 = vld [vmem:[%s53 + $0x4] sm:$0xf]
        %v5452 = vld [vmem:[%s53 + $0x8] sm:$0xf]
        %v5453 = vld [vmem:[%s53 + $0xc] sm:$0xf]
        %v5454 = vld [vmem:[%s53 + $0x10] sm:$0xf]
        %v5455 = vld [vmem:[%s53 + $0x14] sm:$0xf]
        %v5456 = vld [vmem:[%s53 + $0x18] sm:$0xf]
        %v5457 = vld [vmem:[%s53 + $0x1c] sm:$0xf]
        %v5458 = vld [vmem:[%s53 + $0x20] sm:$0xf]
        %v5459 = vld [vmem:[%s53 + $0x24] sm:$0xf]
        %v5460 = vld [vmem:[%s53 + $0x28] sm:$0xf]
        %v5461 = vld [vmem:[%s53 + $0x2c] sm:$0xf]
        %v5462 = vld [vmem:[%s53 + $0x30] sm:$0xf]
        %v5463 = vld [vmem:[%s53 + $0x34] sm:$0xf]
        %v5464 = vld [vmem:[%s53 + $0x38] sm:$0xf]
        %v5465 = vld [vmem:[%s53 + $0x3c] sm:$0xf]
        %v5466 = vld [vmem:[%s53 + $0x40] sm:$0xf]
        %v5467 = vld [vmem:[%s53 + $0x44] sm:$0xf]
        %v5468 = vld [vmem:[%s53 + $0x48] sm:$0xf]
        %v5469 = vld [vmem:[%s53 + $0x4c] sm:$0xf]
        %v5470 = vld [vmem:[%s53 + $0x50] sm:$0xf]
        %v5471 = vld [vmem:[%s53 + $0x54] sm:$0xf]
        %v5472 = vld [vmem:[%s53 + $0x58] sm:$0xf]
        %v5473 = vld [vmem:[%s53 + $0x5c] sm:$0xf]
        %v5474 = vld [vmem:[%s53 + $0x60] sm:$0xf]
        %v5475 = vld [vmem:[%s53 + $0x64] sm:$0xf]
        %v5476 = vld [vmem:[%s53 + $0x68] sm:$0xf]
        %v5477 = vld [vmem:[%s53 + $0x6c] sm:$0xf]
        %v5478 = vld [vmem:[%s53 + $0x70] sm:$0xf]
        %v5479 = vld [vmem:[%s53 + $0x74] sm:$0xf]
        %v5480 = vld [vmem:[%s53 + $0x78] sm:$0xf]
        %v5481 = vld [vmem:[%s53 + $0x7c] sm:$0xf]
        %v5482 = vld [vmem:[%s53 + $0x80] sm:$0xf]
        %v5483 = vld [vmem:[%s53 + $0x84] sm:$0xf]
        %v5484 = vld [vmem:[%s53 + $0x88] sm:$0xf]
        %v5485 = vld [vmem:[%s53 + $0x8c] sm:$0xf]
        %v5486 = vld [vmem:[%s53 + $0x90] sm:$0xf]
        %v5487 = vld [vmem:[%s53 + $0x94] sm:$0xf]
        %v5488 = vld [vmem:[%s53 + $0x98] sm:$0xf]
        %v5489 = vld [vmem:[%s53 + $0x9c] sm:$0xf]
        %v5490 = vld [vmem:[%s53 + $0xa0] sm:$0xf]
        %v5491 = vld [vmem:[%s53 + $0xa4] sm:$0xf]
        %v5492 = vld [vmem:[%s53 + $0xa8] sm:$0xf]
        %v5493 = vld [vmem:[%s53 + $0xac] sm:$0xf]
        %v5494 = vld [vmem:[%s53 + $0xb0] sm:$0xf]
        %v5495 = vld [vmem:[%s53 + $0xb4] sm:$0xf]
        %v5496 = vld [vmem:[%s53 + $0xb8] sm:$0xf]
        %v5497 = vld [vmem:[%s53 + $0xbc] sm:$0xf]
        %v5498 = vld [vmem:[%s53 + $0xc0] sm:$0xf]
        %v5499 = vld [vmem:[%s53 + $0xc4] sm:$0xf]
        %v5500 = vld [vmem:[%s53 + $0xc8] sm:$0xf]
        %v5501 = vld [vmem:[%s53 + $0xcc] sm:$0xf]
        %v5502 = vld [vmem:[%s53 + $0xd0] sm:$0xf]
        %v5503 = vld [vmem:[%s53 + $0xd4] sm:$0xf]
        %v5504 = vld [vmem:[%s53 + $0xd8] sm:$0xf]
        %v5505 = vld [vmem:[%s53 + $0xdc] sm:$0xf]
        %v5506 = vld [vmem:[%s53 + $0xe0] sm:$0xf]
        %v5507 = vld [vmem:[%s53 + $0xe4] sm:$0xf]
        %v5508 = vld [vmem:[%s53 + $0xe8] sm:$0xf]
        %v5509 = vld [vmem:[%s53 + $0xec] sm:$0xf]
        %v5510 = vld [vmem:[%s53 + $0xf0] sm:$0xf]
        %v5511 = vld [vmem:[%s53 + $0xf4] sm:$0xf]
        %v5512 = vld [vmem:[%s53 + $0xf8] sm:$0xf]
        %v5513 = vld [vmem:[%s53 + $0xfc] sm:$0xf]
        %v5578 = vunpack.c.l.b16 %v5450
        %v5579 = vunpack.c.l.b16 %v5451
        %v5580 = vunpack.c.l.b16 %v5452
        %v5581 = vunpack.c.l.b16 %v5453
        %v5582 = vunpack.c.l.b16 %v5454
        %v5583 = vunpack.c.l.b16 %v5455
        %v5584 = vunpack.c.l.b16 %v5456
        %v5585 = vunpack.c.l.b16 %v5457
        %v5586 = vunpack.c.l.b16 %v5458
        %v5587 = vunpack.c.l.b16 %v5459
        %v5588 = vunpack.c.l.b16 %v5460
        %v5589 = vunpack.c.l.b16 %v5461
        %v5590 = vunpack.c.l.b16 %v5462
        %v5591 = vunpack.c.l.b16 %v5463
        %v5592 = vunpack.c.l.b16 %v5464
        %v5593 = vunpack.c.l.b16 %v5465
        %v5594 = vunpack.c.l.b16 %v5466
        %v5595 = vunpack.c.l.b16 %v5467
        %v5596 = vunpack.c.l.b16 %v5468
        %v5597 = vunpack.c.l.b16 %v5469
        %v5598 = vunpack.c.l.b16 %v5470
        %v5599 = vunpack.c.l.b16 %v5471
        %v5600 = vunpack.c.l.b16 %v5472
        %v5601 = vunpack.c.l.b16 %v5473
        %v5602 = vunpack.c.l.b16 %v5474
        %v5603 = vunpack.c.l.b16 %v5475
        %v5604 = vunpack.c.l.b16 %v5476
        %v5605 = vunpack.c.l.b16 %v5477
        %v5606 = vunpack.c.l.b16 %v5478
        %v5607 = vunpack.c.l.b16 %v5479
        %v5608 = vunpack.c.l.b16 %v5480
        %v5609 = vunpack.c.l.b16 %v5481
        %v5610 = vunpack.c.l.b16 %v5482
        %v5611 = vunpack.c.l.b16 %v5483
        %v5612 = vunpack.c.l.b16 %v5484
        %v5613 = vunpack.c.l.b16 %v5485
        %v5614 = vunpack.c.l.b16 %v5486
        %v5615 = vunpack.c.l.b16 %v5487
        %v5616 = vunpack.c.l.b16 %v5488
        %v5617 = vunpack.c.l.b16 %v5489
        %v5618 = vunpack.c.l.b16 %v5490
        %v5619 = vunpack.c.l.b16 %v5491
        %v5620 = vunpack.c.l.b16 %v5492
        %v5621 = vunpack.c.l.b16 %v5493
        %v5622 = vunpack.c.l.b16 %v5494
        %v5623 = vunpack.c.l.b16 %v5495
        %v5624 = vunpack.c.l.b16 %v5496
        %v5625 = vunpack.c.l.b16 %v5497
        %v5626 = vunpack.c.l.b16 %v5498
        %v5627 = vunpack.c.l.b16 %v5499
        %v5628 = vunpack.c.l.b16 %v5500
        %v5629 = vunpack.c.l.b16 %v5501
        %v5630 = vunpack.c.l.b16 %v5502
        %v5631 = vunpack.c.l.b16 %v5503
        %v5632 = vunpack.c.l.b16 %v5504
        %v5633 = vunpack.c.l.b16 %v5505
        %v5634 = vunpack.c.l.b16 %v5506
        %v5635 = vunpack.c.l.b16 %v5507
        %v5636 = vunpack.c.l.b16 %v5508
        %v5637 = vunpack.c.l.b16 %v5509
        %v5638 = vunpack.c.l.b16 %v5510
        %v5639 = vunpack.c.l.b16 %v5511
        %v5640 = vunpack.c.l.b16 %v5512
        %v5641 = vunpack.c.l.b16 %v5513
        %v5642 = vpack.c.b16 %v5579, %v5578
        %v5643 = vpack.c.b16 %v5581, %v5580
        %v5644 = vpack.c.b16 %v5583, %v5582
        %v5645 = vpack.c.b16 %v5585, %v5584
        %v5646 = vpack.c.b16 %v5587, %v5586
        %v5647 = vpack.c.b16 %v5589, %v5588
        %v5648 = vpack.c.b16 %v5591, %v5590
        %v5649 = vpack.c.b16 %v5593, %v5592
        %v5650 = vpack.c.b16 %v5595, %v5594
        %v5651 = vpack.c.b16 %v5597, %v5596
        %v5652 = vpack.c.b16 %v5599, %v5598
        %v5653 = vpack.c.b16 %v5601, %v5600
        %v5654 = vpack.c.b16 %v5603, %v5602
        %v5655 = vpack.c.b16 %v5605, %v5604
        %v5656 = vpack.c.b16 %v5607, %v5606
        %v5657 = vpack.c.b16 %v5609, %v5608
        %v5658 = vpack.c.b16 %v5611, %v5610
        %v5659 = vpack.c.b16 %v5613, %v5612
        %v5660 = vpack.c.b16 %v5615, %v5614
        %v5661 = vpack.c.b16 %v5617, %v5616
        %v5662 = vpack.c.b16 %v5619, %v5618
        %v5663 = vpack.c.b16 %v5621, %v5620
        %v5664 = vpack.c.b16 %v5623, %v5622
        %v5665 = vpack.c.b16 %v5625, %v5624
        %v5666 = vpack.c.b16 %v5627, %v5626
        %v5667 = vpack.c.b16 %v5629, %v5628
        %v5668 = vpack.c.b16 %v5631, %v5630
        %v5669 = vpack.c.b16 %v5633, %v5632
        %v5670 = vpack.c.b16 %v5635, %v5634
        %v5671 = vpack.c.b16 %v5637, %v5636
        %v5672 = vpack.c.b16 %v5639, %v5638
        %v5673 = vpack.c.b16 %v5641, %v5640
        %5706 = vmatprep.subr.bf16.mxu0 0
        %5707 = vmatpush1.bf16.msra.mxu0 %v5642
        %5708 = vmatprep.subr.bf16.mxu0 0
        %5709 = vmatpush1.bf16.msra.mxu0 %v5643
        %5710 = vmatprep.subr.bf16.mxu0 0
        %5711 = vmatpush1.bf16.msra.mxu0 %v5644
        %5712 = vmatprep.subr.bf16.mxu0 0
        %5713 = vmatpush1.bf16.msra.mxu0 %v5645
        %5714 = vmatprep.subr.bf16.mxu0 0
        %5715 = vmatpush1.bf16.msra.mxu0 %v5646
        %5716 = vmatprep.subr.bf16.mxu0 0
        %5717 = vmatpush1.bf16.msra.mxu0 %v5647
        %5718 = vmatprep.subr.bf16.mxu0 0
        %5719 = vmatpush1.bf16.msra.mxu0 %v5648
        %5720 = vmatprep.subr.bf16.mxu0 0
        %5721 = vmatpush1.bf16.msra.mxu0 %v5649
        %5722 = vmatprep.subr.bf16.mxu0 0
        %5723 = vmatpush1.bf16.msra.mxu0 %v5650
        %5724 = vmatprep.subr.bf16.mxu0 0
        %5725 = vmatpush1.bf16.msra.mxu0 %v5651
        %5726 = vmatprep.subr.bf16.mxu0 0
        %5727 = vmatpush1.bf16.msra.mxu0 %v5652
        %5728 = vmatprep.subr.bf16.mxu0 0
        %5729 = vmatpush1.bf16.msra.mxu0 %v5653
        %5730 = vmatprep.subr.bf16.mxu0 0
        %5731 = vmatpush1.bf16.msra.mxu0 %v5654
        %5732 = vmatprep.subr.bf16.mxu0 0
        %5733 = vmatpush1.bf16.msra.mxu0 %v5655
        %5734 = vmatprep.subr.bf16.mxu0 0
        %5735 = vmatpush1.bf16.msra.mxu0 %v5656
        %5736 = vmatprep.subr.bf16.mxu0 0
        %5737 = vmatpush1.bf16.msra.mxu0 %v5657
        %5738 = vmatprep.mubr.bf16.mxu0 %v5173
        %5739 = vmatmul.mubr.bf16.gmra.mrb[0].mxu0 %v5172
        %v5740 = vpop.f32.mrb[0].mxu0
        %v5741 = vadd.f32 0.0, %v5740
        %v5742 = vpop.f32.mrb[0].mxu0
        %v5743 = vpop.f32.mrb[0].mxu0
        %v5744 = vadd.f32 0.0, %v5743
        %v5745 = vpop.f32.mrb[0].mxu0
        %5746 = vdwg.mxu0
        %5747 = vmatprep.subr.bf16.mxu0 0
        %5748 = vmatpush1.bf16.msra.mxu0 %v5658
        %5749 = vmatprep.subr.bf16.mxu0 0
        %5750 = vmatpush1.bf16.msra.mxu0 %v5659
        %5751 = vmatprep.subr.bf16.mxu0 0
        %5752 = vmatpush1.bf16.msra.mxu0 %v5660
        %5753 = vmatprep.subr.bf16.mxu0 0
        %5754 = vmatpush1.bf16.msra.mxu0 %v5661
        %5755 = vmatprep.subr.bf16.mxu0 0
        %5756 = vmatpush1.bf16.msra.mxu0 %v5662
        %5757 = vmatprep.subr.bf16.mxu0 0
        %5758 = vmatpush1.bf16.msra.mxu0 %v5663
        %5759 = vmatprep.subr.bf16.mxu0 0
        %5760 = vmatpush1.bf16.msra.mxu0 %v5664
        %5761 = vmatprep.subr.bf16.mxu0 0
        %5762 = vmatpush1.bf16.msra.mxu0 %v5665
        %5763 = vmatprep.subr.bf16.mxu0 0
        %5764 = vmatpush1.bf16.msra.mxu0 %v5666
        %5765 = vmatprep.subr.bf16.mxu0 0
        %5766 = vmatpush1.bf16.msra.mxu0 %v5667
        %5767 = vmatprep.subr.bf16.mxu0 0
        %5768 = vmatpush1.bf16.msra.mxu0 %v5668
        %5769 = vmatprep.subr.bf16.mxu0 0
        %5770 = vmatpush1.bf16.msra.mxu0 %v5669
        %5771 = vmatprep.subr.bf16.mxu0 0
        %5772 = vmatpush1.bf16.msra.mxu0 %v5670
        %5773 = vmatprep.subr.bf16.mxu0 0
        %5774 = vmatpush1.bf16.msra.mxu0 %v5671
        %5775 = vmatprep.subr.bf16.mxu0 0
        %5776 = vmatpush1.bf16.msra.mxu0 %v5672
        %5777 = vmatprep.subr.bf16.mxu0 0
        %5778 = vmatpush1.bf16.msra.mxu0 %v5673
        %5779 = vmatprep.mubr.bf16.mxu0 %v5175
        %5780 = vmatmul.mubr.bf16.gmra.mrb[0].mxu0 %v5174
        %v5781 = vpop.f32.mrb[0].mxu0
        %v5782 = vadd.f32 %v5741, %v5781
        %v5783 = vpop.f32.mrb[0].mxu0
        %v5784 = vpop.f32.mrb[0].mxu0
        %v5785 = vadd.f32 %v5744, %v5784
        %v5786 = vpop.f32.mrb[0].mxu0
        %5787 = vdwg.mxu0
        %v5788 = vrot.slane %v5444, 7
        %v5789 = vrot.slane %v5447, 7
        %v5790 = vlaneseq
        %v5791 = vshrl.u32 %v5790, 7
        %vm5792 = vcmp.lt.s32.totalorder %v5791, 1
        %v5793 = vsel %vm5792, %v5788, %v5789
        %v5794 = vsel %vm5792, %v5789, %v5788
        %v5795 = vrot.slane %v5444, 1
        %v5796 = vrot.slane %v5447, 1
        %vm5797 = vcmp.lt.s32.totalorder %v5791, 7
        %v5798 = vsel %vm5797, %v5795, %v5796
        %v5799 = vsel %vm5797, %v5796, %v5795
        %v5800 = vadd.f32 %v5794, %v5782
        %v5801 = vadd.f32 %v5793, %v5785
        %vm5802 = vcmp.gt.f32.partialorder %v5800, 0.0
        %vm5803 = vcmp.gt.f32.partialorder %v5801, 0.0
        %v5804 = vmul.f32 %v5800, 0.2
        %v5805 = vmul.f32 %v5801, 0.2
        %v5806 = vsel %vm5802, %v5800, %v5804
        %v5807 = vsel %vm5803, %v5801, %v5805
        %v5808 = vadd.f32 %v5798, %v5782
        %v5809 = vadd.f32 %v5799, %v5785
        %vm5810 = vcmp.gt.f32.partialorder %v5808, 0.0
        %vm5811 = vcmp.gt.f32.partialorder %v5809, 0.0
        %v5812 = vmul.f32 %v5808, 0.2
        %v5813 = vmul.f32 %v5809, 0.2
        %v5814 = vsel %vm5810, %v5808, %v5812
        %v5815 = vsel %vm5811, %v5809, %v5813
        %v5816 = vadd.f32 %v5444, %v5782
        %v5817 = vadd.f32 %v5447, %v5785
        %vm5818 = vcmp.gt.f32.partialorder %v5816, 0.0
        %vm5819 = vcmp.gt.f32.partialorder %v5817, 0.0
        %v5820 = vmul.f32 %v5816, 0.2
        %v5821 = vmul.f32 %v5817, 0.2
        %v5822 = vsel %vm5818, %v5816, %v5820
        %v5823 = vsel %vm5819, %v5817, %v5821
        %v5824 = vmax.f32 %v5806, %v5814
        %v5825 = vmax.f32 %v5807, %v5815
        %v5826 = vmax.f32 %v5824, %v5822
        %v5827 = vmax.f32 %v5825, %v5823
        %v5828 = vsub.f32 %v5806, %v5826
        %v5829 = vsub.f32 %v5807, %v5827
        %v5830 = vmul.f32 %v5828, 1.442695
        %v5831 = vpow.pop %v5830
        %v5832 = vmul.f32 %v5829, 1.442695
        %v5833 = vpow.pop %v5832
        %v5834 = vsub.f32 %v5814, %v5826
        %v5835 = vsub.f32 %v5815, %v5827
        %v5836 = vmul.f32 %v5834, 1.442695
        %v5837 = vpow.pop %v5836
        %v5838 = vmul.f32 %v5835, 1.442695
        %v5839 = vpow.pop %v5838
        %v5840 = vsub.f32 %v5822, %v5826
        %v5841 = vsub.f32 %v5823, %v5827
        %v5842 = vmul.f32 %v5840, 1.442695
        %v5843 = vpow.pop %v5842
        %v5844 = vmul.f32 %v5841, 1.442695
        %v5845 = vpow.pop %v5844
        %v5846 = vadd.f32 %v5831, %v5837
        %v5847 = vadd.f32 %v5833, %v5839
        %v5848 = vadd.f32 %v5846, %v5843
        %v5849 = vadd.f32 %v5847, %v5845
        %v5850 = vrcp.pop %v5848
        %v5851 = vmul.f32 1.0, %v5850
        %v5852 = vrcp.pop %v5849
        %v5853 = vmul.f32 1.0, %v5852
        %v5854 = vmul.f32 %v5831, %v5851
        %v5855 = vmul.f32 %v5833, %v5853
        %v5856 = vmul.f32 %v5837, %v5851
        %v5857 = vmul.f32 %v5839, %v5853
        %v5858 = vmul.f32 %v5843, %v5851
        %v5859 = vmul.f32 %v5845, %v5853
        %v5860 = vrot.slane %v5057, 7
        %v5861 = vrot.slane %v5059, 7
        %v5862 = vrot.slane %v5100, 7
        %v5863 = vrot.slane %v5102, 7
        %v5864 = vrot.slane %v5061, 7
        %v5865 = vrot.slane %v5063, 7
        %v5866 = vrot.slane %v5104, 7
        %v5867 = vrot.slane %v5106, 7
        %v5868 = vsel %vm5792, %v5860, %v5864
        %v5869 = vsel %vm5792, %v5861, %v5865
        %v5870 = vsel %vm5792, %v5862, %v5866
        %v5871 = vsel %vm5792, %v5863, %v5867
        %v5872 = vsel %vm5792, %v5864, %v5860
        %v5873 = vsel %vm5792, %v5865, %v5861
        %v5874 = vsel %vm5792, %v5866, %v5862
        %v5875 = vsel %vm5792, %v5867, %v5863
        %v5876 = vrot.slane %v5057, 1
        %v5877 = vrot.slane %v5059, 1
        %v5878 = vrot.slane %v5100, 1
        %v5879 = vrot.slane %v5102, 1
        %v5880 = vrot.slane %v5061, 1
        %v5881 = vrot.slane %v5063, 1
        %v5882 = vrot.slane %v5104, 1
        %v5883 = vrot.slane %v5106, 1
        %v5884 = vsel %vm5797, %v5876, %v5880
        %v5885 = vsel %vm5797, %v5877, %v5881
        %v5886 = vsel %vm5797, %v5878, %v5882
        %v5887 = vsel %vm5797, %v5879, %v5883
        %v5888 = vsel %vm5797, %v5880, %v5876
        %v5889 = vsel %vm5797, %v5881, %v5877
        %v5890 = vsel %vm5797, %v5882, %v5878
        %v5891 = vsel %vm5797, %v5883, %v5879
        %v5892 = vcombine.low %v5057, %v5100
        %v5893 = vcombine.high %v5057, %v5100
        %v5895 = vunpack.c.l.s4 1983009808
        %v5896 = vunpack.c.0.s8 %v5895
        %v5897 = vlaneseq
        %v5898 = vshrl.u32 %v5897, 7
        %v5899 = vsub.s32 %v5896, %v5898
        %v5900 = vrot.slane %v5892, %v5899
        %v5902 = vunpack.c.l.s4 1983009808
        %v5903 = vunpack.c.0.s8 %v5902
        %v5904 = vlaneseq
        %v5905 = vshrl.u32 %v5904, 7
        %v5906 = vsub.s32 %v5903, %v5905
        %v5907 = vrot.slane %v5893, %v5906
        %v5908 = vcombine.low %v5059, %v5102
        %v5909 = vcombine.high %v5059, %v5102
        %v5911 = vunpack.c.l.s4 1983009808
        %v5912 = vunpack.c.0.s8 %v5911
        %v5913 = vlaneseq
        %v5914 = vshrl.u32 %v5913, 7
        %v5915 = vsub.s32 %v5912, %v5914
        %v5916 = vrot.slane %v5908, %v5915
        %v5918 = vunpack.c.l.s4 1983009808
        %v5919 = vunpack.c.0.s8 %v5918
        %v5920 = vlaneseq
        %v5921 = vshrl.u32 %v5920, 7
        %v5922 = vsub.s32 %v5919, %v5921
        %v5923 = vrot.slane %v5909, %v5922
        %v5924 = vcombine.low %v5900, %v5916
        %v5925 = vcombine.high %v5900, %v5916
        %v5927 = vunpack.c.l.s4 1934713408
        %v5928 = vunpack.c.0.s8 %v5927
        %v5929 = vlaneseq
        %v5930 = vshrl.u32 %v5929, 7
        %v5931 = vsub.s32 %v5928, %v5930
        %v5932 = vrot.slane %v5924, %v5931
        %v5934 = vunpack.c.l.s4 1934713408
        %v5935 = vunpack.c.0.s8 %v5934
        %v5936 = vlaneseq
        %v5937 = vshrl.u32 %v5936, 7
        %v5938 = vsub.s32 %v5935, %v5937
        %v5939 = vrot.slane %v5925, %v5938
        %v5940 = vcombine.low %v5907, %v5923
        %v5941 = vcombine.high %v5907, %v5923
        %v5943 = vunpack.c.l.s4 1934713408
        %v5944 = vunpack.c.0.s8 %v5943
        %v5945 = vlaneseq
        %v5946 = vshrl.u32 %v5945, 7
        %v5947 = vsub.s32 %v5944, %v5946
        %v5948 = vrot.slane %v5940, %v5947
        %v5950 = vunpack.c.l.s4 1934713408
        %v5951 = vunpack.c.0.s8 %v5950
        %v5952 = vlaneseq
        %v5953 = vshrl.u32 %v5952, 7
        %v5954 = vsub.s32 %v5951, %v5953
        %v5955 = vrot.slane %v5941, %v5954
        %v5956 = vcombine.high %v5932, 0.0
        %v5957 = vcombine.high %v5939, 0.0
        %v5958 = vcombine.high %v5948, 0.0
        %v5959 = vcombine.high %v5955, 0.0
        %v5960 = vcombine.low %v5061, %v5104
        %v5961 = vcombine.high %v5061, %v5104
        %v5963 = vunpack.c.l.s4 1983009808
        %v5964 = vunpack.c.0.s8 %v5963
        %v5965 = vlaneseq
        %v5966 = vshrl.u32 %v5965, 7
        %v5967 = vsub.s32 %v5964, %v5966
        %v5968 = vrot.slane %v5960, %v5967
        %v5970 = vunpack.c.l.s4 1983009808
        %v5971 = vunpack.c.0.s8 %v5970
        %v5972 = vlaneseq
        %v5973 = vshrl.u32 %v5972, 7
        %v5974 = vsub.s32 %v5971, %v5973
        %v5975 = vrot.slane %v5961, %v5974
        %v5976 = vcombine.low %v5063, %v5106
        %v5977 = vcombine.high %v5063, %v5106
        %v5979 = vunpack.c.l.s4 1983009808
        %v5980 = vunpack.c.0.s8 %v5979
        %v5981 = vlaneseq
        %v5982 = vshrl.u32 %v5981, 7
        %v5983 = vsub.s32 %v5980, %v5982
        %v5984 = vrot.slane %v5976, %v5983
        %v5986 = vunpack.c.l.s4 1983009808
        %v5987 = vunpack.c.0.s8 %v5986
        %v5988 = vlaneseq
        %v5989 = vshrl.u32 %v5988, 7
        %v5990 = vsub.s32 %v5987, %v5989
        %v5991 = vrot.slane %v5977, %v5990
        %v5992 = vcombine.low %v5968, %v5984
        %v5993 = vcombine.high %v5968, %v5984
        %v5995 = vunpack.c.l.s4 1934713408
        %v5996 = vunpack.c.0.s8 %v5995
        %v5997 = vlaneseq
        %v5998 = vshrl.u32 %v5997, 7
        %v5999 = vsub.s32 %v5996, %v5998
        %v6000 = vrot.slane %v5992, %v5999
        %v6002 = vunpack.c.l.s4 1934713408
        %v6003 = vunpack.c.0.s8 %v6002
        %v6004 = vlaneseq
        %v6005 = vshrl.u32 %v6004, 7
        %v6006 = vsub.s32 %v6003, %v6005
        %v6007 = vrot.slane %v5993, %v6006
        %v6008 = vcombine.low %v5975, %v5991
        %v6009 = vcombine.high %v5975, %v5991
        %v6011 = vunpack.c.l.s4 1934713408
        %v6012 = vunpack.c.0.s8 %v6011
        %v6013 = vlaneseq
        %v6014 = vshrl.u32 %v6013, 7
        %v6015 = vsub.s32 %v6012, %v6014
        %v6016 = vrot.slane %v6008, %v6015
        %v6018 = vunpack.c.l.s4 1934713408
        %v6019 = vunpack.c.0.s8 %v6018
        %v6020 = vlaneseq
        %v6021 = vshrl.u32 %v6020, 7
        %v6022 = vsub.s32 %v6019, %v6021
        %v6023 = vrot.slane %v6009, %v6022
        %v6024 = vcombine.high %v6000, 0.0
        %v6025 = vcombine.high %v6007, 0.0
        %v6026 = vcombine.high %v6016, 0.0
        %v6027 = vcombine.high %v6023, 0.0
        %v6028 = vcombine.low %v5872, %v5874
        %v6029 = vcombine.high %v5872, %v5874
        %v6031 = vunpack.c.l.s4 1983009808
        %v6032 = vunpack.c.0.s8 %v6031
        %v6033 = vlaneseq
        %v6034 = vshrl.u32 %v6033, 7
        %v6035 = vsub.s32 %v6032, %v6034
        %v6036 = vrot.slane %v6028, %v6035
        %v6038 = vunpack.c.l.s4 1983009808
        %v6039 = vunpack.c.0.s8 %v6038
        %v6040 = vlaneseq
        %v6041 = vshrl.u32 %v6040, 7
        %v6042 = vsub.s32 %v6039, %v6041
        %v6043 = vrot.slane %v6029, %v6042
        %v6044 = vcombine.low %v5873, %v5875
        %v6045 = vcombine.high %v5873, %v5875
        %v6047 = vunpack.c.l.s4 1983009808
        %v6048 = vunpack.c.0.s8 %v6047
        %v6049 = vlaneseq
        %v6050 = vshrl.u32 %v6049, 7
        %v6051 = vsub.s32 %v6048, %v6050
        %v6052 = vrot.slane %v6044, %v6051
        %v6054 = vunpack.c.l.s4 1983009808
        %v6055 = vunpack.c.0.s8 %v6054
        %v6056 = vlaneseq
        %v6057 = vshrl.u32 %v6056, 7
        %v6058 = vsub.s32 %v6055, %v6057
        %v6059 = vrot.slane %v6045, %v6058
        %v6060 = vcombine.low %v6036, %v6052
        %v6061 = vcombine.high %v6036, %v6052
        %v6063 = vunpack.c.l.s4 1934713408
        %v6064 = vunpack.c.0.s8 %v6063
        %v6065 = vlaneseq
        %v6066 = vshrl.u32 %v6065, 7
        %v6067 = vsub.s32 %v6064, %v6066
        %v6068 = vrot.slane %v6060, %v6067
        %v6070 = vunpack.c.l.s4 1934713408
        %v6071 = vunpack.c.0.s8 %v6070
        %v6072 = vlaneseq
        %v6073 = vshrl.u32 %v6072, 7
        %v6074 = vsub.s32 %v6071, %v6073
        %v6075 = vrot.slane %v6061, %v6074
        %v6076 = vcombine.low %v6043, %v6059
        %v6077 = vcombine.high %v6043, %v6059
        %v6079 = vunpack.c.l.s4 1934713408
        %v6080 = vunpack.c.0.s8 %v6079
        %v6081 = vlaneseq
        %v6082 = vshrl.u32 %v6081, 7
        %v6083 = vsub.s32 %v6080, %v6082
        %v6084 = vrot.slane %v6076, %v6083
        %v6086 = vunpack.c.l.s4 1934713408
        %v6087 = vunpack.c.0.s8 %v6086
        %v6088 = vlaneseq
        %v6089 = vshrl.u32 %v6088, 7
        %v6090 = vsub.s32 %v6087, %v6089
        %v6091 = vrot.slane %v6077, %v6090
        %v6092 = vcombine.high %v6068, 0.0
        %v6093 = vcombine.high %v6075, 0.0
        %v6094 = vcombine.high %v6084, 0.0
        %v6095 = vcombine.high %v6091, 0.0
        %v6096 = vcombine.low %v5868, %v5870
        %v6097 = vcombine.high %v5868, %v5870
        %v6099 = vunpack.c.l.s4 1983009808
        %v6100 = vunpack.c.0.s8 %v6099
        %v6101 = vlaneseq
        %v6102 = vshrl.u32 %v6101, 7
        %v6103 = vsub.s32 %v6100, %v6102
        %v6104 = vrot.slane %v6096, %v6103
        %v6106 = vunpack.c.l.s4 1983009808
        %v6107 = vunpack.c.0.s8 %v6106
        %v6108 = vlaneseq
        %v6109 = vshrl.u32 %v6108, 7
        %v6110 = vsub.s32 %v6107, %v6109
        %v6111 = vrot.slane %v6097, %v6110
        %v6112 = vcombine.low %v5869, %v5871
        %v6113 = vcombine.high %v5869, %v5871
        %v6115 = vunpack.c.l.s4 1983009808
        %v6116 = vunpack.c.0.s8 %v6115
        %v6117 = vlaneseq
        %v6118 = vshrl.u32 %v6117, 7
        %v6119 = vsub.s32 %v6116, %v6118
        %v6120 = vrot.slane %v6112, %v6119
        %v6122 = vunpack.c.l.s4 1983009808
        %v6123 = vunpack.c.0.s8 %v6122
        %v6124 = vlaneseq
        %v6125 = vshrl.u32 %v6124, 7
        %v6126 = vsub.s32 %v6123, %v6125
        %v6127 = vrot.slane %v6113, %v6126
        %v6128 = vcombine.low %v6104, %v6120
        %v6129 = vcombine.high %v6104, %v6120
        %v6131 = vunpack.c.l.s4 1934713408
        %v6132 = vunpack.c.0.s8 %v6131
        %v6133 = vlaneseq
        %v6134 = vshrl.u32 %v6133, 7
        %v6135 = vsub.s32 %v6132, %v6134
        %v6136 = vrot.slane %v6128, %v6135
        %v6138 = vunpack.c.l.s4 1934713408
        %v6139 = vunpack.c.0.s8 %v6138
        %v6140 = vlaneseq
        %v6141 = vshrl.u32 %v6140, 7
        %v6142 = vsub.s32 %v6139, %v6141
        %v6143 = vrot.slane %v6129, %v6142
        %v6144 = vcombine.low %v6111, %v6127
        %v6145 = vcombine.high %v6111, %v6127
        %v6147 = vunpack.c.l.s4 1934713408
        %v6148 = vunpack.c.0.s8 %v6147
        %v6149 = vlaneseq
        %v6150 = vshrl.u32 %v6149, 7
        %v6151 = vsub.s32 %v6148, %v6150
        %v6152 = vrot.slane %v6144, %v6151
        %v6154 = vunpack.c.l.s4 1934713408
        %v6155 = vunpack.c.0.s8 %v6154
        %v6156 = vlaneseq
        %v6157 = vshrl.u32 %v6156, 7
        %v6158 = vsub.s32 %v6155, %v6157
        %v6159 = vrot.slane %v6145, %v6158
        %v6160 = vcombine.high %v6136, 0.0
        %v6161 = vcombine.high %v6143, 0.0
        %v6162 = vcombine.high %v6152, 0.0
        %v6163 = vcombine.high %v6159, 0.0
        %v6164 = vcombine.low %v5884, %v5886
        %v6165 = vcombine.high %v5884, %v5886
        %v6167 = vunpack.c.l.s4 1983009808
        %v6168 = vunpack.c.0.s8 %v6167
        %v6169 = vlaneseq
        %v6170 = vshrl.u32 %v6169, 7
        %v6171 = vsub.s32 %v6168, %v6170
        %v6172 = vrot.slane %v6164, %v6171
        %v6174 = vunpack.c.l.s4 1983009808
        %v6175 = vunpack.c.0.s8 %v6174
        %v6176 = vlaneseq
        %v6177 = vshrl.u32 %v6176, 7
        %v6178 = vsub.s32 %v6175, %v6177
        %v6179 = vrot.slane %v6165, %v6178
        %v6180 = vcombine.low %v5885, %v5887
        %v6181 = vcombine.high %v5885, %v5887
        %v6183 = vunpack.c.l.s4 1983009808
        %v6184 = vunpack.c.0.s8 %v6183
        %v6185 = vlaneseq
        %v6186 = vshrl.u32 %v6185, 7
        %v6187 = vsub.s32 %v6184, %v6186
        %v6188 = vrot.slane %v6180, %v6187
        %v6190 = vunpack.c.l.s4 1983009808
        %v6191 = vunpack.c.0.s8 %v6190
        %v6192 = vlaneseq
        %v6193 = vshrl.u32 %v6192, 7
        %v6194 = vsub.s32 %v6191, %v6193
        %v6195 = vrot.slane %v6181, %v6194
        %v6196 = vcombine.low %v6172, %v6188
        %v6197 = vcombine.high %v6172, %v6188
        %v6199 = vunpack.c.l.s4 1934713408
        %v6200 = vunpack.c.0.s8 %v6199
        %v6201 = vlaneseq
        %v6202 = vshrl.u32 %v6201, 7
        %v6203 = vsub.s32 %v6200, %v6202
        %v6204 = vrot.slane %v6196, %v6203
        %v6206 = vunpack.c.l.s4 1934713408
        %v6207 = vunpack.c.0.s8 %v6206
        %v6208 = vlaneseq
        %v6209 = vshrl.u32 %v6208, 7
        %v6210 = vsub.s32 %v6207, %v6209
        %v6211 = vrot.slane %v6197, %v6210
        %v6212 = vcombine.low %v6179, %v6195
        %v6213 = vcombine.high %v6179, %v6195
        %v6215 = vunpack.c.l.s4 1934713408
        %v6216 = vunpack.c.0.s8 %v6215
        %v6217 = vlaneseq
        %v6218 = vshrl.u32 %v6217, 7
        %v6219 = vsub.s32 %v6216, %v6218
        %v6220 = vrot.slane %v6212, %v6219
        %v6222 = vunpack.c.l.s4 1934713408
        %v6223 = vunpack.c.0.s8 %v6222
        %v6224 = vlaneseq
        %v6225 = vshrl.u32 %v6224, 7
        %v6226 = vsub.s32 %v6223, %v6225
        %v6227 = vrot.slane %v6213, %v6226
        %v6228 = vcombine.high %v6204, 0.0
        %v6229 = vcombine.high %v6211, 0.0
        %v6230 = vcombine.high %v6220, 0.0
        %v6231 = vcombine.high %v6227, 0.0
        %v6232 = vcombine.low %v5888, %v5890
        %v6233 = vcombine.high %v5888, %v5890
        %v6235 = vunpack.c.l.s4 1983009808
        %v6236 = vunpack.c.0.s8 %v6235
        %v6237 = vlaneseq
        %v6238 = vshrl.u32 %v6237, 7
        %v6239 = vsub.s32 %v6236, %v6238
        %v6240 = vrot.slane %v6232, %v6239
        %v6242 = vunpack.c.l.s4 1983009808
        %v6243 = vunpack.c.0.s8 %v6242
        %v6244 = vlaneseq
        %v6245 = vshrl.u32 %v6244, 7
        %v6246 = vsub.s32 %v6243, %v6245
        %v6247 = vrot.slane %v6233, %v6246
        %v6248 = vcombine.low %v5889, %v5891
        %v6249 = vcombine.high %v5889, %v5891
        %v6251 = vunpack.c.l.s4 1983009808
        %v6252 = vunpack.c.0.s8 %v6251
        %v6253 = vlaneseq
        %v6254 = vshrl.u32 %v6253, 7
        %v6255 = vsub.s32 %v6252, %v6254
        %v6256 = vrot.slane %v6248, %v6255
        %v6258 = vunpack.c.l.s4 1983009808
        %v6259 = vunpack.c.0.s8 %v6258
        %v6260 = vlaneseq
        %v6261 = vshrl.u32 %v6260, 7
        %v6262 = vsub.s32 %v6259, %v6261
        %v6263 = vrot.slane %v6249, %v6262
        %v6264 = vcombine.low %v6240, %v6256
        %v6265 = vcombine.high %v6240, %v6256
        %v6267 = vunpack.c.l.s4 1934713408
        %v6268 = vunpack.c.0.s8 %v6267
        %v6269 = vlaneseq
        %v6270 = vshrl.u32 %v6269, 7
        %v6271 = vsub.s32 %v6268, %v6270
        %v6272 = vrot.slane %v6264, %v6271
        %v6274 = vunpack.c.l.s4 1934713408
        %v6275 = vunpack.c.0.s8 %v6274
        %v6276 = vlaneseq
        %v6277 = vshrl.u32 %v6276, 7
        %v6278 = vsub.s32 %v6275, %v6277
        %v6279 = vrot.slane %v6265, %v6278
        %v6280 = vcombine.low %v6247, %v6263
        %v6281 = vcombine.high %v6247, %v6263
        %v6283 = vunpack.c.l.s4 1934713408
        %v6284 = vunpack.c.0.s8 %v6283
        %v6285 = vlaneseq
        %v6286 = vshrl.u32 %v6285, 7
        %v6287 = vsub.s32 %v6284, %v6286
        %v6288 = vrot.slane %v6280, %v6287
        %v6290 = vunpack.c.l.s4 1934713408
        %v6291 = vunpack.c.0.s8 %v6290
        %v6292 = vlaneseq
        %v6293 = vshrl.u32 %v6292, 7
        %v6294 = vsub.s32 %v6291, %v6293
        %v6295 = vrot.slane %v6281, %v6294
        %v6296 = vcombine.high %v6272, 0.0
        %v6297 = vcombine.high %v6279, 0.0
        %v6298 = vcombine.high %v6288, 0.0
        %v6299 = vcombine.high %v6295, 0.0
        %v6300 = vlaneseq
        %v6301 = vshrl.u32 %v6300, 7
        %v6302 = vsub.s32 0, %v6301
        %v6303 = vrot.slane %v5854, %v6302
        %6305 = vbcast.lane.b32.xlu0 %v6303, 256
        %v6306 = vpop.permute.xlu0 %6305
        %v6307 = vlaneseq
        %v6308 = vshrl.u32 %v6307, 7
        %v6309 = vsub.s32 1, %v6308
        %v6310 = vrot.slane %v5854, %v6309
        %6312 = vbcast.lane.b32.xlu0 %v6310, 256
        %v6313 = vpop.permute.xlu0 %6312
        %v6314 = vlaneseq
        %v6315 = vshrl.u32 %v6314, 7
        %v6316 = vsub.s32 2, %v6315
        %v6317 = vrot.slane %v5854, %v6316
        %6319 = vbcast.lane.b32.xlu0 %v6317, 256
        %v6320 = vpop.permute.xlu0 %6319
        %v6321 = vlaneseq
        %v6322 = vshrl.u32 %v6321, 7
        %v6323 = vsub.s32 3, %v6322
        %v6324 = vrot.slane %v5854, %v6323
        %6326 = vbcast.lane.b32.xlu0 %v6324, 256
        %v6327 = vpop.permute.xlu0 %6326
        %v6328 = vlaneseq
        %v6329 = vshrl.u32 %v6328, 7
        %v6330 = vsub.s32 4, %v6329
        %v6331 = vrot.slane %v5854, %v6330
        %6333 = vbcast.lane.b32.xlu0 %v6331, 256
        %v6334 = vpop.permute.xlu0 %6333
        %v6335 = vlaneseq
        %v6336 = vshrl.u32 %v6335, 7
        %v6337 = vsub.s32 5, %v6336
        %v6338 = vrot.slane %v5854, %v6337
        %6340 = vbcast.lane.b32.xlu0 %v6338, 256
        %v6341 = vpop.permute.xlu0 %6340
        %v6342 = vlaneseq
        %v6343 = vshrl.u32 %v6342, 7
        %v6344 = vsub.s32 6, %v6343
        %v6345 = vrot.slane %v5854, %v6344
        %6347 = vbcast.lane.b32.xlu0 %v6345, 256
        %v6348 = vpop.permute.xlu0 %6347
        %v6349 = vlaneseq
        %v6350 = vshrl.u32 %v6349, 7
        %v6351 = vsub.s32 7, %v6350
        %v6352 = vrot.slane %v5854, %v6351
        %6354 = vbcast.lane.b32.xlu0 %v6352, 256
        %v6355 = vpop.permute.xlu0 %6354
        %v6356 = vlaneseq
        %v6357 = vshrl.u32 %v6356, 7
        %v6358 = vsub.s32 0, %v6357
        %v6359 = vrot.slane %v5855, %v6358
        %6361 = vbcast.lane.b32.xlu0 %v6359, 256
        %v6362 = vpop.permute.xlu0 %6361
        %v6363 = vlaneseq
        %v6364 = vshrl.u32 %v6363, 7
        %v6365 = vsub.s32 1, %v6364
        %v6366 = vrot.slane %v5855, %v6365
        %6368 = vbcast.lane.b32.xlu0 %v6366, 256
        %v6369 = vpop.permute.xlu0 %6368
        %v6370 = vlaneseq
        %v6371 = vshrl.u32 %v6370, 7
        %v6372 = vsub.s32 2, %v6371
        %v6373 = vrot.slane %v5855, %v6372
        %6375 = vbcast.lane.b32.xlu0 %v6373, 256
        %v6376 = vpop.permute.xlu0 %6375
        %v6377 = vlaneseq
        %v6378 = vshrl.u32 %v6377, 7
        %v6379 = vsub.s32 3, %v6378
        %v6380 = vrot.slane %v5855, %v6379
        %6382 = vbcast.lane.b32.xlu0 %v6380, 256
        %v6383 = vpop.permute.xlu0 %6382
        %v6384 = vlaneseq
        %v6385 = vshrl.u32 %v6384, 7
        %v6386 = vsub.s32 4, %v6385
        %v6387 = vrot.slane %v5855, %v6386
        %6389 = vbcast.lane.b32.xlu0 %v6387, 256
        %v6390 = vpop.permute.xlu0 %6389
        %v6391 = vlaneseq
        %v6392 = vshrl.u32 %v6391, 7
        %v6393 = vsub.s32 5, %v6392
        %v6394 = vrot.slane %v5855, %v6393
        %6396 = vbcast.lane.b32.xlu0 %v6394, 256
        %v6397 = vpop.permute.xlu0 %6396
        %v6398 = vlaneseq
        %v6399 = vshrl.u32 %v6398, 7
        %v6400 = vsub.s32 6, %v6399
        %v6401 = vrot.slane %v5855, %v6400
        %6403 = vbcast.lane.b32.xlu0 %v6401, 256
        %v6404 = vpop.permute.xlu0 %6403
        %v6405 = vlaneseq
        %v6406 = vshrl.u32 %v6405, 7
        %v6407 = vsub.s32 7, %v6406
        %v6408 = vrot.slane %v5855, %v6407
        %6410 = vbcast.lane.b32.xlu0 %v6408, 256
        %v6411 = vpop.permute.xlu0 %6410
        %v6412 = vmul.f32 %v6306, %v6068
        %v6413 = vmul.f32 %v6313, %v6092
        %v6414 = vmul.f32 %v6320, %v6075
        %v6415 = vmul.f32 %v6327, %v6093
        %v6416 = vmul.f32 %v6334, %v6084
        %v6417 = vmul.f32 %v6341, %v6094
        %v6418 = vmul.f32 %v6348, %v6091
        %v6419 = vmul.f32 %v6355, %v6095
        %v6420 = vmul.f32 %v6362, %v6136
        %v6421 = vmul.f32 %v6369, %v6160
        %v6422 = vmul.f32 %v6376, %v6143
        %v6423 = vmul.f32 %v6383, %v6161
        %v6424 = vmul.f32 %v6390, %v6152
        %v6425 = vmul.f32 %v6397, %v6162
        %v6426 = vmul.f32 %v6404, %v6159
        %v6427 = vmul.f32 %v6411, %v6163
        %v6428 = vlaneseq
        %v6429 = vshrl.u32 %v6428, 7
        %v6430 = vsub.s32 0, %v6429
        %v6431 = vrot.slane %v5856, %v6430
        %6433 = vbcast.lane.b32.xlu0 %v6431, 256
        %v6434 = vpop.permute.xlu0 %6433
        %v6435 = vlaneseq
        %v6436 = vshrl.u32 %v6435, 7
        %v6437 = vsub.s32 1, %v6436
        %v6438 = vrot.slane %v5856, %v6437
        %6440 = vbcast.lane.b32.xlu0 %v6438, 256
        %v6441 = vpop.permute.xlu0 %6440
        %v6442 = vlaneseq
        %v6443 = vshrl.u32 %v6442, 7
        %v6444 = vsub.s32 2, %v6443
        %v6445 = vrot.slane %v5856, %v6444
        %6447 = vbcast.lane.b32.xlu0 %v6445, 256
        %v6448 = vpop.permute.xlu0 %6447
        %v6449 = vlaneseq
        %v6450 = vshrl.u32 %v6449, 7
        %v6451 = vsub.s32 3, %v6450
        %v6452 = vrot.slane %v5856, %v6451
        %6454 = vbcast.lane.b32.xlu0 %v6452, 256
        %v6455 = vpop.permute.xlu0 %6454
        %v6456 = vlaneseq
        %v6457 = vshrl.u32 %v6456, 7
        %v6458 = vsub.s32 4, %v6457
        %v6459 = vrot.slane %v5856, %v6458
        %6461 = vbcast.lane.b32.xlu0 %v6459, 256
        %v6462 = vpop.permute.xlu0 %6461
        %v6463 = vlaneseq
        %v6464 = vshrl.u32 %v6463, 7
        %v6465 = vsub.s32 5, %v6464
        %v6466 = vrot.slane %v5856, %v6465
        %6468 = vbcast.lane.b32.xlu0 %v6466, 256
        %v6469 = vpop.permute.xlu0 %6468
        %v6470 = vlaneseq
        %v6471 = vshrl.u32 %v6470, 7
        %v6472 = vsub.s32 6, %v6471
        %v6473 = vrot.slane %v5856, %v6472
        %6475 = vbcast.lane.b32.xlu0 %v6473, 256
        %v6476 = vpop.permute.xlu0 %6475
        %v6477 = vlaneseq
        %v6478 = vshrl.u32 %v6477, 7
        %v6479 = vsub.s32 7, %v6478
        %v6480 = vrot.slane %v5856, %v6479
        %6482 = vbcast.lane.b32.xlu0 %v6480, 256
        %v6483 = vpop.permute.xlu0 %6482
        %v6484 = vlaneseq
        %v6485 = vshrl.u32 %v6484, 7
        %v6486 = vsub.s32 0, %v6485
        %v6487 = vrot.slane %v5857, %v6486
        %6489 = vbcast.lane.b32.xlu0 %v6487, 256
        %v6490 = vpop.permute.xlu0 %6489
        %v6491 = vlaneseq
        %v6492 = vshrl.u32 %v6491, 7
        %v6493 = vsub.s32 1, %v6492
        %v6494 = vrot.slane %v5857, %v6493
        %6496 = vbcast.lane.b32.xlu0 %v6494, 256
        %v6497 = vpop.permute.xlu0 %6496
        %v6498 = vlaneseq
        %v6499 = vshrl.u32 %v6498, 7
        %v6500 = vsub.s32 2, %v6499
        %v6501 = vrot.slane %v5857, %v6500
        %6503 = vbcast.lane.b32.xlu0 %v6501, 256
        %v6504 = vpop.permute.xlu0 %6503
        %v6505 = vlaneseq
        %v6506 = vshrl.u32 %v6505, 7
        %v6507 = vsub.s32 3, %v6506
        %v6508 = vrot.slane %v5857, %v6507
        %6510 = vbcast.lane.b32.xlu0 %v6508, 256
        %v6511 = vpop.permute.xlu0 %6510
        %v6512 = vlaneseq
        %v6513 = vshrl.u32 %v6512, 7
        %v6514 = vsub.s32 4, %v6513
        %v6515 = vrot.slane %v5857, %v6514
        %6517 = vbcast.lane.b32.xlu0 %v6515, 256
        %v6518 = vpop.permute.xlu0 %6517
        %v6519 = vlaneseq
        %v6520 = vshrl.u32 %v6519, 7
        %v6521 = vsub.s32 5, %v6520
        %v6522 = vrot.slane %v5857, %v6521
        %6524 = vbcast.lane.b32.xlu0 %v6522, 256
        %v6525 = vpop.permute.xlu0 %6524
        %v6526 = vlaneseq
        %v6527 = vshrl.u32 %v6526, 7
        %v6528 = vsub.s32 6, %v6527
        %v6529 = vrot.slane %v5857, %v6528
        %6531 = vbcast.lane.b32.xlu0 %v6529, 256
        %v6532 = vpop.permute.xlu0 %6531
        %v6533 = vlaneseq
        %v6534 = vshrl.u32 %v6533, 7
        %v6535 = vsub.s32 7, %v6534
        %v6536 = vrot.slane %v5857, %v6535
        %6538 = vbcast.lane.b32.xlu0 %v6536, 256
        %v6539 = vpop.permute.xlu0 %6538
        %v6540 = vmul.f32 %v6434, %v6204
        %v6541 = vmul.f32 %v6441, %v6228
        %v6542 = vmul.f32 %v6448, %v6211
        %v6543 = vmul.f32 %v6455, %v6229
        %v6544 = vmul.f32 %v6462, %v6220
        %v6545 = vmul.f32 %v6469, %v6230
        %v6546 = vmul.f32 %v6476, %v6227
        %v6547 = vmul.f32 %v6483, %v6231
        %v6548 = vmul.f32 %v6490, %v6272
        %v6549 = vmul.f32 %v6497, %v6296
        %v6550 = vmul.f32 %v6504, %v6279
        %v6551 = vmul.f32 %v6511, %v6297
        %v6552 = vmul.f32 %v6518, %v6288
        %v6553 = vmul.f32 %v6525, %v6298
        %v6554 = vmul.f32 %v6532, %v6295
        %v6555 = vmul.f32 %v6539, %v6299
        %v6556 = vadd.f32 %v6412, %v6540
        %v6557 = vadd.f32 %v6413, %v6541
        %v6558 = vadd.f32 %v6414, %v6542
        %v6559 = vadd.f32 %v6415, %v6543
        %v6560 = vadd.f32 %v6416, %v6544
        %v6561 = vadd.f32 %v6417, %v6545
        %v6562 = vadd.f32 %v6418, %v6546
        %v6563 = vadd.f32 %v6419, %v6547
        %v6564 = vadd.f32 %v6420, %v6548
        %v6565 = vadd.f32 %v6421, %v6549
        %v6566 = vadd.f32 %v6422, %v6550
        %v6567 = vadd.f32 %v6423, %v6551
        %v6568 = vadd.f32 %v6424, %v6552
        %v6569 = vadd.f32 %v6425, %v6553
        %v6570 = vadd.f32 %v6426, %v6554
        %v6571 = vadd.f32 %v6427, %v6555
        %v6572 = vlaneseq
        %v6573 = vshrl.u32 %v6572, 7
        %v6574 = vsub.s32 0, %v6573
        %v6575 = vrot.slane %v5858, %v6574
        %6577 = vbcast.lane.b32.xlu0 %v6575, 256
        %v6578 = vpop.permute.xlu0 %6577
        %v6579 = vlaneseq
        %v6580 = vshrl.u32 %v6579, 7
        %v6581 = vsub.s32 1, %v6580
        %v6582 = vrot.slane %v5858, %v6581
        %6584 = vbcast.lane.b32.xlu0 %v6582, 256
        %v6585 = vpop.permute.xlu0 %6584
        %v6586 = vlaneseq
        %v6587 = vshrl.u32 %v6586, 7
        %v6588 = vsub.s32 2, %v6587
        %v6589 = vrot.slane %v5858, %v6588
        %6591 = vbcast.lane.b32.xlu0 %v6589, 256
        %v6592 = vpop.permute.xlu0 %6591
        %v6593 = vlaneseq
        %v6594 = vshrl.u32 %v6593, 7
        %v6595 = vsub.s32 3, %v6594
        %v6596 = vrot.slane %v5858, %v6595
        %6598 = vbcast.lane.b32.xlu0 %v6596, 256
        %v6599 = vpop.permute.xlu0 %6598
        %v6600 = vlaneseq
        %v6601 = vshrl.u32 %v6600, 7
        %v6602 = vsub.s32 4, %v6601
        %v6603 = vrot.slane %v5858, %v6602
        %6605 = vbcast.lane.b32.xlu0 %v6603, 256
        %v6606 = vpop.permute.xlu0 %6605
        %v6607 = vlaneseq
        %v6608 = vshrl.u32 %v6607, 7
        %v6609 = vsub.s32 5, %v6608
        %v6610 = vrot.slane %v5858, %v6609
        %6612 = vbcast.lane.b32.xlu0 %v6610, 256
        %v6613 = vpop.permute.xlu0 %6612
        %v6614 = vlaneseq
        %v6615 = vshrl.u32 %v6614, 7
        %v6616 = vsub.s32 6, %v6615
        %v6617 = vrot.slane %v5858, %v6616
        %6619 = vbcast.lane.b32.xlu0 %v6617, 256
        %v6620 = vpop.permute.xlu0 %6619
        %v6621 = vlaneseq
        %v6622 = vshrl.u32 %v6621, 7
        %v6623 = vsub.s32 7, %v6622
        %v6624 = vrot.slane %v5858, %v6623
        %6626 = vbcast.lane.b32.xlu0 %v6624, 256
        %v6627 = vpop.permute.xlu0 %6626
        %v6628 = vlaneseq
        %v6629 = vshrl.u32 %v6628, 7
        %v6630 = vsub.s32 0, %v6629
        %v6631 = vrot.slane %v5859, %v6630
        %6633 = vbcast.lane.b32.xlu0 %v6631, 256
        %v6634 = vpop.permute.xlu0 %6633
        %v6635 = vlaneseq
        %v6636 = vshrl.u32 %v6635, 7
        %v6637 = vsub.s32 1, %v6636
        %v6638 = vrot.slane %v5859, %v6637
        %6640 = vbcast.lane.b32.xlu0 %v6638, 256
        %v6641 = vpop.permute.xlu0 %6640
        %v6642 = vlaneseq
        %v6643 = vshrl.u32 %v6642, 7
        %v6644 = vsub.s32 2, %v6643
        %v6645 = vrot.slane %v5859, %v6644
        %6647 = vbcast.lane.b32.xlu0 %v6645, 256
        %v6648 = vpop.permute.xlu0 %6647
        %v6649 = vlaneseq
        %v6650 = vshrl.u32 %v6649, 7
        %v6651 = vsub.s32 3, %v6650
        %v6652 = vrot.slane %v5859, %v6651
        %6654 = vbcast.lane.b32.xlu0 %v6652, 256
        %v6655 = vpop.permute.xlu0 %6654
        %v6656 = vlaneseq
        %v6657 = vshrl.u32 %v6656, 7
        %v6658 = vsub.s32 4, %v6657
        %v6659 = vrot.slane %v5859, %v6658
        %6661 = vbcast.lane.b32.xlu0 %v6659, 256
        %v6662 = vpop.permute.xlu0 %6661
        %v6663 = vlaneseq
        %v6664 = vshrl.u32 %v6663, 7
        %v6665 = vsub.s32 5, %v6664
        %v6666 = vrot.slane %v5859, %v6665
        %6668 = vbcast.lane.b32.xlu0 %v6666, 256
        %v6669 = vpop.permute.xlu0 %6668
        %v6670 = vlaneseq
        %v6671 = vshrl.u32 %v6670, 7
        %v6672 = vsub.s32 6, %v6671
        %v6673 = vrot.slane %v5859, %v6672
        %6675 = vbcast.lane.b32.xlu0 %v6673, 256
        %v6676 = vpop.permute.xlu0 %6675
        %v6677 = vlaneseq
        %v6678 = vshrl.u32 %v6677, 7
        %v6679 = vsub.s32 7, %v6678
        %v6680 = vrot.slane %v5859, %v6679
        %6682 = vbcast.lane.b32.xlu0 %v6680, 256
        %v6683 = vpop.permute.xlu0 %6682
        %v6684 = vmul.f32 %v6578, %v5932
        %v6685 = vmul.f32 %v6585, %v5956
        %v6686 = vmul.f32 %v6592, %v5939
        %v6687 = vmul.f32 %v6599, %v5957
        %v6688 = vmul.f32 %v6606, %v5948
        %v6689 = vmul.f32 %v6613, %v5958
        %v6690 = vmul.f32 %v6620, %v5955
        %v6691 = vmul.f32 %v6627, %v5959
        %v6692 = vmul.f32 %v6634, %v6000
        %v6693 = vmul.f32 %v6641, %v6024
        %v6694 = vmul.f32 %v6648, %v6007
        %v6695 = vmul.f32 %v6655, %v6025
        %v6696 = vmul.f32 %v6662, %v6016
        %v6697 = vmul.f32 %v6669, %v6026
        %v6698 = vmul.f32 %v6676, %v6023
        %v6699 = vmul.f32 %v6683, %v6027
        %v6700 = vadd.f32 %v6556, %v6684
        %v6701 = vadd.f32 %v6557, %v6685
        %v6702 = vadd.f32 %v6558, %v6686
        %v6703 = vadd.f32 %v6559, %v6687
        %v6704 = vadd.f32 %v6560, %v6688
        %v6705 = vadd.f32 %v6561, %v6689
        %v6706 = vadd.f32 %v6562, %v6690
        %v6707 = vadd.f32 %v6563, %v6691
        %v6708 = vadd.f32 %v6564, %v6692
        %v6709 = vadd.f32 %v6565, %v6693
        %v6710 = vadd.f32 %v6566, %v6694
        %v6711 = vadd.f32 %v6567, %v6695
        %v6712 = vadd.f32 %v6568, %v6696
        %v6713 = vadd.f32 %v6569, %v6697
        %v6714 = vadd.f32 %v6570, %v6698
        %v6715 = vadd.f32 %v6571, %v6699
        %v6716 = vsel %vm2620, %v6700, 0.0
        %v6717 = vrot.slane %v6716, 4
        %v6718 = vadd.f32 %v6716, %v6717
        %v6719 = vrot.slane %v6718, 2
        %v6720 = vadd.f32 %v6718, %v6719
        %v6721 = vrot.slane %v6720, 1
        %v6722 = vadd.f32 %v6720, %v6721
        %v6723 = vsel %vm2620, %v6701, 0.0
        %v6724 = vrot.slane %v6723, 4
        %v6725 = vadd.f32 %v6723, %v6724
        %v6726 = vrot.slane %v6725, 2
        %v6727 = vadd.f32 %v6725, %v6726
        %v6728 = vrot.slane %v6727, 1
        %v6729 = vadd.f32 %v6727, %v6728
        %v6730 = vsel %vm2620, %v6702, 0.0
        %v6731 = vrot.slane %v6730, 4
        %v6732 = vadd.f32 %v6730, %v6731
        %v6733 = vrot.slane %v6732, 2
        %v6734 = vadd.f32 %v6732, %v6733
        %v6735 = vrot.slane %v6734, 1
        %v6736 = vadd.f32 %v6734, %v6735
        %v6737 = vsel %vm2620, %v6703, 0.0
        %v6738 = vrot.slane %v6737, 4
        %v6739 = vadd.f32 %v6737, %v6738
        %v6740 = vrot.slane %v6739, 2
        %v6741 = vadd.f32 %v6739, %v6740
        %v6742 = vrot.slane %v6741, 1
        %v6743 = vadd.f32 %v6741, %v6742
        %v6744 = vsel %vm2620, %v6704, 0.0
        %v6745 = vrot.slane %v6744, 4
        %v6746 = vadd.f32 %v6744, %v6745
        %v6747 = vrot.slane %v6746, 2
        %v6748 = vadd.f32 %v6746, %v6747
        %v6749 = vrot.slane %v6748, 1
        %v6750 = vadd.f32 %v6748, %v6749
        %v6751 = vsel %vm2620, %v6705, 0.0
        %v6752 = vrot.slane %v6751, 4
        %v6753 = vadd.f32 %v6751, %v6752
        %v6754 = vrot.slane %v6753, 2
        %v6755 = vadd.f32 %v6753, %v6754
        %v6756 = vrot.slane %v6755, 1
        %v6757 = vadd.f32 %v6755, %v6756
        %v6758 = vsel %vm2620, %v6706, 0.0
        %v6759 = vrot.slane %v6758, 4
        %v6760 = vadd.f32 %v6758, %v6759
        %v6761 = vrot.slane %v6760, 2
        %v6762 = vadd.f32 %v6760, %v6761
        %v6763 = vrot.slane %v6762, 1
        %v6764 = vadd.f32 %v6762, %v6763
        %v6765 = vsel %vm2620, %v6707, 0.0
        %v6766 = vrot.slane %v6765, 4
        %v6767 = vadd.f32 %v6765, %v6766
        %v6768 = vrot.slane %v6767, 2
        %v6769 = vadd.f32 %v6767, %v6768
        %v6770 = vrot.slane %v6769, 1
        %v6771 = vadd.f32 %v6769, %v6770
        %v6772 = vsel %vm2620, %v6708, 0.0
        %v6773 = vrot.slane %v6772, 4
        %v6774 = vadd.f32 %v6772, %v6773
        %v6775 = vrot.slane %v6774, 2
        %v6776 = vadd.f32 %v6774, %v6775
        %v6777 = vrot.slane %v6776, 1
        %v6778 = vadd.f32 %v6776, %v6777
        %v6779 = vsel %vm2620, %v6709, 0.0
        %v6780 = vrot.slane %v6779, 4
        %v6781 = vadd.f32 %v6779, %v6780
        %v6782 = vrot.slane %v6781, 2
        %v6783 = vadd.f32 %v6781, %v6782
        %v6784 = vrot.slane %v6783, 1
        %v6785 = vadd.f32 %v6783, %v6784
        %v6786 = vsel %vm2620, %v6710, 0.0
        %v6787 = vrot.slane %v6786, 4
        %v6788 = vadd.f32 %v6786, %v6787
        %v6789 = vrot.slane %v6788, 2
        %v6790 = vadd.f32 %v6788, %v6789
        %v6791 = vrot.slane %v6790, 1
        %v6792 = vadd.f32 %v6790, %v6791
        %v6793 = vsel %vm2620, %v6711, 0.0
        %v6794 = vrot.slane %v6793, 4
        %v6795 = vadd.f32 %v6793, %v6794
        %v6796 = vrot.slane %v6795, 2
        %v6797 = vadd.f32 %v6795, %v6796
        %v6798 = vrot.slane %v6797, 1
        %v6799 = vadd.f32 %v6797, %v6798
        %v6800 = vsel %vm2620, %v6712, 0.0
        %v6801 = vrot.slane %v6800, 4
        %v6802 = vadd.f32 %v6800, %v6801
        %v6803 = vrot.slane %v6802, 2
        %v6804 = vadd.f32 %v6802, %v6803
        %v6805 = vrot.slane %v6804, 1
        %v6806 = vadd.f32 %v6804, %v6805
        %v6807 = vsel %vm2620, %v6713, 0.0
        %v6808 = vrot.slane %v6807, 4
        %v6809 = vadd.f32 %v6807, %v6808
        %v6810 = vrot.slane %v6809, 2
        %v6811 = vadd.f32 %v6809, %v6810
        %v6812 = vrot.slane %v6811, 1
        %v6813 = vadd.f32 %v6811, %v6812
        %v6814 = vsel %vm2620, %v6714, 0.0
        %v6815 = vrot.slane %v6814, 4
        %v6816 = vadd.f32 %v6814, %v6815
        %v6817 = vrot.slane %v6816, 2
        %v6818 = vadd.f32 %v6816, %v6817
        %v6819 = vrot.slane %v6818, 1
        %v6820 = vadd.f32 %v6818, %v6819
        %v6821 = vsel %vm2620, %v6715, 0.0
        %v6822 = vrot.slane %v6821, 4
        %v6823 = vadd.f32 %v6821, %v6822
        %v6824 = vrot.slane %v6823, 2
        %v6825 = vadd.f32 %v6823, %v6824
        %v6826 = vrot.slane %v6825, 1
        %v6827 = vadd.f32 %v6825, %v6826
        %v6828 = vrcp.pop 4.0
        %v6829 = vmul.f32 %v6722, %v6828
        %v6830 = vmul.f32 %v6729, %v6828
        %v6831 = vmul.f32 %v6736, %v6828
        %v6832 = vmul.f32 %v6743, %v6828
        %v6833 = vmul.f32 %v6750, %v6828
        %v6834 = vmul.f32 %v6757, %v6828
        %v6835 = vmul.f32 %v6764, %v6828
        %v6836 = vmul.f32 %v6771, %v6828
        %v6837 = vmul.f32 %v6778, %v6828
        %v6838 = vmul.f32 %v6785, %v6828
        %v6839 = vmul.f32 %v6792, %v6828
        %v6840 = vmul.f32 %v6799, %v6828
        %v6841 = vmul.f32 %v6806, %v6828
        %v6842 = vmul.f32 %v6813, %v6828
        %v6843 = vmul.f32 %v6820, %v6828
        %v6844 = vmul.f32 %v6827, %v6828
        %v6845 = vld [vmem:[%s55] sm:$0x1]
        %v6847 = vlaneseq
        %v6848 = vshrl.u32 %v6847, 7
        %v6849 = vsub.s32 0, %v6848
        %v6850 = vrot.slane %v6845, %v6849
        %v6852 = vadd.f32 %v6829, %v6850
        %v6853 = vadd.f32 %v6830, %v6850
        %v6854 = vadd.f32 %v6831, %v6850
        %v6855 = vadd.f32 %v6832, %v6850
        %v6856 = vadd.f32 %v6833, %v6850
        %v6857 = vadd.f32 %v6834, %v6850
        %v6858 = vadd.f32 %v6835, %v6850
        %v6859 = vadd.f32 %v6836, %v6850
        %v6860 = vadd.f32 %v6837, %v6850
        %v6861 = vadd.f32 %v6838, %v6850
        %v6862 = vadd.f32 %v6839, %v6850
        %v6863 = vadd.f32 %v6840, %v6850
        %v6864 = vadd.f32 %v6841, %v6850
        %v6865 = vadd.f32 %v6842, %v6850
        %v6866 = vadd.f32 %v6843, %v6850
        %v6867 = vadd.f32 %v6844, %v6850
        %v6868 = vld [vmem:[#allocation38] sm:$0x1]
        %v6870 = vlaneseq
        %v6871 = vshrl.u32 %v6870, 7
        %v6872 = vsub.s32 0, %v6871
        %v6873 = vrot.slane %v6868, %v6872
        %v6875 = vsub.f32 %v6852, %v6873
        %v6876 = vsub.f32 %v6853, %v6873
        %v6877 = vsub.f32 %v6854, %v6873
        %v6878 = vsub.f32 %v6855, %v6873
        %v6879 = vsub.f32 %v6856, %v6873
        %v6880 = vsub.f32 %v6857, %v6873
        %v6881 = vsub.f32 %v6858, %v6873
        %v6882 = vsub.f32 %v6859, %v6873
        %v6883 = vsub.f32 %v6860, %v6873
        %v6884 = vsub.f32 %v6861, %v6873
        %v6885 = vsub.f32 %v6862, %v6873
        %v6886 = vsub.f32 %v6863, %v6873
        %v6887 = vsub.f32 %v6864, %v6873
        %v6888 = vsub.f32 %v6865, %v6873
        %v6889 = vsub.f32 %v6866, %v6873
        %v6890 = vsub.f32 %v6867, %v6873
        %v6891 = vld [vmem:[#allocation39] sm:$0x1]
        %v6892 = vadd.f32 %v6891, 1e-05
        %v6893 = vrsqrt.pop %v6892
        %v6895 = vlaneseq
        %v6896 = vshrl.u32 %v6895, 7
        %v6897 = vsub.s32 0, %v6896
        %v6898 = vrot.slane %v6893, %v6897
        %v6900 = vmul.f32 %v6875, %v6898
        %v6901 = vmul.f32 %v6876, %v6898
        %v6902 = vmul.f32 %v6877, %v6898
        %v6903 = vmul.f32 %v6878, %v6898
        %v6904 = vmul.f32 %v6879, %v6898
        %v6905 = vmul.f32 %v6880, %v6898
        %v6906 = vmul.f32 %v6881, %v6898
        %v6907 = vmul.f32 %v6882, %v6898
        %v6908 = vmul.f32 %v6883, %v6898
        %v6909 = vmul.f32 %v6884, %v6898
        %v6910 = vmul.f32 %v6885, %v6898
        %v6911 = vmul.f32 %v6886, %v6898
        %v6912 = vmul.f32 %v6887, %v6898
        %v6913 = vmul.f32 %v6888, %v6898
        %v6914 = vmul.f32 %v6889, %v6898
        %v6915 = vmul.f32 %v6890, %v6898
        %v6916 = vld [vmem:[#allocation35] sm:$0x1]
        %v6918 = vlaneseq
        %v6919 = vshrl.u32 %v6918, 7
        %v6920 = vsub.s32 0, %v6919
        %v6921 = vrot.slane %v6916, %v6920
        %v6923 = vmul.f32 %v6900, %v6921
        %v6924 = vmul.f32 %v6901, %v6921
        %v6925 = vmul.f32 %v6902, %v6921
        %v6926 = vmul.f32 %v6903, %v6921
        %v6927 = vmul.f32 %v6904, %v6921
        %v6928 = vmul.f32 %v6905, %v6921
        %v6929 = vmul.f32 %v6906, %v6921
        %v6930 = vmul.f32 %v6907, %v6921
        %v6931 = vmul.f32 %v6908, %v6921
        %v6932 = vmul.f32 %v6909, %v6921
        %v6933 = vmul.f32 %v6910, %v6921
        %v6934 = vmul.f32 %v6911, %v6921
        %v6935 = vmul.f32 %v6912, %v6921
        %v6936 = vmul.f32 %v6913, %v6921
        %v6937 = vmul.f32 %v6914, %v6921
        %v6938 = vmul.f32 %v6915, %v6921
        %v6939 = vld [vmem:[#allocation36] sm:$0x1]
        %v6941 = vlaneseq
        %v6942 = vshrl.u32 %v6941, 7
        %v6943 = vsub.s32 0, %v6942
        %v6944 = vrot.slane %v6939, %v6943
        %v6946 = vadd.f32 %v6923, %v6944
        %v6947 = vadd.f32 %v6924, %v6944
        %v6948 = vadd.f32 %v6925, %v6944
        %v6949 = vadd.f32 %v6926, %v6944
        %v6950 = vadd.f32 %v6927, %v6944
        %v6951 = vadd.f32 %v6928, %v6944
        %v6952 = vadd.f32 %v6929, %v6944
        %v6953 = vadd.f32 %v6930, %v6944
        %v6954 = vadd.f32 %v6931, %v6944
        %v6955 = vadd.f32 %v6932, %v6944
        %v6956 = vadd.f32 %v6933, %v6944
        %v6957 = vadd.f32 %v6934, %v6944
        %v6958 = vadd.f32 %v6935, %v6944
        %v6959 = vadd.f32 %v6936, %v6944
        %v6960 = vadd.f32 %v6937, %v6944
        %v6961 = vadd.f32 %v6938, %v6944
        %v6962 = vmax.f32 %v6946, 0.0
        %v6963 = vmax.f32 %v6947, 0.0
        %v6964 = vmax.f32 %v6948, 0.0
        %v6965 = vmax.f32 %v6949, 0.0
        %v6966 = vmax.f32 %v6950, 0.0
        %v6967 = vmax.f32 %v6951, 0.0
        %v6968 = vmax.f32 %v6952, 0.0
        %v6969 = vmax.f32 %v6953, 0.0
        %v6970 = vmax.f32 %v6954, 0.0
        %v6971 = vmax.f32 %v6955, 0.0
        %v6972 = vmax.f32 %v6956, 0.0
        %v6973 = vmax.f32 %v6957, 0.0
        %v6974 = vmax.f32 %v6958, 0.0
        %v6975 = vmax.f32 %v6959, 0.0
        %v6976 = vmax.f32 %v6960, 0.0
        %v6977 = vmax.f32 %v6961, 0.0
        %v6978 = vld [vmem:[%s65] sm:$0xf]
        %v6979 = vld [vmem:[%s65 + $0x4] sm:$0xf]
        %v6980 = vld [vmem:[%s65 + $0x8] sm:$0xf]
        %v6981 = vld [vmem:[%s65 + $0xc] sm:$0xf]
        %v6982 = vld [vmem:[%s65 + $0x10] sm:$0xf]
        %v6983 = vld [vmem:[%s65 + $0x14] sm:$0xf]
        %v6984 = vld [vmem:[%s65 + $0x18] sm:$0xf]
        %v6985 = vld [vmem:[%s65 + $0x1c] sm:$0xf]
        %v6986 = vld [vmem:[%s65 + $0x20] sm:$0xf]
        %v6987 = vld [vmem:[%s65 + $0x24] sm:$0xf]
        %v6988 = vld [vmem:[%s65 + $0x28] sm:$0xf]
        %v6989 = vld [vmem:[%s65 + $0x2c] sm:$0xf]
        %v6990 = vld [vmem:[%s65 + $0x30] sm:$0xf]
        %v6991 = vld [vmem:[%s65 + $0x34] sm:$0xf]
        %v6992 = vld [vmem:[%s65 + $0x38] sm:$0xf]
        %v6993 = vld [vmem:[%s65 + $0x3c] sm:$0xf]
        %v6994 = vpack.c.bf16 %v6962, %v6962
        %v6995 = vpack.c.bf16 %v6963, %v6963
        %v6996 = vpack.c.bf16 %v6964, %v6964
        %v6997 = vpack.c.bf16 %v6965, %v6965
        %v6998 = vpack.c.bf16 %v6966, %v6966
        %v6999 = vpack.c.bf16 %v6967, %v6967
        %v7000 = vpack.c.bf16 %v6968, %v6968
        %v7001 = vpack.c.bf16 %v6969, %v6969
        %v7002 = vpack.c.bf16 %v6970, %v6970
        %v7003 = vpack.c.bf16 %v6971, %v6971
        %v7004 = vpack.c.bf16 %v6972, %v6972
        %v7005 = vpack.c.bf16 %v6973, %v6973
        %v7006 = vpack.c.bf16 %v6974, %v6974
        %v7007 = vpack.c.bf16 %v6975, %v6975
        %v7008 = vpack.c.bf16 %v6976, %v6976
        %v7009 = vpack.c.bf16 %v6977, %v6977
        %v7010 = vld [vmem:[#allocation2] sm:$0x1]
        %v7012 = vlaneseq
        %v7013 = vshrl.u32 %v7012, 7
        %v7014 = vsub.s32 0, %v7013
        %v7015 = vrot.slane %v7010, %v7014
        %v7033 = vunpack.c.l.b16 %v6994
        %v7034 = vunpack.c.l.b16 %v6995
        %v7035 = vunpack.c.l.b16 %v6996
        %v7036 = vunpack.c.l.b16 %v6997
        %v7037 = vunpack.c.l.b16 %v6998
        %v7038 = vunpack.c.l.b16 %v6999
        %v7039 = vunpack.c.l.b16 %v7000
        %v7040 = vunpack.c.l.b16 %v7001
        %v7041 = vunpack.c.l.b16 %v7002
        %v7042 = vunpack.c.l.b16 %v7003
        %v7043 = vunpack.c.l.b16 %v7004
        %v7044 = vunpack.c.l.b16 %v7005
        %v7045 = vunpack.c.l.b16 %v7006
        %v7046 = vunpack.c.l.b16 %v7007
        %v7047 = vunpack.c.l.b16 %v7008
        %v7048 = vunpack.c.l.b16 %v7009
        %v7049 = vrot.slane %v7034, 7
        %vm7050 = vcmask 1041409
        %v7051 = vsel %vm7050, %v7049, %v7033
        %v7052 = vrot.slane %v7035, 6
        %vm7053 = vcmask 1042434
        %v7054 = vsel %vm7053, %v7052, %v7051
        %v7055 = vrot.slane %v7036, 5
        %vm7056 = vcmask 1043459
        %v7057 = vsel %vm7056, %v7055, %v7054
        %v7058 = vrot.slane %v7037, 4
        %vm7059 = vcmask 1044484
        %v7060 = vsel %vm7059, %v7058, %v7057
        %v7061 = vrot.slane %v7038, 3
        %vm7062 = vcmask 1045509
        %v7063 = vsel %vm7062, %v7061, %v7060
        %v7064 = vrot.slane %v7039, 2
        %vm7065 = vcmask 1046534
        %v7066 = vsel %vm7065, %v7064, %v7063
        %v7067 = vrot.slane %v7040, 1
        %vm7068 = vcmask 1047559
        %v7069 = vsel %vm7068, %v7067, %v7066
        %v7070 = vrot.slane %v7042, 7
        %v7071 = vsel %vm7050, %v7070, %v7041
        %v7072 = vrot.slane %v7043, 6
        %v7073 = vsel %vm7053, %v7072, %v7071
        %v7074 = vrot.slane %v7044, 5
        %v7075 = vsel %vm7056, %v7074, %v7073
        %v7076 = vrot.slane %v7045, 4
        %v7077 = vsel %vm7059, %v7076, %v7075
        %v7078 = vrot.slane %v7046, 3
        %v7079 = vsel %vm7062, %v7078, %v7077
        %v7080 = vrot.slane %v7047, 2
        %v7081 = vsel %vm7065, %v7080, %v7079
        %v7082 = vrot.slane %v7048, 1
        %v7083 = vsel %vm7068, %v7082, %v7081
        %v7084 = vpack.c.b16 %v7083, %v7069
        %v7102 = vunpack.c.l.b16 %v6978
        %v7103 = vunpack.c.l.b16 %v6979
        %v7104 = vunpack.c.l.b16 %v6980
        %v7105 = vunpack.c.l.b16 %v6981
        %v7106 = vunpack.c.l.b16 %v6982
        %v7107 = vunpack.c.l.b16 %v6983
        %v7108 = vunpack.c.l.b16 %v6984
        %v7109 = vunpack.c.l.b16 %v6985
        %v7110 = vunpack.c.l.b16 %v6986
        %v7111 = vunpack.c.l.b16 %v6987
        %v7112 = vunpack.c.l.b16 %v6988
        %v7113 = vunpack.c.l.b16 %v6989
        %v7114 = vunpack.c.l.b16 %v6990
        %v7115 = vunpack.c.l.b16 %v6991
        %v7116 = vunpack.c.l.b16 %v6992
        %v7117 = vunpack.c.l.b16 %v6993
        %v7118 = vpack.c.b16 %v7103, %v7102
        %v7119 = vpack.c.b16 %v7105, %v7104
        %v7120 = vpack.c.b16 %v7107, %v7106
        %v7121 = vpack.c.b16 %v7109, %v7108
        %v7122 = vpack.c.b16 %v7111, %v7110
        %v7123 = vpack.c.b16 %v7113, %v7112
        %v7124 = vpack.c.b16 %v7115, %v7114
        %v7125 = vpack.c.b16 %v7117, %v7116
        %7134 = vmatprep.subr.bf16.mxu0 0
        %7135 = vmatpush1.bf16.msra.mxu0 %v7118
        %7136 = vmatprep.subr.bf16.mxu0 0
        %7137 = vmatpush1.bf16.msra.mxu0 %v7119
        %7138 = vmatprep.subr.bf16.mxu0 0
        %7139 = vmatpush1.bf16.msra.mxu0 %v7120
        %7140 = vmatprep.subr.bf16.mxu0 0
        %7141 = vmatpush1.bf16.msra.mxu0 %v7121
        %7142 = vmatprep.subr.bf16.mxu0 0
        %7143 = vmatpush1.bf16.msra.mxu0 %v7122
        %7144 = vmatprep.subr.bf16.mxu0 0
        %7145 = vmatpush1.bf16.msra.mxu0 %v7123
        %7146 = vmatprep.subr.bf16.mxu0 0
        %7147 = vmatpush1.bf16.msra.mxu0 %v7124
        %7148 = vmatprep.subr.bf16.mxu0 0
        %7149 = vmatpush1.bf16.msra.mxu0 %v7125
        %7150 = vmatprep.subr.bf16.mxu0 0
        %7151 = vmatpush1.bf16.msra.mxu0 0
        %7152 = vmatprep.subr.bf16.mxu0 0
        %7153 = vmatpush1.bf16.msra.mxu0 0
        %7154 = vmatprep.subr.bf16.mxu0 0
        %7155 = vmatpush1.bf16.msra.mxu0 0
        %7156 = vmatprep.subr.bf16.mxu0 0
        %7157 = vmatpush1.bf16.msra.mxu0 0
        %7158 = vmatprep.subr.bf16.mxu0 0
        %7159 = vmatpush1.bf16.msra.mxu0 0
        %7160 = vmatprep.subr.bf16.mxu0 0
        %7161 = vmatpush1.bf16.msra.mxu0 0
        %7162 = vmatprep.subr.bf16.mxu0 0
        %7163 = vmatpush1.bf16.msra.mxu0 0
        %7164 = vmatprep.subr.bf16.mxu0 0
        %7165 = vmatpush1.bf16.msra.mxu0 0
        %7166 = vmatprep.mubr.bf16.mxu0 0
        %7167 = vmatmul.mubr.bf16.gmra.mrb[0].mxu0 %v7084
        %v7168 = vpop.f32.mrb[0].mxu0
        %v7169 = vadd.f32 %v7015, %v7168
        %v7170 = vpop.f32.mrb[0].mxu0
        %v7171 = vpop.f32.mrb[0].mxu0
        %v7172 = vadd.f32 %v7015, %v7171
        %v7173 = vpop.f32.mrb[0].mxu0
        %7174 = vdwg.mxu0
        %vm7175 = vcmask 7168
        %v7176 = vsel %vm7175, %v7169, -inf
        %v7177 = vsel %vm7175, %v7172, -inf
        %v7178 = vmax.f32 %v7176, %v7177
        %v7179 = vrot.slane %v7178, 4
        %v7180 = vmax.f32 %v7178, %v7179
        %v7181 = vrot.slane %v7180, 2
        %v7182 = vmax.f32 %v7180, %v7181
        %v7183 = vrot.slane %v7182, 1
        %v7184 = vmax.f32 %v7182, %v7183
        %v7185 = vsub.f32 %v7169, %v7184
        %v7186 = vsub.f32 %v7172, %v7184
        %v7187 = vmul.f32 %v7185, 1.442695
        %v7188 = vpow.pop %v7187
        %v7189 = vmul.f32 %v7186, 1.442695
        %v7190 = vpow.pop %v7189
        %v7191 = vsel %vm7175, %v7188, 0.0
        %v7192 = vsel %vm7175, %v7190, 0.0
        %v7193 = vadd.f32 %v7191, %v7192
        %v7194 = vrot.slane %v7193, 4
        %v7195 = vadd.f32 %v7193, %v7194
        %v7196 = vrot.slane %v7195, 2
        %v7197 = vadd.f32 %v7195, %v7196
        %v7198 = vrot.slane %v7197, 1
        %v7199 = vadd.f32 %v7197, %v7198
        %v7200 = vrcp.pop %v7199
        %v7201 = vmul.f32 %v7188, %v7200
        %v7202 = vmul.f32 %v7190, %v7200
        %7204 = vset.pattern.permute.xlu0 0
        %7205 = vperm.xlu0 %7204, %v7201
        %v7206 = vpop.permute.xlu0 %7205
        %7209 = vset.pattern.permute.xlu0 0
        %7210 = vperm.xlu0 %7209, %v7202
        %v7211 = vpop.permute.xlu0 %7210
        %v7229 = vrot.slane %v6963, 7
        %v7230 = vsel %vm7050, %v7229, %v6962
        %v7231 = vrot.slane %v6964, 6
        %v7232 = vsel %vm7053, %v7231, %v7230
        %v7233 = vrot.slane %v6965, 5
        %v7234 = vsel %vm7056, %v7233, %v7232
        %v7235 = vrot.slane %v6966, 4
        %v7236 = vsel %vm7059, %v7235, %v7234
        %v7237 = vrot.slane %v6967, 3
        %v7238 = vsel %vm7062, %v7237, %v7236
        %v7239 = vrot.slane %v6968, 2
        %v7240 = vsel %vm7065, %v7239, %v7238
        %v7241 = vrot.slane %v6969, 1
        %v7242 = vsel %vm7068, %v7241, %v7240
        %v7243 = vrot.slane %v6971, 7
        %v7244 = vsel %vm7050, %v7243, %v6970
        %v7245 = vrot.slane %v6972, 6
        %v7246 = vsel %vm7053, %v7245, %v7244
        %v7247 = vrot.slane %v6973, 5
        %v7248 = vsel %vm7056, %v7247, %v7246
        %v7249 = vrot.slane %v6974, 4
        %v7250 = vsel %vm7059, %v7249, %v7248
        %v7251 = vrot.slane %v6975, 3
        %v7252 = vsel %vm7062, %v7251, %v7250
        %v7253 = vrot.slane %v6976, 2
        %v7254 = vsel %vm7065, %v7253, %v7252
        %v7255 = vrot.slane %v6977, 1
        %v7256 = vsel %vm7068, %v7255, %v7254
        %v7259 = vmul.f32 %v7206, %v7242
        %v7260 = vmul.f32 %v7211, %v7256
        %v7261 = vadd.f32 %v7259, %v7260
        %v7262 = vrot.slane %v7261, 4
        %v7263 = vadd.f32 %v7261, %v7262
        %v7264 = vrot.slane %v7263, 2
        %v7265 = vadd.f32 %v7263, %v7264
        %v7266 = vrot.slane %v7265, 1
        %v7267 = vadd.f32 %v7265, %v7266
        %v7268 = vld [vmem:[#allocation41] sm:$0xff]
        %v7269 = vld [vmem:[#allocation41 + $0x8] sm:$0xff]
        %v7270 = vld [vmem:[#allocation41 + $0x10] sm:$0xff]
        %v7271 = vld [vmem:[#allocation41 + $0x18] sm:$0xff]
        %v7272 = vld [vmem:[#allocation41 + $0x20] sm:$0xff]
        %v7273 = vld [vmem:[#allocation41 + $0x28] sm:$0xff]
        %v7274 = vld [vmem:[#allocation41 + $0x30] sm:$0xff]
        %v7275 = vld [vmem:[#allocation41 + $0x38] sm:$0xff]
        %v7276 = vld [vmem:[#allocation41 + $0x40] sm:$0xff]
        %v7277 = vld [vmem:[#allocation41 + $0x48] sm:$0xff]
        %v7278 = vld [vmem:[#allocation41 + $0x50] sm:$0xff]
        %v7279 = vld [vmem:[#allocation41 + $0x58] sm:$0xff]
        %v7280 = vld [vmem:[#allocation41 + $0x60] sm:$0xff]
        %v7281 = vld [vmem:[#allocation41 + $0x68] sm:$0xff]
        %v7282 = vld [vmem:[#allocation41 + $0x70] sm:$0xff]
        %v7283 = vld [vmem:[#allocation41 + $0x78] sm:$0xff]
        %v7284 = vld [vmem:[#allocation41 + $0x80] sm:$0xff]
        %v7285 = vld [vmem:[#allocation41 + $0x88] sm:$0xff]
        %v7286 = vld [vmem:[#allocation41 + $0x90] sm:$0xff]
        %v7287 = vld [vmem:[#allocation41 + $0x98] sm:$0xff]
        %v7288 = vld [vmem:[#allocation41 + $0xa0] sm:$0xff]
        %v7289 = vld [vmem:[#allocation41 + $0xa8] sm:$0xff]
        %v7290 = vld [vmem:[#allocation41 + $0xb0] sm:$0xff]
        %v7291 = vld [vmem:[#allocation41 + $0xb8] sm:$0xff]
        %v7292 = vld [vmem:[#allocation41 + $0xc0] sm:$0xff]
        %v7293 = vld [vmem:[#allocation41 + $0xc8] sm:$0xff]
        %v7294 = vld [vmem:[#allocation41 + $0xd0] sm:$0xff]
        %v7295 = vld [vmem:[#allocation41 + $0xd8] sm:$0xff]
        %v7296 = vld [vmem:[#allocation41 + $0xe0] sm:$0xff]
        %v7297 = vld [vmem:[#allocation41 + $0xe8] sm:$0xff]
        %v7298 = vld [vmem:[#allocation41 + $0xf0] sm:$0xff]
        %v7299 = vld [vmem:[#allocation41 + $0xf8] sm:$0xff]
        %v7300 = vpack.c.bf16 %v7267, %v7267
        %v7301 = vld [vmem:[%s71] sm:$0xf]
        %v7334 = vunpack.c.l.b16 %v7268
        %v7335 = vunpack.c.h.b16 %v7268
        %v7336 = vunpack.c.l.b16 %v7269
        %v7337 = vunpack.c.h.b16 %v7269
        %v7338 = vunpack.c.l.b16 %v7270
        %v7339 = vunpack.c.h.b16 %v7270
        %v7340 = vunpack.c.l.b16 %v7271
        %v7341 = vunpack.c.h.b16 %v7271
        %v7342 = vunpack.c.l.b16 %v7272
        %v7343 = vunpack.c.h.b16 %v7272
        %v7344 = vunpack.c.l.b16 %v7273
        %v7345 = vunpack.c.h.b16 %v7273
        %v7346 = vunpack.c.l.b16 %v7274
        %v7347 = vunpack.c.h.b16 %v7274
        %v7348 = vunpack.c.l.b16 %v7275
        %v7349 = vunpack.c.h.b16 %v7275
        %v7350 = vunpack.c.l.b16 %v7276
        %v7351 = vunpack.c.h.b16 %v7276
        %v7352 = vunpack.c.l.b16 %v7277
        %v7353 = vunpack.c.h.b16 %v7277
        %v7354 = vunpack.c.l.b16 %v7278
        %v7355 = vunpack.c.h.b16 %v7278
        %v7356 = vunpack.c.l.b16 %v7279
        %v7357 = vunpack.c.h.b16 %v7279
        %v7358 = vunpack.c.l.b16 %v7280
        %v7359 = vunpack.c.h.b16 %v7280
        %v7360 = vunpack.c.l.b16 %v7281
        %v7361 = vunpack.c.h.b16 %v7281
        %v7362 = vunpack.c.l.b16 %v7282
        %v7363 = vunpack.c.h.b16 %v7282
        %v7364 = vunpack.c.l.b16 %v7283
        %v7365 = vunpack.c.h.b16 %v7283
        %v7366 = vunpack.c.l.b16 %v7284
        %v7367 = vunpack.c.h.b16 %v7284
        %v7368 = vunpack.c.l.b16 %v7285
        %v7369 = vunpack.c.h.b16 %v7285
        %v7370 = vunpack.c.l.b16 %v7286
        %v7371 = vunpack.c.h.b16 %v7286
        %v7372 = vunpack.c.l.b16 %v7287
        %v7373 = vunpack.c.h.b16 %v7287
        %v7374 = vunpack.c.l.b16 %v7288
        %v7375 = vunpack.c.h.b16 %v7288
        %v7376 = vunpack.c.l.b16 %v7289
        %v7377 = vunpack.c.h.b16 %v7289
        %v7378 = vunpack.c.l.b16 %v7290
        %v7379 = vunpack.c.h.b16 %v7290
        %v7380 = vunpack.c.l.b16 %v7291
        %v7381 = vunpack.c.h.b16 %v7291
        %v7382 = vunpack.c.l.b16 %v7292
        %v7383 = vunpack.c.h.b16 %v7292
        %v7384 = vunpack.c.l.b16 %v7293
        %v7385 = vunpack.c.h.b16 %v7293
        %v7386 = vunpack.c.l.b16 %v7294
        %v7387 = vunpack.c.h.b16 %v7294
        %v7388 = vunpack.c.l.b16 %v7295
        %v7389 = vunpack.c.h.b16 %v7295
        %v7390 = vunpack.c.l.b16 %v7296
        %v7391 = vunpack.c.h.b16 %v7296
        %v7392 = vunpack.c.l.b16 %v7297
        %v7393 = vunpack.c.h.b16 %v7297
        %v7394 = vunpack.c.l.b16 %v7298
        %v7395 = vunpack.c.h.b16 %v7298
        %v7396 = vunpack.c.l.b16 %v7299
        %v7397 = vunpack.c.h.b16 %v7299
        %v7398 = vpack.c.b16 %v7338, %v7334
        %v7399 = vpack.c.b16 %v7339, %v7335
        %v7400 = vpack.c.b16 %v7340, %v7336
        %v7401 = vpack.c.b16 %v7341, %v7337
        %v7402 = vpack.c.b16 %v7346, %v7342
        %v7403 = vpack.c.b16 %v7347, %v7343
        %v7404 = vpack.c.b16 %v7348, %v7344
        %v7405 = vpack.c.b16 %v7349, %v7345
        %v7406 = vpack.c.b16 %v7354, %v7350
        %v7407 = vpack.c.b16 %v7355, %v7351
        %v7408 = vpack.c.b16 %v7356, %v7352
        %v7409 = vpack.c.b16 %v7357, %v7353
        %v7410 = vpack.c.b16 %v7362, %v7358
        %v7411 = vpack.c.b16 %v7363, %v7359
        %v7412 = vpack.c.b16 %v7364, %v7360
        %v7413 = vpack.c.b16 %v7365, %v7361
        %v7414 = vpack.c.b16 %v7370, %v7366
        %v7415 = vpack.c.b16 %v7371, %v7367
        %v7416 = vpack.c.b16 %v7372, %v7368
        %v7417 = vpack.c.b16 %v7373, %v7369
        %v7418 = vpack.c.b16 %v7378, %v7374
        %v7419 = vpack.c.b16 %v7379, %v7375
        %v7420 = vpack.c.b16 %v7380, %v7376
        %v7421 = vpack.c.b16 %v7381, %v7377
        %v7422 = vpack.c.b16 %v7386, %v7382
        %v7423 = vpack.c.b16 %v7387, %v7383
        %v7424 = vpack.c.b16 %v7388, %v7384
        %v7425 = vpack.c.b16 %v7389, %v7385
        %v7426 = vpack.c.b16 %v7394, %v7390
        %v7427 = vpack.c.b16 %v7395, %v7391
        %v7428 = vpack.c.b16 %v7396, %v7392
        %v7429 = vpack.c.b16 %v7397, %v7393
        %v7463 = vlaneseq
        %v7464 = vshrl.u32 %v7463, 7
        %v7465 = vsub.s32 0, %v7464
        %v7466 = vrot.slane %v7301, %v7465
        %v7467 = vlaneseq
        %v7468 = vshrl.u32 %v7467, 7
        %v7469 = vsub.s32 1, %v7468
        %v7470 = vrot.slane %v7301, %v7469
        %v7471 = vlaneseq
        %v7472 = vshrl.u32 %v7471, 7
        %v7473 = vsub.s32 2, %v7472
        %v7474 = vrot.slane %v7301, %v7473
        %v7475 = vlaneseq
        %v7476 = vshrl.u32 %v7475, 7
        %v7477 = vsub.s32 3, %v7476
        %v7478 = vrot.slane %v7301, %v7477
        %7483 = vmatprep.subr.bf16.mxu0 %v7399
        %7484 = vmatpush1.bf16.msra.mxu0 %v7398
        %7485 = vmatprep.subr.bf16.mxu0 %v7403
        %7486 = vmatpush1.bf16.msra.mxu0 %v7402
        %7487 = vmatprep.subr.bf16.mxu0 %v7407
        %7488 = vmatpush1.bf16.msra.mxu0 %v7406
        %7489 = vmatprep.subr.bf16.mxu0 %v7411
        %7490 = vmatpush1.bf16.msra.mxu0 %v7410
        %7491 = vmatprep.subr.bf16.mxu0 %v7415
        %7492 = vmatpush1.bf16.msra.mxu0 %v7414
        %7493 = vmatprep.subr.bf16.mxu0 %v7419
        %7494 = vmatpush1.bf16.msra.mxu0 %v7418
        %7495 = vmatprep.subr.bf16.mxu0 %v7423
        %7496 = vmatpush1.bf16.msra.mxu0 %v7422
        %7497 = vmatprep.subr.bf16.mxu0 %v7427
        %7498 = vmatpush1.bf16.msra.mxu0 %v7426
        %7499 = vmatprep.subr.bf16.mxu0 0
        %7500 = vmatpush1.bf16.msra.mxu0 0
        %7501 = vmatprep.subr.bf16.mxu0 0
        %7502 = vmatpush1.bf16.msra.mxu0 0
        %7503 = vmatprep.subr.bf16.mxu0 0
        %7504 = vmatpush1.bf16.msra.mxu0 0
        %7505 = vmatprep.subr.bf16.mxu0 0
        %7506 = vmatpush1.bf16.msra.mxu0 0
        %7507 = vmatprep.subr.bf16.mxu0 0
        %7508 = vmatpush1.bf16.msra.mxu0 0
        %7509 = vmatprep.subr.bf16.mxu0 0
        %7510 = vmatpush1.bf16.msra.mxu0 0
        %7511 = vmatprep.subr.bf16.mxu0 0
        %7512 = vmatpush1.bf16.msra.mxu0 0
        %7513 = vmatprep.subr.bf16.mxu0 0
        %7514 = vmatpush1.bf16.msra.mxu0 0
        %7515 = vmatprep.mubr.bf16.mxu0 0
        %7516 = vmatmul.mubr.bf16.gmra.mrb[0].mxu0 %v7300
        %v7517 = vpop.f32.mrb[0].mxu0
        %v7518 = vadd.f32 %v7466, %v7517
        %v7519 = vpop.f32.mrb[0].mxu0
        %v7520 = vadd.f32 %v7470, %v7519
        %v7521 = vpop.f32.mrb[0].mxu0
        %v7522 = vpop.f32.mrb[0].mxu0
        %7523 = vdwg.mxu0
        %7524 = vmatprep.subr.bf16.mxu0 %v7401
        %7525 = vmatpush1.bf16.msra.mxu0 %v7400
        %7526 = vmatprep.subr.bf16.mxu0 %v7405
        %7527 = vmatpush1.bf16.msra.mxu0 %v7404
        %7528 = vmatprep.subr.bf16.mxu0 %v7409
        %7529 = vmatpush1.bf16.msra.mxu0 %v7408
        %7530 = vmatprep.subr.bf16.mxu0 %v7413
        %7531 = vmatpush1.bf16.msra.mxu0 %v7412
        %7532 = vmatprep.subr.bf16.mxu0 %v7417
        %7533 = vmatpush1.bf16.msra.mxu0 %v7416
        %7534 = vmatprep.subr.bf16.mxu0 %v7421
        %7535 = vmatpush1.bf16.msra.mxu0 %v7420
        %7536 = vmatprep.subr.bf16.mxu0 %v7425
        %7537 = vmatpush1.bf16.msra.mxu0 %v7424
        %7538 = vmatprep.subr.bf16.mxu0 %v7429
        %7539 = vmatpush1.bf16.msra.mxu0 %v7428
        %7540 = vmatprep.subr.bf16.mxu0 0
        %7541 = vmatpush1.bf16.msra.mxu0 0
        %7542 = vmatprep.subr.bf16.mxu0 0
        %7543 = vmatpush1.bf16.msra.mxu0 0
        %7544 = vmatprep.subr.bf16.mxu0 0
        %7545 = vmatpush1.bf16.msra.mxu0 0
        %7546 = vmatprep.subr.bf16.mxu0 0
        %7547 = vmatpush1.bf16.msra.mxu0 0
        %7548 = vmatprep.subr.bf16.mxu0 0
        %7549 = vmatpush1.bf16.msra.mxu0 0
        %7550 = vmatprep.subr.bf16.mxu0 0
        %7551 = vmatpush1.bf16.msra.mxu0 0
        %7552 = vmatprep.subr.bf16.mxu0 0
        %7553 = vmatpush1.bf16.msra.mxu0 0
        %7554 = vmatprep.subr.bf16.mxu0 0
        %7555 = vmatpush1.bf16.msra.mxu0 0
        %7556 = vmatprep.mubr.bf16.mxu0 0
        %7557 = vmatmul.mubr.bf16.gmra.mrb[0].mxu0 %v7300
        %v7558 = vpop.f32.mrb[0].mxu0
        %v7559 = vadd.f32 %v7474, %v7558
        %v7560 = vpop.f32.mrb[0].mxu0
        %v7561 = vadd.f32 %v7478, %v7560
        %v7562 = vpop.f32.mrb[0].mxu0
        %v7563 = vpop.f32.mrb[0].mxu0
        %7564 = vdwg.mxu0
        %v7565 = vmax.f32 %v7518, 0.0
        %v7566 = vmax.f32 %v7520, 0.0
        %v7567 = vmax.f32 %v7559, 0.0
        %v7568 = vmax.f32 %v7561, 0.0
        %v7569 = vld [vmem:[%s73] sm:$0xf]
        %v7570 = vld [vmem:[%s73 + $0x4] sm:$0xf]
        %v7571 = vld [vmem:[%s73 + $0x8] sm:$0xf]
        %v7572 = vld [vmem:[%s73 + $0xc] sm:$0xf]
        %v7573 = vld [vmem:[%s73 + $0x10] sm:$0xf]
        %v7574 = vld [vmem:[%s73 + $0x14] sm:$0xf]
        %v7575 = vld [vmem:[%s73 + $0x18] sm:$0xf]
        %v7576 = vld [vmem:[%s73 + $0x1c] sm:$0xf]
        %v7577 = vld [vmem:[%s73 + $0x20] sm:$0xf]
        %v7578 = vld [vmem:[%s73 + $0x24] sm:$0xf]
        %v7579 = vld [vmem:[%s73 + $0x28] sm:$0xf]
        %v7580 = vld [vmem:[%s73 + $0x2c] sm:$0xf]
        %v7581 = vld [vmem:[%s73 + $0x30] sm:$0xf]
        %v7582 = vld [vmem:[%s73 + $0x34] sm:$0xf]
        %v7583 = vld [vmem:[%s73 + $0x38] sm:$0xf]
        %v7584 = vld [vmem:[%s73 + $0x3c] sm:$0xf]
        %v7585 = vld [vmem:[%s73 + $0x40] sm:$0xf]
        %v7586 = vld [vmem:[%s73 + $0x44] sm:$0xf]
        %v7587 = vld [vmem:[%s73 + $0x48] sm:$0xf]
        %v7588 = vld [vmem:[%s73 + $0x4c] sm:$0xf]
        %v7589 = vld [vmem:[%s73 + $0x50] sm:$0xf]
        %v7590 = vld [vmem:[%s73 + $0x54] sm:$0xf]
        %v7591 = vld [vmem:[%s73 + $0x58] sm:$0xf]
        %v7592 = vld [vmem:[%s73 + $0x5c] sm:$0xf]
        %v7593 = vld [vmem:[%s73 + $0x60] sm:$0xf]
        %v7594 = vld [vmem:[%s73 + $0x64] sm:$0xf]
        %v7595 = vld [vmem:[%s73 + $0x68] sm:$0xf]
        %v7596 = vld [vmem:[%s73 + $0x6c] sm:$0xf]
        %v7597 = vld [vmem:[%s73 + $0x70] sm:$0xf]
        %v7598 = vld [vmem:[%s73 + $0x74] sm:$0xf]
        %v7599 = vld [vmem:[%s73 + $0x78] sm:$0xf]
        %v7600 = vld [vmem:[%s73 + $0x7c] sm:$0xf]
        %v7601 = vld [vmem:[%s73 + $0x80] sm:$0xf]
        %v7602 = vld [vmem:[%s73 + $0x84] sm:$0xf]
        %v7603 = vld [vmem:[%s73 + $0x88] sm:$0xf]
        %v7604 = vld [vmem:[%s73 + $0x8c] sm:$0xf]
        %v7605 = vld [vmem:[%s73 + $0x90] sm:$0xf]
        %v7606 = vld [vmem:[%s73 + $0x94] sm:$0xf]
        %v7607 = vld [vmem:[%s73 + $0x98] sm:$0xf]
        %v7608 = vld [vmem:[%s73 + $0x9c] sm:$0xf]
        %v7609 = vld [vmem:[%s73 + $0xa0] sm:$0xf]
        %v7610 = vld [vmem:[%s73 + $0xa4] sm:$0xf]
        %v7611 = vld [vmem:[%s73 + $0xa8] sm:$0xf]
        %v7612 = vld [vmem:[%s73 + $0xac] sm:$0xf]
        %v7613 = vld [vmem:[%s73 + $0xb0] sm:$0xf]
        %v7614 = vld [vmem:[%s73 + $0xb4] sm:$0xf]
        %v7615 = vld [vmem:[%s73 + $0xb8] sm:$0xf]
        %v7616 = vld [vmem:[%s73 + $0xbc] sm:$0xf]
        %v7617 = vld [vmem:[%s73 + $0xc0] sm:$0xf]
        %v7618 = vld [vmem:[%s73 + $0xc4] sm:$0xf]
        %v7619 = vld [vmem:[%s73 + $0xc8] sm:$0xf]
        %v7620 = vld [vmem:[%s73 + $0xcc] sm:$0xf]
        %v7621 = vld [vmem:[%s73 + $0xd0] sm:$0xf]
        %v7622 = vld [vmem:[%s73 + $0xd4] sm:$0xf]
        %v7623 = vld [vmem:[%s73 + $0xd8] sm:$0xf]
        %v7624 = vld [vmem:[%s73 + $0xdc] sm:$0xf]
        %v7625 = vld [vmem:[%s73 + $0xe0] sm:$0xf]
        %v7626 = vld [vmem:[%s73 + $0xe4] sm:$0xf]
        %v7627 = vld [vmem:[%s73 + $0xe8] sm:$0xf]
        %v7628 = vld [vmem:[%s73 + $0xec] sm:$0xf]
        %v7629 = vld [vmem:[%s73 + $0xf0] sm:$0xf]
        %v7630 = vld [vmem:[%s73 + $0xf4] sm:$0xf]
        %v7631 = vld [vmem:[%s73 + $0xf8] sm:$0xf]
        %v7632 = vld [vmem:[%s73 + $0xfc] sm:$0xf]
        %v7633 = vpack.c.bf16 %v7565, %v7565
        %v7634 = vpack.c.bf16 %v7566, %v7566
        %v7635 = vpack.c.bf16 %v7567, %v7567
        %v7636 = vpack.c.bf16 %v7568, %v7568
        %v7637 = vld [vmem:[%s75] sm:$0x1]
        %v7702 = vunpack.c.l.b16 %v7569
        %v7703 = vunpack.c.l.b16 %v7570
        %v7704 = vunpack.c.l.b16 %v7571
        %v7705 = vunpack.c.l.b16 %v7572
        %v7706 = vunpack.c.l.b16 %v7573
        %v7707 = vunpack.c.l.b16 %v7574
        %v7708 = vunpack.c.l.b16 %v7575
        %v7709 = vunpack.c.l.b16 %v7576
        %v7710 = vunpack.c.l.b16 %v7577
        %v7711 = vunpack.c.l.b16 %v7578
        %v7712 = vunpack.c.l.b16 %v7579
        %v7713 = vunpack.c.l.b16 %v7580
        %v7714 = vunpack.c.l.b16 %v7581
        %v7715 = vunpack.c.l.b16 %v7582
        %v7716 = vunpack.c.l.b16 %v7583
        %v7717 = vunpack.c.l.b16 %v7584
        %v7718 = vunpack.c.l.b16 %v7585
        %v7719 = vunpack.c.l.b16 %v7586
        %v7720 = vunpack.c.l.b16 %v7587
        %v7721 = vunpack.c.l.b16 %v7588
        %v7722 = vunpack.c.l.b16 %v7589
        %v7723 = vunpack.c.l.b16 %v7590
        %v7724 = vunpack.c.l.b16 %v7591
        %v7725 = vunpack.c.l.b16 %v7592
        %v7726 = vunpack.c.l.b16 %v7593
        %v7727 = vunpack.c.l.b16 %v7594
        %v7728 = vunpack.c.l.b16 %v7595
        %v7729 = vunpack.c.l.b16 %v7596
        %v7730 = vunpack.c.l.b16 %v7597
        %v7731 = vunpack.c.l.b16 %v7598
        %v7732 = vunpack.c.l.b16 %v7599
        %v7733 = vunpack.c.l.b16 %v7600
        %v7734 = vunpack.c.l.b16 %v7601
        %v7735 = vunpack.c.l.b16 %v7602
        %v7736 = vunpack.c.l.b16 %v7603
        %v7737 = vunpack.c.l.b16 %v7604
        %v7738 = vunpack.c.l.b16 %v7605
        %v7739 = vunpack.c.l.b16 %v7606
        %v7740 = vunpack.c.l.b16 %v7607
        %v7741 = vunpack.c.l.b16 %v7608
        %v7742 = vunpack.c.l.b16 %v7609
        %v7743 = vunpack.c.l.b16 %v7610
        %v7744 = vunpack.c.l.b16 %v7611
        %v7745 = vunpack.c.l.b16 %v7612
        %v7746 = vunpack.c.l.b16 %v7613
        %v7747 = vunpack.c.l.b16 %v7614
        %v7748 = vunpack.c.l.b16 %v7615
        %v7749 = vunpack.c.l.b16 %v7616
        %v7750 = vunpack.c.l.b16 %v7617
        %v7751 = vunpack.c.l.b16 %v7618
        %v7752 = vunpack.c.l.b16 %v7619
        %v7753 = vunpack.c.l.b16 %v7620
        %v7754 = vunpack.c.l.b16 %v7621
        %v7755 = vunpack.c.l.b16 %v7622
        %v7756 = vunpack.c.l.b16 %v7623
        %v7757 = vunpack.c.l.b16 %v7624
        %v7758 = vunpack.c.l.b16 %v7625
        %v7759 = vunpack.c.l.b16 %v7626
        %v7760 = vunpack.c.l.b16 %v7627
        %v7761 = vunpack.c.l.b16 %v7628
        %v7762 = vunpack.c.l.b16 %v7629
        %v7763 = vunpack.c.l.b16 %v7630
        %v7764 = vunpack.c.l.b16 %v7631
        %v7765 = vunpack.c.l.b16 %v7632
        %v7766 = vpack.c.b16 %v7703, %v7702
        %v7767 = vpack.c.b16 %v7705, %v7704
        %v7768 = vpack.c.b16 %v7707, %v7706
        %v7769 = vpack.c.b16 %v7709, %v7708
        %v7770 = vpack.c.b16 %v7711, %v7710
        %v7771 = vpack.c.b16 %v7713, %v7712
        %v7772 = vpack.c.b16 %v7715, %v7714
        %v7773 = vpack.c.b16 %v7717, %v7716
        %v7774 = vpack.c.b16 %v7719, %v7718
        %v7775 = vpack.c.b16 %v7721, %v7720
        %v7776 = vpack.c.b16 %v7723, %v7722
        %v7777 = vpack.c.b16 %v7725, %v7724
        %v7778 = vpack.c.b16 %v7727, %v7726
        %v7779 = vpack.c.b16 %v7729, %v7728
        %v7780 = vpack.c.b16 %v7731, %v7730
        %v7781 = vpack.c.b16 %v7733, %v7732
        %v7782 = vpack.c.b16 %v7735, %v7734
        %v7783 = vpack.c.b16 %v7737, %v7736
        %v7784 = vpack.c.b16 %v7739, %v7738
        %v7785 = vpack.c.b16 %v7741, %v7740
        %v7786 = vpack.c.b16 %v7743, %v7742
        %v7787 = vpack.c.b16 %v7745, %v7744
        %v7788 = vpack.c.b16 %v7747, %v7746
        %v7789 = vpack.c.b16 %v7749, %v7748
        %v7790 = vpack.c.b16 %v7751, %v7750
        %v7791 = vpack.c.b16 %v7753, %v7752
        %v7792 = vpack.c.b16 %v7755, %v7754
        %v7793 = vpack.c.b16 %v7757, %v7756
        %v7794 = vpack.c.b16 %v7759, %v7758
        %v7795 = vpack.c.b16 %v7761, %v7760
        %v7796 = vpack.c.b16 %v7763, %v7762
        %v7797 = vpack.c.b16 %v7765, %v7764
        %7830 = vmatprep.subr.bf16.mxu0 0
        %7831 = vmatpush1.bf16.msra.mxu0 %v7766
        %7832 = vmatprep.subr.bf16.mxu0 0
        %7833 = vmatpush1.bf16.msra.mxu0 %v7767
        %7834 = vmatprep.subr.bf16.mxu0 0
        %7835 = vmatpush1.bf16.msra.mxu0 %v7768
        %7836 = vmatprep.subr.bf16.mxu0 0
        %7837 = vmatpush1.bf16.msra.mxu0 %v7769
        %7838 = vmatprep.subr.bf16.mxu0 0
        %7839 = vmatpush1.bf16.msra.mxu0 %v7770
        %7840 = vmatprep.subr.bf16.mxu0 0
        %7841 = vmatpush1.bf16.msra.mxu0 %v7771
        %7842 = vmatprep.subr.bf16.mxu0 0
        %7843 = vmatpush1.bf16.msra.mxu0 %v7772
        %7844 = vmatprep.subr.bf16.mxu0 0
        %7845 = vmatpush1.bf16.msra.mxu0 %v7773
        %7846 = vmatprep.subr.bf16.mxu0 0
        %7847 = vmatpush1.bf16.msra.mxu0 %v7774
        %7848 = vmatprep.subr.bf16.mxu0 0
        %7849 = vmatpush1.bf16.msra.mxu0 %v7775
        %7850 = vmatprep.subr.bf16.mxu0 0
        %7851 = vmatpush1.bf16.msra.mxu0 %v7776
        %7852 = vmatprep.subr.bf16.mxu0 0
        %7853 = vmatpush1.bf16.msra.mxu0 %v7777
        %7854 = vmatprep.subr.bf16.mxu0 0
        %7855 = vmatpush1.bf16.msra.mxu0 %v7778
        %7856 = vmatprep.subr.bf16.mxu0 0
        %7857 = vmatpush1.bf16.msra.mxu0 %v7779
        %7858 = vmatprep.subr.bf16.mxu0 0
        %7859 = vmatpush1.bf16.msra.mxu0 %v7780
        %7860 = vmatprep.subr.bf16.mxu0 0
        %7861 = vmatpush1.bf16.msra.mxu0 %v7781
        %7862 = vmatprep.mubr.bf16.mxu0 %v7634
        %7863 = vmatmul.mubr.bf16.gmra.mrb[0].mxu0 %v7633
        %v7864 = vpop.f32.mrb[0].mxu0
        %v7865 = vadd.f32 %v7637, %v7864
        %v7866 = vpop.f32.mrb[0].mxu0
        %v7867 = vpop.f32.mrb[0].mxu0
        %v7868 = vpop.f32.mrb[0].mxu0
        %7869 = vdwg.mxu0
        %7870 = vmatprep.subr.bf16.mxu0 0
        %7871 = vmatpush1.bf16.msra.mxu0 %v7782
        %7872 = vmatprep.subr.bf16.mxu0 0
        %7873 = vmatpush1.bf16.msra.mxu0 %v7783
        %7874 = vmatprep.subr.bf16.mxu0 0
        %7875 = vmatpush1.bf16.msra.mxu0 %v7784
        %7876 = vmatprep.subr.bf16.mxu0 0
        %7877 = vmatpush1.bf16.msra.mxu0 %v7785
        %7878 = vmatprep.subr.bf16.mxu0 0
        %7879 = vmatpush1.bf16.msra.mxu0 %v7786
        %7880 = vmatprep.subr.bf16.mxu0 0
        %7881 = vmatpush1.bf16.msra.mxu0 %v7787
        %7882 = vmatprep.subr.bf16.mxu0 0
        %7883 = vmatpush1.bf16.msra.mxu0 %v7788
        %7884 = vmatprep.subr.bf16.mxu0 0
        %7885 = vmatpush1.bf16.msra.mxu0 %v7789
        %7886 = vmatprep.subr.bf16.mxu0 0
        %7887 = vmatpush1.bf16.msra.mxu0 %v7790
        %7888 = vmatprep.subr.bf16.mxu0 0
        %7889 = vmatpush1.bf16.msra.mxu0 %v7791
        %7890 = vmatprep.subr.bf16.mxu0 0
        %7891 = vmatpush1.bf16.msra.mxu0 %v7792
        %7892 = vmatprep.subr.bf16.mxu0 0
        %7893 = vmatpush1.bf16.msra.mxu0 %v7793
        %7894 = vmatprep.subr.bf16.mxu0 0
        %7895 = vmatpush1.bf16.msra.mxu0 %v7794
        %7896 = vmatprep.subr.bf16.mxu0 0
        %7897 = vmatpush1.bf16.msra.mxu0 %v7795
        %7898 = vmatprep.subr.bf16.mxu0 0
        %7899 = vmatpush1.bf16.msra.mxu0 %v7796
        %7900 = vmatprep.subr.bf16.mxu0 0
        %7901 = vmatpush1.bf16.msra.mxu0 %v7797
        %7902 = vmatprep.mubr.bf16.mxu0 %v7636
        %7903 = vmatmul.mubr.bf16.gmra.mrb[0].mxu0 %v7635
        %v7904 = vpop.f32.mrb[0].mxu0
        %v7905 = vadd.f32 %v7865, %v7904
        %v7906 = vpop.f32.mrb[0].mxu0
        %v7907 = vpop.f32.mrb[0].mxu0
        %v7908 = vpop.f32.mrb[0].mxu0
        %7909 = vdwg.mxu0
        %vm7910 = vcmask 73728
        %7911 = vst.msk [vmem:[%s1499] sm:$0x1] %vm7910, %v7905
        %s7912 = sand.u32 %s919, 1
        %s7913 = scalar_lea.sflag [#allocation5], %s7912
        %s7914 = sand.u32 %s919, 1
        %s7915 = scalar_lea.vmem [#allocation42], %s7914
        // Predicated region
        $region273: #{tpu_custom_call.1} parent=171 // pred_check
          %p7916 = pneg %p929
        $region274: #{tpu_custom_call.1} parent=171 // pred_check_branch
          %7918 = sbr.rel (%p7916) target = $region276
        $region275: #{tpu_custom_call.1} parent=171 // pred_region
          %s7920 = ssub.s32 16, 16
          %7921 = vsyncadd %s7913, %s7920
          %s7922 = smul.addr %s108, 16
          %s7923 = scalar_lea.hbm %s77, %s7922
          %s7925 = sshll.u32 %s7915, 4
          %s7926 = int_to_ptr.vmem [resolvable:$true] %s7925
          %7928 = dma.vmem_to_hbm [thread:$0]  %s7926, 16, %s7923, %s7913
        $region276: #{tpu_custom_call.1} parent=171 // pred_fallthru
          _
      $region172: #{tpu_custom_call.1} parent=5 // pred_fallthru
        _
      %p7929 = scmp.le.s32.totalorder 2, %s103
      // Predicated region
      $region277: #{tpu_custom_call.1} parent=5 // pred_check
        %p7930 = pneg %p7929
      $region278: #{tpu_custom_call.1} parent=5 // pred_check_branch
        %7932 = sbr.rel (%p7930) target = $region280
      $region279: #{tpu_custom_call.1} parent=5 // pred_region
        %s7933 = ssub.s32 %s103, 2
        // Predicated region
        $region281: #{tpu_custom_call.1} parent=279 // pred_check
          %p7934 = pneg %p935
        $region282: #{tpu_custom_call.1} parent=279 // pred_check_branch
          %7936 = sbr.rel (%p7934) target = $region284
        $region283: #{tpu_custom_call.1} parent=279 // pred_region
          %s7937 = sand.u32 %s920, 1
          %s7938 = scalar_lea.sflag [#allocation5], %s7937
          %s7939 = sand.u32 %s920, 1
          %s7940 = scalar_lea.vmem [#allocation42], %s7939
          %7941 = dma.done %s7938, 16
        $region284: #{tpu_custom_call.1} parent=279 // pred_fallthru
          _
      $region280: #{tpu_custom_call.1} parent=5 // pred_fallthru
        _
    $region6: #{tpu_custom_call.1} parent=1 // loop_footer
      %s107 = sadd.s32 1, %s103
    $region7: #{tpu_custom_call.1} parent=1 // loop_footer_branch
      %102 = sbr.rel target = $region3
    $region8: #{tpu_custom_call.1} parent=1 // loop_exit
      _
    %7942 = vsyncpa [#allocation4], 1
    %s7943 = scalar_lea.sflag [#allocation4], 1
    %7944 = vsyncpa %s7943, 1
    %7945 = vsyncpa [#allocation7], 1
    %7946 = vsyncpa [#allocation10], 1
    %7947 = vsyncpa [#allocation13], 1
    %7948 = vsyncpa [#allocation16], 1
    %7949 = vsyncpa [#allocation19], 1
    %7950 = vsyncpa [#allocation22], 1
    %7951 = vsyncpa [#allocation25], 1
    %7952 = vsyncpa [#allocation28], 1
    %7953 = vsyncpa [#allocation31], 1
    %7954 = vsyncpa [#allocation34], 1
    %7955 = vsyncpa [#allocation37], 1
    %7956 = vsyncpa [#allocation40], 1
    %7957 = vsyncpa [#allocation5], 1
    %s7958 = scalar_lea.sflag [#allocation5], 1
    %7959 = vsyncpa %s7958, 1

</llo_original>
